<compile_context>
chip_gen: v7x
topology: tpu7x:2x2x1
jax: 0.10.0
libtpu: 0.0.40
codegen_flags: <defaults>
</compile_context>

<pallas_src>
import math

import jax
import jax.numpy as jnp
from jax.experimental import pallas as pl
from jax.experimental.pallas import tpu as pltpu


DECAY = 0.9  # RNNCell default


# --------------------------------------------------------------------------- #
# Helpers
# --------------------------------------------------------------------------- #
def _round_up(x, m):
    return ((x + m - 1) // m) * m


def _largest_divisor_leq(n, x):
    x = max(1, min(n, x))
    for d in range(x, 0, -1):
        if n % d == 0:
            return d
    return 1


def _device_kind():
    try:
        return jax.devices()[0].device_kind.lower()
    except Exception:
        return ""


def _vmem_capacity_bytes():
    """Physical VMEM per TensorCore, generation aware."""
    try:
        return int(pltpu.get_tpu_info().vmem_capacity_bytes)
    except Exception:
        kind = _device_kind()
        if "v7" in kind:
            return 64 << 20
        return 128 << 20  # v5e / v6e


# --------------------------------------------------------------------------- #
# Kernel
# --------------------------------------------------------------------------- #
def _make_rnn_kernel(num_layers, decay, tt, mxu_dtype, carry_in_regs):
    alpha = 1.0 - decay

    def kernel(*refs):
        # refs layout:
        #   [0] x_ref      (tt, tb, I)    raw inputs (time block)
        #   [1] h0_ref     (1, tb, Hp)    hidden_init (padded)
        #   [2] w_ih0_ref  (I, Hp)        layer-0 input weight, transposed
        #   [3] w_hh0_ref  (Hp, Hp)       layer-0 recurrent weight, transposed
        #   [4] b0_ref     (1, Hp)
        #   per layer l>=1: w_ihT_l (Hp,Hp), w_hhT_l (Hp,Hp), b_l (1,Hp)
        #   outputs:        hid_l (tt, tb, Hp) per layer
        #   scratch:        h_state (L, tb, Hp) f32 (persists across time blocks)
        x_ref, h0_ref = refs[0], refs[1]
        w_ih_refs = [refs[2]]
        w_hh_refs = [refs[3]]
        b_refs = [refs[4]]
        idx = 5
        for _ in range(num_layers - 1):
            w_ih_refs.append(refs[idx])
            w_hh_refs.append(refs[idx + 1])
            b_refs.append(refs[idx + 2])
            idx += 3
        hid_refs = refs[idx: idx + num_layers]
        h_state = refs[idx + num_layers]

        t_blk = pl.program_id(1)

        @pl.when(t_blk == 0)
        def _init():
            for layer in range(num_layers):
                h_state[layer] = h0_ref[0]

        # Small loop-invariant loads (biases only; weight refs are indexed at
        # the dot call sites so Mosaic streams them from VMEM, no vreg spills).
        biases = [b_refs[l][...] for l in range(num_layers)]

        # Hidden-state carry: SSA values across the unrolled block when small.
        if carry_in_regs:
            h_vals = [h_state[l] for l in range(num_layers)]

        def read_h(l):
            return h_vals[l] if carry_in_regs else h_state[l]

        def write_h(l, v):
            if carry_in_regs:
                h_vals[l] = v
            else:
                h_state[l] = v

        # Wavefront (layer-skewed) schedule: wave w computes (layer l, step w-l).
        # Layers are visited deepest-first inside a wave, so layer l reads layer
        # l-1's value from the previous wave (== its step w-l output), giving
        # num_layers independent matmul->tanh->update chains in flight.
        n_waves = tt + num_layers - 1
        for w in range(n_waves):
            for l in reversed(range(num_layers)):
                s = w - l
                if s < 0 or s >= tt:
                    continue
                h_prev = read_h(l)
                if l == 0:
                    below = x_ref[s].astype(mxu_dtype)
                else:
                    below = read_h(l - 1).astype(mxu_dtype)
                # Split dots (no concatenation): K-splitting is free on the MXU.
                pre = (
                    jnp.dot(below, w_ih_refs[l][...],
                            preferred_element_type=jnp.float32)
                    + jnp.dot(h_prev.astype(mxu_dtype), w_hh_refs[l][...],
                              preferred_element_type=jnp.float32)
                    + biases[l]
                )
                h_new = decay * h_prev + alpha * jnp.tanh(pre)
                write_h(l, h_new)
                hid_refs[l][s] = h_new.astype(hid_refs[l].dtype)

        if carry_in_regs:
            for l in range(num_layers):
                h_state[l] = h_vals[l]

    return kernel


# --------------------------------------------------------------------------- #
# Wrapper
# --------------------------------------------------------------------------- #
def rnn_layers_forward(inputs, hidden_init, params, decay=DECAY,
                       tt=None, tb=None, mxu_dtype=jnp.float32,
                       out_dtype=jnp.float32):
    """Pallas forward for RNNLayers.

    inputs:       (T, B, I) float32
    hidden_init:  (1, B, H) float32
    params:       list of (w_ih (H, I_l), w_hh (H, H), bias (H,)) per layer
    tt:           timesteps per grid step (must divide T); default auto (<=32)
    tb:           batch rows per grid step (must divide B, multiple of 8 or B)
    mxu_dtype:    matmul operand dtype.  bfloat16 is recommended on all TPU
                  generations (v5e included) for large H; note the recurrent
                  operand is rounded to bf16 every step, so validate with a
                  looser tolerance than the f32 path.
    out_dtype:    dtype of the per-layer hidden writeback (f32 or bf16); the
                  in-kernel recurrence always accumulates in f32.
    Returns (outputs (T,B,H), [all_hiddens_l (T+1,B,H) per layer]).
    """
    T, B, I = inputs.shape
    H = hidden_init.shape[-1]
    num_layers = len(params)
    f32 = jnp.float32
    mxu_dtype = jnp.dtype(mxu_dtype)
    out_dtype = jnp.dtype(out_dtype)

    kind = _device_kind()
    is_v7 = "v7" in kind
    is_v5e = ("v5 lite" in kind) or ("v5e" in kind) or ("v5litepod" in kind)
    bf16_big_mxu = (mxu_dtype == jnp.dtype(jnp.bfloat16)) and not is_v5e

    # Lane padding: full MXU tiles (256x256 on v6e/v7x when bf16, else 128).
    lane_mult = 256 if bf16_big_mxu else 128
    Hp = _round_up(H, lane_mult)

    # ---- tile defaults -------------------------------------------------- #
    if tb is None:
        m_cap = 256 if bf16_big_mxu else 128
        tb = B
        for d in range(min(B, m_cap), 7, -1):
            if B % d == 0 and d % 8 == 0:
                tb = d
                break
        # v7x: keep >= 2 iterations on the parallel batch axis (2 TensorCores).
        if is_v7 and tb == B and B >= 16:
            for d in range(B // 2, 7, -1):
                if B % d == 0 and d % 8 == 0:
                    tb = d
                    break
    assert B % tb == 0, "tb must divide B"
    assert tb == B or tb % 8 == 0, "tb must be a multiple of 8 (f32 sublane) or B"

    if tt is None:
        tt = _largest_divisor_leq(T, 32)
    assert T % tt == 0, "tt must divide T"

    # ---- VMEM budget (generation aware) & auto-shrink tt/tb -------------- #
    capacity = _vmem_capacity_bytes()
    budget = int(0.80 * capacity)          # headroom for Mosaic internal scratch
    mxu_b = mxu_dtype.itemsize
    out_b = out_dtype.itemsize

    def vmem_estimate(tt_, tb_):
        w_bytes = (I * Hp + (2 * num_layers - 1) * Hp * Hp) * mxu_b  # resident, 1-buf
        bias_bytes = num_layers * Hp * 4
        h0_bytes = 2 * tb_ * Hp * 4
        in_stream = 2 * tt_ * tb_ * I * mxu_b
        out_stream = 2 * num_layers * tt_ * tb_ * Hp * out_b
        scratch = num_layers * tb_ * Hp * 4
        return w_bytes + bias_bytes + h0_bytes + in_stream + out_stream + scratch

    while vmem_estimate(tt, tb) > budget and tt > 1:
        tt = _largest_divisor_leq(T, max(1, tt // 2))
    while vmem_estimate(tt, tb) > budget and tb > 8:
        new_tb = tb
        for d in range(tb // 2, 7, -1):
            if B % d == 0 and d % 8 == 0:
                new_tb = d
                break
        if new_tb == tb:
            break
        tb = new_tb

    vmem_limit = int(min(budget, max(32 << 20, 2 * vmem_estimate(tt, tb) + (8 << 20))))

    # ---- operands: pre-transposed, zero-padded weights ------------------- #
    # Zero padding is exact: padded hidden columns stay identically 0.
    x_in = inputs if mxu_dtype == jnp.dtype(f32) else inputs.astype(mxu_dtype)
    h0 = jnp.zeros((1, B, Hp), f32).at[:, :, :H].set(hidden_init.astype(f32))

    w_ih0, w_hh0, b0 = params[0]
    weight_args = [
        jnp.zeros((I, Hp), f32).at[:, :H].set(w_ih0.T.astype(f32)).astype(mxu_dtype),
        jnp.zeros((Hp, Hp), f32).at[:H, :H].set(w_hh0.T.astype(f32)).astype(mxu_dtype),
        jnp.zeros((1, Hp), f32).at[:, :H].set(b0.astype(f32)),
    ]
    for (w_ih, w_hh, b) in params[1:]:
        weight_args.append(
            jnp.zeros((Hp, Hp), f32).at[:H, :H].set(w_ih.T.astype(f32)).astype(mxu_dtype))
        weight_args.append(
            jnp.zeros((Hp, Hp), f32).at[:H, :H].set(w_hh.T.astype(f32)).astype(mxu_dtype))
        weight_args.append(jnp.zeros((1, Hp), f32).at[:, :H].set(b.astype(f32)))

    carry_in_regs = (tb <= 64 and Hp <= 256)
    kernel = _make_rnn_kernel(num_layers, decay, tt, mxu_dtype, carry_in_regs)

    # ---- specs ------------------------------------------------------------ #
    def build_in_specs(single_buffer_weights):
        if single_buffer_weights:
            resident = dict(pipeline_mode=pl.Buffered(1))  # constant-index: 1 buffer
        else:
            resident = {}
        specs = [
            pl.BlockSpec((tt, tb, I), lambda b_, t_: (t_, b_, 0)),      # inputs
            pl.BlockSpec((1, tb, Hp), lambda b_, t_: (0, b_, 0)),       # hidden_init
            pl.BlockSpec((I, Hp), lambda b_, t_: (0, 0), **resident),   # W_ih0^T
            pl.BlockSpec((Hp, Hp), lambda b_, t_: (0, 0), **resident),  # W_hh0^T
            pl.BlockSpec((1, Hp), lambda b_, t_: (0, 0), **resident),   # b0
        ]
        for _ in range(num_layers - 1):
            specs.append(pl.BlockSpec((Hp, Hp), lambda b_, t_: (0, 0), **resident))
            specs.append(pl.BlockSpec((Hp, Hp), lambda b_, t_: (0, 0), **resident))
            specs.append(pl.BlockSpec((1, Hp), lambda b_, t_: (0, 0), **resident))
        return specs

    out_shapes = tuple(jax.ShapeDtypeStruct((T, B, Hp), out_dtype)
                       for _ in range(num_layers))
    out_specs = tuple(pl.BlockSpec((tt, tb, Hp), lambda b_, t_: (t_, b_, 0))
                      for _ in range(num_layers))

    def run(single_buffer_weights):
        return pl.pallas_call(
            kernel,
            out_shape=out_shapes,
            grid_spec=pltpu.PrefetchScalarGridSpec(
                num_scalar_prefetch=0,
                grid=(B // tb, T // tt),         # (batch-parallel, sequential time)
                in_specs=build_in_specs(single_buffer_weights),
                out_specs=out_specs,
                scratch_shapes=[pltpu.VMEM((num_layers, tb, Hp), f32)],
            ),
            compiler_params=pltpu.CompilerParams(
                dimension_semantics=("parallel", "arbitrary"),
                vmem_limit_bytes=vmem_limit,
            ),
        )(x_in, h0, *weight_args)

    try:
        results = run(True)
    except Exception:
        # pipeline_mode=pl.Buffered(1) not supported by this JAX/libtpu build;
        # fall back to default double-buffering of the resident weights.
        results = run(False)

    # De-pad the lane dimension; prepend the initial hidden (PyTorch's [h] seed).
    hid_list = [r[:, :, :H] for r in results]
    outputs = hid_list[-1]                            # last-layer hiddens == outputs
    init_row = hidden_init[0][None].astype(out_dtype)  # (1, B, H)
    all_hiddens = [jnp.concatenate([init_row, h], axis=0) for h in hid_list]
    return outputs, all_hiddens


# --------------------------------------------------------------------------- #
# Pure-JAX reference (mirrors PyTorch RNNLayers.forward)
# --------------------------------------------------------------------------- #
def rnn_layers_ref(inputs, hidden_init, params, decay=DECAY):
    T = inputs.shape[0]
    num_layers = len(params)
    hiddens = [hidden_init[0] for _ in range(num_layers)]
    all_hiddens = [[h] for h in hiddens]
    outputs = []
    for t in range(T):
        cell_input = inputs[t]
        for layer, (w_ih, w_hh, b) in enumerate(params):
            pre = cell_input @ w_ih.T + hiddens[layer] @ w_hh.T + b
            act = jnp.tanh(pre)
            h = decay * hiddens[layer] + (1.0 - decay) * act
            hiddens[layer] = h
            all_hiddens[layer].append(h)
            cell_input = h
        outputs.append(cell_input)
    return jnp.stack(outputs), [jnp.stack(h) for h in all_hiddens]


def _init_cell_params(key, input_size, hidden_size):
    """Deterministic init mimicking kaiming_uniform_(a=sqrt(5)) + bias uniform."""
    k_ih, k_hh, k_b = jax.random.split(key, 3)
    bound_ih = 1.0 / math.sqrt(input_size)
    bound_hh = 1.0 / math.sqrt(hidden_size)
    w_ih = jax.random.uniform(k_ih, (hidden_size, input_size), jnp.float32,
                              -bound_ih, bound_ih)
    w_hh = jax.random.uniform(k_hh, (hidden_size, hidden_size), jnp.float32,
                              -bound_hh, bound_hh)
    b = jax.random.uniform(k_b, (hidden_size,), jnp.float32, -bound_ih, bound_ih)
    return w_ih, w_hh, b
    # TODO(synk): coords / connection-distance buffers (ff_distances, rec_distances)
    # are only used for wiring-cost regularization, not the forward pass — omitted.


if __name__ == "__main__":
    key = jax.random.PRNGKey(0)

    # Small shapes consistent with the module: time-major input, hidden_size a
    # perfect square (coords constraint).  T=16 with tt=4 exercises the hidden
    # state carry across grid time blocks; 3 layers exercises the wavefront.
    T, B, I, H = 16, 8, 16, 64
    num_layers = 3

    k_x, k_h, k_p = jax.random.split(key, 3)
    inputs = jax.random.normal(k_x, (T, B, I), jnp.float32)
    hidden_init = jax.random.normal(k_h, (1, B, H), jnp.float32)

    params = []
    in_size = I
    for kp in jax.random.split(k_p, num_layers):
        params.append(_init_cell_params(kp, in_size, H))
        in_size = H

    outputs, all_hiddens = rnn_layers_forward(inputs, hidden_init, params, tt=4)
    outputs = jax.block_until_ready(outputs)
    all_hiddens = [jax.block_until_ready(h) for h in all_hiddens]

    ref_out, ref_all = rnn_layers_ref(inputs, hidden_init, params)

    assert outputs.shape == (T, B, H)
    assert all(h.shape == (T + 1, B, H) for h in all_hiddens)
    assert jnp.allclose(outputs, ref_out, atol=1e-4, rtol=1e-4)
    for h_k, h_r in zip(all_hiddens, ref_all):
        assert jnp.allclose(h_k, h_r, atol=1e-4, rtol=1e-4)

    print("KERNEL_OK")
</pallas_src>

<mosaic_0001>
module attributes {stable_mosaic.version = 11 : i64} {
  func.func @kernel(%arg0: i32, %arg1: i32, %arg2: memref<4x8x16xf32, #tpu.memory_space<vmem>>, %arg3: memref<1x8x128xf32, #tpu.memory_space<vmem>>, %arg4: memref<16x128xf32, #tpu.memory_space<vmem>>, %arg5: memref<128x128xf32, #tpu.memory_space<vmem>>, %arg6: memref<1x128xf32, #tpu.memory_space<vmem>>, %arg7: memref<128x128xf32, #tpu.memory_space<vmem>>, %arg8: memref<128x128xf32, #tpu.memory_space<vmem>>, %arg9: memref<1x128xf32, #tpu.memory_space<vmem>>, %arg10: memref<128x128xf32, #tpu.memory_space<vmem>>, %arg11: memref<128x128xf32, #tpu.memory_space<vmem>>, %arg12: memref<1x128xf32, #tpu.memory_space<vmem>>, %arg13: memref<4x8x128xf32, #tpu.memory_space<vmem>>, %arg14: memref<4x8x128xf32, #tpu.memory_space<vmem>>, %arg15: memref<4x8x128xf32, #tpu.memory_space<vmem>>, %arg16: memref<3x8x128xf32, #tpu.memory_space<vmem>>) attributes {dimension_semantics = [#tpu.dimension_semantics<parallel>, #tpu.dimension_semantics<arbitrary>], iteration_bounds = array<i64: 1, 4>, scalar_prefetch = 0 : i64, scratch_operands = 1 : i64, tpu.core_type = #tpu.core_type<tc>, window_params = [{transform_indices = @transform_0, window_bounds = array<i64: 4, 8, 16>}, {transform_indices = @transform_1, window_bounds = array<i64: 1, 8, 128>}, {pipeline_mode = #tpu.pipeline_mode<synchronous>, transform_indices = @transform_2, window_bounds = array<i64: 16, 128>}, {pipeline_mode = #tpu.pipeline_mode<synchronous>, transform_indices = @transform_3, window_bounds = array<i64: 128, 128>}, {pipeline_mode = #tpu.pipeline_mode<synchronous>, transform_indices = @transform_4, window_bounds = array<i64: 1, 128>}, {pipeline_mode = #tpu.pipeline_mode<synchronous>, transform_indices = @transform_5, window_bounds = array<i64: 128, 128>}, {pipeline_mode = #tpu.pipeline_mode<synchronous>, transform_indices = @transform_6, window_bounds = array<i64: 128, 128>}, {pipeline_mode = #tpu.pipeline_mode<synchronous>, transform_indices = @transform_7, window_bounds = array<i64: 1, 128>}, {pipeline_mode = #tpu.pipeline_mode<synchronous>, transform_indices = @transform_8, window_bounds = array<i64: 128, 128>}, {pipeline_mode = #tpu.pipeline_mode<synchronous>, transform_indices = @transform_9, window_bounds = array<i64: 128, 128>}, {pipeline_mode = #tpu.pipeline_mode<synchronous>, transform_indices = @transform_10, window_bounds = array<i64: 1, 128>}, {transform_indices = @transform_11, window_bounds = array<i64: 4, 8, 128>}, {transform_indices = @transform_12, window_bounds = array<i64: 4, 8, 128>}, {transform_indices = @transform_13, window_bounds = array<i64: 4, 8, 128>}]} {
    %c0_i32 = arith.constant 0 : i32
    %0 = arith.cmpi eq, %arg1, %c0_i32 : i32
    %1 = arith.extui %0 : i1 to i32
    %c0_i32_0 = arith.constant 0 : i32
    %2 = arith.cmpi ne, %1, %c0_i32_0 : i32
    scf.if %2 {
      %c0_164 = arith.constant 0 : index
      %c0_165 = arith.constant 0 : index
      %c0_166 = arith.constant 0 : index
      %221 = vector.load %arg3[%c0_164, %c0_165, %c0_166] : memref<1x8x128xf32, #tpu.memory_space<vmem>>, vector<1x8x128xf32>
      %222 = vector.shape_cast %221 : vector<1x8x128xf32> to vector<8x128xf32>
      %c0_167 = arith.constant 0 : index
      %c0_168 = arith.constant 0 : index
      %c0_169 = arith.constant 0 : index
      %223 = vector.load %arg16[%c0_167, %c0_168, %c0_169] : memref<3x8x128xf32, #tpu.memory_space<vmem>>, vector<1x8x128xf32>
      %224 = vector.shape_cast %223 : vector<1x8x128xf32> to vector<8x128xf32>
      %225 = vector.shape_cast %222 : vector<8x128xf32> to vector<1x8x128xf32>
      tpu.vector_store %arg16[%c0_167, %c0_168, %c0_169], %225 {strides = array<i32>} : memref<3x8x128xf32, #tpu.memory_space<vmem>>, vector<1x8x128xf32>,
      %c0_170 = arith.constant 0 : index
      %c0_171 = arith.constant 0 : index
      %c0_172 = arith.constant 0 : index
      %226 = vector.load %arg3[%c0_170, %c0_171, %c0_172] : memref<1x8x128xf32, #tpu.memory_space<vmem>>, vector<1x8x128xf32>
      %227 = vector.shape_cast %226 : vector<1x8x128xf32> to vector<8x128xf32>
      %c1_173 = arith.constant 1 : index
      %c0_174 = arith.constant 0 : index
      %c0_175 = arith.constant 0 : index
      %228 = vector.load %arg16[%c1_173, %c0_174, %c0_175] : memref<3x8x128xf32, #tpu.memory_space<vmem>>, vector<1x8x128xf32>
      %229 = vector.shape_cast %228 : vector<1x8x128xf32> to vector<8x128xf32>
      %230 = vector.shape_cast %227 : vector<8x128xf32> to vector<1x8x128xf32>
      tpu.vector_store %arg16[%c1_173, %c0_174, %c0_175], %230 {strides = array<i32>} : memref<3x8x128xf32, #tpu.memory_space<vmem>>, vector<1x8x128xf32>,
      %c0_176 = arith.constant 0 : index
      %c0_177 = arith.constant 0 : index
      %c0_178 = arith.constant 0 : index
      %231 = vector.load %arg3[%c0_176, %c0_177, %c0_178] : memref<1x8x128xf32, #tpu.memory_space<vmem>>, vector<1x8x128xf32>
      %232 = vector.shape_cast %231 : vector<1x8x128xf32> to vector<8x128xf32>
      %c2_179 = arith.constant 2 : index
      %c0_180 = arith.constant 0 : index
      %c0_181 = arith.constant 0 : index
      %233 = vector.load %arg16[%c2_179, %c0_180, %c0_181] : memref<3x8x128xf32, #tpu.memory_space<vmem>>, vector<1x8x128xf32>
      %234 = vector.shape_cast %233 : vector<1x8x128xf32> to vector<8x128xf32>
      %235 = vector.shape_cast %232 : vector<8x128xf32> to vector<1x8x128xf32>
      tpu.vector_store %arg16[%c2_179, %c0_180, %c0_181], %235 {strides = array<i32>} : memref<3x8x128xf32, #tpu.memory_space<vmem>>, vector<1x8x128xf32>,
    } else {
    }
    %c0 = arith.constant 0 : index
    %c0_1 = arith.constant 0 : index
    %3 = vector.load %arg6[%c0, %c0_1] : memref<1x128xf32, #tpu.memory_space<vmem>>, vector<1x128xf32>
    %c0_2 = arith.constant 0 : index
    %c0_3 = arith.constant 0 : index
    %4 = vector.load %arg9[%c0_2, %c0_3] : memref<1x128xf32, #tpu.memory_space<vmem>>, vector<1x128xf32>
    %c0_4 = arith.constant 0 : index
    %c0_5 = arith.constant 0 : index
    %5 = vector.load %arg12[%c0_4, %c0_5] : memref<1x128xf32, #tpu.memory_space<vmem>>, vector<1x128xf32>
    %c0_6 = arith.constant 0 : index
    %c0_7 = arith.constant 0 : index
    %c0_8 = arith.constant 0 : index
    %6 = vector.load %arg16[%c0_6, %c0_7, %c0_8] : memref<3x8x128xf32, #tpu.memory_space<vmem>>, vector<1x8x128xf32>
    %7 = vector.shape_cast %6 : vector<1x8x128xf32> to vector<8x128xf32>
    %c1 = arith.constant 1 : index
    %c0_9 = arith.constant 0 : index
    %c0_10 = arith.constant 0 : index
    %8 = vector.load %arg16[%c1, %c0_9, %c0_10] : memref<3x8x128xf32, #tpu.memory_space<vmem>>, vector<1x8x128xf32>
    %9 = vector.shape_cast %8 : vector<1x8x128xf32> to vector<8x128xf32>
    %c2 = arith.constant 2 : index
    %c0_11 = arith.constant 0 : index
    %c0_12 = arith.constant 0 : index
    %10 = vector.load %arg16[%c2, %c0_11, %c0_12] : memref<3x8x128xf32, #tpu.memory_space<vmem>>, vector<1x8x128xf32>
    %11 = vector.shape_cast %10 : vector<1x8x128xf32> to vector<8x128xf32>
    %c0_13 = arith.constant 0 : index
    %c0_14 = arith.constant 0 : index
    %c0_15 = arith.constant 0 : index
    %12 = vector.load %arg2[%c0_13, %c0_14, %c0_15] : memref<4x8x16xf32, #tpu.memory_space<vmem>>, vector<1x8x16xf32>
    %13 = vector.shape_cast %12 : vector<1x8x16xf32> to vector<8x16xf32>
    %c0_16 = arith.constant 0 : index
    %c0_17 = arith.constant 0 : index
    %14 = vector.load %arg4[%c0_16, %c0_17] : memref<16x128xf32, #tpu.memory_space<vmem>>, vector<16x128xf32>
    %cst = arith.constant dense<0.000000e+00> : vector<8x128xf32>
    %15 = tpu.matmul %13, %14, %cst {dimension_numbers = #tpu.dot_dimension_numbers<[1], [0], [0], [1], [0, 0, 1, 1], [], []>} : vector<8x16xf32>, vector<16x128xf32>, vector<8x128xf32> -> vector<8x128xf32>
    %c0_18 = arith.constant 0 : index
    %c0_19 = arith.constant 0 : index
    %16 = vector.load %arg5[%c0_18, %c0_19] : memref<128x128xf32, #tpu.memory_space<vmem>>, vector<128x128xf32>
    %cst_20 = arith.constant dense<0.000000e+00> : vector<8x128xf32>
    %17 = tpu.matmul %7, %16, %cst_20 {dimension_numbers = #tpu.dot_dimension_numbers<[1], [0], [0], [1], [0, 0, 1, 1], [], []>} : vector<8x128xf32>, vector<128x128xf32>, vector<8x128xf32> -> vector<8x128xf32>
    %18 = arith.addf %15, %17 : vector<8x128xf32>
    %19 = vector.broadcast %3 : vector<1x128xf32> to vector<8x128xf32>
    %20 = arith.addf %18, %19 : vector<8x128xf32>
    %cst_21 = arith.constant 0.899999976 : f32
    %21 = vector.broadcast %cst_21 : f32 to vector<8x128xf32>
    %22 = arith.mulf %21, %7 : vector<8x128xf32>
    %23 = math.tanh %20 : vector<8x128xf32>
    %cst_22 = arith.constant 1.000000e-01 : f32
    %24 = vector.broadcast %cst_22 : f32 to vector<8x128xf32>
    %25 = arith.mulf %24, %23 : vector<8x128xf32>
    %26 = arith.addf %22, %25 : vector<8x128xf32>
    %c0_23 = arith.constant 0 : index
    %c0_24 = arith.constant 0 : index
    %c0_25 = arith.constant 0 : index
    %27 = vector.load %arg13[%c0_23, %c0_24, %c0_25] : memref<4x8x128xf32, #tpu.memory_space<vmem>>, vector<1x8x128xf32>
    %28 = vector.shape_cast %27 : vector<1x8x128xf32> to vector<8x128xf32>
    %29 = vector.shape_cast %26 : vector<8x128xf32> to vector<1x8x128xf32>
    tpu.vector_store %arg13[%c0_23, %c0_24, %c0_25], %29 {strides = array<i32>} : memref<4x8x128xf32, #tpu.memory_space<vmem>>, vector<1x8x128xf32>,
    %c0_26 = arith.constant 0 : index
    %c0_27 = arith.constant 0 : index
    %30 = vector.load %arg7[%c0_26, %c0_27] : memref<128x128xf32, #tpu.memory_space<vmem>>, vector<128x128xf32>
    %cst_28 = arith.constant dense<0.000000e+00> : vector<8x128xf32>
    %31 = tpu.matmul %26, %30, %cst_28 {dimension_numbers = #tpu.dot_dimension_numbers<[1], [0], [0], [1], [0, 0, 1, 1], [], []>} : vector<8x128xf32>, vector<128x128xf32>, vector<8x128xf32> -> vector<8x128xf32>
    %c0_29 = arith.constant 0 : index
    %c0_30 = arith.constant 0 : index
    %32 = vector.load %arg8[%c0_29, %c0_30] : memref<128x128xf32, #tpu.memory_space<vmem>>, vector<128x128xf32>
    %cst_31 = arith.constant dense<0.000000e+00> : vector<8x128xf32>
    %33 = tpu.matmul %9, %32, %cst_31 {dimension_numbers = #tpu.dot_dimension_numbers<[1], [0], [0], [1], [0, 0, 1, 1], [], []>} : vector<8x128xf32>, vector<128x128xf32>, vector<8x128xf32> -> vector<8x128xf32>
    %34 = arith.addf %31, %33 : vector<8x128xf32>
    %35 = vector.broadcast %4 : vector<1x128xf32> to vector<8x128xf32>
    %36 = arith.addf %34, %35 : vector<8x128xf32>
    %cst_32 = arith.constant 0.899999976 : f32
    %37 = vector.broadcast %cst_32 : f32 to vector<8x128xf32>
    %38 = arith.mulf %37, %9 : vector<8x128xf32>
    %39 = math.tanh %36 : vector<8x128xf32>
    %cst_33 = arith.constant 1.000000e-01 : f32
    %40 = vector.broadcast %cst_33 : f32 to vector<8x128xf32>
    %41 = arith.mulf %40, %39 : vector<8x128xf32>
    %42 = arith.addf %38, %41 : vector<8x128xf32>
    %c0_34 = arith.constant 0 : index
    %c0_35 = arith.constant 0 : index
    %c0_36 = arith.constant 0 : index
    %43 = vector.load %arg14[%c0_34, %c0_35, %c0_36] : memref<4x8x128xf32, #tpu.memory_space<vmem>>, vector<1x8x128xf32>
    %44 = vector.shape_cast %43 : vector<1x8x128xf32> to vector<8x128xf32>
    %45 = vector.shape_cast %42 : vector<8x128xf32> to vector<1x8x128xf32>
    tpu.vector_store %arg14[%c0_34, %c0_35, %c0_36], %45 {strides = array<i32>} : memref<4x8x128xf32, #tpu.memory_space<vmem>>, vector<1x8x128xf32>,
    %c1_37 = arith.constant 1 : index
    %c0_38 = arith.constant 0 : index
    %c0_39 = arith.constant 0 : index
    %46 = vector.load %arg2[%c1_37, %c0_38, %c0_39] : memref<4x8x16xf32, #tpu.memory_space<vmem>>, vector<1x8x16xf32>
    %47 = vector.shape_cast %46 : vector<1x8x16xf32> to vector<8x16xf32>
    %c0_40 = arith.constant 0 : index
    %c0_41 = arith.constant 0 : index
    %48 = vector.load %arg4[%c0_40, %c0_41] : memref<16x128xf32, #tpu.memory_space<vmem>>, vector<16x128xf32>
    %cst_42 = arith.constant dense<0.000000e+00> : vector<8x128xf32>
    %49 = tpu.matmul %47, %48, %cst_42 {dimension_numbers = #tpu.dot_dimension_numbers<[1], [0], [0], [1], [0, 0, 1, 1], [], []>} : vector<8x16xf32>, vector<16x128xf32>, vector<8x128xf32> -> vector<8x128xf32>
    %c0_43 = arith.constant 0 : index
    %c0_44 = arith.constant 0 : index
    %50 = vector.load %arg5[%c0_43, %c0_44] : memref<128x128xf32, #tpu.memory_space<vmem>>, vector<128x128xf32>
    %cst_45 = arith.constant dense<0.000000e+00> : vector<8x128xf32>
    %51 = tpu.matmul %26, %50, %cst_45 {dimension_numbers = #tpu.dot_dimension_numbers<[1], [0], [0], [1], [0, 0, 1, 1], [], []>} : vector<8x128xf32>, vector<128x128xf32>, vector<8x128xf32> -> vector<8x128xf32>
    %52 = arith.addf %49, %51 : vector<8x128xf32>
    %53 = vector.broadcast %3 : vector<1x128xf32> to vector<8x128xf32>
    %54 = arith.addf %52, %53 : vector<8x128xf32>
    %cst_46 = arith.constant 0.899999976 : f32
    %55 = vector.broadcast %cst_46 : f32 to vector<8x128xf32>
    %56 = arith.mulf %55, %26 : vector<8x128xf32>
    %57 = math.tanh %54 : vector<8x128xf32>
    %cst_47 = arith.constant 1.000000e-01 : f32
    %58 = vector.broadcast %cst_47 : f32 to vector<8x128xf32>
    %59 = arith.mulf %58, %57 : vector<8x128xf32>
    %60 = arith.addf %56, %59 : vector<8x128xf32>
    %c1_48 = arith.constant 1 : index
    %c0_49 = arith.constant 0 : index
    %c0_50 = arith.constant 0 : index
    %61 = vector.load %arg13[%c1_48, %c0_49, %c0_50] : memref<4x8x128xf32, #tpu.memory_space<vmem>>, vector<1x8x128xf32>
    %62 = vector.shape_cast %61 : vector<1x8x128xf32> to vector<8x128xf32>
    %63 = vector.shape_cast %60 : vector<8x128xf32> to vector<1x8x128xf32>
    tpu.vector_store %arg13[%c1_48, %c0_49, %c0_50], %63 {strides = array<i32>} : memref<4x8x128xf32, #tpu.memory_space<vmem>>, vector<1x8x128xf32>,
    %c0_51 = arith.constant 0 : index
    %c0_52 = arith.constant 0 : index
    %64 = vector.load %arg10[%c0_51, %c0_52] : memref<128x128xf32, #tpu.memory_space<vmem>>, vector<128x128xf32>
    %cst_53 = arith.constant dense<0.000000e+00> : vector<8x128xf32>
    %65 = tpu.matmul %42, %64, %cst_53 {dimension_numbers = #tpu.dot_dimension_numbers<[1], [0], [0], [1], [0, 0, 1, 1], [], []>} : vector<8x128xf32>, vector<128x128xf32>, vector<8x128xf32> -> vector<8x128xf32>
    %c0_54 = arith.constant 0 : index
    %c0_55 = arith.constant 0 : index
    %66 = vector.load %arg11[%c0_54, %c0_55] : memref<128x128xf32, #tpu.memory_space<vmem>>, vector<128x128xf32>
    %cst_56 = arith.constant dense<0.000000e+00> : vector<8x128xf32>
    %67 = tpu.matmul %11, %66, %cst_56 {dimension_numbers = #tpu.dot_dimension_numbers<[1], [0], [0], [1], [0, 0, 1, 1], [], []>} : vector<8x128xf32>, vector<128x128xf32>, vector<8x128xf32> -> vector<8x128xf32>
    %68 = arith.addf %65, %67 : vector<8x128xf32>
    %69 = vector.broadcast %5 : vector<1x128xf32> to vector<8x128xf32>
    %70 = arith.addf %68, %69 : vector<8x128xf32>
    %cst_57 = arith.constant 0.899999976 : f32
    %71 = vector.broadcast %cst_57 : f32 to vector<8x128xf32>
    %72 = arith.mulf %71, %11 : vector<8x128xf32>
    %73 = math.tanh %70 : vector<8x128xf32>
    %cst_58 = arith.constant 1.000000e-01 : f32
    %74 = vector.broadcast %cst_58 : f32 to vector<8x128xf32>
    %75 = arith.mulf %74, %73 : vector<8x128xf32>
    %76 = arith.addf %72, %75 : vector<8x128xf32>
    %c0_59 = arith.constant 0 : index
    %c0_60 = arith.constant 0 : index
    %c0_61 = arith.constant 0 : index
    %77 = vector.load %arg15[%c0_59, %c0_60, %c0_61] : memref<4x8x128xf32, #tpu.memory_space<vmem>>, vector<1x8x128xf32>
    %78 = vector.shape_cast %77 : vector<1x8x128xf32> to vector<8x128xf32>
    %79 = vector.shape_cast %76 : vector<8x128xf32> to vector<1x8x128xf32>
    tpu.vector_store %arg15[%c0_59, %c0_60, %c0_61], %79 {strides = array<i32>} : memref<4x8x128xf32, #tpu.memory_space<vmem>>, vector<1x8x128xf32>,
    %c0_62 = arith.constant 0 : index
    %c0_63 = arith.constant 0 : index
    %80 = vector.load %arg7[%c0_62, %c0_63] : memref<128x128xf32, #tpu.memory_space<vmem>>, vector<128x128xf32>
    %cst_64 = arith.constant dense<0.000000e+00> : vector<8x128xf32>
    %81 = tpu.matmul %60, %80, %cst_64 {dimension_numbers = #tpu.dot_dimension_numbers<[1], [0], [0], [1], [0, 0, 1, 1], [], []>} : vector<8x128xf32>, vector<128x128xf32>, vector<8x128xf32> -> vector<8x128xf32>
    %c0_65 = arith.constant 0 : index
    %c0_66 = arith.constant 0 : index
    %82 = vector.load %arg8[%c0_65, %c0_66] : memref<128x128xf32, #tpu.memory_space<vmem>>, vector<128x128xf32>
    %cst_67 = arith.constant dense<0.000000e+00> : vector<8x128xf32>
    %83 = tpu.matmul %42, %82, %cst_67 {dimension_numbers = #tpu.dot_dimension_numbers<[1], [0], [0], [1], [0, 0, 1, 1], [], []>} : vector<8x128xf32>, vector<128x128xf32>, vector<8x128xf32> -> vector<8x128xf32>
    %84 = arith.addf %81, %83 : vector<8x128xf32>
    %85 = vector.broadcast %4 : vector<1x128xf32> to vector<8x128xf32>
    %86 = arith.addf %84, %85 : vector<8x128xf32>
    %cst_68 = arith.constant 0.899999976 : f32
    %87 = vector.broadcast %cst_68 : f32 to vector<8x128xf32>
    %88 = arith.mulf %87, %42 : vector<8x128xf32>
    %89 = math.tanh %86 : vector<8x128xf32>
    %cst_69 = arith.constant 1.000000e-01 : f32
    %90 = vector.broadcast %cst_69 : f32 to vector<8x128xf32>
    %91 = arith.mulf %90, %89 : vector<8x128xf32>
    %92 = arith.addf %88, %91 : vector<8x128xf32>
    %c1_70 = arith.constant 1 : index
    %c0_71 = arith.constant 0 : index
    %c0_72 = arith.constant 0 : index
    %93 = vector.load %arg14[%c1_70, %c0_71, %c0_72] : memref<4x8x128xf32, #tpu.memory_space<vmem>>, vector<1x8x128xf32>
    %94 = vector.shape_cast %93 : vector<1x8x128xf32> to vector<8x128xf32>
    %95 = vector.shape_cast %92 : vector<8x128xf32> to vector<1x8x128xf32>
    tpu.vector_store %arg14[%c1_70, %c0_71, %c0_72], %95 {strides = array<i32>} : memref<4x8x128xf32, #tpu.memory_space<vmem>>, vector<1x8x128xf32>,
    %c2_73 = arith.constant 2 : index
    %c0_74 = arith.constant 0 : index
    %c0_75 = arith.constant 0 : index
    %96 = vector.load %arg2[%c2_73, %c0_74, %c0_75] : memref<4x8x16xf32, #tpu.memory_space<vmem>>, vector<1x8x16xf32>
    %97 = vector.shape_cast %96 : vector<1x8x16xf32> to vector<8x16xf32>
    %c0_76 = arith.constant 0 : index
    %c0_77 = arith.constant 0 : index
    %98 = vector.load %arg4[%c0_76, %c0_77] : memref<16x128xf32, #tpu.memory_space<vmem>>, vector<16x128xf32>
    %cst_78 = arith.constant dense<0.000000e+00> : vector<8x128xf32>
    %99 = tpu.matmul %97, %98, %cst_78 {dimension_numbers = #tpu.dot_dimension_numbers<[1], [0], [0], [1], [0, 0, 1, 1], [], []>} : vector<8x16xf32>, vector<16x128xf32>, vector<8x128xf32> -> vector<8x128xf32>
    %c0_79 = arith.constant 0 : index
    %c0_80 = arith.constant 0 : index
    %100 = vector.load %arg5[%c0_79, %c0_80] : memref<128x128xf32, #tpu.memory_space<vmem>>, vector<128x128xf32>
    %cst_81 = arith.constant dense<0.000000e+00> : vector<8x128xf32>
    %101 = tpu.matmul %60, %100, %cst_81 {dimension_numbers = #tpu.dot_dimension_numbers<[1], [0], [0], [1], [0, 0, 1, 1], [], []>} : vector<8x128xf32>, vector<128x128xf32>, vector<8x128xf32> -> vector<8x128xf32>
    %102 = arith.addf %99, %101 : vector<8x128xf32>
    %103 = vector.broadcast %3 : vector<1x128xf32> to vector<8x128xf32>
    %104 = arith.addf %102, %103 : vector<8x128xf32>
    %cst_82 = arith.constant 0.899999976 : f32
    %105 = vector.broadcast %cst_82 : f32 to vector<8x128xf32>
    %106 = arith.mulf %105, %60 : vector<8x128xf32>
    %107 = math.tanh %104 : vector<8x128xf32>
    %cst_83 = arith.constant 1.000000e-01 : f32
    %108 = vector.broadcast %cst_83 : f32 to vector<8x128xf32>
    %109 = arith.mulf %108, %107 : vector<8x128xf32>
    %110 = arith.addf %106, %109 : vector<8x128xf32>
    %c2_84 = arith.constant 2 : index
    %c0_85 = arith.constant 0 : index
    %c0_86 = arith.constant 0 : index
    %111 = vector.load %arg13[%c2_84, %c0_85, %c0_86] : memref<4x8x128xf32, #tpu.memory_space<vmem>>, vector<1x8x128xf32>
    %112 = vector.shape_cast %111 : vector<1x8x128xf32> to vector<8x128xf32>
    %113 = vector.shape_cast %110 : vector<8x128xf32> to vector<1x8x128xf32>
    tpu.vector_store %arg13[%c2_84, %c0_85, %c0_86], %113 {strides = array<i32>} : memref<4x8x128xf32, #tpu.memory_space<vmem>>, vector<1x8x128xf32>,
    %c0_87 = arith.constant 0 : index
    %c0_88 = arith.constant 0 : index
    %114 = vector.load %arg10[%c0_87, %c0_88] : memref<128x128xf32, #tpu.memory_space<vmem>>, vector<128x128xf32>
    %cst_89 = arith.constant dense<0.000000e+00> : vector<8x128xf32>
    %115 = tpu.matmul %92, %114, %cst_89 {dimension_numbers = #tpu.dot_dimension_numbers<[1], [0], [0], [1], [0, 0, 1, 1], [], []>} : vector<8x128xf32>, vector<128x128xf32>, vector<8x128xf32> -> vector<8x128xf32>
    %c0_90 = arith.constant 0 : index
    %c0_91 = arith.constant 0 : index
    %116 = vector.load %arg11[%c0_90, %c0_91] : memref<128x128xf32, #tpu.memory_space<vmem>>, vector<128x128xf32>
    %cst_92 = arith.constant dense<0.000000e+00> : vector<8x128xf32>
    %117 = tpu.matmul %76, %116, %cst_92 {dimension_numbers = #tpu.dot_dimension_numbers<[1], [0], [0], [1], [0, 0, 1, 1], [], []>} : vector<8x128xf32>, vector<128x128xf32>, vector<8x128xf32> -> vector<8x128xf32>
    %118 = arith.addf %115, %117 : vector<8x128xf32>
    %119 = vector.broadcast %5 : vector<1x128xf32> to vector<8x128xf32>
    %120 = arith.addf %118, %119 : vector<8x128xf32>
    %cst_93 = arith.constant 0.899999976 : f32
    %121 = vector.broadcast %cst_93 : f32 to vector<8x128xf32>
    %122 = arith.mulf %121, %76 : vector<8x128xf32>
    %123 = math.tanh %120 : vector<8x128xf32>
    %cst_94 = arith.constant 1.000000e-01 : f32
    %124 = vector.broadcast %cst_94 : f32 to vector<8x128xf32>
    %125 = arith.mulf %124, %123 : vector<8x128xf32>
    %126 = arith.addf %122, %125 : vector<8x128xf32>
    %c1_95 = arith.constant 1 : index
    %c0_96 = arith.constant 0 : index
    %c0_97 = arith.constant 0 : index
    %127 = vector.load %arg15[%c1_95, %c0_96, %c0_97] : memref<4x8x128xf32, #tpu.memory_space<vmem>>, vector<1x8x128xf32>
    %128 = vector.shape_cast %127 : vector<1x8x128xf32> to vector<8x128xf32>
    %129 = vector.shape_cast %126 : vector<8x128xf32> to vector<1x8x128xf32>
    tpu.vector_store %arg15[%c1_95, %c0_96, %c0_97], %129 {strides = array<i32>} : memref<4x8x128xf32, #tpu.memory_space<vmem>>, vector<1x8x128xf32>,
    %c0_98 = arith.constant 0 : index
    %c0_99 = arith.constant 0 : index
    %130 = vector.load %arg7[%c0_98, %c0_99] : memref<128x128xf32, #tpu.memory_space<vmem>>, vector<128x128xf32>
    %cst_100 = arith.constant dense<0.000000e+00> : vector<8x128xf32>
    %131 = tpu.matmul %110, %130, %cst_100 {dimension_numbers = #tpu.dot_dimension_numbers<[1], [0], [0], [1], [0, 0, 1, 1], [], []>} : vector<8x128xf32>, vector<128x128xf32>, vector<8x128xf32> -> vector<8x128xf32>
    %c0_101 = arith.constant 0 : index
    %c0_102 = arith.constant 0 : index
    %132 = vector.load %arg8[%c0_101, %c0_102] : memref<128x128xf32, #tpu.memory_space<vmem>>, vector<128x128xf32>
    %cst_103 = arith.constant dense<0.000000e+00> : vector<8x128xf32>
    %133 = tpu.matmul %92, %132, %cst_103 {dimension_numbers = #tpu.dot_dimension_numbers<[1], [0], [0], [1], [0, 0, 1, 1], [], []>} : vector<8x128xf32>, vector<128x128xf32>, vector<8x128xf32> -> vector<8x128xf32>
    %134 = arith.addf %131, %133 : vector<8x128xf32>
    %135 = vector.broadcast %4 : vector<1x128xf32> to vector<8x128xf32>
    %136 = arith.addf %134, %135 : vector<8x128xf32>
    %cst_104 = arith.constant 0.899999976 : f32
    %137 = vector.broadcast %cst_104 : f32 to vector<8x128xf32>
    %138 = arith.mulf %137, %92 : vector<8x128xf32>
    %139 = math.tanh %136 : vector<8x128xf32>
    %cst_105 = arith.constant 1.000000e-01 : f32
    %140 = vector.broadcast %cst_105 : f32 to vector<8x128xf32>
    %141 = arith.mulf %140, %139 : vector<8x128xf32>
    %142 = arith.addf %138, %141 : vector<8x128xf32>
    %c2_106 = arith.constant 2 : index
    %c0_107 = arith.constant 0 : index
    %c0_108 = arith.constant 0 : index
    %143 = vector.load %arg14[%c2_106, %c0_107, %c0_108] : memref<4x8x128xf32, #tpu.memory_space<vmem>>, vector<1x8x128xf32>
    %144 = vector.shape_cast %143 : vector<1x8x128xf32> to vector<8x128xf32>
    %145 = vector.shape_cast %142 : vector<8x128xf32> to vector<1x8x128xf32>
    tpu.vector_store %arg14[%c2_106, %c0_107, %c0_108], %145 {strides = array<i32>} : memref<4x8x128xf32, #tpu.memory_space<vmem>>, vector<1x8x128xf32>,
    %c3 = arith.constant 3 : index
    %c0_109 = arith.constant 0 : index
    %c0_110 = arith.constant 0 : index
    %146 = vector.load %arg2[%c3, %c0_109, %c0_110] : memref<4x8x16xf32, #tpu.memory_space<vmem>>, vector<1x8x16xf32>
    %147 = vector.shape_cast %146 : vector<1x8x16xf32> to vector<8x16xf32>
    %c0_111 = arith.constant 0 : index
    %c0_112 = arith.constant 0 : index
    %148 = vector.load %arg4[%c0_111, %c0_112] : memref<16x128xf32, #tpu.memory_space<vmem>>, vector<16x128xf32>
    %cst_113 = arith.constant dense<0.000000e+00> : vector<8x128xf32>
    %149 = tpu.matmul %147, %148, %cst_113 {dimension_numbers = #tpu.dot_dimension_numbers<[1], [0], [0], [1], [0, 0, 1, 1], [], []>} : vector<8x16xf32>, vector<16x128xf32>, vector<8x128xf32> -> vector<8x128xf32>
    %c0_114 = arith.constant 0 : index
    %c0_115 = arith.constant 0 : index
    %150 = vector.load %arg5[%c0_114, %c0_115] : memref<128x128xf32, #tpu.memory_space<vmem>>, vector<128x128xf32>
    %cst_116 = arith.constant dense<0.000000e+00> : vector<8x128xf32>
    %151 = tpu.matmul %110, %150, %cst_116 {dimension_numbers = #tpu.dot_dimension_numbers<[1], [0], [0], [1], [0, 0, 1, 1], [], []>} : vector<8x128xf32>, vector<128x128xf32>, vector<8x128xf32> -> vector<8x128xf32>
    %152 = arith.addf %149, %151 : vector<8x128xf32>
    %153 = vector.broadcast %3 : vector<1x128xf32> to vector<8x128xf32>
    %154 = arith.addf %152, %153 : vector<8x128xf32>
    %cst_117 = arith.constant 0.899999976 : f32
    %155 = vector.broadcast %cst_117 : f32 to vector<8x128xf32>
    %156 = arith.mulf %155, %110 : vector<8x128xf32>
    %157 = math.tanh %154 : vector<8x128xf32>
    %cst_118 = arith.constant 1.000000e-01 : f32
    %158 = vector.broadcast %cst_118 : f32 to vector<8x128xf32>
    %159 = arith.mulf %158, %157 : vector<8x128xf32>
    %160 = arith.addf %156, %159 : vector<8x128xf32>
    %c3_119 = arith.constant 3 : index
    %c0_120 = arith.constant 0 : index
    %c0_121 = arith.constant 0 : index
    %161 = vector.load %arg13[%c3_119, %c0_120, %c0_121] : memref<4x8x128xf32, #tpu.memory_space<vmem>>, vector<1x8x128xf32>
    %162 = vector.shape_cast %161 : vector<1x8x128xf32> to vector<8x128xf32>
    %163 = vector.shape_cast %160 : vector<8x128xf32> to vector<1x8x128xf32>
    tpu.vector_store %arg13[%c3_119, %c0_120, %c0_121], %163 {strides = array<i32>} : memref<4x8x128xf32, #tpu.memory_space<vmem>>, vector<1x8x128xf32>,
    %c0_122 = arith.constant 0 : index
    %c0_123 = arith.constant 0 : index
    %164 = vector.load %arg10[%c0_122, %c0_123] : memref<128x128xf32, #tpu.memory_space<vmem>>, vector<128x128xf32>
    %cst_124 = arith.constant dense<0.000000e+00> : vector<8x128xf32>
    %165 = tpu.matmul %142, %164, %cst_124 {dimension_numbers = #tpu.dot_dimension_numbers<[1], [0], [0], [1], [0, 0, 1, 1], [], []>} : vector<8x128xf32>, vector<128x128xf32>, vector<8x128xf32> -> vector<8x128xf32>
    %c0_125 = arith.constant 0 : index
    %c0_126 = arith.constant 0 : index
    %166 = vector.load %arg11[%c0_125, %c0_126] : memref<128x128xf32, #tpu.memory_space<vmem>>, vector<128x128xf32>
    %cst_127 = arith.constant dense<0.000000e+00> : vector<8x128xf32>
    %167 = tpu.matmul %126, %166, %cst_127 {dimension_numbers = #tpu.dot_dimension_numbers<[1], [0], [0], [1], [0, 0, 1, 1], [], []>} : vector<8x128xf32>, vector<128x128xf32>, vector<8x128xf32> -> vector<8x128xf32>
    %168 = arith.addf %165, %167 : vector<8x128xf32>
    %169 = vector.broadcast %5 : vector<1x128xf32> to vector<8x128xf32>
    %170 = arith.addf %168, %169 : vector<8x128xf32>
    %cst_128 = arith.constant 0.899999976 : f32
    %171 = vector.broadcast %cst_128 : f32 to vector<8x128xf32>
    %172 = arith.mulf %171, %126 : vector<8x128xf32>
    %173 = math.tanh %170 : vector<8x128xf32>
    %cst_129 = arith.constant 1.000000e-01 : f32
    %174 = vector.broadcast %cst_129 : f32 to vector<8x128xf32>
    %175 = arith.mulf %174, %173 : vector<8x128xf32>
    %176 = arith.addf %172, %175 : vector<8x128xf32>
    %c2_130 = arith.constant 2 : index
    %c0_131 = arith.constant 0 : index
    %c0_132 = arith.constant 0 : index
    %177 = vector.load %arg15[%c2_130, %c0_131, %c0_132] : memref<4x8x128xf32, #tpu.memory_space<vmem>>, vector<1x8x128xf32>
    %178 = vector.shape_cast %177 : vector<1x8x128xf32> to vector<8x128xf32>
    %179 = vector.shape_cast %176 : vector<8x128xf32> to vector<1x8x128xf32>
    tpu.vector_store %arg15[%c2_130, %c0_131, %c0_132], %179 {strides = array<i32>} : memref<4x8x128xf32, #tpu.memory_space<vmem>>, vector<1x8x128xf32>,
    %c0_133 = arith.constant 0 : index
    %c0_134 = arith.constant 0 : index
    %180 = vector.load %arg7[%c0_133, %c0_134] : memref<128x128xf32, #tpu.memory_space<vmem>>, vector<128x128xf32>
    %cst_135 = arith.constant dense<0.000000e+00> : vector<8x128xf32>
    %181 = tpu.matmul %160, %180, %cst_135 {dimension_numbers = #tpu.dot_dimension_numbers<[1], [0], [0], [1], [0, 0, 1, 1], [], []>} : vector<8x128xf32>, vector<128x128xf32>, vector<8x128xf32> -> vector<8x128xf32>
    %c0_136 = arith.constant 0 : index
    %c0_137 = arith.constant 0 : index
    %182 = vector.load %arg8[%c0_136, %c0_137] : memref<128x128xf32, #tpu.memory_space<vmem>>, vector<128x128xf32>
    %cst_138 = arith.constant dense<0.000000e+00> : vector<8x128xf32>
    %183 = tpu.matmul %142, %182, %cst_138 {dimension_numbers = #tpu.dot_dimension_numbers<[1], [0], [0], [1], [0, 0, 1, 1], [], []>} : vector<8x128xf32>, vector<128x128xf32>, vector<8x128xf32> -> vector<8x128xf32>
    %184 = arith.addf %181, %183 : vector<8x128xf32>
    %185 = vector.broadcast %4 : vector<1x128xf32> to vector<8x128xf32>
    %186 = arith.addf %184, %185 : vector<8x128xf32>
    %cst_139 = arith.constant 0.899999976 : f32
    %187 = vector.broadcast %cst_139 : f32 to vector<8x128xf32>
    %188 = arith.mulf %187, %142 : vector<8x128xf32>
    %189 = math.tanh %186 : vector<8x128xf32>
    %cst_140 = arith.constant 1.000000e-01 : f32
    %190 = vector.broadcast %cst_140 : f32 to vector<8x128xf32>
    %191 = arith.mulf %190, %189 : vector<8x128xf32>
    %192 = arith.addf %188, %191 : vector<8x128xf32>
    %c3_141 = arith.constant 3 : index
    %c0_142 = arith.constant 0 : index
    %c0_143 = arith.constant 0 : index
    %193 = vector.load %arg14[%c3_141, %c0_142, %c0_143] : memref<4x8x128xf32, #tpu.memory_space<vmem>>, vector<1x8x128xf32>
    %194 = vector.shape_cast %193 : vector<1x8x128xf32> to vector<8x128xf32>
    %195 = vector.shape_cast %192 : vector<8x128xf32> to vector<1x8x128xf32>
    tpu.vector_store %arg14[%c3_141, %c0_142, %c0_143], %195 {strides = array<i32>} : memref<4x8x128xf32, #tpu.memory_space<vmem>>, vector<1x8x128xf32>,
    %c0_144 = arith.constant 0 : index
    %c0_145 = arith.constant 0 : index
    %196 = vector.load %arg10[%c0_144, %c0_145] : memref<128x128xf32, #tpu.memory_space<vmem>>, vector<128x128xf32>
    %cst_146 = arith.constant dense<0.000000e+00> : vector<8x128xf32>
    %197 = tpu.matmul %192, %196, %cst_146 {dimension_numbers = #tpu.dot_dimension_numbers<[1], [0], [0], [1], [0, 0, 1, 1], [], []>} : vector<8x128xf32>, vector<128x128xf32>, vector<8x128xf32> -> vector<8x128xf32>
    %c0_147 = arith.constant 0 : index
    %c0_148 = arith.constant 0 : index
    %198 = vector.load %arg11[%c0_147, %c0_148] : memref<128x128xf32, #tpu.memory_space<vmem>>, vector<128x128xf32>
    %cst_149 = arith.constant dense<0.000000e+00> : vector<8x128xf32>
    %199 = tpu.matmul %176, %198, %cst_149 {dimension_numbers = #tpu.dot_dimension_numbers<[1], [0], [0], [1], [0, 0, 1, 1], [], []>} : vector<8x128xf32>, vector<128x128xf32>, vector<8x128xf32> -> vector<8x128xf32>
    %200 = arith.addf %197, %199 : vector<8x128xf32>
    %201 = vector.broadcast %5 : vector<1x128xf32> to vector<8x128xf32>
    %202 = arith.addf %200, %201 : vector<8x128xf32>
    %cst_150 = arith.constant 0.899999976 : f32
    %203 = vector.broadcast %cst_150 : f32 to vector<8x128xf32>
    %204 = arith.mulf %203, %176 : vector<8x128xf32>
    %205 = math.tanh %202 : vector<8x128xf32>
    %cst_151 = arith.constant 1.000000e-01 : f32
    %206 = vector.broadcast %cst_151 : f32 to vector<8x128xf32>
    %207 = arith.mulf %206, %205 : vector<8x128xf32>
    %208 = arith.addf %204, %207 : vector<8x128xf32>
    %c3_152 = arith.constant 3 : index
    %c0_153 = arith.constant 0 : index
    %c0_154 = arith.constant 0 : index
    %209 = vector.load %arg15[%c3_152, %c0_153, %c0_154] : memref<4x8x128xf32, #tpu.memory_space<vmem>>, vector<1x8x128xf32>
    %210 = vector.shape_cast %209 : vector<1x8x128xf32> to vector<8x128xf32>
    %211 = vector.shape_cast %208 : vector<8x128xf32> to vector<1x8x128xf32>
    tpu.vector_store %arg15[%c3_152, %c0_153, %c0_154], %211 {strides = array<i32>} : memref<4x8x128xf32, #tpu.memory_space<vmem>>, vector<1x8x128xf32>,
    %c0_155 = arith.constant 0 : index
    %c0_156 = arith.constant 0 : index
    %c0_157 = arith.constant 0 : index
    %212 = vector.load %arg16[%c0_155, %c0_156, %c0_157] : memref<3x8x128xf32, #tpu.memory_space<vmem>>, vector<1x8x128xf32>
    %213 = vector.shape_cast %212 : vector<1x8x128xf32> to vector<8x128xf32>
    %214 = vector.shape_cast %160 : vector<8x128xf32> to vector<1x8x128xf32>
    tpu.vector_store %arg16[%c0_155, %c0_156, %c0_157], %214 {strides = array<i32>} : memref<3x8x128xf32, #tpu.memory_space<vmem>>, vector<1x8x128xf32>,
    %c1_158 = arith.constant 1 : index
    %c0_159 = arith.constant 0 : index
    %c0_160 = arith.constant 0 : index
    %215 = vector.load %arg16[%c1_158, %c0_159, %c0_160] : memref<3x8x128xf32, #tpu.memory_space<vmem>>, vector<1x8x128xf32>
    %216 = vector.shape_cast %215 : vector<1x8x128xf32> to vector<8x128xf32>
    %217 = vector.shape_cast %192 : vector<8x128xf32> to vector<1x8x128xf32>
    tpu.vector_store %arg16[%c1_158, %c0_159, %c0_160], %217 {strides = array<i32>} : memref<3x8x128xf32, #tpu.memory_space<vmem>>, vector<1x8x128xf32>,
    %c2_161 = arith.constant 2 : index
    %c0_162 = arith.constant 0 : index
    %c0_163 = arith.constant 0 : index
    %218 = vector.load %arg16[%c2_161, %c0_162, %c0_163] : memref<3x8x128xf32, #tpu.memory_space<vmem>>, vector<1x8x128xf32>
    %219 = vector.shape_cast %218 : vector<1x8x128xf32> to vector<8x128xf32>
    %220 = vector.shape_cast %208 : vector<8x128xf32> to vector<1x8x128xf32>
    tpu.vector_store %arg16[%c2_161, %c0_162, %c0_163], %220 {strides = array<i32>} : memref<3x8x128xf32, #tpu.memory_space<vmem>>, vector<1x8x128xf32>,
    return
  }
  func.func @transform_0(%arg0: i32, %arg1: i32) -> (i32, i32, i32) {
    %c0_i32 = arith.constant 0 : i32
    %c0_i32_0 = arith.constant 0 : i32
    return %arg1, %arg0, %c0_i32 : i32, i32, i32
  }
  func.func @transform_1(%arg0: i32, %arg1: i32) -> (i32, i32, i32) {
    %c0_i32 = arith.constant 0 : i32
    %c0_i32_0 = arith.constant 0 : i32
    %c0_i32_1 = arith.constant 0 : i32
    return %c0_i32, %arg0, %c0_i32_0 : i32, i32, i32
  }
  func.func @transform_2(%arg0: i32, %arg1: i32) -> (i32, i32) {
    %c0_i32 = arith.constant 0 : i32
    %c0_i32_0 = arith.constant 0 : i32
    %c0_i32_1 = arith.constant 0 : i32
    return %c0_i32, %c0_i32_0 : i32, i32
  }
  func.func @transform_3(%arg0: i32, %arg1: i32) -> (i32, i32) {
    %c0_i32 = arith.constant 0 : i32
    %c0_i32_0 = arith.constant 0 : i32
    %c0_i32_1 = arith.constant 0 : i32
    return %c0_i32, %c0_i32_0 : i32, i32
  }
  func.func @transform_4(%arg0: i32, %arg1: i32) -> (i32, i32) {
    %c0_i32 = arith.constant 0 : i32
    %c0_i32_0 = arith.constant 0 : i32
    %c0_i32_1 = arith.constant 0 : i32
    return %c0_i32, %c0_i32_0 : i32, i32
  }
  func.func @transform_5(%arg0: i32, %arg1: i32) -> (i32, i32) {
    %c0_i32 = arith.constant 0 : i32
    %c0_i32_0 = arith.constant 0 : i32
    %c0_i32_1 = arith.constant 0 : i32
    return %c0_i32, %c0_i32_0 : i32, i32
  }
  func.func @transform_6(%arg0: i32, %arg1: i32) -> (i32, i32) {
    %c0_i32 = arith.constant 0 : i32
    %c0_i32_0 = arith.constant 0 : i32
    %c0_i32_1 = arith.constant 0 : i32
    return %c0_i32, %c0_i32_0 : i32, i32
  }
  func.func @transform_7(%arg0: i32, %arg1: i32) -> (i32, i32) {
    %c0_i32 = arith.constant 0 : i32
    %c0_i32_0 = arith.constant 0 : i32
    %c0_i32_1 = arith.constant 0 : i32
    return %c0_i32, %c0_i32_0 : i32, i32
  }
  func.func @transform_8(%arg0: i32, %arg1: i32) -> (i32, i32) {
    %c0_i32 = arith.constant 0 : i32
    %c0_i32_0 = arith.constant 0 : i32
    %c0_i32_1 = arith.constant 0 : i32
    return %c0_i32, %c0_i32_0 : i32, i32
  }
  func.func @transform_9(%arg0: i32, %arg1: i32) -> (i32, i32) {
    %c0_i32 = arith.constant 0 : i32
    %c0_i32_0 = arith.constant 0 : i32
    %c0_i32_1 = arith.constant 0 : i32
    return %c0_i32, %c0_i32_0 : i32, i32
  }
  func.func @transform_10(%arg0: i32, %arg1: i32) -> (i32, i32) {
    %c0_i32 = arith.constant 0 : i32
    %c0_i32_0 = arith.constant 0 : i32
    %c0_i32_1 = arith.constant 0 : i32
    return %c0_i32, %c0_i32_0 : i32, i32
  }
  func.func @transform_11(%arg0: i32, %arg1: i32) -> (i32, i32, i32) {
    %c0_i32 = arith.constant 0 : i32
    %c0_i32_0 = arith.constant 0 : i32
    return %arg1, %arg0, %c0_i32 : i32, i32, i32
  }
  func.func @transform_12(%arg0: i32, %arg1: i32) -> (i32, i32, i32) {
    %c0_i32 = arith.constant 0 : i32
    %c0_i32_0 = arith.constant 0 : i32
    return %arg1, %arg0, %c0_i32 : i32, i32, i32
  }
  func.func @transform_13(%arg0: i32, %arg1: i32) -> (i32, i32, i32) {
    %c0_i32 = arith.constant 0 : i32
    %c0_i32_0 = arith.constant 0 : i32
    return %arg1, %arg0, %c0_i32 : i32, i32, i32
  }
}

module attributes {stable_mosaic.version = 11 : i64} {
  func.func @kernel(%arg0: i32, %arg1: i32, %arg2: memref<4x8x16xf32, #tpu.memory_space<vmem>>, %arg3: memref<1x8x128xf32, #tpu.memory_space<vmem>>, %arg4: memref<16x128xf32, #tpu.memory_space<vmem>>, %arg5: memref<128x128xf32, #tpu.memory_space<vmem>>, %arg6: memref<1x128xf32, #tpu.memory_space<vmem>>, %arg7: memref<128x128xf32, #tpu.memory_space<vmem>>, %arg8: memref<128x128xf32, #tpu.memory_space<vmem>>, %arg9: memref<1x128xf32, #tpu.memory_space<vmem>>, %arg10: memref<128x128xf32, #tpu.memory_space<vmem>>, %arg11: memref<128x128xf32, #tpu.memory_space<vmem>>, %arg12: memref<1x128xf32, #tpu.memory_space<vmem>>, %arg13: memref<4x8x128xf32, #tpu.memory_space<vmem>>, %arg14: memref<4x8x128xf32, #tpu.memory_space<vmem>>, %arg15: memref<4x8x128xf32, #tpu.memory_space<vmem>>, %arg16: memref<3x8x128xf32, #tpu.memory_space<vmem>>) attributes {dimension_semantics = [#tpu.dimension_semantics<parallel>, #tpu.dimension_semantics<arbitrary>], iteration_bounds = array<i64: 1, 4>, scalar_prefetch = 0 : i64, scratch_operands = 1 : i64, tpu.core_type = #tpu.core_type<tc>, window_params = [{transform_indices = @transform_0, window_bounds = array<i64: 4, 8, 16>}, {transform_indices = @transform_1, window_bounds = array<i64: 1, 8, 128>}, {pipeline_mode = #tpu.pipeline_mode<synchronous>, transform_indices = @transform_2, window_bounds = array<i64: 16, 128>}, {pipeline_mode = #tpu.pipeline_mode<synchronous>, transform_indices = @transform_3, window_bounds = array<i64: 128, 128>}, {pipeline_mode = #tpu.pipeline_mode<synchronous>, transform_indices = @transform_4, window_bounds = array<i64: 1, 128>}, {pipeline_mode = #tpu.pipeline_mode<synchronous>, transform_indices = @transform_5, window_bounds = array<i64: 128, 128>}, {pipeline_mode = #tpu.pipeline_mode<synchronous>, transform_indices = @transform_6, window_bounds = array<i64: 128, 128>}, {pipeline_mode = #tpu.pipeline_mode<synchronous>, transform_indices = @transform_7, window_bounds = array<i64: 1, 128>}, {pipeline_mode = #tpu.pipeline_mode<synchronous>, transform_indices = @transform_8, window_bounds = array<i64: 128, 128>}, {pipeline_mode = #tpu.pipeline_mode<synchronous>, transform_indices = @transform_9, window_bounds = array<i64: 128, 128>}, {pipeline_mode = #tpu.pipeline_mode<synchronous>, transform_indices = @transform_10, window_bounds = array<i64: 1, 128>}, {transform_indices = @transform_11, window_bounds = array<i64: 4, 8, 128>}, {transform_indices = @transform_12, window_bounds = array<i64: 4, 8, 128>}, {transform_indices = @transform_13, window_bounds = array<i64: 4, 8, 128>}]} {
    %c0_i32 = arith.constant 0 : i32
    %0 = arith.cmpi eq, %arg1, %c0_i32 : i32
    %1 = arith.extui %0 : i1 to i32
    %c0_i32_0 = arith.constant 0 : i32
    %2 = arith.cmpi ne, %1, %c0_i32_0 : i32
    scf.if %2 {
      %c0_164 = arith.constant 0 : index
      %c0_165 = arith.constant 0 : index
      %c0_166 = arith.constant 0 : index
      %221 = vector.load %arg3[%c0_164, %c0_165, %c0_166] : memref<1x8x128xf32, #tpu.memory_space<vmem>>, vector<1x8x128xf32>
      %222 = vector.shape_cast %221 : vector<1x8x128xf32> to vector<8x128xf32>
      %c0_167 = arith.constant 0 : index
      %c0_168 = arith.constant 0 : index
      %c0_169 = arith.constant 0 : index
      %223 = vector.load %arg16[%c0_167, %c0_168, %c0_169] : memref<3x8x128xf32, #tpu.memory_space<vmem>>, vector<1x8x128xf32>
      %224 = vector.shape_cast %223 : vector<1x8x128xf32> to vector<8x128xf32>
      %225 = vector.shape_cast %222 : vector<8x128xf32> to vector<1x8x128xf32>
      tpu.vector_store %arg16[%c0_167, %c0_168, %c0_169], %225 {strides = array<i32>} : memref<3x8x128xf32, #tpu.memory_space<vmem>>, vector<1x8x128xf32>,
      %c0_170 = arith.constant 0 : index
      %c0_171 = arith.constant 0 : index
      %c0_172 = arith.constant 0 : index
      %226 = vector.load %arg3[%c0_170, %c0_171, %c0_172] : memref<1x8x128xf32, #tpu.memory_space<vmem>>, vector<1x8x128xf32>
      %227 = vector.shape_cast %226 : vector<1x8x128xf32> to vector<8x128xf32>
      %c1_173 = arith.constant 1 : index
      %c0_174 = arith.constant 0 : index
      %c0_175 = arith.constant 0 : index
      %228 = vector.load %arg16[%c1_173, %c0_174, %c0_175] : memref<3x8x128xf32, #tpu.memory_space<vmem>>, vector<1x8x128xf32>
      %229 = vector.shape_cast %228 : vector<1x8x128xf32> to vector<8x128xf32>
      %230 = vector.shape_cast %227 : vector<8x128xf32> to vector<1x8x128xf32>
      tpu.vector_store %arg16[%c1_173, %c0_174, %c0_175], %230 {strides = array<i32>} : memref<3x8x128xf32, #tpu.memory_space<vmem>>, vector<1x8x128xf32>,
      %c0_176 = arith.constant 0 : index
      %c0_177 = arith.constant 0 : index
      %c0_178 = arith.constant 0 : index
      %231 = vector.load %arg3[%c0_176, %c0_177, %c0_178] : memref<1x8x128xf32, #tpu.memory_space<vmem>>, vector<1x8x128xf32>
      %232 = vector.shape_cast %231 : vector<1x8x128xf32> to vector<8x128xf32>
      %c2_179 = arith.constant 2 : index
      %c0_180 = arith.constant 0 : index
      %c0_181 = arith.constant 0 : index
      %233 = vector.load %arg16[%c2_179, %c0_180, %c0_181] : memref<3x8x128xf32, #tpu.memory_space<vmem>>, vector<1x8x128xf32>
      %234 = vector.shape_cast %233 : vector<1x8x128xf32> to vector<8x128xf32>
      %235 = vector.shape_cast %232 : vector<8x128xf32> to vector<1x8x128xf32>
      tpu.vector_store %arg16[%c2_179, %c0_180, %c0_181], %235 {strides = array<i32>} : memref<3x8x128xf32, #tpu.memory_space<vmem>>, vector<1x8x128xf32>,
    } else {
    }
    %c0 = arith.constant 0 : index
    %c0_1 = arith.constant 0 : index
    %3 = vector.load %arg6[%c0, %c0_1] : memref<1x128xf32, #tpu.memory_space<vmem>>, vector<1x128xf32>
    %c0_2 = arith.constant 0 : index
    %c0_3 = arith.constant 0 : index
    %4 = vector.load %arg9[%c0_2, %c0_3] : memref<1x128xf32, #tpu.memory_space<vmem>>, vector<1x128xf32>
    %c0_4 = arith.constant 0 : index
    %c0_5 = arith.constant 0 : index
    %5 = vector.load %arg12[%c0_4, %c0_5] : memref<1x128xf32, #tpu.memory_space<vmem>>, vector<1x128xf32>
    %c0_6 = arith.constant 0 : index
    %c0_7 = arith.constant 0 : index
    %c0_8 = arith.constant 0 : index
    %6 = vector.load %arg16[%c0_6, %c0_7, %c0_8] : memref<3x8x128xf32, #tpu.memory_space<vmem>>, vector<1x8x128xf32>
    %7 = vector.shape_cast %6 : vector<1x8x128xf32> to vector<8x128xf32>
    %c1 = arith.constant 1 : index
    %c0_9 = arith.constant 0 : index
    %c0_10 = arith.constant 0 : index
    %8 = vector.load %arg16[%c1, %c0_9, %c0_10] : memref<3x8x128xf32, #tpu.memory_space<vmem>>, vector<1x8x128xf32>
    %9 = vector.shape_cast %8 : vector<1x8x128xf32> to vector<8x128xf32>
    %c2 = arith.constant 2 : index
    %c0_11 = arith.constant 0 : index
    %c0_12 = arith.constant 0 : index
    %10 = vector.load %arg16[%c2, %c0_11, %c0_12] : memref<3x8x128xf32, #tpu.memory_space<vmem>>, vector<1x8x128xf32>
    %11 = vector.shape_cast %10 : vector<1x8x128xf32> to vector<8x128xf32>
    %c0_13 = arith.constant 0 : index
    %c0_14 = arith.constant 0 : index
    %c0_15 = arith.constant 0 : index
    %12 = vector.load %arg2[%c0_13, %c0_14, %c0_15] : memref<4x8x16xf32, #tpu.memory_space<vmem>>, vector<1x8x16xf32>
    %13 = vector.shape_cast %12 : vector<1x8x16xf32> to vector<8x16xf32>
    %c0_16 = arith.constant 0 : index
    %c0_17 = arith.constant 0 : index
    %14 = vector.load %arg4[%c0_16, %c0_17] : memref<16x128xf32, #tpu.memory_space<vmem>>, vector<16x128xf32>
    %cst = arith.constant dense<0.000000e+00> : vector<8x128xf32>
    %15 = tpu.matmul %13, %14, %cst {dimension_numbers = #tpu.dot_dimension_numbers<[1], [0], [0], [1], [0, 0, 1, 1], [], []>} : vector<8x16xf32>, vector<16x128xf32>, vector<8x128xf32> -> vector<8x128xf32>
    %c0_18 = arith.constant 0 : index
    %c0_19 = arith.constant 0 : index
    %16 = vector.load %arg5[%c0_18, %c0_19] : memref<128x128xf32, #tpu.memory_space<vmem>>, vector<128x128xf32>
    %cst_20 = arith.constant dense<0.000000e+00> : vector<8x128xf32>
    %17 = tpu.matmul %7, %16, %cst_20 {dimension_numbers = #tpu.dot_dimension_numbers<[1], [0], [0], [1], [0, 0, 1, 1], [], []>} : vector<8x128xf32>, vector<128x128xf32>, vector<8x128xf32> -> vector<8x128xf32>
    %18 = arith.addf %15, %17 : vector<8x128xf32>
    %19 = vector.broadcast %3 : vector<1x128xf32> to vector<8x128xf32>
    %20 = arith.addf %18, %19 : vector<8x128xf32>
    %cst_21 = arith.constant 0.899999976 : f32
    %21 = vector.broadcast %cst_21 : f32 to vector<8x128xf32>
    %22 = arith.mulf %21, %7 : vector<8x128xf32>
    %23 = math.tanh %20 : vector<8x128xf32>
    %cst_22 = arith.constant 1.000000e-01 : f32
    %24 = vector.broadcast %cst_22 : f32 to vector<8x128xf32>
    %25 = arith.mulf %24, %23 : vector<8x128xf32>
    %26 = arith.addf %22, %25 : vector<8x128xf32>
    %c0_23 = arith.constant 0 : index
    %c0_24 = arith.constant 0 : index
    %c0_25 = arith.constant 0 : index
    %27 = vector.load %arg13[%c0_23, %c0_24, %c0_25] : memref<4x8x128xf32, #tpu.memory_space<vmem>>, vector<1x8x128xf32>
    %28 = vector.shape_cast %27 : vector<1x8x128xf32> to vector<8x128xf32>
    %29 = vector.shape_cast %26 : vector<8x128xf32> to vector<1x8x128xf32>
    tpu.vector_store %arg13[%c0_23, %c0_24, %c0_25], %29 {strides = array<i32>} : memref<4x8x128xf32, #tpu.memory_space<vmem>>, vector<1x8x128xf32>,
    %c0_26 = arith.constant 0 : index
    %c0_27 = arith.constant 0 : index
    %30 = vector.load %arg7[%c0_26, %c0_27] : memref<128x128xf32, #tpu.memory_space<vmem>>, vector<128x128xf32>
    %cst_28 = arith.constant dense<0.000000e+00> : vector<8x128xf32>
    %31 = tpu.matmul %26, %30, %cst_28 {dimension_numbers = #tpu.dot_dimension_numbers<[1], [0], [0], [1], [0, 0, 1, 1], [], []>} : vector<8x128xf32>, vector<128x128xf32>, vector<8x128xf32> -> vector<8x128xf32>
    %c0_29 = arith.constant 0 : index
    %c0_30 = arith.constant 0 : index
    %32 = vector.load %arg8[%c0_29, %c0_30] : memref<128x128xf32, #tpu.memory_space<vmem>>, vector<128x128xf32>
    %cst_31 = arith.constant dense<0.000000e+00> : vector<8x128xf32>
    %33 = tpu.matmul %9, %32, %cst_31 {dimension_numbers = #tpu.dot_dimension_numbers<[1], [0], [0], [1], [0, 0, 1, 1], [], []>} : vector<8x128xf32>, vector<128x128xf32>, vector<8x128xf32> -> vector<8x128xf32>
    %34 = arith.addf %31, %33 : vector<8x128xf32>
    %35 = vector.broadcast %4 : vector<1x128xf32> to vector<8x128xf32>
    %36 = arith.addf %34, %35 : vector<8x128xf32>
    %cst_32 = arith.constant 0.899999976 : f32
    %37 = vector.broadcast %cst_32 : f32 to vector<8x128xf32>
    %38 = arith.mulf %37, %9 : vector<8x128xf32>
    %39 = math.tanh %36 : vector<8x128xf32>
    %cst_33 = arith.constant 1.000000e-01 : f32
    %40 = vector.broadcast %cst_33 : f32 to vector<8x128xf32>
    %41 = arith.mulf %40, %39 : vector<8x128xf32>
    %42 = arith.addf %38, %41 : vector<8x128xf32>
    %c0_34 = arith.constant 0 : index
    %c0_35 = arith.constant 0 : index
    %c0_36 = arith.constant 0 : index
    %43 = vector.load %arg14[%c0_34, %c0_35, %c0_36] : memref<4x8x128xf32, #tpu.memory_space<vmem>>, vector<1x8x128xf32>
    %44 = vector.shape_cast %43 : vector<1x8x128xf32> to vector<8x128xf32>
    %45 = vector.shape_cast %42 : vector<8x128xf32> to vector<1x8x128xf32>
    tpu.vector_store %arg14[%c0_34, %c0_35, %c0_36], %45 {strides = array<i32>} : memref<4x8x128xf32, #tpu.memory_space<vmem>>, vector<1x8x128xf32>,
    %c1_37 = arith.constant 1 : index
    %c0_38 = arith.constant 0 : index
    %c0_39 = arith.constant 0 : index
    %46 = vector.load %arg2[%c1_37, %c0_38, %c0_39] : memref<4x8x16xf32, #tpu.memory_space<vmem>>, vector<1x8x16xf32>
    %47 = vector.shape_cast %46 : vector<1x8x16xf32> to vector<8x16xf32>
    %c0_40 = arith.constant 0 : index
    %c0_41 = arith.constant 0 : index
    %48 = vector.load %arg4[%c0_40, %c0_41] : memref<16x128xf32, #tpu.memory_space<vmem>>, vector<16x128xf32>
    %cst_42 = arith.constant dense<0.000000e+00> : vector<8x128xf32>
    %49 = tpu.matmul %47, %48, %cst_42 {dimension_numbers = #tpu.dot_dimension_numbers<[1], [0], [0], [1], [0, 0, 1, 1], [], []>} : vector<8x16xf32>, vector<16x128xf32>, vector<8x128xf32> -> vector<8x128xf32>
    %c0_43 = arith.constant 0 : index
    %c0_44 = arith.constant 0 : index
    %50 = vector.load %arg5[%c0_43, %c0_44] : memref<128x128xf32, #tpu.memory_space<vmem>>, vector<128x128xf32>
    %cst_45 = arith.constant dense<0.000000e+00> : vector<8x128xf32>
    %51 = tpu.matmul %26, %50, %cst_45 {dimension_numbers = #tpu.dot_dimension_numbers<[1], [0], [0], [1], [0, 0, 1, 1], [], []>} : vector<8x128xf32>, vector<128x128xf32>, vector<8x128xf32> -> vector<8x128xf32>
    %52 = arith.addf %49, %51 : vector<8x128xf32>
    %53 = vector.broadcast %3 : vector<1x128xf32> to vector<8x128xf32>
    %54 = arith.addf %52, %53 : vector<8x128xf32>
    %cst_46 = arith.constant 0.899999976 : f32
    %55 = vector.broadcast %cst_46 : f32 to vector<8x128xf32>
    %56 = arith.mulf %55, %26 : vector<8x128xf32>
    %57 = math.tanh %54 : vector<8x128xf32>
    %cst_47 = arith.constant 1.000000e-01 : f32
    %58 = vector.broadcast %cst_47 : f32 to vector<8x128xf32>
    %59 = arith.mulf %58, %57 : vector<8x128xf32>
    %60 = arith.addf %56, %59 : vector<8x128xf32>
    %c1_48 = arith.constant 1 : index
    %c0_49 = arith.constant 0 : index
    %c0_50 = arith.constant 0 : index
    %61 = vector.load %arg13[%c1_48, %c0_49, %c0_50] : memref<4x8x128xf32, #tpu.memory_space<vmem>>, vector<1x8x128xf32>
    %62 = vector.shape_cast %61 : vector<1x8x128xf32> to vector<8x128xf32>
    %63 = vector.shape_cast %60 : vector<8x128xf32> to vector<1x8x128xf32>
    tpu.vector_store %arg13[%c1_48, %c0_49, %c0_50], %63 {strides = array<i32>} : memref<4x8x128xf32, #tpu.memory_space<vmem>>, vector<1x8x128xf32>,
    %c0_51 = arith.constant 0 : index
    %c0_52 = arith.constant 0 : index
    %64 = vector.load %arg10[%c0_51, %c0_52] : memref<128x128xf32, #tpu.memory_space<vmem>>, vector<128x128xf32>
    %cst_53 = arith.constant dense<0.000000e+00> : vector<8x128xf32>
    %65 = tpu.matmul %42, %64, %cst_53 {dimension_numbers = #tpu.dot_dimension_numbers<[1], [0], [0], [1], [0, 0, 1, 1], [], []>} : vector<8x128xf32>, vector<128x128xf32>, vector<8x128xf32> -> vector<8x128xf32>
    %c0_54 = arith.constant 0 : index
    %c0_55 = arith.constant 0 : index
    %66 = vector.load %arg11[%c0_54, %c0_55] : memref<128x128xf32, #tpu.memory_space<vmem>>, vector<128x128xf32>
    %cst_56 = arith.constant dense<0.000000e+00> : vector<8x128xf32>
    %67 = tpu.matmul %11, %66, %cst_56 {dimension_numbers = #tpu.dot_dimension_numbers<[1], [0], [0], [1], [0, 0, 1, 1], [], []>} : vector<8x128xf32>, vector<128x128xf32>, vector<8x128xf32> -> vector<8x128xf32>
    %68 = arith.addf %65, %67 : vector<8x128xf32>
    %69 = vector.broadcast %5 : vector<1x128xf32> to vector<8x128xf32>
    %70 = arith.addf %68, %69 : vector<8x128xf32>
    %cst_57 = arith.constant 0.899999976 : f32
    %71 = vector.broadcast %cst_57 : f32 to vector<8x128xf32>
    %72 = arith.mulf %71, %11 : vector<8x128xf32>
    %73 = math.tanh %70 : vector<8x128xf32>
    %cst_58 = arith.constant 1.000000e-01 : f32
    %74 = vector.broadcast %cst_58 : f32 to vector<8x128xf32>
    %75 = arith.mulf %74, %73 : vector<8x128xf32>
    %76 = arith.addf %72, %75 : vector<8x128xf32>
    %c0_59 = arith.constant 0 : index
    %c0_60 = arith.constant 0 : index
    %c0_61 = arith.constant 0 : index
    %77 = vector.load %arg15[%c0_59, %c0_60, %c0_61] : memref<4x8x128xf32, #tpu.memory_space<vmem>>, vector<1x8x128xf32>
    %78 = vector.shape_cast %77 : vector<1x8x128xf32> to vector<8x128xf32>
    %79 = vector.shape_cast %76 : vector<8x128xf32> to vector<1x8x128xf32>
    tpu.vector_store %arg15[%c0_59, %c0_60, %c0_61], %79 {strides = array<i32>} : memref<4x8x128xf32, #tpu.memory_space<vmem>>, vector<1x8x128xf32>,
    %c0_62 = arith.constant 0 : index
    %c0_63 = arith.constant 0 : index
    %80 = vector.load %arg7[%c0_62, %c0_63] : memref<128x128xf32, #tpu.memory_space<vmem>>, vector<128x128xf32>
    %cst_64 = arith.constant dense<0.000000e+00> : vector<8x128xf32>
    %81 = tpu.matmul %60, %80, %cst_64 {dimension_numbers = #tpu.dot_dimension_numbers<[1], [0], [0], [1], [0, 0, 1, 1], [], []>} : vector<8x128xf32>, vector<128x128xf32>, vector<8x128xf32> -> vector<8x128xf32>
    %c0_65 = arith.constant 0 : index
    %c0_66 = arith.constant 0 : index
    %82 = vector.load %arg8[%c0_65, %c0_66] : memref<128x128xf32, #tpu.memory_space<vmem>>, vector<128x128xf32>
    %cst_67 = arith.constant dense<0.000000e+00> : vector<8x128xf32>
    %83 = tpu.matmul %42, %82, %cst_67 {dimension_numbers = #tpu.dot_dimension_numbers<[1], [0], [0], [1], [0, 0, 1, 1], [], []>} : vector<8x128xf32>, vector<128x128xf32>, vector<8x128xf32> -> vector<8x128xf32>
    %84 = arith.addf %81, %83 : vector<8x128xf32>
    %85 = vector.broadcast %4 : vector<1x128xf32> to vector<8x128xf32>
    %86 = arith.addf %84, %85 : vector<8x128xf32>
    %cst_68 = arith.constant 0.899999976 : f32
    %87 = vector.broadcast %cst_68 : f32 to vector<8x128xf32>
    %88 = arith.mulf %87, %42 : vector<8x128xf32>
    %89 = math.tanh %86 : vector<8x128xf32>
    %cst_69 = arith.constant 1.000000e-01 : f32
    %90 = vector.broadcast %cst_69 : f32 to vector<8x128xf32>
    %91 = arith.mulf %90, %89 : vector<8x128xf32>
    %92 = arith.addf %88, %91 : vector<8x128xf32>
    %c1_70 = arith.constant 1 : index
    %c0_71 = arith.constant 0 : index
    %c0_72 = arith.constant 0 : index
    %93 = vector.load %arg14[%c1_70, %c0_71, %c0_72] : memref<4x8x128xf32, #tpu.memory_space<vmem>>, vector<1x8x128xf32>
    %94 = vector.shape_cast %93 : vector<1x8x128xf32> to vector<8x128xf32>
    %95 = vector.shape_cast %92 : vector<8x128xf32> to vector<1x8x128xf32>
    tpu.vector_store %arg14[%c1_70, %c0_71, %c0_72], %95 {strides = array<i32>} : memref<4x8x128xf32, #tpu.memory_space<vmem>>, vector<1x8x128xf32>,
    %c2_73 = arith.constant 2 : index
    %c0_74 = arith.constant 0 : index
    %c0_75 = arith.constant 0 : index
    %96 = vector.load %arg2[%c2_73, %c0_74, %c0_75] : memref<4x8x16xf32, #tpu.memory_space<vmem>>, vector<1x8x16xf32>
    %97 = vector.shape_cast %96 : vector<1x8x16xf32> to vector<8x16xf32>
    %c0_76 = arith.constant 0 : index
    %c0_77 = arith.constant 0 : index
    %98 = vector.load %arg4[%c0_76, %c0_77] : memref<16x128xf32, #tpu.memory_space<vmem>>, vector<16x128xf32>
    %cst_78 = arith.constant dense<0.000000e+00> : vector<8x128xf32>
    %99 = tpu.matmul %97, %98, %cst_78 {dimension_numbers = #tpu.dot_dimension_numbers<[1], [0], [0], [1], [0, 0, 1, 1], [], []>} : vector<8x16xf32>, vector<16x128xf32>, vector<8x128xf32> -> vector<8x128xf32>
    %c0_79 = arith.constant 0 : index
    %c0_80 = arith.constant 0 : index
    %100 = vector.load %arg5[%c0_79, %c0_80] : memref<128x128xf32, #tpu.memory_space<vmem>>, vector<128x128xf32>
    %cst_81 = arith.constant dense<0.000000e+00> : vector<8x128xf32>
    %101 = tpu.matmul %60, %100, %cst_81 {dimension_numbers = #tpu.dot_dimension_numbers<[1], [0], [0], [1], [0, 0, 1, 1], [], []>} : vector<8x128xf32>, vector<128x128xf32>, vector<8x128xf32> -> vector<8x128xf32>
    %102 = arith.addf %99, %101 : vector<8x128xf32>
    %103 = vector.broadcast %3 : vector<1x128xf32> to vector<8x128xf32>
    %104 = arith.addf %102, %103 : vector<8x128xf32>
    %cst_82 = arith.constant 0.899999976 : f32
    %105 = vector.broadcast %cst_82 : f32 to vector<8x128xf32>
    %106 = arith.mulf %105, %60 : vector<8x128xf32>
    %107 = math.tanh %104 : vector<8x128xf32>
    %cst_83 = arith.constant 1.000000e-01 : f32
    %108 = vector.broadcast %cst_83 : f32 to vector<8x128xf32>
    %109 = arith.mulf %108, %107 : vector<8x128xf32>
    %110 = arith.addf %106, %109 : vector<8x128xf32>
    %c2_84 = arith.constant 2 : index
    %c0_85 = arith.constant 0 : index
    %c0_86 = arith.constant 0 : index
    %111 = vector.load %arg13[%c2_84, %c0_85, %c0_86] : memref<4x8x128xf32, #tpu.memory_space<vmem>>, vector<1x8x128xf32>
    %112 = vector.shape_cast %111 : vector<1x8x128xf32> to vector<8x128xf32>
    %113 = vector.shape_cast %110 : vector<8x128xf32> to vector<1x8x128xf32>
    tpu.vector_store %arg13[%c2_84, %c0_85, %c0_86], %113 {strides = array<i32>} : memref<4x8x128xf32, #tpu.memory_space<vmem>>, vector<1x8x128xf32>,
    %c0_87 = arith.constant 0 : index
    %c0_88 = arith.constant 0 : index
    %114 = vector.load %arg10[%c0_87, %c0_88] : memref<128x128xf32, #tpu.memory_space<vmem>>, vector<128x128xf32>
    %cst_89 = arith.constant dense<0.000000e+00> : vector<8x128xf32>
    %115 = tpu.matmul %92, %114, %cst_89 {dimension_numbers = #tpu.dot_dimension_numbers<[1], [0], [0], [1], [0, 0, 1, 1], [], []>} : vector<8x128xf32>, vector<128x128xf32>, vector<8x128xf32> -> vector<8x128xf32>
    %c0_90 = arith.constant 0 : index
    %c0_91 = arith.constant 0 : index
    %116 = vector.load %arg11[%c0_90, %c0_91] : memref<128x128xf32, #tpu.memory_space<vmem>>, vector<128x128xf32>
    %cst_92 = arith.constant dense<0.000000e+00> : vector<8x128xf32>
    %117 = tpu.matmul %76, %116, %cst_92 {dimension_numbers = #tpu.dot_dimension_numbers<[1], [0], [0], [1], [0, 0, 1, 1], [], []>} : vector<8x128xf32>, vector<128x128xf32>, vector<8x128xf32> -> vector<8x128xf32>
    %118 = arith.addf %115, %117 : vector<8x128xf32>
    %119 = vector.broadcast %5 : vector<1x128xf32> to vector<8x128xf32>
    %120 = arith.addf %118, %119 : vector<8x128xf32>
    %cst_93 = arith.constant 0.899999976 : f32
    %121 = vector.broadcast %cst_93 : f32 to vector<8x128xf32>
    %122 = arith.mulf %121, %76 : vector<8x128xf32>
    %123 = math.tanh %120 : vector<8x128xf32>
    %cst_94 = arith.constant 1.000000e-01 : f32
    %124 = vector.broadcast %cst_94 : f32 to vector<8x128xf32>
    %125 = arith.mulf %124, %123 : vector<8x128xf32>
    %126 = arith.addf %122, %125 : vector<8x128xf32>
    %c1_95 = arith.constant 1 : index
    %c0_96 = arith.constant 0 : index
    %c0_97 = arith.constant 0 : index
    %127 = vector.load %arg15[%c1_95, %c0_96, %c0_97] : memref<4x8x128xf32, #tpu.memory_space<vmem>>, vector<1x8x128xf32>
    %128 = vector.shape_cast %127 : vector<1x8x128xf32> to vector<8x128xf32>
    %129 = vector.shape_cast %126 : vector<8x128xf32> to vector<1x8x128xf32>
    tpu.vector_store %arg15[%c1_95, %c0_96, %c0_97], %129 {strides = array<i32>} : memref<4x8x128xf32, #tpu.memory_space<vmem>>, vector<1x8x128xf32>,
    %c0_98 = arith.constant 0 : index
    %c0_99 = arith.constant 0 : index
    %130 = vector.load %arg7[%c0_98, %c0_99] : memref<128x128xf32, #tpu.memory_space<vmem>>, vector<128x128xf32>
    %cst_100 = arith.constant dense<0.000000e+00> : vector<8x128xf32>
    %131 = tpu.matmul %110, %130, %cst_100 {dimension_numbers = #tpu.dot_dimension_numbers<[1], [0], [0], [1], [0, 0, 1, 1], [], []>} : vector<8x128xf32>, vector<128x128xf32>, vector<8x128xf32> -> vector<8x128xf32>
    %c0_101 = arith.constant 0 : index
    %c0_102 = arith.constant 0 : index
    %132 = vector.load %arg8[%c0_101, %c0_102] : memref<128x128xf32, #tpu.memory_space<vmem>>, vector<128x128xf32>
    %cst_103 = arith.constant dense<0.000000e+00> : vector<8x128xf32>
    %133 = tpu.matmul %92, %132, %cst_103 {dimension_numbers = #tpu.dot_dimension_numbers<[1], [0], [0], [1], [0, 0, 1, 1], [], []>} : vector<8x128xf32>, vector<128x128xf32>, vector<8x128xf32> -> vector<8x128xf32>
    %134 = arith.addf %131, %133 : vector<8x128xf32>
    %135 = vector.broadcast %4 : vector<1x128xf32> to vector<8x128xf32>
    %136 = arith.addf %134, %135 : vector<8x128xf32>
    %cst_104 = arith.constant 0.899999976 : f32
    %137 = vector.broadcast %cst_104 : f32 to vector<8x128xf32>
    %138 = arith.mulf %137, %92 : vector<8x128xf32>
    %139 = math.tanh %136 : vector<8x128xf32>
    %cst_105 = arith.constant 1.000000e-01 : f32
    %140 = vector.broadcast %cst_105 : f32 to vector<8x128xf32>
    %141 = arith.mulf %140, %139 : vector<8x128xf32>
    %142 = arith.addf %138, %141 : vector<8x128xf32>
    %c2_106 = arith.constant 2 : index
    %c0_107 = arith.constant 0 : index
    %c0_108 = arith.constant 0 : index
    %143 = vector.load %arg14[%c2_106, %c0_107, %c0_108] : memref<4x8x128xf32, #tpu.memory_space<vmem>>, vector<1x8x128xf32>
    %144 = vector.shape_cast %143 : vector<1x8x128xf32> to vector<8x128xf32>
    %145 = vector.shape_cast %142 : vector<8x128xf32> to vector<1x8x128xf32>
    tpu.vector_store %arg14[%c2_106, %c0_107, %c0_108], %145 {strides = array<i32>} : memref<4x8x128xf32, #tpu.memory_space<vmem>>, vector<1x8x128xf32>,
    %c3 = arith.constant 3 : index
    %c0_109 = arith.constant 0 : index
    %c0_110 = arith.constant 0 : index
    %146 = vector.load %arg2[%c3, %c0_109, %c0_110] : memref<4x8x16xf32, #tpu.memory_space<vmem>>, vector<1x8x16xf32>
    %147 = vector.shape_cast %146 : vector<1x8x16xf32> to vector<8x16xf32>
    %c0_111 = arith.constant 0 : index
    %c0_112 = arith.constant 0 : index
    %148 = vector.load %arg4[%c0_111, %c0_112] : memref<16x128xf32, #tpu.memory_space<vmem>>, vector<16x128xf32>
    %cst_113 = arith.constant dense<0.000000e+00> : vector<8x128xf32>
    %149 = tpu.matmul %147, %148, %cst_113 {dimension_numbers = #tpu.dot_dimension_numbers<[1], [0], [0], [1], [0, 0, 1, 1], [], []>} : vector<8x16xf32>, vector<16x128xf32>, vector<8x128xf32> -> vector<8x128xf32>
    %c0_114 = arith.constant 0 : index
    %c0_115 = arith.constant 0 : index
    %150 = vector.load %arg5[%c0_114, %c0_115] : memref<128x128xf32, #tpu.memory_space<vmem>>, vector<128x128xf32>
    %cst_116 = arith.constant dense<0.000000e+00> : vector<8x128xf32>
    %151 = tpu.matmul %110, %150, %cst_116 {dimension_numbers = #tpu.dot_dimension_numbers<[1], [0], [0], [1], [0, 0, 1, 1], [], []>} : vector<8x128xf32>, vector<128x128xf32>, vector<8x128xf32> -> vector<8x128xf32>
    %152 = arith.addf %149, %151 : vector<8x128xf32>
    %153 = vector.broadcast %3 : vector<1x128xf32> to vector<8x128xf32>
    %154 = arith.addf %152, %153 : vector<8x128xf32>
    %cst_117 = arith.constant 0.899999976 : f32
    %155 = vector.broadcast %cst_117 : f32 to vector<8x128xf32>
    %156 = arith.mulf %155, %110 : vector<8x128xf32>
    %157 = math.tanh %154 : vector<8x128xf32>
    %cst_118 = arith.constant 1.000000e-01 : f32
    %158 = vector.broadcast %cst_118 : f32 to vector<8x128xf32>
    %159 = arith.mulf %158, %157 : vector<8x128xf32>
    %160 = arith.addf %156, %159 : vector<8x128xf32>
    %c3_119 = arith.constant 3 : index
    %c0_120 = arith.constant 0 : index
    %c0_121 = arith.constant 0 : index
    %161 = vector.load %arg13[%c3_119, %c0_120, %c0_121] : memref<4x8x128xf32, #tpu.memory_space<vmem>>, vector<1x8x128xf32>
    %162 = vector.shape_cast %161 : vector<1x8x128xf32> to vector<8x128xf32>
    %163 = vector.shape_cast %160 : vector<8x128xf32> to vector<1x8x128xf32>
    tpu.vector_store %arg13[%c3_119, %c0_120, %c0_121], %163 {strides = array<i32>} : memref<4x8x128xf32, #tpu.memory_space<vmem>>, vector<1x8x128xf32>,
    %c0_122 = arith.constant 0 : index
    %c0_123 = arith.constant 0 : index
    %164 = vector.load %arg10[%c0_122, %c0_123] : memref<128x128xf32, #tpu.memory_space<vmem>>, vector<128x128xf32>
    %cst_124 = arith.constant dense<0.000000e+00> : vector<8x128xf32>
    %165 = tpu.matmul %142, %164, %cst_124 {dimension_numbers = #tpu.dot_dimension_numbers<[1], [0], [0], [1], [0, 0, 1, 1], [], []>} : vector<8x128xf32>, vector<128x128xf32>, vector<8x128xf32> -> vector<8x128xf32>
    %c0_125 = arith.constant 0 : index
    %c0_126 = arith.constant 0 : index
    %166 = vector.load %arg11[%c0_125, %c0_126] : memref<128x128xf32, #tpu.memory_space<vmem>>, vector<128x128xf32>
    %cst_127 = arith.constant dense<0.000000e+00> : vector<8x128xf32>
    %167 = tpu.matmul %126, %166, %cst_127 {dimension_numbers = #tpu.dot_dimension_numbers<[1], [0], [0], [1], [0, 0, 1, 1], [], []>} : vector<8x128xf32>, vector<128x128xf32>, vector<8x128xf32> -> vector<8x128xf32>
    %168 = arith.addf %165, %167 : vector<8x128xf32>
    %169 = vector.broadcast %5 : vector<1x128xf32> to vector<8x128xf32>
    %170 = arith.addf %168, %169 : vector<8x128xf32>
    %cst_128 = arith.constant 0.899999976 : f32
    %171 = vector.broadcast %cst_128 : f32 to vector<8x128xf32>
    %172 = arith.mulf %171, %126 : vector<8x128xf32>
    %173 = math.tanh %170 : vector<8x128xf32>
    %cst_129 = arith.constant 1.000000e-01 : f32
    %174 = vector.broadcast %cst_129 : f32 to vector<8x128xf32>
    %175 = arith.mulf %174, %173 : vector<8x128xf32>
    %176 = arith.addf %172, %175 : vector<8x128xf32>
    %c2_130 = arith.constant 2 : index
    %c0_131 = arith.constant 0 : index
    %c0_132 = arith.constant 0 : index
    %177 = vector.load %arg15[%c2_130, %c0_131, %c0_132] : memref<4x8x128xf32, #tpu.memory_space<vmem>>, vector<1x8x128xf32>
    %178 = vector.shape_cast %177 : vector<1x8x128xf32> to vector<8x128xf32>
    %179 = vector.shape_cast %176 : vector<8x128xf32> to vector<1x8x128xf32>
    tpu.vector_store %arg15[%c2_130, %c0_131, %c0_132], %179 {strides = array<i32>} : memref<4x8x128xf32, #tpu.memory_space<vmem>>, vector<1x8x128xf32>,
    %c0_133 = arith.constant 0 : index
    %c0_134 = arith.constant 0 : index
    %180 = vector.load %arg7[%c0_133, %c0_134] : memref<128x128xf32, #tpu.memory_space<vmem>>, vector<128x128xf32>
    %cst_135 = arith.constant dense<0.000000e+00> : vector<8x128xf32>
    %181 = tpu.matmul %160, %180, %cst_135 {dimension_numbers = #tpu.dot_dimension_numbers<[1], [0], [0], [1], [0, 0, 1, 1], [], []>} : vector<8x128xf32>, vector<128x128xf32>, vector<8x128xf32> -> vector<8x128xf32>
    %c0_136 = arith.constant 0 : index
    %c0_137 = arith.constant 0 : index
    %182 = vector.load %arg8[%c0_136, %c0_137] : memref<128x128xf32, #tpu.memory_space<vmem>>, vector<128x128xf32>
    %cst_138 = arith.constant dense<0.000000e+00> : vector<8x128xf32>
    %183 = tpu.matmul %142, %182, %cst_138 {dimension_numbers = #tpu.dot_dimension_numbers<[1], [0], [0], [1], [0, 0, 1, 1], [], []>} : vector<8x128xf32>, vector<128x128xf32>, vector<8x128xf32> -> vector<8x128xf32>
    %184 = arith.addf %181, %183 : vector<8x128xf32>
    %185 = vector.broadcast %4 : vector<1x128xf32> to vector<8x128xf32>
    %186 = arith.addf %184, %185 : vector<8x128xf32>
    %cst_139 = arith.constant 0.899999976 : f32
    %187 = vector.broadcast %cst_139 : f32 to vector<8x128xf32>
    %188 = arith.mulf %187, %142 : vector<8x128xf32>
    %189 = math.tanh %186 : vector<8x128xf32>
    %cst_140 = arith.constant 1.000000e-01 : f32
    %190 = vector.broadcast %cst_140 : f32 to vector<8x128xf32>
    %191 = arith.mulf %190, %189 : vector<8x128xf32>
    %192 = arith.addf %188, %191 : vector<8x128xf32>
    %c3_141 = arith.constant 3 : index
    %c0_142 = arith.constant 0 : index
    %c0_143 = arith.constant 0 : index
    %193 = vector.load %arg14[%c3_141, %c0_142, %c0_143] : memref<4x8x128xf32, #tpu.memory_space<vmem>>, vector<1x8x128xf32>
    %194 = vector.shape_cast %193 : vector<1x8x128xf32> to vector<8x128xf32>
    %195 = vector.shape_cast %192 : vector<8x128xf32> to vector<1x8x128xf32>
    tpu.vector_store %arg14[%c3_141, %c0_142, %c0_143], %195 {strides = array<i32>} : memref<4x8x128xf32, #tpu.memory_space<vmem>>, vector<1x8x128xf32>,
    %c0_144 = arith.constant 0 : index
    %c0_145 = arith.constant 0 : index
    %196 = vector.load %arg10[%c0_144, %c0_145] : memref<128x128xf32, #tpu.memory_space<vmem>>, vector<128x128xf32>
    %cst_146 = arith.constant dense<0.000000e+00> : vector<8x128xf32>
    %197 = tpu.matmul %192, %196, %cst_146 {dimension_numbers = #tpu.dot_dimension_numbers<[1], [0], [0], [1], [0, 0, 1, 1], [], []>} : vector<8x128xf32>, vector<128x128xf32>, vector<8x128xf32> -> vector<8x128xf32>
    %c0_147 = arith.constant 0 : index
    %c0_148 = arith.constant 0 : index
    %198 = vector.load %arg11[%c0_147, %c0_148] : memref<128x128xf32, #tpu.memory_space<vmem>>, vector<128x128xf32>
    %cst_149 = arith.constant dense<0.000000e+00> : vector<8x128xf32>
    %199 = tpu.matmul %176, %198, %cst_149 {dimension_numbers = #tpu.dot_dimension_numbers<[1], [0], [0], [1], [0, 0, 1, 1], [], []>} : vector<8x128xf32>, vector<128x128xf32>, vector<8x128xf32> -> vector<8x128xf32>
    %200 = arith.addf %197, %199 : vector<8x128xf32>
    %201 = vector.broadcast %5 : vector<1x128xf32> to vector<8x128xf32>
    %202 = arith.addf %200, %201 : vector<8x128xf32>
    %cst_150 = arith.constant 0.899999976 : f32
    %203 = vector.broadcast %cst_150 : f32 to vector<8x128xf32>
    %204 = arith.mulf %203, %176 : vector<8x128xf32>
    %205 = math.tanh %202 : vector<8x128xf32>
    %cst_151 = arith.constant 1.000000e-01 : f32
    %206 = vector.broadcast %cst_151 : f32 to vector<8x128xf32>
    %207 = arith.mulf %206, %205 : vector<8x128xf32>
    %208 = arith.addf %204, %207 : vector<8x128xf32>
    %c3_152 = arith.constant 3 : index
    %c0_153 = arith.constant 0 : index
    %c0_154 = arith.constant 0 : index
    %209 = vector.load %arg15[%c3_152, %c0_153, %c0_154] : memref<4x8x128xf32, #tpu.memory_space<vmem>>, vector<1x8x128xf32>
    %210 = vector.shape_cast %209 : vector<1x8x128xf32> to vector<8x128xf32>
    %211 = vector.shape_cast %208 : vector<8x128xf32> to vector<1x8x128xf32>
    tpu.vector_store %arg15[%c3_152, %c0_153, %c0_154], %211 {strides = array<i32>} : memref<4x8x128xf32, #tpu.memory_space<vmem>>, vector<1x8x128xf32>,
    %c0_155 = arith.constant 0 : index
    %c0_156 = arith.constant 0 : index
    %c0_157 = arith.constant 0 : index
    %212 = vector.load %arg16[%c0_155, %c0_156, %c0_157] : memref<3x8x128xf32, #tpu.memory_space<vmem>>, vector<1x8x128xf32>
    %213 = vector.shape_cast %212 : vector<1x8x128xf32> to vector<8x128xf32>
    %214 = vector.shape_cast %160 : vector<8x128xf32> to vector<1x8x128xf32>
    tpu.vector_store %arg16[%c0_155, %c0_156, %c0_157], %214 {strides = array<i32>} : memref<3x8x128xf32, #tpu.memory_space<vmem>>, vector<1x8x128xf32>,
    %c1_158 = arith.constant 1 : index
    %c0_159 = arith.constant 0 : index
    %c0_160 = arith.constant 0 : index
    %215 = vector.load %arg16[%c1_158, %c0_159, %c0_160] : memref<3x8x128xf32, #tpu.memory_space<vmem>>, vector<1x8x128xf32>
    %216 = vector.shape_cast %215 : vector<1x8x128xf32> to vector<8x128xf32>
    %217 = vector.shape_cast %192 : vector<8x128xf32> to vector<1x8x128xf32>
    tpu.vector_store %arg16[%c1_158, %c0_159, %c0_160], %217 {strides = array<i32>} : memref<3x8x128xf32, #tpu.memory_space<vmem>>, vector<1x8x128xf32>,
    %c2_161 = arith.constant 2 : index
    %c0_162 = arith.constant 0 : index
    %c0_163 = arith.constant 0 : index
    %218 = vector.load %arg16[%c2_161, %c0_162, %c0_163] : memref<3x8x128xf32, #tpu.memory_space<vmem>>, vector<1x8x128xf32>
    %219 = vector.shape_cast %218 : vector<1x8x128xf32> to vector<8x128xf32>
    %220 = vector.shape_cast %208 : vector<8x128xf32> to vector<1x8x128xf32>
    tpu.vector_store %arg16[%c2_161, %c0_162, %c0_163], %220 {strides = array<i32>} : memref<3x8x128xf32, #tpu.memory_space<vmem>>, vector<1x8x128xf32>,
    return
  }
  func.func @transform_0(%arg0: i32, %arg1: i32) -> (i32, i32, i32) {
    %c0_i32 = arith.constant 0 : i32
    %c0_i32_0 = arith.constant 0 : i32
    return %arg1, %arg0, %c0_i32 : i32, i32, i32
  }
  func.func @transform_1(%arg0: i32, %arg1: i32) -> (i32, i32, i32) {
    %c0_i32 = arith.constant 0 : i32
    %c0_i32_0 = arith.constant 0 : i32
    %c0_i32_1 = arith.constant 0 : i32
    return %c0_i32, %arg0, %c0_i32_0 : i32, i32, i32
  }
  func.func @transform_2(%arg0: i32, %arg1: i32) -> (i32, i32) {
    %c0_i32 = arith.constant 0 : i32
    %c0_i32_0 = arith.constant 0 : i32
    %c0_i32_1 = arith.constant 0 : i32
    return %c0_i32, %c0_i32_0 : i32, i32
  }
  func.func @transform_3(%arg0: i32, %arg1: i32) -> (i32, i32) {
    %c0_i32 = arith.constant 0 : i32
    %c0_i32_0 = arith.constant 0 : i32
    %c0_i32_1 = arith.constant 0 : i32
    return %c0_i32, %c0_i32_0 : i32, i32
  }
  func.func @transform_4(%arg0: i32, %arg1: i32) -> (i32, i32) {
    %c0_i32 = arith.constant 0 : i32
    %c0_i32_0 = arith.constant 0 : i32
    %c0_i32_1 = arith.constant 0 : i32
    return %c0_i32, %c0_i32_0 : i32, i32
  }
  func.func @transform_5(%arg0: i32, %arg1: i32) -> (i32, i32) {
    %c0_i32 = arith.constant 0 : i32
    %c0_i32_0 = arith.constant 0 : i32
    %c0_i32_1 = arith.constant 0 : i32
    return %c0_i32, %c0_i32_0 : i32, i32
  }
  func.func @transform_6(%arg0: i32, %arg1: i32) -> (i32, i32) {
    %c0_i32 = arith.constant 0 : i32
    %c0_i32_0 = arith.constant 0 : i32
    %c0_i32_1 = arith.constant 0 : i32
    return %c0_i32, %c0_i32_0 : i32, i32
  }
  func.func @transform_7(%arg0: i32, %arg1: i32) -> (i32, i32) {
    %c0_i32 = arith.constant 0 : i32
    %c0_i32_0 = arith.constant 0 : i32
    %c0_i32_1 = arith.constant 0 : i32
    return %c0_i32, %c0_i32_0 : i32, i32
  }
  func.func @transform_8(%arg0: i32, %arg1: i32) -> (i32, i32) {
    %c0_i32 = arith.constant 0 : i32
    %c0_i32_0 = arith.constant 0 : i32
    %c0_i32_1 = arith.constant 0 : i32
    return %c0_i32, %c0_i32_0 : i32, i32
  }
  func.func @transform_9(%arg0: i32, %arg1: i32) -> (i32, i32) {
    %c0_i32 = arith.constant 0 : i32
    %c0_i32_0 = arith.constant 0 : i32
    %c0_i32_1 = arith.constant 0 : i32
    return %c0_i32, %c0_i32_0 : i32, i32
  }
  func.func @transform_10(%arg0: i32, %arg1: i32) -> (i32, i32) {
    %c0_i32 = arith.constant 0 : i32
    %c0_i32_0 = arith.constant 0 : i32
    %c0_i32_1 = arith.constant 0 : i32
    return %c0_i32, %c0_i32_0 : i32, i32
  }
  func.func @transform_11(%arg0: i32, %arg1: i32) -> (i32, i32, i32) {
    %c0_i32 = arith.constant 0 : i32
    %c0_i32_0 = arith.constant 0 : i32
    return %arg1, %arg0, %c0_i32 : i32, i32, i32
  }
  func.func @transform_12(%arg0: i32, %arg1: i32) -> (i32, i32, i32) {
    %c0_i32 = arith.constant 0 : i32
    %c0_i32_0 = arith.constant 0 : i32
    return %arg1, %arg0, %c0_i32 : i32, i32, i32
  }
  func.func @transform_13(%arg0: i32, %arg1: i32) -> (i32, i32, i32) {
    %c0_i32 = arith.constant 0 : i32
    %c0_i32_0 = arith.constant 0 : i32
    return %arg1, %arg0, %c0_i32 : i32, i32, i32
  }
}

</mosaic_0001>

<llo_original>
// kernel: tpu_custom_call.1
$region0: #{tpu_custom_call.1}
  #allocation0 [shape = 'u32[]', space=smem, size = 0x4, offset = 0x4, fixed_abs, tag = 'smem constant byte address 0x4 - core index']
  #allocation1 [shape = 'u32[144,128]{1,0:T(1,128)}', space=vmem, size = 0x12000, scoped, tag = 'internal scratch']
  #allocation2 [shape = 'f32[3,8,128]{2,1,0:T(8,128)}', space=vmem, size = 0x3000, scoped, tag = 'scratch operand']
  %s0 = inlined_call_operand.hbm [shape: f32[16,8,16], index: 0, kind: input, shape index: {}]
  %s1 = inlined_call_operand.hbm [shape: f32[1,8,128], index: 1, kind: input, shape index: {}]
  %s2 = inlined_call_operand.hbm [shape: f32[16,128], index: 2, kind: input, shape index: {}]
  %s3 = inlined_call_operand.hbm [shape: f32[128,128], index: 3, kind: input, shape index: {}]
  %s4 = inlined_call_operand.vmem [shape: f32[1,128], index: 4, kind: input, shape index: {}]
  %s5 = inlined_call_operand.hbm [shape: f32[128,128], index: 5, kind: input, shape index: {}]
  %s6 = inlined_call_operand.hbm [shape: f32[128,128], index: 6, kind: input, shape index: {}]
  %s7 = inlined_call_operand.vmem [shape: f32[1,128], index: 7, kind: input, shape index: {}]
  %s8 = inlined_call_operand.hbm [shape: f32[128,128], index: 8, kind: input, shape index: {}]
  %s9 = inlined_call_operand.hbm [shape: f32[128,128], index: 9, kind: input, shape index: {}]
  %s10 = inlined_call_operand.vmem [shape: f32[1,128], index: 10, kind: input, shape index: {}]
  %s11 = inlined_call_operand.hbm [shape: f32[16,8,128], index: 11, kind: output, shape index: {0}]
  %s12 = inlined_call_operand.hbm [shape: f32[16,8,128], index: 12, kind: output, shape index: {1}]
  %s13 = inlined_call_operand.hbm [shape: f32[16,8,128], index: 13, kind: output, shape index: {2}]
  %14 = xla_tuple %s11, %s12, %s13
  %s15 = sld [smem:[#allocation0]]
  $region129: #{tpu_custom_call.1} parent=0
    _
  %s17 = ssub.s32 1, %s15
  %s18 = scalar_select 0, %s17, %s15
  $region1: #{tpu_custom_call.1} parent=0
    #allocation3 [shape = 'u8[32768]{0}', space=vmem, size = 0x8000, scoped, tag = 'input window, operand 0']
    #allocation4 [shape = 's32[2]{0}', space=sflag, size = 0x8, scoped, tag = 'scoped memory for tpu_custom_call.1']
    #allocation5 [shape = 's32[2]{0}', space=sflag, size = 0x8, scoped, tag = 'scoped memory for tpu_custom_call.1']
    #allocation6 [shape = 'u8[4096]{0}', space=vmem, size = 0x1000, scoped, tag = 'input window, operand 1, single buffered']
    #allocation7 [shape = 's32[1]{0}', space=sflag, size = 0x4, scoped, tag = 'scoped memory for tpu_custom_call.1']
    #allocation8 [shape = 'u8[8192]{0}', space=vmem, size = 0x2000, scoped, tag = 'input window, operand 2, single buffered']
    #allocation9 [shape = 'u8[65536]{0}', space=vmem, size = 0x10000, scoped, tag = 'input window, operand 3, single buffered']
    #allocation10 [shape = 's32[1]{0}', space=sflag, size = 0x4, scoped, tag = 'scoped memory for tpu_custom_call.1']
    #allocation11 [shape = 'u8[65536]{0}', space=vmem, size = 0x10000, scoped, tag = 'input window, operand 5, single buffered']
    #allocation12 [shape = 'u8[65536]{0}', space=vmem, size = 0x10000, scoped, tag = 'input window, operand 6, single buffered']
    #allocation13 [shape = 's32[1]{0}', space=sflag, size = 0x4, scoped, tag = 'scoped memory for tpu_custom_call.1']
    #allocation14 [shape = 'u8[65536]{0}', space=vmem, size = 0x10000, scoped, tag = 'input window, operand 8, single buffered']
    #allocation15 [shape = 'u8[65536]{0}', space=vmem, size = 0x10000, scoped, tag = 'input window, operand 9, single buffered']
    #allocation16 [shape = 's32[1]{0}', space=sflag, size = 0x4, scoped, tag = 'scoped memory for tpu_custom_call.1']
    #allocation17 [shape = 'u8[32768]{0}', space=vmem, size = 0x8000, scoped, tag = 'output window, operand 0']
    #allocation18 [shape = 'u8[32768]{0}', space=vmem, size = 0x8000, scoped, tag = 'output window, operand 1']
    #allocation19 [shape = 's32[2]{0}', space=sflag, size = 0x8, scoped, tag = 'scoped memory for tpu_custom_call.1']
    #allocation20 [shape = 'u8[32768]{0}', space=vmem, size = 0x8000, scoped, tag = 'output window, operand 2']
    %19 = vsyncpa [#allocation4], 0
    %s20 = scalar_lea.sflag [#allocation4], 1
    %21 = vsyncpa %s20, 0
    %22 = vsyncpa [#allocation7], 0
    %23 = vsyncpa [#allocation10], 0
    %24 = vsyncpa [#allocation13], 0
    %25 = vsyncpa [#allocation16], 0
    %26 = vsyncpa [#allocation5], 0
    %s27 = scalar_lea.sflag [#allocation5], 1
    %28 = vsyncpa %s27, 0
    %29 = vsyncpa [#allocation19], 0
    %s30 = scalar_lea.sflag [#allocation19], 1
    %31 = vsyncpa %s30, 0
    loop: start=0, step=1, limit=6
    $region2: #{tpu_custom_call.1} parent=1 // loop_pre_header
      _
    $region3: #{tpu_custom_call.1} parent=1 // loop_header
      %s33 = sphi 0, %s37
      %p34 = scmp.ge.s32.totalorder %s33, 6
      %s40 = sphi 0, %s52
      %s41 = sphi 0, %s48
      %s42 = sphi 0, %s40
      %s43 = sphi 0, %s41
      %s44 = sphi 0, %s42
      %s45 = sphi 0, %s43
      %s57 = sphi 0, %s59
      %s60 = sphi 0, %s57
      %s61 = sphi 0, %s60
      %s77 = sphi 0, %s61
      %s83 = sphi 0, %s85
      %s86 = sphi 0, %s83
      %s87 = sphi 0, %s86
      %s103 = sphi 0, %s87
      %s107 = sphi 0, %s107
      %s109 = sphi 0, %s107
      %s110 = sphi 0, %s109
      %s124 = sphi 0, %s110
      %s128 = sphi 0, %s128
      %s130 = sphi 0, %s128
      %s131 = sphi 0, %s130
      %s145 = sphi 0, %s131
      %s149 = sphi 0, %s149
      %s151 = sphi 0, %s149
      %s152 = sphi 0, %s151
      %s166 = sphi 0, %s152
      %s170 = sphi 0, %s170
      %s172 = sphi 0, %s170
      %s173 = sphi 0, %s172
      %s187 = sphi 0, %s173
      %s191 = sphi 0, %s191
      %s193 = sphi 0, %s191
      %s194 = sphi 0, %s193
      %s208 = sphi 0, %s194
      %s212 = sphi 0, %s212
      %s214 = sphi 0, %s212
      %s215 = sphi 0, %s214
      %s229 = sphi 0, %s215
      %s233 = sphi 0, %s233
      %s235 = sphi 0, %s233
      %s236 = sphi 0, %s235
      %s250 = sphi 0, %s236
      %s254 = sphi 0, %s254
      %s256 = sphi 0, %s254
      %s257 = sphi 0, %s256
      %s271 = sphi 0, %s257
      %s275 = sphi 0, %s275
      %s277 = sphi 0, %s275
      %s278 = sphi 0, %s277
      %s292 = sphi 0, %s278
      %s300 = sphi 0, %s302
      %s303 = sphi 0, %s300
      %s304 = sphi 0, %s303
      %s320 = sphi 0, %s304
      %s328 = sphi 0, %s330
      %s331 = sphi 0, %s328
      %s332 = sphi 0, %s331
      %s348 = sphi 0, %s332
      %s356 = sphi 0, %s358
      %s359 = sphi 0, %s356
      %s360 = sphi 0, %s359
      %s376 = sphi 0, %s360
    $region4: #{tpu_custom_call.1} parent=1 // loop_header_branch
      %36 = sbr.rel (%p34) target = $region8
    $region5: #{tpu_custom_call.1} parent=1 // loop_body
      %s38 = ssub.s32 %s33, 1
      %s39 = ssub.s32 %s33, 2
      %s46 = sadd.s32 1, %s41
      %p47 = scmp.ge.s32.totalorder %s46, 4
      %s48 = scalar_select %p47, 0, %s46
      %s49 = sadd.s32 1, %s40
      %s50 = scalar_select %p47, %s49, %s40
      %p51 = scmp.ge.s32.totalorder %s50, 1
      %s52 = scalar_select %p51, 0, %s50
      %s53 = ssub.s32 %s41, %s48
      %s54 = ssub.s32 %s40, %s52
      %s55 = sor.u32 %s53, %s54
      %p56 = scmp.eq.s32.totalorder %s55, 0
      %s58 = sadd.s32 %s57, 1
      %s59 = scalar_select %p56, %s57, %s58
      %p62 = pneg %p56
      %p63 = scmp.eq.s32.totalorder %s33, 3
      %p64 = por %p62, %p63
      %p65 = scmp.ne.s32.totalorder %s57, %s60
      %p66 = scmp.eq.s32.totalorder %s33, 0
      %p67 = por %p65, %p66
      %p68 = scmp.ne.s32.totalorder %s57, %s60
      %p69 = scmp.eq.s32.totalorder %s38, 3
      %p70 = por %p68, %p69
      %p71 = scmp.ne.s32.totalorder %s60, %s61
      %p72 = scmp.eq.s32.totalorder %s38, 0
      %p73 = por %p71, %p72
      %p74 = scmp.ne.s32.totalorder %s60, %s61
      %p75 = scmp.eq.s32.totalorder %s39, 3
      %p76 = por %p74, %p75
      %p78 = scmp.ne.s32.totalorder %s61, %s77
      %p79 = scmp.eq.s32.totalorder %s39, 0
      %p80 = por %p78, %p79
      %s81 = ssub.s32 %s40, %s52
      %p82 = scmp.eq.s32.totalorder %s81, 0
      %s84 = sadd.s32 %s83, 1
      %s85 = scalar_select %p82, %s83, %s84
      %p88 = pneg %p82
      %p89 = scmp.eq.s32.totalorder %s33, 3
      %p90 = por %p88, %p89
      %p91 = scmp.ne.s32.totalorder %s83, %s86
      %p92 = scmp.eq.s32.totalorder %s33, 0
      %p93 = por %p91, %p92
      %p94 = scmp.ne.s32.totalorder %s83, %s86
      %p95 = scmp.eq.s32.totalorder %s38, 3
      %p96 = por %p94, %p95
      %p97 = scmp.ne.s32.totalorder %s86, %s87
      %p98 = scmp.eq.s32.totalorder %s38, 0
      %p99 = por %p97, %p98
      %p100 = scmp.ne.s32.totalorder %s86, %s87
      %p101 = scmp.eq.s32.totalorder %s39, 3
      %p102 = por %p100, %p101
      %p104 = scmp.ne.s32.totalorder %s87, %s103
      %p105 = scmp.eq.s32.totalorder %s39, 0
      %p106 = por %p104, %p105
      %s108 = sadd.s32 %s107, 1
      %p111 = scmp.eq.s32.totalorder %s33, 3
      %p112 = scmp.ne.s32.totalorder %s107, %s109
      %p113 = scmp.eq.s32.totalorder %s33, 0
      %p114 = por %p112, %p113
      %p115 = scmp.ne.s32.totalorder %s107, %s109
      %p116 = scmp.eq.s32.totalorder %s38, 3
      %p117 = por %p115, %p116
      %p118 = scmp.ne.s32.totalorder %s109, %s110
      %p119 = scmp.eq.s32.totalorder %s38, 0
      %p120 = por %p118, %p119
      %p121 = scmp.ne.s32.totalorder %s109, %s110
      %p122 = scmp.eq.s32.totalorder %s39, 3
      %p123 = por %p121, %p122
      %p125 = scmp.ne.s32.totalorder %s110, %s124
      %p126 = scmp.eq.s32.totalorder %s39, 0
      %p127 = por %p125, %p126
      %s129 = sadd.s32 %s128, 1
      %p132 = scmp.eq.s32.totalorder %s33, 3
      %p133 = scmp.ne.s32.totalorder %s128, %s130
      %p134 = scmp.eq.s32.totalorder %s33, 0
      %p135 = por %p133, %p134
      %p136 = scmp.ne.s32.totalorder %s128, %s130
      %p137 = scmp.eq.s32.totalorder %s38, 3
      %p138 = por %p136, %p137
      %p139 = scmp.ne.s32.totalorder %s130, %s131
      %p140 = scmp.eq.s32.totalorder %s38, 0
      %p141 = por %p139, %p140
      %p142 = scmp.ne.s32.totalorder %s130, %s131
      %p143 = scmp.eq.s32.totalorder %s39, 3
      %p144 = por %p142, %p143
      %p146 = scmp.ne.s32.totalorder %s131, %s145
      %p147 = scmp.eq.s32.totalorder %s39, 0
      %p148 = por %p146, %p147
      %s150 = sadd.s32 %s149, 1
      %p153 = scmp.eq.s32.totalorder %s33, 3
      %p154 = scmp.ne.s32.totalorder %s149, %s151
      %p155 = scmp.eq.s32.totalorder %s33, 0
      %p156 = por %p154, %p155
      %p157 = scmp.ne.s32.totalorder %s149, %s151
      %p158 = scmp.eq.s32.totalorder %s38, 3
      %p159 = por %p157, %p158
      %p160 = scmp.ne.s32.totalorder %s151, %s152
      %p161 = scmp.eq.s32.totalorder %s38, 0
      %p162 = por %p160, %p161
      %p163 = scmp.ne.s32.totalorder %s151, %s152
      %p164 = scmp.eq.s32.totalorder %s39, 3
      %p165 = por %p163, %p164
      %p167 = scmp.ne.s32.totalorder %s152, %s166
      %p168 = scmp.eq.s32.totalorder %s39, 0
      %p169 = por %p167, %p168
      %s171 = sadd.s32 %s170, 1
      %p174 = scmp.eq.s32.totalorder %s33, 3
      %p175 = scmp.ne.s32.totalorder %s170, %s172
      %p176 = scmp.eq.s32.totalorder %s33, 0
      %p177 = por %p175, %p176
      %p178 = scmp.ne.s32.totalorder %s170, %s172
      %p179 = scmp.eq.s32.totalorder %s38, 3
      %p180 = por %p178, %p179
      %p181 = scmp.ne.s32.totalorder %s172, %s173
      %p182 = scmp.eq.s32.totalorder %s38, 0
      %p183 = por %p181, %p182
      %p184 = scmp.ne.s32.totalorder %s172, %s173
      %p185 = scmp.eq.s32.totalorder %s39, 3
      %p186 = por %p184, %p185
      %p188 = scmp.ne.s32.totalorder %s173, %s187
      %p189 = scmp.eq.s32.totalorder %s39, 0
      %p190 = por %p188, %p189
      %s192 = sadd.s32 %s191, 1
      %p195 = scmp.eq.s32.totalorder %s33, 3
      %p196 = scmp.ne.s32.totalorder %s191, %s193
      %p197 = scmp.eq.s32.totalorder %s33, 0
      %p198 = por %p196, %p197
      %p199 = scmp.ne.s32.totalorder %s191, %s193
      %p200 = scmp.eq.s32.totalorder %s38, 3
      %p201 = por %p199, %p200
      %p202 = scmp.ne.s32.totalorder %s193, %s194
      %p203 = scmp.eq.s32.totalorder %s38, 0
      %p204 = por %p202, %p203
      %p205 = scmp.ne.s32.totalorder %s193, %s194
      %p206 = scmp.eq.s32.totalorder %s39, 3
      %p207 = por %p205, %p206
      %p209 = scmp.ne.s32.totalorder %s194, %s208
      %p210 = scmp.eq.s32.totalorder %s39, 0
      %p211 = por %p209, %p210
      %s213 = sadd.s32 %s212, 1
      %p216 = scmp.eq.s32.totalorder %s33, 3
      %p217 = scmp.ne.s32.totalorder %s212, %s214
      %p218 = scmp.eq.s32.totalorder %s33, 0
      %p219 = por %p217, %p218
      %p220 = scmp.ne.s32.totalorder %s212, %s214
      %p221 = scmp.eq.s32.totalorder %s38, 3
      %p222 = por %p220, %p221
      %p223 = scmp.ne.s32.totalorder %s214, %s215
      %p224 = scmp.eq.s32.totalorder %s38, 0
      %p225 = por %p223, %p224
      %p226 = scmp.ne.s32.totalorder %s214, %s215
      %p227 = scmp.eq.s32.totalorder %s39, 3
      %p228 = por %p226, %p227
      %p230 = scmp.ne.s32.totalorder %s215, %s229
      %p231 = scmp.eq.s32.totalorder %s39, 0
      %p232 = por %p230, %p231
      %s234 = sadd.s32 %s233, 1
      %p237 = scmp.eq.s32.totalorder %s33, 3
      %p238 = scmp.ne.s32.totalorder %s233, %s235
      %p239 = scmp.eq.s32.totalorder %s33, 0
      %p240 = por %p238, %p239
      %p241 = scmp.ne.s32.totalorder %s233, %s235
      %p242 = scmp.eq.s32.totalorder %s38, 3
      %p243 = por %p241, %p242
      %p244 = scmp.ne.s32.totalorder %s235, %s236
      %p245 = scmp.eq.s32.totalorder %s38, 0
      %p246 = por %p244, %p245
      %p247 = scmp.ne.s32.totalorder %s235, %s236
      %p248 = scmp.eq.s32.totalorder %s39, 3
      %p249 = por %p247, %p248
      %p251 = scmp.ne.s32.totalorder %s236, %s250
      %p252 = scmp.eq.s32.totalorder %s39, 0
      %p253 = por %p251, %p252
      %s255 = sadd.s32 %s254, 1
      %p258 = scmp.eq.s32.totalorder %s33, 3
      %p259 = scmp.ne.s32.totalorder %s254, %s256
      %p260 = scmp.eq.s32.totalorder %s33, 0
      %p261 = por %p259, %p260
      %p262 = scmp.ne.s32.totalorder %s254, %s256
      %p263 = scmp.eq.s32.totalorder %s38, 3
      %p264 = por %p262, %p263
      %p265 = scmp.ne.s32.totalorder %s256, %s257
      %p266 = scmp.eq.s32.totalorder %s38, 0
      %p267 = por %p265, %p266
      %p268 = scmp.ne.s32.totalorder %s256, %s257
      %p269 = scmp.eq.s32.totalorder %s39, 3
      %p270 = por %p268, %p269
      %p272 = scmp.ne.s32.totalorder %s257, %s271
      %p273 = scmp.eq.s32.totalorder %s39, 0
      %p274 = por %p272, %p273
      %s276 = sadd.s32 %s275, 1
      %p279 = scmp.eq.s32.totalorder %s33, 3
      %p280 = scmp.ne.s32.totalorder %s275, %s277
      %p281 = scmp.eq.s32.totalorder %s33, 0
      %p282 = por %p280, %p281
      %p283 = scmp.ne.s32.totalorder %s275, %s277
      %p284 = scmp.eq.s32.totalorder %s38, 3
      %p285 = por %p283, %p284
      %p286 = scmp.ne.s32.totalorder %s277, %s278
      %p287 = scmp.eq.s32.totalorder %s38, 0
      %p288 = por %p286, %p287
      %p289 = scmp.ne.s32.totalorder %s277, %s278
      %p290 = scmp.eq.s32.totalorder %s39, 3
      %p291 = por %p289, %p290
      %p293 = scmp.ne.s32.totalorder %s278, %s292
      %p294 = scmp.eq.s32.totalorder %s39, 0
      %p295 = por %p293, %p294
      %s296 = ssub.s32 %s41, %s48
      %s297 = ssub.s32 %s40, %s52
      %s298 = sor.u32 %s296, %s297
      %p299 = scmp.eq.s32.totalorder %s298, 0
      %s301 = sadd.s32 %s300, 1
      %s302 = scalar_select %p299, %s300, %s301
      %p305 = pneg %p299
      %p306 = scmp.eq.s32.totalorder %s33, 3
      %p307 = por %p305, %p306
      %p308 = scmp.ne.s32.totalorder %s300, %s303
      %p309 = scmp.eq.s32.totalorder %s33, 0
      %p310 = por %p308, %p309
      %p311 = scmp.ne.s32.totalorder %s300, %s303
      %p312 = scmp.eq.s32.totalorder %s38, 3
      %p313 = por %p311, %p312
      %p314 = scmp.ne.s32.totalorder %s303, %s304
      %p315 = scmp.eq.s32.totalorder %s38, 0
      %p316 = por %p314, %p315
      %p317 = scmp.ne.s32.totalorder %s303, %s304
      %p318 = scmp.eq.s32.totalorder %s39, 3
      %p319 = por %p317, %p318
      %p321 = scmp.ne.s32.totalorder %s304, %s320
      %p322 = scmp.eq.s32.totalorder %s39, 0
      %p323 = por %p321, %p322
      %s324 = ssub.s32 %s41, %s48
      %s325 = ssub.s32 %s40, %s52
      %s326 = sor.u32 %s324, %s325
      %p327 = scmp.eq.s32.totalorder %s326, 0
      %s329 = sadd.s32 %s328, 1
      %s330 = scalar_select %p327, %s328, %s329
      %p333 = pneg %p327
      %p334 = scmp.eq.s32.totalorder %s33, 3
      %p335 = por %p333, %p334
      %p336 = scmp.ne.s32.totalorder %s328, %s331
      %p337 = scmp.eq.s32.totalorder %s33, 0
      %p338 = por %p336, %p337
      %p339 = scmp.ne.s32.totalorder %s328, %s331
      %p340 = scmp.eq.s32.totalorder %s38, 3
      %p341 = por %p339, %p340
      %p342 = scmp.ne.s32.totalorder %s331, %s332
      %p343 = scmp.eq.s32.totalorder %s38, 0
      %p344 = por %p342, %p343
      %p345 = scmp.ne.s32.totalorder %s331, %s332
      %p346 = scmp.eq.s32.totalorder %s39, 3
      %p347 = por %p345, %p346
      %p349 = scmp.ne.s32.totalorder %s332, %s348
      %p350 = scmp.eq.s32.totalorder %s39, 0
      %p351 = por %p349, %p350
      %s352 = ssub.s32 %s41, %s48
      %s353 = ssub.s32 %s40, %s52
      %s354 = sor.u32 %s352, %s353
      %p355 = scmp.eq.s32.totalorder %s354, 0
      %s357 = sadd.s32 %s356, 1
      %s358 = scalar_select %p355, %s356, %s357
      %p361 = pneg %p355
      %p362 = scmp.eq.s32.totalorder %s33, 3
      %p363 = por %p361, %p362
      %p364 = scmp.ne.s32.totalorder %s356, %s359
      %p365 = scmp.eq.s32.totalorder %s33, 0
      %p366 = por %p364, %p365
      %p367 = scmp.ne.s32.totalorder %s356, %s359
      %p368 = scmp.eq.s32.totalorder %s38, 3
      %p369 = por %p367, %p368
      %p370 = scmp.ne.s32.totalorder %s359, %s360
      %p371 = scmp.eq.s32.totalorder %s38, 0
      %p372 = por %p370, %p371
      %p373 = scmp.ne.s32.totalorder %s359, %s360
      %p374 = scmp.eq.s32.totalorder %s39, 3
      %p375 = por %p373, %p374
      %p377 = scmp.ne.s32.totalorder %s360, %s376
      %p378 = scmp.eq.s32.totalorder %s39, 0
      %p379 = por %p377, %p378
      %p380 = scmp.le.s32.totalorder 1, %s33
      %p381 = scmp.lt.s32.totalorder %s33, 5
      %p382 = pnand %p380, %p381
      %p383 = pneg %p382
      // Predicated region
      $region9: #{tpu_custom_call.1} parent=5 // pred_check
        _
      $region10: #{tpu_custom_call.1} parent=5 // pred_check_branch
        %385 = sbr.rel (%p382) target = $region12
      $region11: #{tpu_custom_call.1} parent=5 // pred_region
        %s386 = ssub.s32 %s33, 1
        // Predicated region
        $region13: #{tpu_custom_call.1} parent=11 // pred_check
          %p387 = pneg %p99
        $region14: #{tpu_custom_call.1} parent=11 // pred_check_branch
          %389 = sbr.rel (%p387) target = $region16
        $region15: #{tpu_custom_call.1} parent=11 // pred_region
          %s391 = ssub.s32 128, 128
          %392 = vsyncadd [#allocation7], %s391
          %s393 = smul.addr %s42, 128
          %s394 = scalar_lea.hbm %s1, %s393
          %s396 = sshll.u32 [#allocation6], 4
          %s397 = int_to_ptr.vmem [resolvable:$true] %s396
          %399 = dma.hbm_to_vmem [thread:$0]  %s394, 128, %s397, [#allocation7]
        $region16: #{tpu_custom_call.1} parent=11 // pred_fallthru
          _
        // Predicated region
        $region17: #{tpu_custom_call.1} parent=11 // pred_check
          %p400 = pneg %p120
        $region18: #{tpu_custom_call.1} parent=11 // pred_check_branch
          %402 = sbr.rel (%p400) target = $region20
        $region19: #{tpu_custom_call.1} parent=11 // pred_region
          %s404 = ssub.s32 256, 256
          %405 = vsyncadd [#allocation7], %s404
          %s406 = sshll.u32 [#allocation8], 4
          %s407 = int_to_ptr.vmem [resolvable:$true] %s406
          %412 = dma.hbm_to_vmem [thread:$0]  %s2, 256, %s407, [#allocation7], 128, 128, 8
        $region20: #{tpu_custom_call.1} parent=11 // pred_fallthru
          _
        // Predicated region
        $region21: #{tpu_custom_call.1} parent=11 // pred_check
          %p413 = pneg %p141
        $region22: #{tpu_custom_call.1} parent=11 // pred_check_branch
          %415 = sbr.rel (%p413) target = $region24
        $region23: #{tpu_custom_call.1} parent=11 // pred_region
          %s417 = ssub.s32 2048, 2048
          %418 = vsyncadd [#allocation10], %s417
          %s419 = sshll.u32 [#allocation9], 4
          %s420 = int_to_ptr.vmem [resolvable:$true] %s419
          %425 = dma.hbm_to_vmem [thread:$0]  %s3, 2048, %s420, [#allocation10], 128, 128, 8
        $region24: #{tpu_custom_call.1} parent=11 // pred_fallthru
          _
        // Predicated region
        $region25: #{tpu_custom_call.1} parent=11 // pred_check
          %p426 = pneg %p162
        $region26: #{tpu_custom_call.1} parent=11 // pred_check_branch
          %428 = sbr.rel (%p426) target = $region28
        $region27: #{tpu_custom_call.1} parent=11 // pred_region
          _
        $region28: #{tpu_custom_call.1} parent=11 // pred_fallthru
          _
        // Predicated region
        $region29: #{tpu_custom_call.1} parent=11 // pred_check
          %p429 = pneg %p183
        $region30: #{tpu_custom_call.1} parent=11 // pred_check_branch
          %431 = sbr.rel (%p429) target = $region32
        $region31: #{tpu_custom_call.1} parent=11 // pred_region
          %s433 = ssub.s32 2048, 2048
          %434 = vsyncadd [#allocation10], %s433
          %s435 = sshll.u32 [#allocation11], 4
          %s436 = int_to_ptr.vmem [resolvable:$true] %s435
          %441 = dma.hbm_to_vmem [thread:$0]  %s5, 2048, %s436, [#allocation10], 128, 128, 8
        $region32: #{tpu_custom_call.1} parent=11 // pred_fallthru
          _
        // Predicated region
        $region33: #{tpu_custom_call.1} parent=11 // pred_check
          %p442 = pneg %p204
        $region34: #{tpu_custom_call.1} parent=11 // pred_check_branch
          %444 = sbr.rel (%p442) target = $region36
        $region35: #{tpu_custom_call.1} parent=11 // pred_region
          %s446 = ssub.s32 2048, 2048
          %447 = vsyncadd [#allocation13], %s446
          %s448 = sshll.u32 [#allocation12], 4
          %s449 = int_to_ptr.vmem [resolvable:$true] %s448
          %454 = dma.hbm_to_vmem [thread:$0]  %s6, 2048, %s449, [#allocation13], 128, 128, 8
        $region36: #{tpu_custom_call.1} parent=11 // pred_fallthru
          _
        // Predicated region
        $region37: #{tpu_custom_call.1} parent=11 // pred_check
          %p455 = pneg %p225
        $region38: #{tpu_custom_call.1} parent=11 // pred_check_branch
          %457 = sbr.rel (%p455) target = $region40
        $region39: #{tpu_custom_call.1} parent=11 // pred_region
          _
        $region40: #{tpu_custom_call.1} parent=11 // pred_fallthru
          _
        // Predicated region
        $region41: #{tpu_custom_call.1} parent=11 // pred_check
          %p458 = pneg %p246
        $region42: #{tpu_custom_call.1} parent=11 // pred_check_branch
          %460 = sbr.rel (%p458) target = $region44
        $region43: #{tpu_custom_call.1} parent=11 // pred_region
          %s462 = ssub.s32 2048, 2048
          %463 = vsyncadd [#allocation13], %s462
          %s464 = sshll.u32 [#allocation14], 4
          %s465 = int_to_ptr.vmem [resolvable:$true] %s464
          %470 = dma.hbm_to_vmem [thread:$0]  %s8, 2048, %s465, [#allocation13], 128, 128, 8
        $region44: #{tpu_custom_call.1} parent=11 // pred_fallthru
          _
        // Predicated region
        $region45: #{tpu_custom_call.1} parent=11 // pred_check
          %p471 = pneg %p267
        $region46: #{tpu_custom_call.1} parent=11 // pred_check_branch
          %473 = sbr.rel (%p471) target = $region48
        $region47: #{tpu_custom_call.1} parent=11 // pred_region
          %s475 = ssub.s32 2048, 2048
          %476 = vsyncadd [#allocation16], %s475
          %s477 = sshll.u32 [#allocation15], 4
          %s478 = int_to_ptr.vmem [resolvable:$true] %s477
          %483 = dma.hbm_to_vmem [thread:$0]  %s9, 2048, %s478, [#allocation16], 128, 128, 8
        $region48: #{tpu_custom_call.1} parent=11 // pred_fallthru
          _
        // Predicated region
        $region49: #{tpu_custom_call.1} parent=11 // pred_check
          %p484 = pneg %p288
        $region50: #{tpu_custom_call.1} parent=11 // pred_check_branch
          %486 = sbr.rel (%p484) target = $region52
        $region51: #{tpu_custom_call.1} parent=11 // pred_region
          _
        $region52: #{tpu_custom_call.1} parent=11 // pred_fallthru
          _
      $region12: #{tpu_custom_call.1} parent=5 // pred_fallthru
        _
      %p487 = scmp.lt.s32.totalorder %s33, 4
      // Predicated region
      $region53: #{tpu_custom_call.1} parent=5 // pred_check
        %p488 = pneg %p487
      $region54: #{tpu_custom_call.1} parent=5 // pred_check_branch
        %490 = sbr.rel (%p488) target = $region56
      $region55: #{tpu_custom_call.1} parent=5 // pred_region
        // Predicated region
        $region57: #{tpu_custom_call.1} parent=55 // pred_check
          %p491 = pneg %p67
        $region58: #{tpu_custom_call.1} parent=55 // pred_check_branch
          %493 = sbr.rel (%p491) target = $region60
        $region59: #{tpu_custom_call.1} parent=55 // pred_region
          %s494 = sand.u32 %s57, 1
          %s495 = scalar_lea.sflag [#allocation4], %s494
          %s496 = sand.u32 %s57, 1
          %s497 = smul.addr %s496, 32
          %s498 = scalar_lea.vmem [#allocation3], %s497
          %s499 = smul.u32 4, %s41
          %s501 = ssub.s32 512, 512
          %502 = vsyncadd %s495, %s501
          %s503 = sadd.s32 %s40, %s499
          %s504 = smul.addr %s503, 128
          %s505 = scalar_lea.hbm %s0, %s504
          %s506 = sshll.u32 %s498, 4
          %s507 = int_to_ptr.vmem [resolvable:$true] %s506
          %512 = dma.hbm_to_vmem [thread:$0]  %s505, 512, %s507, %s495, 128, 128, 8
        $region60: #{tpu_custom_call.1} parent=55 // pred_fallthru
          _
      $region56: #{tpu_custom_call.1} parent=5 // pred_fallthru
        _
      %p513 = scmp.le.s32.totalorder 1, %s33
      %p514 = scmp.lt.s32.totalorder %s33, 5
      %p515 = pnand %p513, %p514
      %p516 = pneg %p515
      // Predicated region
      $region61: #{tpu_custom_call.1} parent=5 // pred_check
        _
      $region62: #{tpu_custom_call.1} parent=5 // pred_check_branch
        %518 = sbr.rel (%p515) target = $region64
      $region63: #{tpu_custom_call.1} parent=5 // pred_region
        %s519 = ssub.s32 %s33, 1
        %s520 = sand.u32 %s60, 1
        %s521 = scalar_lea.sflag [#allocation4], %s520
        %s522 = sand.u32 %s60, 1
        %s523 = smul.addr %s522, 32
        %s524 = scalar_lea.vmem [#allocation3], %s523
        // Predicated region
        $region65: #{tpu_custom_call.1} parent=63 // pred_check
          %p525 = pneg %p73
        $region66: #{tpu_custom_call.1} parent=63 // pred_check_branch
          %527 = sbr.rel (%p525) target = $region68
        $region67: #{tpu_custom_call.1} parent=63 // pred_region
          %528 = dma.done %s521, 512
        $region68: #{tpu_custom_call.1} parent=63 // pred_fallthru
          _
        // Predicated region
        $region69: #{tpu_custom_call.1} parent=63 // pred_check
          %p529 = pneg %p99
        $region70: #{tpu_custom_call.1} parent=63 // pred_check_branch
          %531 = sbr.rel (%p529) target = $region72
        $region71: #{tpu_custom_call.1} parent=63 // pred_region
          %532 = dma.done [#allocation7], 128
        $region72: #{tpu_custom_call.1} parent=63 // pred_fallthru
          _
        // Predicated region
        $region73: #{tpu_custom_call.1} parent=63 // pred_check
          %p533 = pneg %p120
        $region74: #{tpu_custom_call.1} parent=63 // pred_check_branch
          %535 = sbr.rel (%p533) target = $region76
        $region75: #{tpu_custom_call.1} parent=63 // pred_region
          %536 = dma.done [#allocation7], 256
        $region76: #{tpu_custom_call.1} parent=63 // pred_fallthru
          _
        // Predicated region
        $region77: #{tpu_custom_call.1} parent=63 // pred_check
          %p537 = pneg %p141
        $region78: #{tpu_custom_call.1} parent=63 // pred_check_branch
          %539 = sbr.rel (%p537) target = $region80
        $region79: #{tpu_custom_call.1} parent=63 // pred_region
          %540 = dma.done [#allocation10], 2048
        $region80: #{tpu_custom_call.1} parent=63 // pred_fallthru
          _
        // Predicated region
        $region81: #{tpu_custom_call.1} parent=63 // pred_check
          %p541 = pneg %p183
        $region82: #{tpu_custom_call.1} parent=63 // pred_check_branch
          %543 = sbr.rel (%p541) target = $region84
        $region83: #{tpu_custom_call.1} parent=63 // pred_region
          %544 = dma.done [#allocation10], 2048
        $region84: #{tpu_custom_call.1} parent=63 // pred_fallthru
          _
        // Predicated region
        $region85: #{tpu_custom_call.1} parent=63 // pred_check
          %p545 = pneg %p204
        $region86: #{tpu_custom_call.1} parent=63 // pred_check_branch
          %547 = sbr.rel (%p545) target = $region88
        $region87: #{tpu_custom_call.1} parent=63 // pred_region
          %548 = dma.done [#allocation13], 2048
        $region88: #{tpu_custom_call.1} parent=63 // pred_fallthru
          _
        // Predicated region
        $region89: #{tpu_custom_call.1} parent=63 // pred_check
          %p549 = pneg %p246
        $region90: #{tpu_custom_call.1} parent=63 // pred_check_branch
          %551 = sbr.rel (%p549) target = $region92
        $region91: #{tpu_custom_call.1} parent=63 // pred_region
          %552 = dma.done [#allocation13], 2048
        $region92: #{tpu_custom_call.1} parent=63 // pred_fallthru
          _
        // Predicated region
        $region93: #{tpu_custom_call.1} parent=63 // pred_check
          %p553 = pneg %p267
        $region94: #{tpu_custom_call.1} parent=63 // pred_check_branch
          %555 = sbr.rel (%p553) target = $region96
        $region95: #{tpu_custom_call.1} parent=63 // pred_region
          %556 = dma.done [#allocation16], 2048
        $region96: #{tpu_custom_call.1} parent=63 // pred_fallthru
          _
        %s557 = sand.u32 %s60, 1
        %s558 = scalar_lea.sflag [#allocation4], %s557
        %s559 = sand.u32 %s60, 1
        %s560 = smul.addr %s559, 32
        %s561 = scalar_lea.vmem [#allocation3], %s560
        %p562 = pneg %p73
        %p563 = pneg %p70
        %p564 = pneg %p99
        %p565 = pneg %p96
        %p566 = pneg %p120
        %p567 = pneg %p117
        %p568 = pneg %p141
        %p569 = pneg %p138
        %p570 = pneg %p162
        %p571 = pneg %p159
        %p572 = pneg %p183
        %p573 = pneg %p180
        %p574 = pneg %p204
        %p575 = pneg %p201
        %p576 = pneg %p225
        %p577 = pneg %p222
        %p578 = pneg %p246
        %p579 = pneg %p243
        %p580 = pneg %p267
        %p581 = pneg %p264
        %p582 = pneg %p288
        %p583 = pneg %p285
        %p584 = pneg %p316
        %p585 = pneg %p313
        %s586 = sand.u32 %s303, 1
        %s587 = scalar_lea.sflag [#allocation5], %s586
        %s588 = sand.u32 %s303, 1
        %s589 = smul.addr %s588, 32
        %s590 = scalar_lea.vmem [#allocation17], %s589
        %p591 = pneg %p344
        %p592 = pneg %p341
        %s593 = sand.u32 %s38, 1
        %s594 = scalar_lea.sflag [#allocation19], %s593
        %s595 = sand.u32 %s331, 1
        %s596 = smul.addr %s595, 32
        %s597 = scalar_lea.vmem [#allocation18], %s596
        %p598 = pneg %p372
        %p599 = pneg %p369
        %s600 = sand.u32 %s38, 1
        %s601 = scalar_lea.sflag [#allocation19], %s600
        %s602 = sand.u32 %s359, 1
        %s603 = smul.addr %s602, 32
        %s604 = scalar_lea.vmem [#allocation20], %s603
        %s605 = smul.u32 4, %s43
        %s606 = smul.u32 4, %s43
        %s607 = smul.u32 4, %s43
        %s608 = smul.u32 4, %s43
        %p609 = scmp.eq.s32.totalorder %s43, 0
        // Predicated region
        $region97: #{tpu_custom_call.1} parent=63 // pred_check
          %p610 = pneg %p609
        $region98: #{tpu_custom_call.1} parent=63 // pred_check_branch
          %612 = sbr.rel (%p610) target = $region100
        $region99: #{tpu_custom_call.1} parent=63 // pred_region
          %v613 = vld [vmem:[#allocation6] sm:$0xff]
          %614 = vst [vmem:[#allocation2] sm:$0xff] %v613
          %v615 = vld [vmem:[#allocation6] sm:$0xff]
          %s616 = scalar_lea.vmem [#allocation2], 8
          %617 = vst [vmem:[%s616] sm:$0xff] %v615
          %v618 = vld [vmem:[#allocation6] sm:$0xff]
          %s619 = scalar_lea.vmem [#allocation2], 16
          %620 = vst [vmem:[%s619] sm:$0xff] %v618
        $region100: #{tpu_custom_call.1} parent=63 // pred_fallthru
          _
        %v621 = vld [vmem:[%s4] sm:$0x1]
        %v622 = vld [vmem:[%s7] sm:$0x1]
        %v623 = vld [vmem:[%s10] sm:$0x1]
        %v624 = vld [vmem:[#allocation2] sm:$0xff]
        %s625 = scalar_lea.vmem [#allocation2], 8
        %v626 = vld [vmem:[%s625] sm:$0xff]
        %s627 = scalar_lea.vmem [#allocation2], 16
        %v628 = vld [vmem:[%s627] sm:$0xff]
        %v629 = vld [vmem:[%s524] sm:$0xff]
        %v630 = vld [vmem:[#allocation8] sm:$0xff]
        %v631 = vld [vmem:[#allocation8 + $0x8] sm:$0xff]
        %v632 = vld [vmem:[#allocation9] sm:$0xff]
        %v633 = vld [vmem:[#allocation9 + $0x8] sm:$0xff]
        %v634 = vld [vmem:[#allocation9 + $0x10] sm:$0xff]
        %v635 = vld [vmem:[#allocation9 + $0x18] sm:$0xff]
        %v636 = vld [vmem:[#allocation9 + $0x20] sm:$0xff]
        %v637 = vld [vmem:[#allocation9 + $0x28] sm:$0xff]
        %v638 = vld [vmem:[#allocation9 + $0x30] sm:$0xff]
        %v639 = vld [vmem:[#allocation9 + $0x38] sm:$0xff]
        %v640 = vld [vmem:[#allocation9 + $0x40] sm:$0xff]
        %v641 = vld [vmem:[#allocation9 + $0x48] sm:$0xff]
        %v642 = vld [vmem:[#allocation9 + $0x50] sm:$0xff]
        %v643 = vld [vmem:[#allocation9 + $0x58] sm:$0xff]
        %v644 = vld [vmem:[#allocation9 + $0x60] sm:$0xff]
        %v645 = vld [vmem:[#allocation9 + $0x68] sm:$0xff]
        %v646 = vld [vmem:[#allocation9 + $0x70] sm:$0xff]
        %v647 = vld [vmem:[#allocation9 + $0x78] sm:$0xff]
        %648 = vmatprep.subr.mxu0 0.0
        %649 = vmatpush1.msra.mxu0 %v632
        %650 = vmatprep.subr.mxu0 0.0
        %651 = vmatpush1.msra.mxu0 %v633
        %652 = vmatprep.subr.mxu0 0.0
        %653 = vmatpush1.msra.mxu0 %v634
        %654 = vmatprep.subr.mxu0 0.0
        %655 = vmatpush1.msra.mxu0 %v635
        %656 = vmatprep.subr.mxu0 0.0
        %657 = vmatpush1.msra.mxu0 %v636
        %658 = vmatprep.subr.mxu0 0.0
        %659 = vmatpush1.msra.mxu0 %v637
        %660 = vmatprep.subr.mxu0 0.0
        %661 = vmatpush1.msra.mxu0 %v638
        %662 = vmatprep.subr.mxu0 0.0
        %663 = vmatpush1.msra.mxu0 %v639
        %664 = vmatprep.subr.mxu0 0.0
        %665 = vmatpush1.msra.mxu0 %v640
        %666 = vmatprep.subr.mxu0 0.0
        %667 = vmatpush1.msra.mxu0 %v641
        %668 = vmatprep.subr.mxu0 0.0
        %669 = vmatpush1.msra.mxu0 %v642
        %670 = vmatprep.subr.mxu0 0.0
        %671 = vmatpush1.msra.mxu0 %v643
        %672 = vmatprep.subr.mxu0 0.0
        %673 = vmatpush1.msra.mxu0 %v644
        %674 = vmatprep.subr.mxu0 0.0
        %675 = vmatpush1.msra.mxu0 %v645
        %676 = vmatprep.subr.mxu0 0.0
        %677 = vmatpush1.msra.mxu0 %v646
        %678 = vmatprep.subr.mxu0 0.0
        %679 = vmatpush1.msra.mxu0 %v647
        %680 = vmatprep.subr.mxu0 0.0
        %681 = vmatpush1.msra.mxu0 0.0
        %682 = vmatprep.subr.mxu0 0.0
        %683 = vmatpush1.msra.mxu0 0.0
        %684 = vmatprep.subr.mxu0 0.0
        %685 = vmatpush1.msra.mxu0 0.0
        %686 = vmatprep.subr.mxu0 0.0
        %687 = vmatpush1.msra.mxu0 0.0
        %688 = vmatprep.subr.mxu0 0.0
        %689 = vmatpush1.msra.mxu0 0.0
        %690 = vmatprep.subr.mxu0 0.0
        %691 = vmatpush1.msra.mxu0 0.0
        %692 = vmatprep.subr.mxu0 0.0
        %693 = vmatpush1.msra.mxu0 0.0
        %694 = vmatprep.subr.mxu0 0.0
        %695 = vmatpush1.msra.mxu0 0.0
        %696 = vmatprep.subr.mxu0 0.0
        %697 = vmatpush1.msra.mxu0 0.0
        %698 = vmatprep.subr.mxu0 0.0
        %699 = vmatpush1.msra.mxu0 0.0
        %700 = vmatprep.subr.mxu0 0.0
        %701 = vmatpush1.msra.mxu0 0.0
        %702 = vmatprep.subr.mxu0 0.0
        %703 = vmatpush1.msra.mxu0 0.0
        %704 = vmatprep.subr.mxu0 0.0
        %705 = vmatpush1.msra.mxu0 0.0
        %706 = vmatprep.subr.mxu0 0.0
        %707 = vmatpush1.msra.mxu0 0.0
        %708 = vmatprep.subr.mxu0 0.0
        %709 = vmatpush1.msra.mxu0 0.0
        %710 = vmatprep.subr.mxu0 0.0
        %711 = vmatpush1.msra.mxu0 0.0
        %712 = vmatprep.mubr.f32.mxu0 0.0
        %713 = vmatmul.mubr.f32.gmra.mrb[0].mxu0 %v624
        %v714 = vpop.f32.mrb[0].mxu0
        %v715 = vadd.f32 0.0, %v714
        %v716 = vpop.f32.mrb[0].mxu0
        %717 = vdwg.mxu0
        %vm718 = vcmask 130048
        %v720 = vsel %vm718, %v629, 0
        %722 = vmatprep.subr.mxu0 0.0
        %723 = vmatpush1.msra.mxu0 %v630
        %724 = vmatprep.subr.mxu0 0.0
        %725 = vmatpush1.msra.mxu0 %v631
        %726 = vmatprep.subr.mxu0 0.0
        %727 = vmatpush1.msra.mxu0 0.0
        %728 = vmatprep.subr.mxu0 0.0
        %729 = vmatpush1.msra.mxu0 0.0
        %730 = vmatprep.subr.mxu0 0.0
        %731 = vmatpush1.msra.mxu0 0.0
        %732 = vmatprep.subr.mxu0 0.0
        %733 = vmatpush1.msra.mxu0 0.0
        %734 = vmatprep.subr.mxu0 0.0
        %735 = vmatpush1.msra.mxu0 0.0
        %736 = vmatprep.subr.mxu0 0.0
        %737 = vmatpush1.msra.mxu0 0.0
        %738 = vmatprep.subr.mxu0 0.0
        %739 = vmatpush1.msra.mxu0 0.0
        %740 = vmatprep.subr.mxu0 0.0
        %741 = vmatpush1.msra.mxu0 0.0
        %742 = vmatprep.subr.mxu0 0.0
        %743 = vmatpush1.msra.mxu0 0.0
        %744 = vmatprep.subr.mxu0 0.0
        %745 = vmatpush1.msra.mxu0 0.0
        %746 = vmatprep.subr.mxu0 0.0
        %747 = vmatpush1.msra.mxu0 0.0
        %748 = vmatprep.subr.mxu0 0.0
        %749 = vmatpush1.msra.mxu0 0.0
        %750 = vmatprep.subr.mxu0 0.0
        %751 = vmatpush1.msra.mxu0 0.0
        %752 = vmatprep.subr.mxu0 0.0
        %753 = vmatpush1.msra.mxu0 0.0
        %754 = vmatprep.subr.mxu0 0.0
        %755 = vmatpush1.msra.mxu0 0.0
        %756 = vmatprep.subr.mxu0 0.0
        %757 = vmatpush1.msra.mxu0 0.0
        %758 = vmatprep.subr.mxu0 0.0
        %759 = vmatpush1.msra.mxu0 0.0
        %760 = vmatprep.subr.mxu0 0.0
        %761 = vmatpush1.msra.mxu0 0.0
        %762 = vmatprep.subr.mxu0 0.0
        %763 = vmatpush1.msra.mxu0 0.0
        %764 = vmatprep.subr.mxu0 0.0
        %765 = vmatpush1.msra.mxu0 0.0
        %766 = vmatprep.subr.mxu0 0.0
        %767 = vmatpush1.msra.mxu0 0.0
        %768 = vmatprep.subr.mxu0 0.0
        %769 = vmatpush1.msra.mxu0 0.0
        %770 = vmatprep.subr.mxu0 0.0
        %771 = vmatpush1.msra.mxu0 0.0
        %772 = vmatprep.subr.mxu0 0.0
        %773 = vmatpush1.msra.mxu0 0.0
        %774 = vmatprep.subr.mxu0 0.0
        %775 = vmatpush1.msra.mxu0 0.0
        %776 = vmatprep.subr.mxu0 0.0
        %777 = vmatpush1.msra.mxu0 0.0
        %778 = vmatprep.subr.mxu0 0.0
        %779 = vmatpush1.msra.mxu0 0.0
        %780 = vmatprep.subr.mxu0 0.0
        %781 = vmatpush1.msra.mxu0 0.0
        %782 = vmatprep.subr.mxu0 0.0
        %783 = vmatpush1.msra.mxu0 0.0
        %784 = vmatprep.subr.mxu0 0.0
        %785 = vmatpush1.msra.mxu0 0.0
        %786 = vmatprep.mubr.f32.mxu0 0.0
        %787 = vmatmul.mubr.f32.gmra.mrb[0].mxu0 %v720
        %v788 = vpop.f32.mrb[0].mxu0
        %v789 = vadd.f32 %v715, %v788
        %v790 = vpop.f32.mrb[0].mxu0
        %791 = vdwg.mxu0
        %v793 = vlaneseq
        %v794 = vshrl.u32 %v793, 7
        %v795 = vsub.s32 0, %v794
        %v796 = vrot.slane %v621, %v795
        %v798 = vadd.f32 %v789, %v796
        %v799 = vmul.f32 %v624, 0.9
        %v800 = vtanh.pop %v798
        %v801 = vmul.f32 %v800, 0.1
        %v802 = vadd.f32 %v799, %v801
        %803 = vst [vmem:[%s590] sm:$0xff] %v802
        %v804 = vld [vmem:[#allocation11] sm:$0xff]
        %v805 = vld [vmem:[#allocation11 + $0x8] sm:$0xff]
        %v806 = vld [vmem:[#allocation11 + $0x10] sm:$0xff]
        %v807 = vld [vmem:[#allocation11 + $0x18] sm:$0xff]
        %v808 = vld [vmem:[#allocation11 + $0x20] sm:$0xff]
        %v809 = vld [vmem:[#allocation11 + $0x28] sm:$0xff]
        %v810 = vld [vmem:[#allocation11 + $0x30] sm:$0xff]
        %v811 = vld [vmem:[#allocation11 + $0x38] sm:$0xff]
        %v812 = vld [vmem:[#allocation11 + $0x40] sm:$0xff]
        %v813 = vld [vmem:[#allocation11 + $0x48] sm:$0xff]
        %v814 = vld [vmem:[#allocation11 + $0x50] sm:$0xff]
        %v815 = vld [vmem:[#allocation11 + $0x58] sm:$0xff]
        %v816 = vld [vmem:[#allocation11 + $0x60] sm:$0xff]
        %v817 = vld [vmem:[#allocation11 + $0x68] sm:$0xff]
        %v818 = vld [vmem:[#allocation11 + $0x70] sm:$0xff]
        %v819 = vld [vmem:[#allocation11 + $0x78] sm:$0xff]
        %v820 = vld [vmem:[#allocation12] sm:$0xff]
        %v821 = vld [vmem:[#allocation12 + $0x8] sm:$0xff]
        %v822 = vld [vmem:[#allocation12 + $0x10] sm:$0xff]
        %v823 = vld [vmem:[#allocation12 + $0x18] sm:$0xff]
        %v824 = vld [vmem:[#allocation12 + $0x20] sm:$0xff]
        %v825 = vld [vmem:[#allocation12 + $0x28] sm:$0xff]
        %v826 = vld [vmem:[#allocation12 + $0x30] sm:$0xff]
        %v827 = vld [vmem:[#allocation12 + $0x38] sm:$0xff]
        %v828 = vld [vmem:[#allocation12 + $0x40] sm:$0xff]
        %v829 = vld [vmem:[#allocation12 + $0x48] sm:$0xff]
        %v830 = vld [vmem:[#allocation12 + $0x50] sm:$0xff]
        %v831 = vld [vmem:[#allocation12 + $0x58] sm:$0xff]
        %v832 = vld [vmem:[#allocation12 + $0x60] sm:$0xff]
        %v833 = vld [vmem:[#allocation12 + $0x68] sm:$0xff]
        %v834 = vld [vmem:[#allocation12 + $0x70] sm:$0xff]
        %v835 = vld [vmem:[#allocation12 + $0x78] sm:$0xff]
        %836 = vmatprep.subr.mxu0 0.0
        %837 = vmatpush1.msra.mxu0 %v820
        %838 = vmatprep.subr.mxu0 0.0
        %839 = vmatpush1.msra.mxu0 %v821
        %840 = vmatprep.subr.mxu0 0.0
        %841 = vmatpush1.msra.mxu0 %v822
        %842 = vmatprep.subr.mxu0 0.0
        %843 = vmatpush1.msra.mxu0 %v823
        %844 = vmatprep.subr.mxu0 0.0
        %845 = vmatpush1.msra.mxu0 %v824
        %846 = vmatprep.subr.mxu0 0.0
        %847 = vmatpush1.msra.mxu0 %v825
        %848 = vmatprep.subr.mxu0 0.0
        %849 = vmatpush1.msra.mxu0 %v826
        %850 = vmatprep.subr.mxu0 0.0
        %851 = vmatpush1.msra.mxu0 %v827
        %852 = vmatprep.subr.mxu0 0.0
        %853 = vmatpush1.msra.mxu0 %v828
        %854 = vmatprep.subr.mxu0 0.0
        %855 = vmatpush1.msra.mxu0 %v829
        %856 = vmatprep.subr.mxu0 0.0
        %857 = vmatpush1.msra.mxu0 %v830
        %858 = vmatprep.subr.mxu0 0.0
        %859 = vmatpush1.msra.mxu0 %v831
        %860 = vmatprep.subr.mxu0 0.0
        %861 = vmatpush1.msra.mxu0 %v832
        %862 = vmatprep.subr.mxu0 0.0
        %863 = vmatpush1.msra.mxu0 %v833
        %864 = vmatprep.subr.mxu0 0.0
        %865 = vmatpush1.msra.mxu0 %v834
        %866 = vmatprep.subr.mxu0 0.0
        %867 = vmatpush1.msra.mxu0 %v835
        %868 = vmatprep.subr.mxu0 0.0
        %869 = vmatpush1.msra.mxu0 0.0
        %870 = vmatprep.subr.mxu0 0.0
        %871 = vmatpush1.msra.mxu0 0.0
        %872 = vmatprep.subr.mxu0 0.0
        %873 = vmatpush1.msra.mxu0 0.0
        %874 = vmatprep.subr.mxu0 0.0
        %875 = vmatpush1.msra.mxu0 0.0
        %876 = vmatprep.subr.mxu0 0.0
        %877 = vmatpush1.msra.mxu0 0.0
        %878 = vmatprep.subr.mxu0 0.0
        %879 = vmatpush1.msra.mxu0 0.0
        %880 = vmatprep.subr.mxu0 0.0
        %881 = vmatpush1.msra.mxu0 0.0
        %882 = vmatprep.subr.mxu0 0.0
        %883 = vmatpush1.msra.mxu0 0.0
        %884 = vmatprep.subr.mxu0 0.0
        %885 = vmatpush1.msra.mxu0 0.0
        %886 = vmatprep.subr.mxu0 0.0
        %887 = vmatpush1.msra.mxu0 0.0
        %888 = vmatprep.subr.mxu0 0.0
        %889 = vmatpush1.msra.mxu0 0.0
        %890 = vmatprep.subr.mxu0 0.0
        %891 = vmatpush1.msra.mxu0 0.0
        %892 = vmatprep.subr.mxu0 0.0
        %893 = vmatpush1.msra.mxu0 0.0
        %894 = vmatprep.subr.mxu0 0.0
        %895 = vmatpush1.msra.mxu0 0.0
        %896 = vmatprep.subr.mxu0 0.0
        %897 = vmatpush1.msra.mxu0 0.0
        %898 = vmatprep.subr.mxu0 0.0
        %899 = vmatpush1.msra.mxu0 0.0
        %900 = vmatprep.mubr.f32.mxu0 0.0
        %901 = vmatmul.mubr.f32.gmra.mrb[0].mxu0 %v626
        %v902 = vpop.f32.mrb[0].mxu0
        %v903 = vadd.f32 0.0, %v902
        %v904 = vpop.f32.mrb[0].mxu0
        %905 = vdwg.mxu0
        %906 = vmatprep.subr.mxu0 0.0
        %907 = vmatpush1.msra.mxu0 %v804
        %908 = vmatprep.subr.mxu0 0.0
        %909 = vmatpush1.msra.mxu0 %v805
        %910 = vmatprep.subr.mxu0 0.0
        %911 = vmatpush1.msra.mxu0 %v806
        %912 = vmatprep.subr.mxu0 0.0
        %913 = vmatpush1.msra.mxu0 %v807
        %914 = vmatprep.subr.mxu0 0.0
        %915 = vmatpush1.msra.mxu0 %v808
        %916 = vmatprep.subr.mxu0 0.0
        %917 = vmatpush1.msra.mxu0 %v809
        %918 = vmatprep.subr.mxu0 0.0
        %919 = vmatpush1.msra.mxu0 %v810
        %920 = vmatprep.subr.mxu0 0.0
        %921 = vmatpush1.msra.mxu0 %v811
        %922 = vmatprep.subr.mxu0 0.0
        %923 = vmatpush1.msra.mxu0 %v812
        %924 = vmatprep.subr.mxu0 0.0
        %925 = vmatpush1.msra.mxu0 %v813
        %926 = vmatprep.subr.mxu0 0.0
        %927 = vmatpush1.msra.mxu0 %v814
        %928 = vmatprep.subr.mxu0 0.0
        %929 = vmatpush1.msra.mxu0 %v815
        %930 = vmatprep.subr.mxu0 0.0
        %931 = vmatpush1.msra.mxu0 %v816
        %932 = vmatprep.subr.mxu0 0.0
        %933 = vmatpush1.msra.mxu0 %v817
        %934 = vmatprep.subr.mxu0 0.0
        %935 = vmatpush1.msra.mxu0 %v818
        %936 = vmatprep.subr.mxu0 0.0
        %937 = vmatpush1.msra.mxu0 %v819
        %938 = vmatprep.subr.mxu0 0.0
        %939 = vmatpush1.msra.mxu0 0.0
        %940 = vmatprep.subr.mxu0 0.0
        %941 = vmatpush1.msra.mxu0 0.0
        %942 = vmatprep.subr.mxu0 0.0
        %943 = vmatpush1.msra.mxu0 0.0
        %944 = vmatprep.subr.mxu0 0.0
        %945 = vmatpush1.msra.mxu0 0.0
        %946 = vmatprep.subr.mxu0 0.0
        %947 = vmatpush1.msra.mxu0 0.0
        %948 = vmatprep.subr.mxu0 0.0
        %949 = vmatpush1.msra.mxu0 0.0
        %950 = vmatprep.subr.mxu0 0.0
        %951 = vmatpush1.msra.mxu0 0.0
        %952 = vmatprep.subr.mxu0 0.0
        %953 = vmatpush1.msra.mxu0 0.0
        %954 = vmatprep.subr.mxu0 0.0
        %955 = vmatpush1.msra.mxu0 0.0
        %956 = vmatprep.subr.mxu0 0.0
        %957 = vmatpush1.msra.mxu0 0.0
        %958 = vmatprep.subr.mxu0 0.0
        %959 = vmatpush1.msra.mxu0 0.0
        %960 = vmatprep.subr.mxu0 0.0
        %961 = vmatpush1.msra.mxu0 0.0
        %962 = vmatprep.subr.mxu0 0.0
        %963 = vmatpush1.msra.mxu0 0.0
        %964 = vmatprep.subr.mxu0 0.0
        %965 = vmatpush1.msra.mxu0 0.0
        %966 = vmatprep.subr.mxu0 0.0
        %967 = vmatpush1.msra.mxu0 0.0
        %968 = vmatprep.subr.mxu0 0.0
        %969 = vmatpush1.msra.mxu0 0.0
        %970 = vmatprep.mubr.f32.mxu0 0.0
        %971 = vmatmul.mubr.f32.gmra.mrb[0].mxu0 %v802
        %v972 = vpop.f32.mrb[0].mxu0
        %v973 = vadd.f32 %v903, %v972
        %v974 = vpop.f32.mrb[0].mxu0
        %975 = vdwg.mxu0
        %v977 = vlaneseq
        %v978 = vshrl.u32 %v977, 7
        %v979 = vsub.s32 0, %v978
        %v980 = vrot.slane %v622, %v979
        %v982 = vadd.f32 %v973, %v980
        %v983 = vmul.f32 %v626, 0.9
        %v984 = vtanh.pop %v982
        %v985 = vmul.f32 %v984, 0.1
        %v986 = vadd.f32 %v983, %v985
        %987 = vst [vmem:[%s597] sm:$0xff] %v986
        %s988 = scalar_lea.vmem %s524, 8 [#allocation3]
        %v989 = vld [vmem:[%s988] sm:$0xff]
        %v990 = vld [vmem:[#allocation8] sm:$0xff]
        %v991 = vld [vmem:[#allocation8 + $0x8] sm:$0xff]
        %v992 = vld [vmem:[#allocation9] sm:$0xff]
        %v993 = vld [vmem:[#allocation9 + $0x8] sm:$0xff]
        %v994 = vld [vmem:[#allocation9 + $0x10] sm:$0xff]
        %v995 = vld [vmem:[#allocation9 + $0x18] sm:$0xff]
        %v996 = vld [vmem:[#allocation9 + $0x20] sm:$0xff]
        %v997 = vld [vmem:[#allocation9 + $0x28] sm:$0xff]
        %v998 = vld [vmem:[#allocation9 + $0x30] sm:$0xff]
        %v999 = vld [vmem:[#allocation9 + $0x38] sm:$0xff]
        %v1000 = vld [vmem:[#allocation9 + $0x40] sm:$0xff]
        %v1001 = vld [vmem:[#allocation9 + $0x48] sm:$0xff]
        %v1002 = vld [vmem:[#allocation9 + $0x50] sm:$0xff]
        %v1003 = vld [vmem:[#allocation9 + $0x58] sm:$0xff]
        %v1004 = vld [vmem:[#allocation9 + $0x60] sm:$0xff]
        %v1005 = vld [vmem:[#allocation9 + $0x68] sm:$0xff]
        %v1006 = vld [vmem:[#allocation9 + $0x70] sm:$0xff]
        %v1007 = vld [vmem:[#allocation9 + $0x78] sm:$0xff]
        %1008 = vmatprep.subr.mxu0 0.0
        %1009 = vmatpush1.msra.mxu0 %v992
        %1010 = vmatprep.subr.mxu0 0.0
        %1011 = vmatpush1.msra.mxu0 %v993
        %1012 = vmatprep.subr.mxu0 0.0
        %1013 = vmatpush1.msra.mxu0 %v994
        %1014 = vmatprep.subr.mxu0 0.0
        %1015 = vmatpush1.msra.mxu0 %v995
        %1016 = vmatprep.subr.mxu0 0.0
        %1017 = vmatpush1.msra.mxu0 %v996
        %1018 = vmatprep.subr.mxu0 0.0
        %1019 = vmatpush1.msra.mxu0 %v997
        %1020 = vmatprep.subr.mxu0 0.0
        %1021 = vmatpush1.msra.mxu0 %v998
        %1022 = vmatprep.subr.mxu0 0.0
        %1023 = vmatpush1.msra.mxu0 %v999
        %1024 = vmatprep.subr.mxu0 0.0
        %1025 = vmatpush1.msra.mxu0 %v1000
        %1026 = vmatprep.subr.mxu0 0.0
        %1027 = vmatpush1.msra.mxu0 %v1001
        %1028 = vmatprep.subr.mxu0 0.0
        %1029 = vmatpush1.msra.mxu0 %v1002
        %1030 = vmatprep.subr.mxu0 0.0
        %1031 = vmatpush1.msra.mxu0 %v1003
        %1032 = vmatprep.subr.mxu0 0.0
        %1033 = vmatpush1.msra.mxu0 %v1004
        %1034 = vmatprep.subr.mxu0 0.0
        %1035 = vmatpush1.msra.mxu0 %v1005
        %1036 = vmatprep.subr.mxu0 0.0
        %1037 = vmatpush1.msra.mxu0 %v1006
        %1038 = vmatprep.subr.mxu0 0.0
        %1039 = vmatpush1.msra.mxu0 %v1007
        %1040 = vmatprep.subr.mxu0 0.0
        %1041 = vmatpush1.msra.mxu0 0.0
        %1042 = vmatprep.subr.mxu0 0.0
        %1043 = vmatpush1.msra.mxu0 0.0
        %1044 = vmatprep.subr.mxu0 0.0
        %1045 = vmatpush1.msra.mxu0 0.0
        %1046 = vmatprep.subr.mxu0 0.0
        %1047 = vmatpush1.msra.mxu0 0.0
        %1048 = vmatprep.subr.mxu0 0.0
        %1049 = vmatpush1.msra.mxu0 0.0
        %1050 = vmatprep.subr.mxu0 0.0
        %1051 = vmatpush1.msra.mxu0 0.0
        %1052 = vmatprep.subr.mxu0 0.0
        %1053 = vmatpush1.msra.mxu0 0.0
        %1054 = vmatprep.subr.mxu0 0.0
        %1055 = vmatpush1.msra.mxu0 0.0
        %1056 = vmatprep.subr.mxu0 0.0
        %1057 = vmatpush1.msra.mxu0 0.0
        %1058 = vmatprep.subr.mxu0 0.0
        %1059 = vmatpush1.msra.mxu0 0.0
        %1060 = vmatprep.subr.mxu0 0.0
        %1061 = vmatpush1.msra.mxu0 0.0
        %1062 = vmatprep.subr.mxu0 0.0
        %1063 = vmatpush1.msra.mxu0 0.0
        %1064 = vmatprep.subr.mxu0 0.0
        %1065 = vmatpush1.msra.mxu0 0.0
        %1066 = vmatprep.subr.mxu0 0.0
        %1067 = vmatpush1.msra.mxu0 0.0
        %1068 = vmatprep.subr.mxu0 0.0
        %1069 = vmatpush1.msra.mxu0 0.0
        %1070 = vmatprep.subr.mxu0 0.0
        %1071 = vmatpush1.msra.mxu0 0.0
        %1072 = vmatprep.mubr.f32.mxu0 0.0
        %1073 = vmatmul.mubr.f32.gmra.mrb[0].mxu0 %v802
        %v1074 = vpop.f32.mrb[0].mxu0
        %v1075 = vadd.f32 0.0, %v1074
        %v1076 = vpop.f32.mrb[0].mxu0
        %1077 = vdwg.mxu0
        %v1079 = vsel %vm718, %v989, 0
        %1081 = vmatprep.subr.mxu0 0.0
        %1082 = vmatpush1.msra.mxu0 %v990
        %1083 = vmatprep.subr.mxu0 0.0
        %1084 = vmatpush1.msra.mxu0 %v991
        %1085 = vmatprep.subr.mxu0 0.0
        %1086 = vmatpush1.msra.mxu0 0.0
        %1087 = vmatprep.subr.mxu0 0.0
        %1088 = vmatpush1.msra.mxu0 0.0
        %1089 = vmatprep.subr.mxu0 0.0
        %1090 = vmatpush1.msra.mxu0 0.0
        %1091 = vmatprep.subr.mxu0 0.0
        %1092 = vmatpush1.msra.mxu0 0.0
        %1093 = vmatprep.subr.mxu0 0.0
        %1094 = vmatpush1.msra.mxu0 0.0
        %1095 = vmatprep.subr.mxu0 0.0
        %1096 = vmatpush1.msra.mxu0 0.0
        %1097 = vmatprep.subr.mxu0 0.0
        %1098 = vmatpush1.msra.mxu0 0.0
        %1099 = vmatprep.subr.mxu0 0.0
        %1100 = vmatpush1.msra.mxu0 0.0
        %1101 = vmatprep.subr.mxu0 0.0
        %1102 = vmatpush1.msra.mxu0 0.0
        %1103 = vmatprep.subr.mxu0 0.0
        %1104 = vmatpush1.msra.mxu0 0.0
        %1105 = vmatprep.subr.mxu0 0.0
        %1106 = vmatpush1.msra.mxu0 0.0
        %1107 = vmatprep.subr.mxu0 0.0
        %1108 = vmatpush1.msra.mxu0 0.0
        %1109 = vmatprep.subr.mxu0 0.0
        %1110 = vmatpush1.msra.mxu0 0.0
        %1111 = vmatprep.subr.mxu0 0.0
        %1112 = vmatpush1.msra.mxu0 0.0
        %1113 = vmatprep.subr.mxu0 0.0
        %1114 = vmatpush1.msra.mxu0 0.0
        %1115 = vmatprep.subr.mxu0 0.0
        %1116 = vmatpush1.msra.mxu0 0.0
        %1117 = vmatprep.subr.mxu0 0.0
        %1118 = vmatpush1.msra.mxu0 0.0
        %1119 = vmatprep.subr.mxu0 0.0
        %1120 = vmatpush1.msra.mxu0 0.0
        %1121 = vmatprep.subr.mxu0 0.0
        %1122 = vmatpush1.msra.mxu0 0.0
        %1123 = vmatprep.subr.mxu0 0.0
        %1124 = vmatpush1.msra.mxu0 0.0
        %1125 = vmatprep.subr.mxu0 0.0
        %1126 = vmatpush1.msra.mxu0 0.0
        %1127 = vmatprep.subr.mxu0 0.0
        %1128 = vmatpush1.msra.mxu0 0.0
        %1129 = vmatprep.subr.mxu0 0.0
        %1130 = vmatpush1.msra.mxu0 0.0
        %1131 = vmatprep.subr.mxu0 0.0
        %1132 = vmatpush1.msra.mxu0 0.0
        %1133 = vmatprep.subr.mxu0 0.0
        %1134 = vmatpush1.msra.mxu0 0.0
        %1135 = vmatprep.subr.mxu0 0.0
        %1136 = vmatpush1.msra.mxu0 0.0
        %1137 = vmatprep.subr.mxu0 0.0
        %1138 = vmatpush1.msra.mxu0 0.0
        %1139 = vmatprep.subr.mxu0 0.0
        %1140 = vmatpush1.msra.mxu0 0.0
        %1141 = vmatprep.subr.mxu0 0.0
        %1142 = vmatpush1.msra.mxu0 0.0
        %1143 = vmatprep.subr.mxu0 0.0
        %1144 = vmatpush1.msra.mxu0 0.0
        %1145 = vmatprep.mubr.f32.mxu0 0.0
        %1146 = vmatmul.mubr.f32.gmra.mrb[0].mxu0 %v1079
        %v1147 = vpop.f32.mrb[0].mxu0
        %v1148 = vadd.f32 %v1075, %v1147
        %v1149 = vpop.f32.mrb[0].mxu0
        %1150 = vdwg.mxu0
        %v1151 = vadd.f32 %v1148, %v796
        %v1152 = vmul.f32 %v802, 0.9
        %v1153 = vtanh.pop %v1151
        %v1154 = vmul.f32 %v1153, 0.1
        %v1155 = vadd.f32 %v1152, %v1154
        %s1156 = scalar_lea.vmem %s590, 8 [#allocation17]
        %1157 = vst [vmem:[%s1156] sm:$0xff] %v1155
        %v1158 = vld [vmem:[#allocation14] sm:$0xff]
        %v1159 = vld [vmem:[#allocation14 + $0x8] sm:$0xff]
        %v1160 = vld [vmem:[#allocation14 + $0x10] sm:$0xff]
        %v1161 = vld [vmem:[#allocation14 + $0x18] sm:$0xff]
        %v1162 = vld [vmem:[#allocation14 + $0x20] sm:$0xff]
        %v1163 = vld [vmem:[#allocation14 + $0x28] sm:$0xff]
        %v1164 = vld [vmem:[#allocation14 + $0x30] sm:$0xff]
        %v1165 = vld [vmem:[#allocation14 + $0x38] sm:$0xff]
        %v1166 = vld [vmem:[#allocation14 + $0x40] sm:$0xff]
        %v1167 = vld [vmem:[#allocation14 + $0x48] sm:$0xff]
        %v1168 = vld [vmem:[#allocation14 + $0x50] sm:$0xff]
        %v1169 = vld [vmem:[#allocation14 + $0x58] sm:$0xff]
        %v1170 = vld [vmem:[#allocation14 + $0x60] sm:$0xff]
        %v1171 = vld [vmem:[#allocation14 + $0x68] sm:$0xff]
        %v1172 = vld [vmem:[#allocation14 + $0x70] sm:$0xff]
        %v1173 = vld [vmem:[#allocation14 + $0x78] sm:$0xff]
        %v1174 = vld [vmem:[#allocation15] sm:$0xff]
        %v1175 = vld [vmem:[#allocation15 + $0x8] sm:$0xff]
        %v1176 = vld [vmem:[#allocation15 + $0x10] sm:$0xff]
        %v1177 = vld [vmem:[#allocation15 + $0x18] sm:$0xff]
        %v1178 = vld [vmem:[#allocation15 + $0x20] sm:$0xff]
        %v1179 = vld [vmem:[#allocation15 + $0x28] sm:$0xff]
        %v1180 = vld [vmem:[#allocation15 + $0x30] sm:$0xff]
        %v1181 = vld [vmem:[#allocation15 + $0x38] sm:$0xff]
        %v1182 = vld [vmem:[#allocation15 + $0x40] sm:$0xff]
        %v1183 = vld [vmem:[#allocation15 + $0x48] sm:$0xff]
        %v1184 = vld [vmem:[#allocation15 + $0x50] sm:$0xff]
        %v1185 = vld [vmem:[#allocation15 + $0x58] sm:$0xff]
        %v1186 = vld [vmem:[#allocation15 + $0x60] sm:$0xff]
        %v1187 = vld [vmem:[#allocation15 + $0x68] sm:$0xff]
        %v1188 = vld [vmem:[#allocation15 + $0x70] sm:$0xff]
        %v1189 = vld [vmem:[#allocation15 + $0x78] sm:$0xff]
        %1190 = vmatprep.subr.mxu0 0.0
        %1191 = vmatpush1.msra.mxu0 %v1174
        %1192 = vmatprep.subr.mxu0 0.0
        %1193 = vmatpush1.msra.mxu0 %v1175
        %1194 = vmatprep.subr.mxu0 0.0
        %1195 = vmatpush1.msra.mxu0 %v1176
        %1196 = vmatprep.subr.mxu0 0.0
        %1197 = vmatpush1.msra.mxu0 %v1177
        %1198 = vmatprep.subr.mxu0 0.0
        %1199 = vmatpush1.msra.mxu0 %v1178
        %1200 = vmatprep.subr.mxu0 0.0
        %1201 = vmatpush1.msra.mxu0 %v1179
        %1202 = vmatprep.subr.mxu0 0.0
        %1203 = vmatpush1.msra.mxu0 %v1180
        %1204 = vmatprep.subr.mxu0 0.0
        %1205 = vmatpush1.msra.mxu0 %v1181
        %1206 = vmatprep.subr.mxu0 0.0
        %1207 = vmatpush1.msra.mxu0 %v1182
        %1208 = vmatprep.subr.mxu0 0.0
        %1209 = vmatpush1.msra.mxu0 %v1183
        %1210 = vmatprep.subr.mxu0 0.0
        %1211 = vmatpush1.msra.mxu0 %v1184
        %1212 = vmatprep.subr.mxu0 0.0
        %1213 = vmatpush1.msra.mxu0 %v1185
        %1214 = vmatprep.subr.mxu0 0.0
        %1215 = vmatpush1.msra.mxu0 %v1186
        %1216 = vmatprep.subr.mxu0 0.0
        %1217 = vmatpush1.msra.mxu0 %v1187
        %1218 = vmatprep.subr.mxu0 0.0
        %1219 = vmatpush1.msra.mxu0 %v1188
        %1220 = vmatprep.subr.mxu0 0.0
        %1221 = vmatpush1.msra.mxu0 %v1189
        %1222 = vmatprep.subr.mxu0 0.0
        %1223 = vmatpush1.msra.mxu0 0.0
        %1224 = vmatprep.subr.mxu0 0.0
        %1225 = vmatpush1.msra.mxu0 0.0
        %1226 = vmatprep.subr.mxu0 0.0
        %1227 = vmatpush1.msra.mxu0 0.0
        %1228 = vmatprep.subr.mxu0 0.0
        %1229 = vmatpush1.msra.mxu0 0.0
        %1230 = vmatprep.subr.mxu0 0.0
        %1231 = vmatpush1.msra.mxu0 0.0
        %1232 = vmatprep.subr.mxu0 0.0
        %1233 = vmatpush1.msra.mxu0 0.0
        %1234 = vmatprep.subr.mxu0 0.0
        %1235 = vmatpush1.msra.mxu0 0.0
        %1236 = vmatprep.subr.mxu0 0.0
        %1237 = vmatpush1.msra.mxu0 0.0
        %1238 = vmatprep.subr.mxu0 0.0
        %1239 = vmatpush1.msra.mxu0 0.0
        %1240 = vmatprep.subr.mxu0 0.0
        %1241 = vmatpush1.msra.mxu0 0.0
        %1242 = vmatprep.subr.mxu0 0.0
        %1243 = vmatpush1.msra.mxu0 0.0
        %1244 = vmatprep.subr.mxu0 0.0
        %1245 = vmatpush1.msra.mxu0 0.0
        %1246 = vmatprep.subr.mxu0 0.0
        %1247 = vmatpush1.msra.mxu0 0.0
        %1248 = vmatprep.subr.mxu0 0.0
        %1249 = vmatpush1.msra.mxu0 0.0
        %1250 = vmatprep.subr.mxu0 0.0
        %1251 = vmatpush1.msra.mxu0 0.0
        %1252 = vmatprep.subr.mxu0 0.0
        %1253 = vmatpush1.msra.mxu0 0.0
        %1254 = vmatprep.mubr.f32.mxu0 0.0
        %1255 = vmatmul.mubr.f32.gmra.mrb[0].mxu0 %v628
        %v1256 = vpop.f32.mrb[0].mxu0
        %v1257 = vadd.f32 0.0, %v1256
        %v1258 = vpop.f32.mrb[0].mxu0
        %1259 = vdwg.mxu0
        %1260 = vmatprep.subr.mxu0 0.0
        %1261 = vmatpush1.msra.mxu0 %v1158
        %1262 = vmatprep.subr.mxu0 0.0
        %1263 = vmatpush1.msra.mxu0 %v1159
        %1264 = vmatprep.subr.mxu0 0.0
        %1265 = vmatpush1.msra.mxu0 %v1160
        %1266 = vmatprep.subr.mxu0 0.0
        %1267 = vmatpush1.msra.mxu0 %v1161
        %1268 = vmatprep.subr.mxu0 0.0
        %1269 = vmatpush1.msra.mxu0 %v1162
        %1270 = vmatprep.subr.mxu0 0.0
        %1271 = vmatpush1.msra.mxu0 %v1163
        %1272 = vmatprep.subr.mxu0 0.0
        %1273 = vmatpush1.msra.mxu0 %v1164
        %1274 = vmatprep.subr.mxu0 0.0
        %1275 = vmatpush1.msra.mxu0 %v1165
        %1276 = vmatprep.subr.mxu0 0.0
        %1277 = vmatpush1.msra.mxu0 %v1166
        %1278 = vmatprep.subr.mxu0 0.0
        %1279 = vmatpush1.msra.mxu0 %v1167
        %1280 = vmatprep.subr.mxu0 0.0
        %1281 = vmatpush1.msra.mxu0 %v1168
        %1282 = vmatprep.subr.mxu0 0.0
        %1283 = vmatpush1.msra.mxu0 %v1169
        %1284 = vmatprep.subr.mxu0 0.0
        %1285 = vmatpush1.msra.mxu0 %v1170
        %1286 = vmatprep.subr.mxu0 0.0
        %1287 = vmatpush1.msra.mxu0 %v1171
        %1288 = vmatprep.subr.mxu0 0.0
        %1289 = vmatpush1.msra.mxu0 %v1172
        %1290 = vmatprep.subr.mxu0 0.0
        %1291 = vmatpush1.msra.mxu0 %v1173
        %1292 = vmatprep.subr.mxu0 0.0
        %1293 = vmatpush1.msra.mxu0 0.0
        %1294 = vmatprep.subr.mxu0 0.0
        %1295 = vmatpush1.msra.mxu0 0.0
        %1296 = vmatprep.subr.mxu0 0.0
        %1297 = vmatpush1.msra.mxu0 0.0
        %1298 = vmatprep.subr.mxu0 0.0
        %1299 = vmatpush1.msra.mxu0 0.0
        %1300 = vmatprep.subr.mxu0 0.0
        %1301 = vmatpush1.msra.mxu0 0.0
        %1302 = vmatprep.subr.mxu0 0.0
        %1303 = vmatpush1.msra.mxu0 0.0
        %1304 = vmatprep.subr.mxu0 0.0
        %1305 = vmatpush1.msra.mxu0 0.0
        %1306 = vmatprep.subr.mxu0 0.0
        %1307 = vmatpush1.msra.mxu0 0.0
        %1308 = vmatprep.subr.mxu0 0.0
        %1309 = vmatpush1.msra.mxu0 0.0
        %1310 = vmatprep.subr.mxu0 0.0
        %1311 = vmatpush1.msra.mxu0 0.0
        %1312 = vmatprep.subr.mxu0 0.0
        %1313 = vmatpush1.msra.mxu0 0.0
        %1314 = vmatprep.subr.mxu0 0.0
        %1315 = vmatpush1.msra.mxu0 0.0
        %1316 = vmatprep.subr.mxu0 0.0
        %1317 = vmatpush1.msra.mxu0 0.0
        %1318 = vmatprep.subr.mxu0 0.0
        %1319 = vmatpush1.msra.mxu0 0.0
        %1320 = vmatprep.subr.mxu0 0.0
        %1321 = vmatpush1.msra.mxu0 0.0
        %1322 = vmatprep.subr.mxu0 0.0
        %1323 = vmatpush1.msra.mxu0 0.0
        %1324 = vmatprep.mubr.f32.mxu0 0.0
        %1325 = vmatmul.mubr.f32.gmra.mrb[0].mxu0 %v986
        %v1326 = vpop.f32.mrb[0].mxu0
        %v1327 = vadd.f32 %v1257, %v1326
        %v1328 = vpop.f32.mrb[0].mxu0
        %1329 = vdwg.mxu0
        %v1331 = vlaneseq
        %v1332 = vshrl.u32 %v1331, 7
        %v1333 = vsub.s32 0, %v1332
        %v1334 = vrot.slane %v623, %v1333
        %v1336 = vadd.f32 %v1327, %v1334
        %v1337 = vmul.f32 %v628, 0.9
        %v1338 = vtanh.pop %v1336
        %v1339 = vmul.f32 %v1338, 0.1
        %v1340 = vadd.f32 %v1337, %v1339
        %1341 = vst [vmem:[%s604] sm:$0xff] %v1340
        %v1342 = vld [vmem:[#allocation11] sm:$0xff]
        %v1343 = vld [vmem:[#allocation11 + $0x8] sm:$0xff]
        %v1344 = vld [vmem:[#allocation11 + $0x10] sm:$0xff]
        %v1345 = vld [vmem:[#allocation11 + $0x18] sm:$0xff]
        %v1346 = vld [vmem:[#allocation11 + $0x20] sm:$0xff]
        %v1347 = vld [vmem:[#allocation11 + $0x28] sm:$0xff]
        %v1348 = vld [vmem:[#allocation11 + $0x30] sm:$0xff]
        %v1349 = vld [vmem:[#allocation11 + $0x38] sm:$0xff]
        %v1350 = vld [vmem:[#allocation11 + $0x40] sm:$0xff]
        %v1351 = vld [vmem:[#allocation11 + $0x48] sm:$0xff]
        %v1352 = vld [vmem:[#allocation11 + $0x50] sm:$0xff]
        %v1353 = vld [vmem:[#allocation11 + $0x58] sm:$0xff]
        %v1354 = vld [vmem:[#allocation11 + $0x60] sm:$0xff]
        %v1355 = vld [vmem:[#allocation11 + $0x68] sm:$0xff]
        %v1356 = vld [vmem:[#allocation11 + $0x70] sm:$0xff]
        %v1357 = vld [vmem:[#allocation11 + $0x78] sm:$0xff]
        %v1358 = vld [vmem:[#allocation12] sm:$0xff]
        %v1359 = vld [vmem:[#allocation12 + $0x8] sm:$0xff]
        %v1360 = vld [vmem:[#allocation12 + $0x10] sm:$0xff]
        %v1361 = vld [vmem:[#allocation12 + $0x18] sm:$0xff]
        %v1362 = vld [vmem:[#allocation12 + $0x20] sm:$0xff]
        %v1363 = vld [vmem:[#allocation12 + $0x28] sm:$0xff]
        %v1364 = vld [vmem:[#allocation12 + $0x30] sm:$0xff]
        %v1365 = vld [vmem:[#allocation12 + $0x38] sm:$0xff]
        %v1366 = vld [vmem:[#allocation12 + $0x40] sm:$0xff]
        %v1367 = vld [vmem:[#allocation12 + $0x48] sm:$0xff]
        %v1368 = vld [vmem:[#allocation12 + $0x50] sm:$0xff]
        %v1369 = vld [vmem:[#allocation12 + $0x58] sm:$0xff]
        %v1370 = vld [vmem:[#allocation12 + $0x60] sm:$0xff]
        %v1371 = vld [vmem:[#allocation12 + $0x68] sm:$0xff]
        %v1372 = vld [vmem:[#allocation12 + $0x70] sm:$0xff]
        %v1373 = vld [vmem:[#allocation12 + $0x78] sm:$0xff]
        %1374 = vmatprep.subr.mxu0 0.0
        %1375 = vmatpush1.msra.mxu0 %v1358
        %1376 = vmatprep.subr.mxu0 0.0
        %1377 = vmatpush1.msra.mxu0 %v1359
        %1378 = vmatprep.subr.mxu0 0.0
        %1379 = vmatpush1.msra.mxu0 %v1360
        %1380 = vmatprep.subr.mxu0 0.0
        %1381 = vmatpush1.msra.mxu0 %v1361
        %1382 = vmatprep.subr.mxu0 0.0
        %1383 = vmatpush1.msra.mxu0 %v1362
        %1384 = vmatprep.subr.mxu0 0.0
        %1385 = vmatpush1.msra.mxu0 %v1363
        %1386 = vmatprep.subr.mxu0 0.0
        %1387 = vmatpush1.msra.mxu0 %v1364
        %1388 = vmatprep.subr.mxu0 0.0
        %1389 = vmatpush1.msra.mxu0 %v1365
        %1390 = vmatprep.subr.mxu0 0.0
        %1391 = vmatpush1.msra.mxu0 %v1366
        %1392 = vmatprep.subr.mxu0 0.0
        %1393 = vmatpush1.msra.mxu0 %v1367
        %1394 = vmatprep.subr.mxu0 0.0
        %1395 = vmatpush1.msra.mxu0 %v1368
        %1396 = vmatprep.subr.mxu0 0.0
        %1397 = vmatpush1.msra.mxu0 %v1369
        %1398 = vmatprep.subr.mxu0 0.0
        %1399 = vmatpush1.msra.mxu0 %v1370
        %1400 = vmatprep.subr.mxu0 0.0
        %1401 = vmatpush1.msra.mxu0 %v1371
        %1402 = vmatprep.subr.mxu0 0.0
        %1403 = vmatpush1.msra.mxu0 %v1372
        %1404 = vmatprep.subr.mxu0 0.0
        %1405 = vmatpush1.msra.mxu0 %v1373
        %1406 = vmatprep.subr.mxu0 0.0
        %1407 = vmatpush1.msra.mxu0 0.0
        %1408 = vmatprep.subr.mxu0 0.0
        %1409 = vmatpush1.msra.mxu0 0.0
        %1410 = vmatprep.subr.mxu0 0.0
        %1411 = vmatpush1.msra.mxu0 0.0
        %1412 = vmatprep.subr.mxu0 0.0
        %1413 = vmatpush1.msra.mxu0 0.0
        %1414 = vmatprep.subr.mxu0 0.0
        %1415 = vmatpush1.msra.mxu0 0.0
        %1416 = vmatprep.subr.mxu0 0.0
        %1417 = vmatpush1.msra.mxu0 0.0
        %1418 = vmatprep.subr.mxu0 0.0
        %1419 = vmatpush1.msra.mxu0 0.0
        %1420 = vmatprep.subr.mxu0 0.0
        %1421 = vmatpush1.msra.mxu0 0.0
        %1422 = vmatprep.subr.mxu0 0.0
        %1423 = vmatpush1.msra.mxu0 0.0
        %1424 = vmatprep.subr.mxu0 0.0
        %1425 = vmatpush1.msra.mxu0 0.0
        %1426 = vmatprep.subr.mxu0 0.0
        %1427 = vmatpush1.msra.mxu0 0.0
        %1428 = vmatprep.subr.mxu0 0.0
        %1429 = vmatpush1.msra.mxu0 0.0
        %1430 = vmatprep.subr.mxu0 0.0
        %1431 = vmatpush1.msra.mxu0 0.0
        %1432 = vmatprep.subr.mxu0 0.0
        %1433 = vmatpush1.msra.mxu0 0.0
        %1434 = vmatprep.subr.mxu0 0.0
        %1435 = vmatpush1.msra.mxu0 0.0
        %1436 = vmatprep.subr.mxu0 0.0
        %1437 = vmatpush1.msra.mxu0 0.0
        %1438 = vmatprep.mubr.f32.mxu0 0.0
        %1439 = vmatmul.mubr.f32.gmra.mrb[0].mxu0 %v986
        %v1440 = vpop.f32.mrb[0].mxu0
        %v1441 = vadd.f32 0.0, %v1440
        %v1442 = vpop.f32.mrb[0].mxu0
        %1443 = vdwg.mxu0
        %1444 = vmatprep.subr.mxu0 0.0
        %1445 = vmatpush1.msra.mxu0 %v1342
        %1446 = vmatprep.subr.mxu0 0.0
        %1447 = vmatpush1.msra.mxu0 %v1343
        %1448 = vmatprep.subr.mxu0 0.0
        %1449 = vmatpush1.msra.mxu0 %v1344
        %1450 = vmatprep.subr.mxu0 0.0
        %1451 = vmatpush1.msra.mxu0 %v1345
        %1452 = vmatprep.subr.mxu0 0.0
        %1453 = vmatpush1.msra.mxu0 %v1346
        %1454 = vmatprep.subr.mxu0 0.0
        %1455 = vmatpush1.msra.mxu0 %v1347
        %1456 = vmatprep.subr.mxu0 0.0
        %1457 = vmatpush1.msra.mxu0 %v1348
        %1458 = vmatprep.subr.mxu0 0.0
        %1459 = vmatpush1.msra.mxu0 %v1349
        %1460 = vmatprep.subr.mxu0 0.0
        %1461 = vmatpush1.msra.mxu0 %v1350
        %1462 = vmatprep.subr.mxu0 0.0
        %1463 = vmatpush1.msra.mxu0 %v1351
        %1464 = vmatprep.subr.mxu0 0.0
        %1465 = vmatpush1.msra.mxu0 %v1352
        %1466 = vmatprep.subr.mxu0 0.0
        %1467 = vmatpush1.msra.mxu0 %v1353
        %1468 = vmatprep.subr.mxu0 0.0
        %1469 = vmatpush1.msra.mxu0 %v1354
        %1470 = vmatprep.subr.mxu0 0.0
        %1471 = vmatpush1.msra.mxu0 %v1355
        %1472 = vmatprep.subr.mxu0 0.0
        %1473 = vmatpush1.msra.mxu0 %v1356
        %1474 = vmatprep.subr.mxu0 0.0
        %1475 = vmatpush1.msra.mxu0 %v1357
        %1476 = vmatprep.subr.mxu0 0.0
        %1477 = vmatpush1.msra.mxu0 0.0
        %1478 = vmatprep.subr.mxu0 0.0
        %1479 = vmatpush1.msra.mxu0 0.0
        %1480 = vmatprep.subr.mxu0 0.0
        %1481 = vmatpush1.msra.mxu0 0.0
        %1482 = vmatprep.subr.mxu0 0.0
        %1483 = vmatpush1.msra.mxu0 0.0
        %1484 = vmatprep.subr.mxu0 0.0
        %1485 = vmatpush1.msra.mxu0 0.0
        %1486 = vmatprep.subr.mxu0 0.0
        %1487 = vmatpush1.msra.mxu0 0.0
        %1488 = vmatprep.subr.mxu0 0.0
        %1489 = vmatpush1.msra.mxu0 0.0
        %1490 = vmatprep.subr.mxu0 0.0
        %1491 = vmatpush1.msra.mxu0 0.0
        %1492 = vmatprep.subr.mxu0 0.0
        %1493 = vmatpush1.msra.mxu0 0.0
        %1494 = vmatprep.subr.mxu0 0.0
        %1495 = vmatpush1.msra.mxu0 0.0
        %1496 = vmatprep.subr.mxu0 0.0
        %1497 = vmatpush1.msra.mxu0 0.0
        %1498 = vmatprep.subr.mxu0 0.0
        %1499 = vmatpush1.msra.mxu0 0.0
        %1500 = vmatprep.subr.mxu0 0.0
        %1501 = vmatpush1.msra.mxu0 0.0
        %1502 = vmatprep.subr.mxu0 0.0
        %1503 = vmatpush1.msra.mxu0 0.0
        %1504 = vmatprep.subr.mxu0 0.0
        %1505 = vmatpush1.msra.mxu0 0.0
        %1506 = vmatprep.subr.mxu0 0.0
        %1507 = vmatpush1.msra.mxu0 0.0
        %1508 = vmatprep.mubr.f32.mxu0 0.0
        %1509 = vmatmul.mubr.f32.gmra.mrb[0].mxu0 %v1155
        %v1510 = vpop.f32.mrb[0].mxu0
        %v1511 = vadd.f32 %v1441, %v1510
        %v1512 = vpop.f32.mrb[0].mxu0
        %1513 = vdwg.mxu0
        %v1514 = vadd.f32 %v1511, %v980
        %v1515 = vmul.f32 %v986, 0.9
        %v1516 = vtanh.pop %v1514
        %v1517 = vmul.f32 %v1516, 0.1
        %v1518 = vadd.f32 %v1515, %v1517
        %s1519 = scalar_lea.vmem %s597, 8 [#allocation18]
        %1520 = vst [vmem:[%s1519] sm:$0xff] %v1518
        %s1521 = scalar_lea.vmem %s524, 16 [#allocation3]
        %v1522 = vld [vmem:[%s1521] sm:$0xff]
        %v1523 = vld [vmem:[#allocation8] sm:$0xff]
        %v1524 = vld [vmem:[#allocation8 + $0x8] sm:$0xff]
        %v1525 = vld [vmem:[#allocation9] sm:$0xff]
        %v1526 = vld [vmem:[#allocation9 + $0x8] sm:$0xff]
        %v1527 = vld [vmem:[#allocation9 + $0x10] sm:$0xff]
        %v1528 = vld [vmem:[#allocation9 + $0x18] sm:$0xff]
        %v1529 = vld [vmem:[#allocation9 + $0x20] sm:$0xff]
        %v1530 = vld [vmem:[#allocation9 + $0x28] sm:$0xff]
        %v1531 = vld [vmem:[#allocation9 + $0x30] sm:$0xff]
        %v1532 = vld [vmem:[#allocation9 + $0x38] sm:$0xff]
        %v1533 = vld [vmem:[#allocation9 + $0x40] sm:$0xff]
        %v1534 = vld [vmem:[#allocation9 + $0x48] sm:$0xff]
        %v1535 = vld [vmem:[#allocation9 + $0x50] sm:$0xff]
        %v1536 = vld [vmem:[#allocation9 + $0x58] sm:$0xff]
        %v1537 = vld [vmem:[#allocation9 + $0x60] sm:$0xff]
        %v1538 = vld [vmem:[#allocation9 + $0x68] sm:$0xff]
        %v1539 = vld [vmem:[#allocation9 + $0x70] sm:$0xff]
        %v1540 = vld [vmem:[#allocation9 + $0x78] sm:$0xff]
        %1541 = vmatprep.subr.mxu0 0.0
        %1542 = vmatpush1.msra.mxu0 %v1525
        %1543 = vmatprep.subr.mxu0 0.0
        %1544 = vmatpush1.msra.mxu0 %v1526
        %1545 = vmatprep.subr.mxu0 0.0
        %1546 = vmatpush1.msra.mxu0 %v1527
        %1547 = vmatprep.subr.mxu0 0.0
        %1548 = vmatpush1.msra.mxu0 %v1528
        %1549 = vmatprep.subr.mxu0 0.0
        %1550 = vmatpush1.msra.mxu0 %v1529
        %1551 = vmatprep.subr.mxu0 0.0
        %1552 = vmatpush1.msra.mxu0 %v1530
        %1553 = vmatprep.subr.mxu0 0.0
        %1554 = vmatpush1.msra.mxu0 %v1531
        %1555 = vmatprep.subr.mxu0 0.0
        %1556 = vmatpush1.msra.mxu0 %v1532
        %1557 = vmatprep.subr.mxu0 0.0
        %1558 = vmatpush1.msra.mxu0 %v1533
        %1559 = vmatprep.subr.mxu0 0.0
        %1560 = vmatpush1.msra.mxu0 %v1534
        %1561 = vmatprep.subr.mxu0 0.0
        %1562 = vmatpush1.msra.mxu0 %v1535
        %1563 = vmatprep.subr.mxu0 0.0
        %1564 = vmatpush1.msra.mxu0 %v1536
        %1565 = vmatprep.subr.mxu0 0.0
        %1566 = vmatpush1.msra.mxu0 %v1537
        %1567 = vmatprep.subr.mxu0 0.0
        %1568 = vmatpush1.msra.mxu0 %v1538
        %1569 = vmatprep.subr.mxu0 0.0
        %1570 = vmatpush1.msra.mxu0 %v1539
        %1571 = vmatprep.subr.mxu0 0.0
        %1572 = vmatpush1.msra.mxu0 %v1540
        %1573 = vmatprep.subr.mxu0 0.0
        %1574 = vmatpush1.msra.mxu0 0.0
        %1575 = vmatprep.subr.mxu0 0.0
        %1576 = vmatpush1.msra.mxu0 0.0
        %1577 = vmatprep.subr.mxu0 0.0
        %1578 = vmatpush1.msra.mxu0 0.0
        %1579 = vmatprep.subr.mxu0 0.0
        %1580 = vmatpush1.msra.mxu0 0.0
        %1581 = vmatprep.subr.mxu0 0.0
        %1582 = vmatpush1.msra.mxu0 0.0
        %1583 = vmatprep.subr.mxu0 0.0
        %1584 = vmatpush1.msra.mxu0 0.0
        %1585 = vmatprep.subr.mxu0 0.0
        %1586 = vmatpush1.msra.mxu0 0.0
        %1587 = vmatprep.subr.mxu0 0.0
        %1588 = vmatpush1.msra.mxu0 0.0
        %1589 = vmatprep.subr.mxu0 0.0
        %1590 = vmatpush1.msra.mxu0 0.0
        %1591 = vmatprep.subr.mxu0 0.0
        %1592 = vmatpush1.msra.mxu0 0.0
        %1593 = vmatprep.subr.mxu0 0.0
        %1594 = vmatpush1.msra.mxu0 0.0
        %1595 = vmatprep.subr.mxu0 0.0
        %1596 = vmatpush1.msra.mxu0 0.0
        %1597 = vmatprep.subr.mxu0 0.0
        %1598 = vmatpush1.msra.mxu0 0.0
        %1599 = vmatprep.subr.mxu0 0.0
        %1600 = vmatpush1.msra.mxu0 0.0
        %1601 = vmatprep.subr.mxu0 0.0
        %1602 = vmatpush1.msra.mxu0 0.0
        %1603 = vmatprep.subr.mxu0 0.0
        %1604 = vmatpush1.msra.mxu0 0.0
        %1605 = vmatprep.mubr.f32.mxu0 0.0
        %1606 = vmatmul.mubr.f32.gmra.mrb[0].mxu0 %v1155
        %v1607 = vpop.f32.mrb[0].mxu0
        %v1608 = vadd.f32 0.0, %v1607
        %v1609 = vpop.f32.mrb[0].mxu0
        %1610 = vdwg.mxu0
        %v1612 = vsel %vm718, %v1522, 0
        %1614 = vmatprep.subr.mxu0 0.0
        %1615 = vmatpush1.msra.mxu0 %v1523
        %1616 = vmatprep.subr.mxu0 0.0
        %1617 = vmatpush1.msra.mxu0 %v1524
        %1618 = vmatprep.subr.mxu0 0.0
        %1619 = vmatpush1.msra.mxu0 0.0
        %1620 = vmatprep.subr.mxu0 0.0
        %1621 = vmatpush1.msra.mxu0 0.0
        %1622 = vmatprep.subr.mxu0 0.0
        %1623 = vmatpush1.msra.mxu0 0.0
        %1624 = vmatprep.subr.mxu0 0.0
        %1625 = vmatpush1.msra.mxu0 0.0
        %1626 = vmatprep.subr.mxu0 0.0
        %1627 = vmatpush1.msra.mxu0 0.0
        %1628 = vmatprep.subr.mxu0 0.0
        %1629 = vmatpush1.msra.mxu0 0.0
        %1630 = vmatprep.subr.mxu0 0.0
        %1631 = vmatpush1.msra.mxu0 0.0
        %1632 = vmatprep.subr.mxu0 0.0
        %1633 = vmatpush1.msra.mxu0 0.0
        %1634 = vmatprep.subr.mxu0 0.0
        %1635 = vmatpush1.msra.mxu0 0.0
        %1636 = vmatprep.subr.mxu0 0.0
        %1637 = vmatpush1.msra.mxu0 0.0
        %1638 = vmatprep.subr.mxu0 0.0
        %1639 = vmatpush1.msra.mxu0 0.0
        %1640 = vmatprep.subr.mxu0 0.0
        %1641 = vmatpush1.msra.mxu0 0.0
        %1642 = vmatprep.subr.mxu0 0.0
        %1643 = vmatpush1.msra.mxu0 0.0
        %1644 = vmatprep.subr.mxu0 0.0
        %1645 = vmatpush1.msra.mxu0 0.0
        %1646 = vmatprep.subr.mxu0 0.0
        %1647 = vmatpush1.msra.mxu0 0.0
        %1648 = vmatprep.subr.mxu0 0.0
        %1649 = vmatpush1.msra.mxu0 0.0
        %1650 = vmatprep.subr.mxu0 0.0
        %1651 = vmatpush1.msra.mxu0 0.0
        %1652 = vmatprep.subr.mxu0 0.0
        %1653 = vmatpush1.msra.mxu0 0.0
        %1654 = vmatprep.subr.mxu0 0.0
        %1655 = vmatpush1.msra.mxu0 0.0
        %1656 = vmatprep.subr.mxu0 0.0
        %1657 = vmatpush1.msra.mxu0 0.0
        %1658 = vmatprep.subr.mxu0 0.0
        %1659 = vmatpush1.msra.mxu0 0.0
        %1660 = vmatprep.subr.mxu0 0.0
        %1661 = vmatpush1.msra.mxu0 0.0
        %1662 = vmatprep.subr.mxu0 0.0
        %1663 = vmatpush1.msra.mxu0 0.0
        %1664 = vmatprep.subr.mxu0 0.0
        %1665 = vmatpush1.msra.mxu0 0.0
        %1666 = vmatprep.subr.mxu0 0.0
        %1667 = vmatpush1.msra.mxu0 0.0
        %1668 = vmatprep.subr.mxu0 0.0
        %1669 = vmatpush1.msra.mxu0 0.0
        %1670 = vmatprep.subr.mxu0 0.0
        %1671 = vmatpush1.msra.mxu0 0.0
        %1672 = vmatprep.subr.mxu0 0.0
        %1673 = vmatpush1.msra.mxu0 0.0
        %1674 = vmatprep.subr.mxu0 0.0
        %1675 = vmatpush1.msra.mxu0 0.0
        %1676 = vmatprep.subr.mxu0 0.0
        %1677 = vmatpush1.msra.mxu0 0.0
        %1678 = vmatprep.mubr.f32.mxu0 0.0
        %1679 = vmatmul.mubr.f32.gmra.mrb[0].mxu0 %v1612
        %v1680 = vpop.f32.mrb[0].mxu0
        %v1681 = vadd.f32 %v1608, %v1680
        %v1682 = vpop.f32.mrb[0].mxu0
        %1683 = vdwg.mxu0
        %v1684 = vadd.f32 %v1681, %v796
        %v1685 = vmul.f32 %v1155, 0.9
        %v1686 = vtanh.pop %v1684
        %v1687 = vmul.f32 %v1686, 0.1
        %v1688 = vadd.f32 %v1685, %v1687
        %s1689 = scalar_lea.vmem %s590, 16 [#allocation17]
        %1690 = vst [vmem:[%s1689] sm:$0xff] %v1688
        %v1691 = vld [vmem:[#allocation14] sm:$0xff]
        %v1692 = vld [vmem:[#allocation14 + $0x8] sm:$0xff]
        %v1693 = vld [vmem:[#allocation14 + $0x10] sm:$0xff]
        %v1694 = vld [vmem:[#allocation14 + $0x18] sm:$0xff]
        %v1695 = vld [vmem:[#allocation14 + $0x20] sm:$0xff]
        %v1696 = vld [vmem:[#allocation14 + $0x28] sm:$0xff]
        %v1697 = vld [vmem:[#allocation14 + $0x30] sm:$0xff]
        %v1698 = vld [vmem:[#allocation14 + $0x38] sm:$0xff]
        %v1699 = vld [vmem:[#allocation14 + $0x40] sm:$0xff]
        %v1700 = vld [vmem:[#allocation14 + $0x48] sm:$0xff]
        %v1701 = vld [vmem:[#allocation14 + $0x50] sm:$0xff]
        %v1702 = vld [vmem:[#allocation14 + $0x58] sm:$0xff]
        %v1703 = vld [vmem:[#allocation14 + $0x60] sm:$0xff]
        %v1704 = vld [vmem:[#allocation14 + $0x68] sm:$0xff]
        %v1705 = vld [vmem:[#allocation14 + $0x70] sm:$0xff]
        %v1706 = vld [vmem:[#allocation14 + $0x78] sm:$0xff]
        %v1707 = vld [vmem:[#allocation15] sm:$0xff]
        %v1708 = vld [vmem:[#allocation15 + $0x8] sm:$0xff]
        %v1709 = vld [vmem:[#allocation15 + $0x10] sm:$0xff]
        %v1710 = vld [vmem:[#allocation15 + $0x18] sm:$0xff]
        %v1711 = vld [vmem:[#allocation15 + $0x20] sm:$0xff]
        %v1712 = vld [vmem:[#allocation15 + $0x28] sm:$0xff]
        %v1713 = vld [vmem:[#allocation15 + $0x30] sm:$0xff]
        %v1714 = vld [vmem:[#allocation15 + $0x38] sm:$0xff]
        %v1715 = vld [vmem:[#allocation15 + $0x40] sm:$0xff]
        %v1716 = vld [vmem:[#allocation15 + $0x48] sm:$0xff]
        %v1717 = vld [vmem:[#allocation15 + $0x50] sm:$0xff]
        %v1718 = vld [vmem:[#allocation15 + $0x58] sm:$0xff]
        %v1719 = vld [vmem:[#allocation15 + $0x60] sm:$0xff]
        %v1720 = vld [vmem:[#allocation15 + $0x68] sm:$0xff]
        %v1721 = vld [vmem:[#allocation15 + $0x70] sm:$0xff]
        %v1722 = vld [vmem:[#allocation15 + $0x78] sm:$0xff]
        %1723 = vmatprep.subr.mxu0 0.0
        %1724 = vmatpush1.msra.mxu0 %v1707
        %1725 = vmatprep.subr.mxu0 0.0
        %1726 = vmatpush1.msra.mxu0 %v1708
        %1727 = vmatprep.subr.mxu0 0.0
        %1728 = vmatpush1.msra.mxu0 %v1709
        %1729 = vmatprep.subr.mxu0 0.0
        %1730 = vmatpush1.msra.mxu0 %v1710
        %1731 = vmatprep.subr.mxu0 0.0
        %1732 = vmatpush1.msra.mxu0 %v1711
        %1733 = vmatprep.subr.mxu0 0.0
        %1734 = vmatpush1.msra.mxu0 %v1712
        %1735 = vmatprep.subr.mxu0 0.0
        %1736 = vmatpush1.msra.mxu0 %v1713
        %1737 = vmatprep.subr.mxu0 0.0
        %1738 = vmatpush1.msra.mxu0 %v1714
        %1739 = vmatprep.subr.mxu0 0.0
        %1740 = vmatpush1.msra.mxu0 %v1715
        %1741 = vmatprep.subr.mxu0 0.0
        %1742 = vmatpush1.msra.mxu0 %v1716
        %1743 = vmatprep.subr.mxu0 0.0
        %1744 = vmatpush1.msra.mxu0 %v1717
        %1745 = vmatprep.subr.mxu0 0.0
        %1746 = vmatpush1.msra.mxu0 %v1718
        %1747 = vmatprep.subr.mxu0 0.0
        %1748 = vmatpush1.msra.mxu0 %v1719
        %1749 = vmatprep.subr.mxu0 0.0
        %1750 = vmatpush1.msra.mxu0 %v1720
        %1751 = vmatprep.subr.mxu0 0.0
        %1752 = vmatpush1.msra.mxu0 %v1721
        %1753 = vmatprep.subr.mxu0 0.0
        %1754 = vmatpush1.msra.mxu0 %v1722
        %1755 = vmatprep.subr.mxu0 0.0
        %1756 = vmatpush1.msra.mxu0 0.0
        %1757 = vmatprep.subr.mxu0 0.0
        %1758 = vmatpush1.msra.mxu0 0.0
        %1759 = vmatprep.subr.mxu0 0.0
        %1760 = vmatpush1.msra.mxu0 0.0
        %1761 = vmatprep.subr.mxu0 0.0
        %1762 = vmatpush1.msra.mxu0 0.0
        %1763 = vmatprep.subr.mxu0 0.0
        %1764 = vmatpush1.msra.mxu0 0.0
        %1765 = vmatprep.subr.mxu0 0.0
        %1766 = vmatpush1.msra.mxu0 0.0
        %1767 = vmatprep.subr.mxu0 0.0
        %1768 = vmatpush1.msra.mxu0 0.0
        %1769 = vmatprep.subr.mxu0 0.0
        %1770 = vmatpush1.msra.mxu0 0.0
        %1771 = vmatprep.subr.mxu0 0.0
        %1772 = vmatpush1.msra.mxu0 0.0
        %1773 = vmatprep.subr.mxu0 0.0
        %1774 = vmatpush1.msra.mxu0 0.0
        %1775 = vmatprep.subr.mxu0 0.0
        %1776 = vmatpush1.msra.mxu0 0.0
        %1777 = vmatprep.subr.mxu0 0.0
        %1778 = vmatpush1.msra.mxu0 0.0
        %1779 = vmatprep.subr.mxu0 0.0
        %1780 = vmatpush1.msra.mxu0 0.0
        %1781 = vmatprep.subr.mxu0 0.0
        %1782 = vmatpush1.msra.mxu0 0.0
        %1783 = vmatprep.subr.mxu0 0.0
        %1784 = vmatpush1.msra.mxu0 0.0
        %1785 = vmatprep.subr.mxu0 0.0
        %1786 = vmatpush1.msra.mxu0 0.0
        %1787 = vmatprep.mubr.f32.mxu0 0.0
        %1788 = vmatmul.mubr.f32.gmra.mrb[0].mxu0 %v1340
        %v1789 = vpop.f32.mrb[0].mxu0
        %v1790 = vadd.f32 0.0, %v1789
        %v1791 = vpop.f32.mrb[0].mxu0
        %1792 = vdwg.mxu0
        %1793 = vmatprep.subr.mxu0 0.0
        %1794 = vmatpush1.msra.mxu0 %v1691
        %1795 = vmatprep.subr.mxu0 0.0
        %1796 = vmatpush1.msra.mxu0 %v1692
        %1797 = vmatprep.subr.mxu0 0.0
        %1798 = vmatpush1.msra.mxu0 %v1693
        %1799 = vmatprep.subr.mxu0 0.0
        %1800 = vmatpush1.msra.mxu0 %v1694
        %1801 = vmatprep.subr.mxu0 0.0
        %1802 = vmatpush1.msra.mxu0 %v1695
        %1803 = vmatprep.subr.mxu0 0.0
        %1804 = vmatpush1.msra.mxu0 %v1696
        %1805 = vmatprep.subr.mxu0 0.0
        %1806 = vmatpush1.msra.mxu0 %v1697
        %1807 = vmatprep.subr.mxu0 0.0
        %1808 = vmatpush1.msra.mxu0 %v1698
        %1809 = vmatprep.subr.mxu0 0.0
        %1810 = vmatpush1.msra.mxu0 %v1699
        %1811 = vmatprep.subr.mxu0 0.0
        %1812 = vmatpush1.msra.mxu0 %v1700
        %1813 = vmatprep.subr.mxu0 0.0
        %1814 = vmatpush1.msra.mxu0 %v1701
        %1815 = vmatprep.subr.mxu0 0.0
        %1816 = vmatpush1.msra.mxu0 %v1702
        %1817 = vmatprep.subr.mxu0 0.0
        %1818 = vmatpush1.msra.mxu0 %v1703
        %1819 = vmatprep.subr.mxu0 0.0
        %1820 = vmatpush1.msra.mxu0 %v1704
        %1821 = vmatprep.subr.mxu0 0.0
        %1822 = vmatpush1.msra.mxu0 %v1705
        %1823 = vmatprep.subr.mxu0 0.0
        %1824 = vmatpush1.msra.mxu0 %v1706
        %1825 = vmatprep.subr.mxu0 0.0
        %1826 = vmatpush1.msra.mxu0 0.0
        %1827 = vmatprep.subr.mxu0 0.0
        %1828 = vmatpush1.msra.mxu0 0.0
        %1829 = vmatprep.subr.mxu0 0.0
        %1830 = vmatpush1.msra.mxu0 0.0
        %1831 = vmatprep.subr.mxu0 0.0
        %1832 = vmatpush1.msra.mxu0 0.0
        %1833 = vmatprep.subr.mxu0 0.0
        %1834 = vmatpush1.msra.mxu0 0.0
        %1835 = vmatprep.subr.mxu0 0.0
        %1836 = vmatpush1.msra.mxu0 0.0
        %1837 = vmatprep.subr.mxu0 0.0
        %1838 = vmatpush1.msra.mxu0 0.0
        %1839 = vmatprep.subr.mxu0 0.0
        %1840 = vmatpush1.msra.mxu0 0.0
        %1841 = vmatprep.subr.mxu0 0.0
        %1842 = vmatpush1.msra.mxu0 0.0
        %1843 = vmatprep.subr.mxu0 0.0
        %1844 = vmatpush1.msra.mxu0 0.0
        %1845 = vmatprep.subr.mxu0 0.0
        %1846 = vmatpush1.msra.mxu0 0.0
        %1847 = vmatprep.subr.mxu0 0.0
        %1848 = vmatpush1.msra.mxu0 0.0
        %1849 = vmatprep.subr.mxu0 0.0
        %1850 = vmatpush1.msra.mxu0 0.0
        %1851 = vmatprep.subr.mxu0 0.0
        %1852 = vmatpush1.msra.mxu0 0.0
        %1853 = vmatprep.subr.mxu0 0.0
        %1854 = vmatpush1.msra.mxu0 0.0
        %1855 = vmatprep.subr.mxu0 0.0
        %1856 = vmatpush1.msra.mxu0 0.0
        %1857 = vmatprep.mubr.f32.mxu0 0.0
        %1858 = vmatmul.mubr.f32.gmra.mrb[0].mxu0 %v1518
        %v1859 = vpop.f32.mrb[0].mxu0
        %v1860 = vadd.f32 %v1790, %v1859
        %v1861 = vpop.f32.mrb[0].mxu0
        %1862 = vdwg.mxu0
        %v1863 = vadd.f32 %v1860, %v1334
        %v1864 = vmul.f32 %v1340, 0.9
        %v1865 = vtanh.pop %v1863
        %v1866 = vmul.f32 %v1865, 0.1
        %v1867 = vadd.f32 %v1864, %v1866
        %s1868 = scalar_lea.vmem %s604, 8 [#allocation20]
        %1869 = vst [vmem:[%s1868] sm:$0xff] %v1867
        %v1870 = vld [vmem:[#allocation11] sm:$0xff]
        %v1871 = vld [vmem:[#allocation11 + $0x8] sm:$0xff]
        %v1872 = vld [vmem:[#allocation11 + $0x10] sm:$0xff]
        %v1873 = vld [vmem:[#allocation11 + $0x18] sm:$0xff]
        %v1874 = vld [vmem:[#allocation11 + $0x20] sm:$0xff]
        %v1875 = vld [vmem:[#allocation11 + $0x28] sm:$0xff]
        %v1876 = vld [vmem:[#allocation11 + $0x30] sm:$0xff]
        %v1877 = vld [vmem:[#allocation11 + $0x38] sm:$0xff]
        %v1878 = vld [vmem:[#allocation11 + $0x40] sm:$0xff]
        %v1879 = vld [vmem:[#allocation11 + $0x48] sm:$0xff]
        %v1880 = vld [vmem:[#allocation11 + $0x50] sm:$0xff]
        %v1881 = vld [vmem:[#allocation11 + $0x58] sm:$0xff]
        %v1882 = vld [vmem:[#allocation11 + $0x60] sm:$0xff]
        %v1883 = vld [vmem:[#allocation11 + $0x68] sm:$0xff]
        %v1884 = vld [vmem:[#allocation11 + $0x70] sm:$0xff]
        %v1885 = vld [vmem:[#allocation11 + $0x78] sm:$0xff]
        %v1886 = vld [vmem:[#allocation12] sm:$0xff]
        %v1887 = vld [vmem:[#allocation12 + $0x8] sm:$0xff]
        %v1888 = vld [vmem:[#allocation12 + $0x10] sm:$0xff]
        %v1889 = vld [vmem:[#allocation12 + $0x18] sm:$0xff]
        %v1890 = vld [vmem:[#allocation12 + $0x20] sm:$0xff]
        %v1891 = vld [vmem:[#allocation12 + $0x28] sm:$0xff]
        %v1892 = vld [vmem:[#allocation12 + $0x30] sm:$0xff]
        %v1893 = vld [vmem:[#allocation12 + $0x38] sm:$0xff]
        %v1894 = vld [vmem:[#allocation12 + $0x40] sm:$0xff]
        %v1895 = vld [vmem:[#allocation12 + $0x48] sm:$0xff]
        %v1896 = vld [vmem:[#allocation12 + $0x50] sm:$0xff]
        %v1897 = vld [vmem:[#allocation12 + $0x58] sm:$0xff]
        %v1898 = vld [vmem:[#allocation12 + $0x60] sm:$0xff]
        %v1899 = vld [vmem:[#allocation12 + $0x68] sm:$0xff]
        %v1900 = vld [vmem:[#allocation12 + $0x70] sm:$0xff]
        %v1901 = vld [vmem:[#allocation12 + $0x78] sm:$0xff]
        %1902 = vmatprep.subr.mxu0 0.0
        %1903 = vmatpush1.msra.mxu0 %v1886
        %1904 = vmatprep.subr.mxu0 0.0
        %1905 = vmatpush1.msra.mxu0 %v1887
        %1906 = vmatprep.subr.mxu0 0.0
        %1907 = vmatpush1.msra.mxu0 %v1888
        %1908 = vmatprep.subr.mxu0 0.0
        %1909 = vmatpush1.msra.mxu0 %v1889
        %1910 = vmatprep.subr.mxu0 0.0
        %1911 = vmatpush1.msra.mxu0 %v1890
        %1912 = vmatprep.subr.mxu0 0.0
        %1913 = vmatpush1.msra.mxu0 %v1891
        %1914 = vmatprep.subr.mxu0 0.0
        %1915 = vmatpush1.msra.mxu0 %v1892
        %1916 = vmatprep.subr.mxu0 0.0
        %1917 = vmatpush1.msra.mxu0 %v1893
        %1918 = vmatprep.subr.mxu0 0.0
        %1919 = vmatpush1.msra.mxu0 %v1894
        %1920 = vmatprep.subr.mxu0 0.0
        %1921 = vmatpush1.msra.mxu0 %v1895
        %1922 = vmatprep.subr.mxu0 0.0
        %1923 = vmatpush1.msra.mxu0 %v1896
        %1924 = vmatprep.subr.mxu0 0.0
        %1925 = vmatpush1.msra.mxu0 %v1897
        %1926 = vmatprep.subr.mxu0 0.0
        %1927 = vmatpush1.msra.mxu0 %v1898
        %1928 = vmatprep.subr.mxu0 0.0
        %1929 = vmatpush1.msra.mxu0 %v1899
        %1930 = vmatprep.subr.mxu0 0.0
        %1931 = vmatpush1.msra.mxu0 %v1900
        %1932 = vmatprep.subr.mxu0 0.0
        %1933 = vmatpush1.msra.mxu0 %v1901
        %1934 = vmatprep.subr.mxu0 0.0
        %1935 = vmatpush1.msra.mxu0 0.0
        %1936 = vmatprep.subr.mxu0 0.0
        %1937 = vmatpush1.msra.mxu0 0.0
        %1938 = vmatprep.subr.mxu0 0.0
        %1939 = vmatpush1.msra.mxu0 0.0
        %1940 = vmatprep.subr.mxu0 0.0
        %1941 = vmatpush1.msra.mxu0 0.0
        %1942 = vmatprep.subr.mxu0 0.0
        %1943 = vmatpush1.msra.mxu0 0.0
        %1944 = vmatprep.subr.mxu0 0.0
        %1945 = vmatpush1.msra.mxu0 0.0
        %1946 = vmatprep.subr.mxu0 0.0
        %1947 = vmatpush1.msra.mxu0 0.0
        %1948 = vmatprep.subr.mxu0 0.0
        %1949 = vmatpush1.msra.mxu0 0.0
        %1950 = vmatprep.subr.mxu0 0.0
        %1951 = vmatpush1.msra.mxu0 0.0
        %1952 = vmatprep.subr.mxu0 0.0
        %1953 = vmatpush1.msra.mxu0 0.0
        %1954 = vmatprep.subr.mxu0 0.0
        %1955 = vmatpush1.msra.mxu0 0.0
        %1956 = vmatprep.subr.mxu0 0.0
        %1957 = vmatpush1.msra.mxu0 0.0
        %1958 = vmatprep.subr.mxu0 0.0
        %1959 = vmatpush1.msra.mxu0 0.0
        %1960 = vmatprep.subr.mxu0 0.0
        %1961 = vmatpush1.msra.mxu0 0.0
        %1962 = vmatprep.subr.mxu0 0.0
        %1963 = vmatpush1.msra.mxu0 0.0
        %1964 = vmatprep.subr.mxu0 0.0
        %1965 = vmatpush1.msra.mxu0 0.0
        %1966 = vmatprep.mubr.f32.mxu0 0.0
        %1967 = vmatmul.mubr.f32.gmra.mrb[0].mxu0 %v1518
        %v1968 = vpop.f32.mrb[0].mxu0
        %v1969 = vadd.f32 0.0, %v1968
        %v1970 = vpop.f32.mrb[0].mxu0
        %1971 = vdwg.mxu0
        %1972 = vmatprep.subr.mxu0 0.0
        %1973 = vmatpush1.msra.mxu0 %v1870
        %1974 = vmatprep.subr.mxu0 0.0
        %1975 = vmatpush1.msra.mxu0 %v1871
        %1976 = vmatprep.subr.mxu0 0.0
        %1977 = vmatpush1.msra.mxu0 %v1872
        %1978 = vmatprep.subr.mxu0 0.0
        %1979 = vmatpush1.msra.mxu0 %v1873
        %1980 = vmatprep.subr.mxu0 0.0
        %1981 = vmatpush1.msra.mxu0 %v1874
        %1982 = vmatprep.subr.mxu0 0.0
        %1983 = vmatpush1.msra.mxu0 %v1875
        %1984 = vmatprep.subr.mxu0 0.0
        %1985 = vmatpush1.msra.mxu0 %v1876
        %1986 = vmatprep.subr.mxu0 0.0
        %1987 = vmatpush1.msra.mxu0 %v1877
        %1988 = vmatprep.subr.mxu0 0.0
        %1989 = vmatpush1.msra.mxu0 %v1878
        %1990 = vmatprep.subr.mxu0 0.0
        %1991 = vmatpush1.msra.mxu0 %v1879
        %1992 = vmatprep.subr.mxu0 0.0
        %1993 = vmatpush1.msra.mxu0 %v1880
        %1994 = vmatprep.subr.mxu0 0.0
        %1995 = vmatpush1.msra.mxu0 %v1881
        %1996 = vmatprep.subr.mxu0 0.0
        %1997 = vmatpush1.msra.mxu0 %v1882
        %1998 = vmatprep.subr.mxu0 0.0
        %1999 = vmatpush1.msra.mxu0 %v1883
        %2000 = vmatprep.subr.mxu0 0.0
        %2001 = vmatpush1.msra.mxu0 %v1884
        %2002 = vmatprep.subr.mxu0 0.0
        %2003 = vmatpush1.msra.mxu0 %v1885
        %2004 = vmatprep.subr.mxu0 0.0
        %2005 = vmatpush1.msra.mxu0 0.0
        %2006 = vmatprep.subr.mxu0 0.0
        %2007 = vmatpush1.msra.mxu0 0.0
        %2008 = vmatprep.subr.mxu0 0.0
        %2009 = vmatpush1.msra.mxu0 0.0
        %2010 = vmatprep.subr.mxu0 0.0
        %2011 = vmatpush1.msra.mxu0 0.0
        %2012 = vmatprep.subr.mxu0 0.0
        %2013 = vmatpush1.msra.mxu0 0.0
        %2014 = vmatprep.subr.mxu0 0.0
        %2015 = vmatpush1.msra.mxu0 0.0
        %2016 = vmatprep.subr.mxu0 0.0
        %2017 = vmatpush1.msra.mxu0 0.0
        %2018 = vmatprep.subr.mxu0 0.0
        %2019 = vmatpush1.msra.mxu0 0.0
        %2020 = vmatprep.subr.mxu0 0.0
        %2021 = vmatpush1.msra.mxu0 0.0
        %2022 = vmatprep.subr.mxu0 0.0
        %2023 = vmatpush1.msra.mxu0 0.0
        %2024 = vmatprep.subr.mxu0 0.0
        %2025 = vmatpush1.msra.mxu0 0.0
        %2026 = vmatprep.subr.mxu0 0.0
        %2027 = vmatpush1.msra.mxu0 0.0
        %2028 = vmatprep.subr.mxu0 0.0
        %2029 = vmatpush1.msra.mxu0 0.0
        %2030 = vmatprep.subr.mxu0 0.0
        %2031 = vmatpush1.msra.mxu0 0.0
        %2032 = vmatprep.subr.mxu0 0.0
        %2033 = vmatpush1.msra.mxu0 0.0
        %2034 = vmatprep.subr.mxu0 0.0
        %2035 = vmatpush1.msra.mxu0 0.0
        %2036 = vmatprep.mubr.f32.mxu0 0.0
        %2037 = vmatmul.mubr.f32.gmra.mrb[0].mxu0 %v1688
        %v2038 = vpop.f32.mrb[0].mxu0
        %v2039 = vadd.f32 %v1969, %v2038
        %v2040 = vpop.f32.mrb[0].mxu0
        %2041 = vdwg.mxu0
        %v2042 = vadd.f32 %v2039, %v980
        %v2043 = vmul.f32 %v1518, 0.9
        %v2044 = vtanh.pop %v2042
        %v2045 = vmul.f32 %v2044, 0.1
        %v2046 = vadd.f32 %v2043, %v2045
        %s2047 = scalar_lea.vmem %s597, 16 [#allocation18]
        %2048 = vst [vmem:[%s2047] sm:$0xff] %v2046
        %s2049 = scalar_lea.vmem %s524, 24 [#allocation3]
        %v2050 = vld [vmem:[%s2049] sm:$0xff]
        %v2051 = vld [vmem:[#allocation8] sm:$0xff]
        %v2052 = vld [vmem:[#allocation8 + $0x8] sm:$0xff]
        %v2053 = vld [vmem:[#allocation9] sm:$0xff]
        %v2054 = vld [vmem:[#allocation9 + $0x8] sm:$0xff]
        %v2055 = vld [vmem:[#allocation9 + $0x10] sm:$0xff]
        %v2056 = vld [vmem:[#allocation9 + $0x18] sm:$0xff]
        %v2057 = vld [vmem:[#allocation9 + $0x20] sm:$0xff]
        %v2058 = vld [vmem:[#allocation9 + $0x28] sm:$0xff]
        %v2059 = vld [vmem:[#allocation9 + $0x30] sm:$0xff]
        %v2060 = vld [vmem:[#allocation9 + $0x38] sm:$0xff]
        %v2061 = vld [vmem:[#allocation9 + $0x40] sm:$0xff]
        %v2062 = vld [vmem:[#allocation9 + $0x48] sm:$0xff]
        %v2063 = vld [vmem:[#allocation9 + $0x50] sm:$0xff]
        %v2064 = vld [vmem:[#allocation9 + $0x58] sm:$0xff]
        %v2065 = vld [vmem:[#allocation9 + $0x60] sm:$0xff]
        %v2066 = vld [vmem:[#allocation9 + $0x68] sm:$0xff]
        %v2067 = vld [vmem:[#allocation9 + $0x70] sm:$0xff]
        %v2068 = vld [vmem:[#allocation9 + $0x78] sm:$0xff]
        %2069 = vmatprep.subr.mxu0 0.0
        %2070 = vmatpush1.msra.mxu0 %v2053
        %2071 = vmatprep.subr.mxu0 0.0
        %2072 = vmatpush1.msra.mxu0 %v2054
        %2073 = vmatprep.subr.mxu0 0.0
        %2074 = vmatpush1.msra.mxu0 %v2055
        %2075 = vmatprep.subr.mxu0 0.0
        %2076 = vmatpush1.msra.mxu0 %v2056
        %2077 = vmatprep.subr.mxu0 0.0
        %2078 = vmatpush1.msra.mxu0 %v2057
        %2079 = vmatprep.subr.mxu0 0.0
        %2080 = vmatpush1.msra.mxu0 %v2058
        %2081 = vmatprep.subr.mxu0 0.0
        %2082 = vmatpush1.msra.mxu0 %v2059
        %2083 = vmatprep.subr.mxu0 0.0
        %2084 = vmatpush1.msra.mxu0 %v2060
        %2085 = vmatprep.subr.mxu0 0.0
        %2086 = vmatpush1.msra.mxu0 %v2061
        %2087 = vmatprep.subr.mxu0 0.0
        %2088 = vmatpush1.msra.mxu0 %v2062
        %2089 = vmatprep.subr.mxu0 0.0
        %2090 = vmatpush1.msra.mxu0 %v2063
        %2091 = vmatprep.subr.mxu0 0.0
        %2092 = vmatpush1.msra.mxu0 %v2064
        %2093 = vmatprep.subr.mxu0 0.0
        %2094 = vmatpush1.msra.mxu0 %v2065
        %2095 = vmatprep.subr.mxu0 0.0
        %2096 = vmatpush1.msra.mxu0 %v2066
        %2097 = vmatprep.subr.mxu0 0.0
        %2098 = vmatpush1.msra.mxu0 %v2067
        %2099 = vmatprep.subr.mxu0 0.0
        %2100 = vmatpush1.msra.mxu0 %v2068
        %2101 = vmatprep.subr.mxu0 0.0
        %2102 = vmatpush1.msra.mxu0 0.0
        %2103 = vmatprep.subr.mxu0 0.0
        %2104 = vmatpush1.msra.mxu0 0.0
        %2105 = vmatprep.subr.mxu0 0.0
        %2106 = vmatpush1.msra.mxu0 0.0
        %2107 = vmatprep.subr.mxu0 0.0
        %2108 = vmatpush1.msra.mxu0 0.0
        %2109 = vmatprep.subr.mxu0 0.0
        %2110 = vmatpush1.msra.mxu0 0.0
        %2111 = vmatprep.subr.mxu0 0.0
        %2112 = vmatpush1.msra.mxu0 0.0
        %2113 = vmatprep.subr.mxu0 0.0
        %2114 = vmatpush1.msra.mxu0 0.0
        %2115 = vmatprep.subr.mxu0 0.0
        %2116 = vmatpush1.msra.mxu0 0.0
        %2117 = vmatprep.subr.mxu0 0.0
        %2118 = vmatpush1.msra.mxu0 0.0
        %2119 = vmatprep.subr.mxu0 0.0
        %2120 = vmatpush1.msra.mxu0 0.0
        %2121 = vmatprep.subr.mxu0 0.0
        %2122 = vmatpush1.msra.mxu0 0.0
        %2123 = vmatprep.subr.mxu0 0.0
        %2124 = vmatpush1.msra.mxu0 0.0
        %2125 = vmatprep.subr.mxu0 0.0
        %2126 = vmatpush1.msra.mxu0 0.0
        %2127 = vmatprep.subr.mxu0 0.0
        %2128 = vmatpush1.msra.mxu0 0.0
        %2129 = vmatprep.subr.mxu0 0.0
        %2130 = vmatpush1.msra.mxu0 0.0
        %2131 = vmatprep.subr.mxu0 0.0
        %2132 = vmatpush1.msra.mxu0 0.0
        %2133 = vmatprep.mubr.f32.mxu0 0.0
        %2134 = vmatmul.mubr.f32.gmra.mrb[0].mxu0 %v1688
        %v2135 = vpop.f32.mrb[0].mxu0
        %v2136 = vadd.f32 0.0, %v2135
        %v2137 = vpop.f32.mrb[0].mxu0
        %2138 = vdwg.mxu0
        %v2140 = vsel %vm718, %v2050, 0
        %2142 = vmatprep.subr.mxu0 0.0
        %2143 = vmatpush1.msra.mxu0 %v2051
        %2144 = vmatprep.subr.mxu0 0.0
        %2145 = vmatpush1.msra.mxu0 %v2052
        %2146 = vmatprep.subr.mxu0 0.0
        %2147 = vmatpush1.msra.mxu0 0.0
        %2148 = vmatprep.subr.mxu0 0.0
        %2149 = vmatpush1.msra.mxu0 0.0
        %2150 = vmatprep.subr.mxu0 0.0
        %2151 = vmatpush1.msra.mxu0 0.0
        %2152 = vmatprep.subr.mxu0 0.0
        %2153 = vmatpush1.msra.mxu0 0.0
        %2154 = vmatprep.subr.mxu0 0.0
        %2155 = vmatpush1.msra.mxu0 0.0
        %2156 = vmatprep.subr.mxu0 0.0
        %2157 = vmatpush1.msra.mxu0 0.0
        %2158 = vmatprep.subr.mxu0 0.0
        %2159 = vmatpush1.msra.mxu0 0.0
        %2160 = vmatprep.subr.mxu0 0.0
        %2161 = vmatpush1.msra.mxu0 0.0
        %2162 = vmatprep.subr.mxu0 0.0
        %2163 = vmatpush1.msra.mxu0 0.0
        %2164 = vmatprep.subr.mxu0 0.0
        %2165 = vmatpush1.msra.mxu0 0.0
        %2166 = vmatprep.subr.mxu0 0.0
        %2167 = vmatpush1.msra.mxu0 0.0
        %2168 = vmatprep.subr.mxu0 0.0
        %2169 = vmatpush1.msra.mxu0 0.0
        %2170 = vmatprep.subr.mxu0 0.0
        %2171 = vmatpush1.msra.mxu0 0.0
        %2172 = vmatprep.subr.mxu0 0.0
        %2173 = vmatpush1.msra.mxu0 0.0
        %2174 = vmatprep.subr.mxu0 0.0
        %2175 = vmatpush1.msra.mxu0 0.0
        %2176 = vmatprep.subr.mxu0 0.0
        %2177 = vmatpush1.msra.mxu0 0.0
        %2178 = vmatprep.subr.mxu0 0.0
        %2179 = vmatpush1.msra.mxu0 0.0
        %2180 = vmatprep.subr.mxu0 0.0
        %2181 = vmatpush1.msra.mxu0 0.0
        %2182 = vmatprep.subr.mxu0 0.0
        %2183 = vmatpush1.msra.mxu0 0.0
        %2184 = vmatprep.subr.mxu0 0.0
        %2185 = vmatpush1.msra.mxu0 0.0
        %2186 = vmatprep.subr.mxu0 0.0
        %2187 = vmatpush1.msra.mxu0 0.0
        %2188 = vmatprep.subr.mxu0 0.0
        %2189 = vmatpush1.msra.mxu0 0.0
        %2190 = vmatprep.subr.mxu0 0.0
        %2191 = vmatpush1.msra.mxu0 0.0
        %2192 = vmatprep.subr.mxu0 0.0
        %2193 = vmatpush1.msra.mxu0 0.0
        %2194 = vmatprep.subr.mxu0 0.0
        %2195 = vmatpush1.msra.mxu0 0.0
        %2196 = vmatprep.subr.mxu0 0.0
        %2197 = vmatpush1.msra.mxu0 0.0
        %2198 = vmatprep.subr.mxu0 0.0
        %2199 = vmatpush1.msra.mxu0 0.0
        %2200 = vmatprep.subr.mxu0 0.0
        %2201 = vmatpush1.msra.mxu0 0.0
        %2202 = vmatprep.subr.mxu0 0.0
        %2203 = vmatpush1.msra.mxu0 0.0
        %2204 = vmatprep.subr.mxu0 0.0
        %2205 = vmatpush1.msra.mxu0 0.0
        %2206 = vmatprep.mubr.f32.mxu0 0.0
        %2207 = vmatmul.mubr.f32.gmra.mrb[0].mxu0 %v2140
        %v2208 = vpop.f32.mrb[0].mxu0
        %v2209 = vadd.f32 %v2136, %v2208
        %v2210 = vpop.f32.mrb[0].mxu0
        %2211 = vdwg.mxu0
        %v2212 = vadd.f32 %v2209, %v796
        %v2213 = vmul.f32 %v1688, 0.9
        %v2214 = vtanh.pop %v2212
        %v2215 = vmul.f32 %v2214, 0.1
        %v2216 = vadd.f32 %v2213, %v2215
        %s2217 = scalar_lea.vmem %s590, 24 [#allocation17]
        %2218 = vst [vmem:[%s2217] sm:$0xff] %v2216
        %v2219 = vld [vmem:[#allocation14] sm:$0xff]
        %v2220 = vld [vmem:[#allocation14 + $0x8] sm:$0xff]
        %v2221 = vld [vmem:[#allocation14 + $0x10] sm:$0xff]
        %v2222 = vld [vmem:[#allocation14 + $0x18] sm:$0xff]
        %v2223 = vld [vmem:[#allocation14 + $0x20] sm:$0xff]
        %v2224 = vld [vmem:[#allocation14 + $0x28] sm:$0xff]
        %v2225 = vld [vmem:[#allocation14 + $0x30] sm:$0xff]
        %v2226 = vld [vmem:[#allocation14 + $0x38] sm:$0xff]
        %v2227 = vld [vmem:[#allocation14 + $0x40] sm:$0xff]
        %v2228 = vld [vmem:[#allocation14 + $0x48] sm:$0xff]
        %v2229 = vld [vmem:[#allocation14 + $0x50] sm:$0xff]
        %v2230 = vld [vmem:[#allocation14 + $0x58] sm:$0xff]
        %v2231 = vld [vmem:[#allocation14 + $0x60] sm:$0xff]
        %v2232 = vld [vmem:[#allocation14 + $0x68] sm:$0xff]
        %v2233 = vld [vmem:[#allocation14 + $0x70] sm:$0xff]
        %v2234 = vld [vmem:[#allocation14 + $0x78] sm:$0xff]
        %v2235 = vld [vmem:[#allocation15] sm:$0xff]
        %v2236 = vld [vmem:[#allocation15 + $0x8] sm:$0xff]
        %v2237 = vld [vmem:[#allocation15 + $0x10] sm:$0xff]
        %v2238 = vld [vmem:[#allocation15 + $0x18] sm:$0xff]
        %v2239 = vld [vmem:[#allocation15 + $0x20] sm:$0xff]
        %v2240 = vld [vmem:[#allocation15 + $0x28] sm:$0xff]
        %v2241 = vld [vmem:[#allocation15 + $0x30] sm:$0xff]
        %v2242 = vld [vmem:[#allocation15 + $0x38] sm:$0xff]
        %v2243 = vld [vmem:[#allocation15 + $0x40] sm:$0xff]
        %v2244 = vld [vmem:[#allocation15 + $0x48] sm:$0xff]
        %v2245 = vld [vmem:[#allocation15 + $0x50] sm:$0xff]
        %v2246 = vld [vmem:[#allocation15 + $0x58] sm:$0xff]
        %v2247 = vld [vmem:[#allocation15 + $0x60] sm:$0xff]
        %v2248 = vld [vmem:[#allocation15 + $0x68] sm:$0xff]
        %v2249 = vld [vmem:[#allocation15 + $0x70] sm:$0xff]
        %v2250 = vld [vmem:[#allocation15 + $0x78] sm:$0xff]
        %2251 = vmatprep.subr.mxu0 0.0
        %2252 = vmatpush1.msra.mxu0 %v2235
        %2253 = vmatprep.subr.mxu0 0.0
        %2254 = vmatpush1.msra.mxu0 %v2236
        %2255 = vmatprep.subr.mxu0 0.0
        %2256 = vmatpush1.msra.mxu0 %v2237
        %2257 = vmatprep.subr.mxu0 0.0
        %2258 = vmatpush1.msra.mxu0 %v2238
        %2259 = vmatprep.subr.mxu0 0.0
        %2260 = vmatpush1.msra.mxu0 %v2239
        %2261 = vmatprep.subr.mxu0 0.0
        %2262 = vmatpush1.msra.mxu0 %v2240
        %2263 = vmatprep.subr.mxu0 0.0
        %2264 = vmatpush1.msra.mxu0 %v2241
        %2265 = vmatprep.subr.mxu0 0.0
        %2266 = vmatpush1.msra.mxu0 %v2242
        %2267 = vmatprep.subr.mxu0 0.0
        %2268 = vmatpush1.msra.mxu0 %v2243
        %2269 = vmatprep.subr.mxu0 0.0
        %2270 = vmatpush1.msra.mxu0 %v2244
        %2271 = vmatprep.subr.mxu0 0.0
        %2272 = vmatpush1.msra.mxu0 %v2245
        %2273 = vmatprep.subr.mxu0 0.0
        %2274 = vmatpush1.msra.mxu0 %v2246
        %2275 = vmatprep.subr.mxu0 0.0
        %2276 = vmatpush1.msra.mxu0 %v2247
        %2277 = vmatprep.subr.mxu0 0.0
        %2278 = vmatpush1.msra.mxu0 %v2248
        %2279 = vmatprep.subr.mxu0 0.0
        %2280 = vmatpush1.msra.mxu0 %v2249
        %2281 = vmatprep.subr.mxu0 0.0
        %2282 = vmatpush1.msra.mxu0 %v2250
        %2283 = vmatprep.subr.mxu0 0.0
        %2284 = vmatpush1.msra.mxu0 0.0
        %2285 = vmatprep.subr.mxu0 0.0
        %2286 = vmatpush1.msra.mxu0 0.0
        %2287 = vmatprep.subr.mxu0 0.0
        %2288 = vmatpush1.msra.mxu0 0.0
        %2289 = vmatprep.subr.mxu0 0.0
        %2290 = vmatpush1.msra.mxu0 0.0
        %2291 = vmatprep.subr.mxu0 0.0
        %2292 = vmatpush1.msra.mxu0 0.0
        %2293 = vmatprep.subr.mxu0 0.0
        %2294 = vmatpush1.msra.mxu0 0.0
        %2295 = vmatprep.subr.mxu0 0.0
        %2296 = vmatpush1.msra.mxu0 0.0
        %2297 = vmatprep.subr.mxu0 0.0
        %2298 = vmatpush1.msra.mxu0 0.0
        %2299 = vmatprep.subr.mxu0 0.0
        %2300 = vmatpush1.msra.mxu0 0.0
        %2301 = vmatprep.subr.mxu0 0.0
        %2302 = vmatpush1.msra.mxu0 0.0
        %2303 = vmatprep.subr.mxu0 0.0
        %2304 = vmatpush1.msra.mxu0 0.0
        %2305 = vmatprep.subr.mxu0 0.0
        %2306 = vmatpush1.msra.mxu0 0.0
        %2307 = vmatprep.subr.mxu0 0.0
        %2308 = vmatpush1.msra.mxu0 0.0
        %2309 = vmatprep.subr.mxu0 0.0
        %2310 = vmatpush1.msra.mxu0 0.0
        %2311 = vmatprep.subr.mxu0 0.0
        %2312 = vmatpush1.msra.mxu0 0.0
        %2313 = vmatprep.subr.mxu0 0.0
        %2314 = vmatpush1.msra.mxu0 0.0
        %2315 = vmatprep.mubr.f32.mxu0 0.0
        %2316 = vmatmul.mubr.f32.gmra.mrb[0].mxu0 %v1867
        %v2317 = vpop.f32.mrb[0].mxu0
        %v2318 = vadd.f32 0.0, %v2317
        %v2319 = vpop.f32.mrb[0].mxu0
        %2320 = vdwg.mxu0
        %2321 = vmatprep.subr.mxu0 0.0
        %2322 = vmatpush1.msra.mxu0 %v2219
        %2323 = vmatprep.subr.mxu0 0.0
        %2324 = vmatpush1.msra.mxu0 %v2220
        %2325 = vmatprep.subr.mxu0 0.0
        %2326 = vmatpush1.msra.mxu0 %v2221
        %2327 = vmatprep.subr.mxu0 0.0
        %2328 = vmatpush1.msra.mxu0 %v2222
        %2329 = vmatprep.subr.mxu0 0.0
        %2330 = vmatpush1.msra.mxu0 %v2223
        %2331 = vmatprep.subr.mxu0 0.0
        %2332 = vmatpush1.msra.mxu0 %v2224
        %2333 = vmatprep.subr.mxu0 0.0
        %2334 = vmatpush1.msra.mxu0 %v2225
        %2335 = vmatprep.subr.mxu0 0.0
        %2336 = vmatpush1.msra.mxu0 %v2226
        %2337 = vmatprep.subr.mxu0 0.0
        %2338 = vmatpush1.msra.mxu0 %v2227
        %2339 = vmatprep.subr.mxu0 0.0
        %2340 = vmatpush1.msra.mxu0 %v2228
        %2341 = vmatprep.subr.mxu0 0.0
        %2342 = vmatpush1.msra.mxu0 %v2229
        %2343 = vmatprep.subr.mxu0 0.0
        %2344 = vmatpush1.msra.mxu0 %v2230
        %2345 = vmatprep.subr.mxu0 0.0
        %2346 = vmatpush1.msra.mxu0 %v2231
        %2347 = vmatprep.subr.mxu0 0.0
        %2348 = vmatpush1.msra.mxu0 %v2232
        %2349 = vmatprep.subr.mxu0 0.0
        %2350 = vmatpush1.msra.mxu0 %v2233
        %2351 = vmatprep.subr.mxu0 0.0
        %2352 = vmatpush1.msra.mxu0 %v2234
        %2353 = vmatprep.subr.mxu0 0.0
        %2354 = vmatpush1.msra.mxu0 0.0
        %2355 = vmatprep.subr.mxu0 0.0
        %2356 = vmatpush1.msra.mxu0 0.0
        %2357 = vmatprep.subr.mxu0 0.0
        %2358 = vmatpush1.msra.mxu0 0.0
        %2359 = vmatprep.subr.mxu0 0.0
        %2360 = vmatpush1.msra.mxu0 0.0
        %2361 = vmatprep.subr.mxu0 0.0
        %2362 = vmatpush1.msra.mxu0 0.0
        %2363 = vmatprep.subr.mxu0 0.0
        %2364 = vmatpush1.msra.mxu0 0.0
        %2365 = vmatprep.subr.mxu0 0.0
        %2366 = vmatpush1.msra.mxu0 0.0
        %2367 = vmatprep.subr.mxu0 0.0
        %2368 = vmatpush1.msra.mxu0 0.0
        %2369 = vmatprep.subr.mxu0 0.0
        %2370 = vmatpush1.msra.mxu0 0.0
        %2371 = vmatprep.subr.mxu0 0.0
        %2372 = vmatpush1.msra.mxu0 0.0
        %2373 = vmatprep.subr.mxu0 0.0
        %2374 = vmatpush1.msra.mxu0 0.0
        %2375 = vmatprep.subr.mxu0 0.0
        %2376 = vmatpush1.msra.mxu0 0.0
        %2377 = vmatprep.subr.mxu0 0.0
        %2378 = vmatpush1.msra.mxu0 0.0
        %2379 = vmatprep.subr.mxu0 0.0
        %2380 = vmatpush1.msra.mxu0 0.0
        %2381 = vmatprep.subr.mxu0 0.0
        %2382 = vmatpush1.msra.mxu0 0.0
        %2383 = vmatprep.subr.mxu0 0.0
        %2384 = vmatpush1.msra.mxu0 0.0
        %2385 = vmatprep.mubr.f32.mxu0 0.0
        %2386 = vmatmul.mubr.f32.gmra.mrb[0].mxu0 %v2046
        %v2387 = vpop.f32.mrb[0].mxu0
        %v2388 = vadd.f32 %v2318, %v2387
        %v2389 = vpop.f32.mrb[0].mxu0
        %2390 = vdwg.mxu0
        %v2391 = vadd.f32 %v2388, %v1334
        %v2392 = vmul.f32 %v1867, 0.9
        %v2393 = vtanh.pop %v2391
        %v2394 = vmul.f32 %v2393, 0.1
        %v2395 = vadd.f32 %v2392, %v2394
        %s2396 = scalar_lea.vmem %s604, 16 [#allocation20]
        %2397 = vst [vmem:[%s2396] sm:$0xff] %v2395
        %v2398 = vld [vmem:[#allocation11] sm:$0xff]
        %v2399 = vld [vmem:[#allocation11 + $0x8] sm:$0xff]
        %v2400 = vld [vmem:[#allocation11 + $0x10] sm:$0xff]
        %v2401 = vld [vmem:[#allocation11 + $0x18] sm:$0xff]
        %v2402 = vld [vmem:[#allocation11 + $0x20] sm:$0xff]
        %v2403 = vld [vmem:[#allocation11 + $0x28] sm:$0xff]
        %v2404 = vld [vmem:[#allocation11 + $0x30] sm:$0xff]
        %v2405 = vld [vmem:[#allocation11 + $0x38] sm:$0xff]
        %v2406 = vld [vmem:[#allocation11 + $0x40] sm:$0xff]
        %v2407 = vld [vmem:[#allocation11 + $0x48] sm:$0xff]
        %v2408 = vld [vmem:[#allocation11 + $0x50] sm:$0xff]
        %v2409 = vld [vmem:[#allocation11 + $0x58] sm:$0xff]
        %v2410 = vld [vmem:[#allocation11 + $0x60] sm:$0xff]
        %v2411 = vld [vmem:[#allocation11 + $0x68] sm:$0xff]
        %v2412 = vld [vmem:[#allocation11 + $0x70] sm:$0xff]
        %v2413 = vld [vmem:[#allocation11 + $0x78] sm:$0xff]
        %v2414 = vld [vmem:[#allocation12] sm:$0xff]
        %v2415 = vld [vmem:[#allocation12 + $0x8] sm:$0xff]
        %v2416 = vld [vmem:[#allocation12 + $0x10] sm:$0xff]
        %v2417 = vld [vmem:[#allocation12 + $0x18] sm:$0xff]
        %v2418 = vld [vmem:[#allocation12 + $0x20] sm:$0xff]
        %v2419 = vld [vmem:[#allocation12 + $0x28] sm:$0xff]
        %v2420 = vld [vmem:[#allocation12 + $0x30] sm:$0xff]
        %v2421 = vld [vmem:[#allocation12 + $0x38] sm:$0xff]
        %v2422 = vld [vmem:[#allocation12 + $0x40] sm:$0xff]
        %v2423 = vld [vmem:[#allocation12 + $0x48] sm:$0xff]
        %v2424 = vld [vmem:[#allocation12 + $0x50] sm:$0xff]
        %v2425 = vld [vmem:[#allocation12 + $0x58] sm:$0xff]
        %v2426 = vld [vmem:[#allocation12 + $0x60] sm:$0xff]
        %v2427 = vld [vmem:[#allocation12 + $0x68] sm:$0xff]
        %v2428 = vld [vmem:[#allocation12 + $0x70] sm:$0xff]
        %v2429 = vld [vmem:[#allocation12 + $0x78] sm:$0xff]
        %2430 = vmatprep.subr.mxu0 0.0
        %2431 = vmatpush1.msra.mxu0 %v2414
        %2432 = vmatprep.subr.mxu0 0.0
        %2433 = vmatpush1.msra.mxu0 %v2415
        %2434 = vmatprep.subr.mxu0 0.0
        %2435 = vmatpush1.msra.mxu0 %v2416
        %2436 = vmatprep.subr.mxu0 0.0
        %2437 = vmatpush1.msra.mxu0 %v2417
        %2438 = vmatprep.subr.mxu0 0.0
        %2439 = vmatpush1.msra.mxu0 %v2418
        %2440 = vmatprep.subr.mxu0 0.0
        %2441 = vmatpush1.msra.mxu0 %v2419
        %2442 = vmatprep.subr.mxu0 0.0
        %2443 = vmatpush1.msra.mxu0 %v2420
        %2444 = vmatprep.subr.mxu0 0.0
        %2445 = vmatpush1.msra.mxu0 %v2421
        %2446 = vmatprep.subr.mxu0 0.0
        %2447 = vmatpush1.msra.mxu0 %v2422
        %2448 = vmatprep.subr.mxu0 0.0
        %2449 = vmatpush1.msra.mxu0 %v2423
        %2450 = vmatprep.subr.mxu0 0.0
        %2451 = vmatpush1.msra.mxu0 %v2424
        %2452 = vmatprep.subr.mxu0 0.0
        %2453 = vmatpush1.msra.mxu0 %v2425
        %2454 = vmatprep.subr.mxu0 0.0
        %2455 = vmatpush1.msra.mxu0 %v2426
        %2456 = vmatprep.subr.mxu0 0.0
        %2457 = vmatpush1.msra.mxu0 %v2427
        %2458 = vmatprep.subr.mxu0 0.0
        %2459 = vmatpush1.msra.mxu0 %v2428
        %2460 = vmatprep.subr.mxu0 0.0
        %2461 = vmatpush1.msra.mxu0 %v2429
        %2462 = vmatprep.subr.mxu0 0.0
        %2463 = vmatpush1.msra.mxu0 0.0
        %2464 = vmatprep.subr.mxu0 0.0
        %2465 = vmatpush1.msra.mxu0 0.0
        %2466 = vmatprep.subr.mxu0 0.0
        %2467 = vmatpush1.msra.mxu0 0.0
        %2468 = vmatprep.subr.mxu0 0.0
        %2469 = vmatpush1.msra.mxu0 0.0
        %2470 = vmatprep.subr.mxu0 0.0
        %2471 = vmatpush1.msra.mxu0 0.0
        %2472 = vmatprep.subr.mxu0 0.0
        %2473 = vmatpush1.msra.mxu0 0.0
        %2474 = vmatprep.subr.mxu0 0.0
        %2475 = vmatpush1.msra.mxu0 0.0
        %2476 = vmatprep.subr.mxu0 0.0
        %2477 = vmatpush1.msra.mxu0 0.0
        %2478 = vmatprep.subr.mxu0 0.0
        %2479 = vmatpush1.msra.mxu0 0.0
        %2480 = vmatprep.subr.mxu0 0.0
        %2481 = vmatpush1.msra.mxu0 0.0
        %2482 = vmatprep.subr.mxu0 0.0
        %2483 = vmatpush1.msra.mxu0 0.0
        %2484 = vmatprep.subr.mxu0 0.0
        %2485 = vmatpush1.msra.mxu0 0.0
        %2486 = vmatprep.subr.mxu0 0.0
        %2487 = vmatpush1.msra.mxu0 0.0
        %2488 = vmatprep.subr.mxu0 0.0
        %2489 = vmatpush1.msra.mxu0 0.0
        %2490 = vmatprep.subr.mxu0 0.0
        %2491 = vmatpush1.msra.mxu0 0.0
        %2492 = vmatprep.subr.mxu0 0.0
        %2493 = vmatpush1.msra.mxu0 0.0
        %2494 = vmatprep.mubr.f32.mxu0 0.0
        %2495 = vmatmul.mubr.f32.gmra.mrb[0].mxu0 %v2046
        %v2496 = vpop.f32.mrb[0].mxu0
        %v2497 = vadd.f32 0.0, %v2496
        %v2498 = vpop.f32.mrb[0].mxu0
        %2499 = vdwg.mxu0
        %2500 = vmatprep.subr.mxu0 0.0
        %2501 = vmatpush1.msra.mxu0 %v2398
        %2502 = vmatprep.subr.mxu0 0.0
        %2503 = vmatpush1.msra.mxu0 %v2399
        %2504 = vmatprep.subr.mxu0 0.0
        %2505 = vmatpush1.msra.mxu0 %v2400
        %2506 = vmatprep.subr.mxu0 0.0
        %2507 = vmatpush1.msra.mxu0 %v2401
        %2508 = vmatprep.subr.mxu0 0.0
        %2509 = vmatpush1.msra.mxu0 %v2402
        %2510 = vmatprep.subr.mxu0 0.0
        %2511 = vmatpush1.msra.mxu0 %v2403
        %2512 = vmatprep.subr.mxu0 0.0
        %2513 = vmatpush1.msra.mxu0 %v2404
        %2514 = vmatprep.subr.mxu0 0.0
        %2515 = vmatpush1.msra.mxu0 %v2405
        %2516 = vmatprep.subr.mxu0 0.0
        %2517 = vmatpush1.msra.mxu0 %v2406
        %2518 = vmatprep.subr.mxu0 0.0
        %2519 = vmatpush1.msra.mxu0 %v2407
        %2520 = vmatprep.subr.mxu0 0.0
        %2521 = vmatpush1.msra.mxu0 %v2408
        %2522 = vmatprep.subr.mxu0 0.0
        %2523 = vmatpush1.msra.mxu0 %v2409
        %2524 = vmatprep.subr.mxu0 0.0
        %2525 = vmatpush1.msra.mxu0 %v2410
        %2526 = vmatprep.subr.mxu0 0.0
        %2527 = vmatpush1.msra.mxu0 %v2411
        %2528 = vmatprep.subr.mxu0 0.0
        %2529 = vmatpush1.msra.mxu0 %v2412
        %2530 = vmatprep.subr.mxu0 0.0
        %2531 = vmatpush1.msra.mxu0 %v2413
        %2532 = vmatprep.subr.mxu0 0.0
        %2533 = vmatpush1.msra.mxu0 0.0
        %2534 = vmatprep.subr.mxu0 0.0
        %2535 = vmatpush1.msra.mxu0 0.0
        %2536 = vmatprep.subr.mxu0 0.0
        %2537 = vmatpush1.msra.mxu0 0.0
        %2538 = vmatprep.subr.mxu0 0.0
        %2539 = vmatpush1.msra.mxu0 0.0
        %2540 = vmatprep.subr.mxu0 0.0
        %2541 = vmatpush1.msra.mxu0 0.0
        %2542 = vmatprep.subr.mxu0 0.0
        %2543 = vmatpush1.msra.mxu0 0.0
        %2544 = vmatprep.subr.mxu0 0.0
        %2545 = vmatpush1.msra.mxu0 0.0
        %2546 = vmatprep.subr.mxu0 0.0
        %2547 = vmatpush1.msra.mxu0 0.0
        %2548 = vmatprep.subr.mxu0 0.0
        %2549 = vmatpush1.msra.mxu0 0.0
        %2550 = vmatprep.subr.mxu0 0.0
        %2551 = vmatpush1.msra.mxu0 0.0
        %2552 = vmatprep.subr.mxu0 0.0
        %2553 = vmatpush1.msra.mxu0 0.0
        %2554 = vmatprep.subr.mxu0 0.0
        %2555 = vmatpush1.msra.mxu0 0.0
        %2556 = vmatprep.subr.mxu0 0.0
        %2557 = vmatpush1.msra.mxu0 0.0
        %2558 = vmatprep.subr.mxu0 0.0
        %2559 = vmatpush1.msra.mxu0 0.0
        %2560 = vmatprep.subr.mxu0 0.0
        %2561 = vmatpush1.msra.mxu0 0.0
        %2562 = vmatprep.subr.mxu0 0.0
        %2563 = vmatpush1.msra.mxu0 0.0
        %2564 = vmatprep.mubr.f32.mxu0 0.0
        %2565 = vmatmul.mubr.f32.gmra.mrb[0].mxu0 %v2216
        %v2566 = vpop.f32.mrb[0].mxu0
        %v2567 = vadd.f32 %v2497, %v2566
        %v2568 = vpop.f32.mrb[0].mxu0
        %2569 = vdwg.mxu0
        %v2570 = vadd.f32 %v2567, %v980
        %v2571 = vmul.f32 %v2046, 0.9
        %v2572 = vtanh.pop %v2570
        %v2573 = vmul.f32 %v2572, 0.1
        %v2574 = vadd.f32 %v2571, %v2573
        %s2575 = scalar_lea.vmem %s597, 24 [#allocation18]
        %2576 = vst [vmem:[%s2575] sm:$0xff] %v2574
        %v2577 = vld [vmem:[#allocation14] sm:$0xff]
        %v2578 = vld [vmem:[#allocation14 + $0x8] sm:$0xff]
        %v2579 = vld [vmem:[#allocation14 + $0x10] sm:$0xff]
        %v2580 = vld [vmem:[#allocation14 + $0x18] sm:$0xff]
        %v2581 = vld [vmem:[#allocation14 + $0x20] sm:$0xff]
        %v2582 = vld [vmem:[#allocation14 + $0x28] sm:$0xff]
        %v2583 = vld [vmem:[#allocation14 + $0x30] sm:$0xff]
        %v2584 = vld [vmem:[#allocation14 + $0x38] sm:$0xff]
        %v2585 = vld [vmem:[#allocation14 + $0x40] sm:$0xff]
        %v2586 = vld [vmem:[#allocation14 + $0x48] sm:$0xff]
        %v2587 = vld [vmem:[#allocation14 + $0x50] sm:$0xff]
        %v2588 = vld [vmem:[#allocation14 + $0x58] sm:$0xff]
        %v2589 = vld [vmem:[#allocation14 + $0x60] sm:$0xff]
        %v2590 = vld [vmem:[#allocation14 + $0x68] sm:$0xff]
        %v2591 = vld [vmem:[#allocation14 + $0x70] sm:$0xff]
        %v2592 = vld [vmem:[#allocation14 + $0x78] sm:$0xff]
        %v2593 = vld [vmem:[#allocation15] sm:$0xff]
        %v2594 = vld [vmem:[#allocation15 + $0x8] sm:$0xff]
        %v2595 = vld [vmem:[#allocation15 + $0x10] sm:$0xff]
        %v2596 = vld [vmem:[#allocation15 + $0x18] sm:$0xff]
        %v2597 = vld [vmem:[#allocation15 + $0x20] sm:$0xff]
        %v2598 = vld [vmem:[#allocation15 + $0x28] sm:$0xff]
        %v2599 = vld [vmem:[#allocation15 + $0x30] sm:$0xff]
        %v2600 = vld [vmem:[#allocation15 + $0x38] sm:$0xff]
        %v2601 = vld [vmem:[#allocation15 + $0x40] sm:$0xff]
        %v2602 = vld [vmem:[#allocation15 + $0x48] sm:$0xff]
        %v2603 = vld [vmem:[#allocation15 + $0x50] sm:$0xff]
        %v2604 = vld [vmem:[#allocation15 + $0x58] sm:$0xff]
        %v2605 = vld [vmem:[#allocation15 + $0x60] sm:$0xff]
        %v2606 = vld [vmem:[#allocation15 + $0x68] sm:$0xff]
        %v2607 = vld [vmem:[#allocation15 + $0x70] sm:$0xff]
        %v2608 = vld [vmem:[#allocation15 + $0x78] sm:$0xff]
        %2609 = vmatprep.subr.mxu0 0.0
        %2610 = vmatpush1.msra.mxu0 %v2593
        %2611 = vmatprep.subr.mxu0 0.0
        %2612 = vmatpush1.msra.mxu0 %v2594
        %2613 = vmatprep.subr.mxu0 0.0
        %2614 = vmatpush1.msra.mxu0 %v2595
        %2615 = vmatprep.subr.mxu0 0.0
        %2616 = vmatpush1.msra.mxu0 %v2596
        %2617 = vmatprep.subr.mxu0 0.0
        %2618 = vmatpush1.msra.mxu0 %v2597
        %2619 = vmatprep.subr.mxu0 0.0
        %2620 = vmatpush1.msra.mxu0 %v2598
        %2621 = vmatprep.subr.mxu0 0.0
        %2622 = vmatpush1.msra.mxu0 %v2599
        %2623 = vmatprep.subr.mxu0 0.0
        %2624 = vmatpush1.msra.mxu0 %v2600
        %2625 = vmatprep.subr.mxu0 0.0
        %2626 = vmatpush1.msra.mxu0 %v2601
        %2627 = vmatprep.subr.mxu0 0.0
        %2628 = vmatpush1.msra.mxu0 %v2602
        %2629 = vmatprep.subr.mxu0 0.0
        %2630 = vmatpush1.msra.mxu0 %v2603
        %2631 = vmatprep.subr.mxu0 0.0
        %2632 = vmatpush1.msra.mxu0 %v2604
        %2633 = vmatprep.subr.mxu0 0.0
        %2634 = vmatpush1.msra.mxu0 %v2605
        %2635 = vmatprep.subr.mxu0 0.0
        %2636 = vmatpush1.msra.mxu0 %v2606
        %2637 = vmatprep.subr.mxu0 0.0
        %2638 = vmatpush1.msra.mxu0 %v2607
        %2639 = vmatprep.subr.mxu0 0.0
        %2640 = vmatpush1.msra.mxu0 %v2608
        %2641 = vmatprep.subr.mxu0 0.0
        %2642 = vmatpush1.msra.mxu0 0.0
        %2643 = vmatprep.subr.mxu0 0.0
        %2644 = vmatpush1.msra.mxu0 0.0
        %2645 = vmatprep.subr.mxu0 0.0
        %2646 = vmatpush1.msra.mxu0 0.0
        %2647 = vmatprep.subr.mxu0 0.0
        %2648 = vmatpush1.msra.mxu0 0.0
        %2649 = vmatprep.subr.mxu0 0.0
        %2650 = vmatpush1.msra.mxu0 0.0
        %2651 = vmatprep.subr.mxu0 0.0
        %2652 = vmatpush1.msra.mxu0 0.0
        %2653 = vmatprep.subr.mxu0 0.0
        %2654 = vmatpush1.msra.mxu0 0.0
        %2655 = vmatprep.subr.mxu0 0.0
        %2656 = vmatpush1.msra.mxu0 0.0
        %2657 = vmatprep.subr.mxu0 0.0
        %2658 = vmatpush1.msra.mxu0 0.0
        %2659 = vmatprep.subr.mxu0 0.0
        %2660 = vmatpush1.msra.mxu0 0.0
        %2661 = vmatprep.subr.mxu0 0.0
        %2662 = vmatpush1.msra.mxu0 0.0
        %2663 = vmatprep.subr.mxu0 0.0
        %2664 = vmatpush1.msra.mxu0 0.0
        %2665 = vmatprep.subr.mxu0 0.0
        %2666 = vmatpush1.msra.mxu0 0.0
        %2667 = vmatprep.subr.mxu0 0.0
        %2668 = vmatpush1.msra.mxu0 0.0
        %2669 = vmatprep.subr.mxu0 0.0
        %2670 = vmatpush1.msra.mxu0 0.0
        %2671 = vmatprep.subr.mxu0 0.0
        %2672 = vmatpush1.msra.mxu0 0.0
        %2673 = vmatprep.mubr.f32.mxu0 0.0
        %2674 = vmatmul.mubr.f32.gmra.mrb[0].mxu0 %v2395
        %v2675 = vpop.f32.mrb[0].mxu0
        %v2676 = vadd.f32 0.0, %v2675
        %v2677 = vpop.f32.mrb[0].mxu0
        %2678 = vdwg.mxu0
        %2679 = vmatprep.subr.mxu0 0.0
        %2680 = vmatpush1.msra.mxu0 %v2577
        %2681 = vmatprep.subr.mxu0 0.0
        %2682 = vmatpush1.msra.mxu0 %v2578
        %2683 = vmatprep.subr.mxu0 0.0
        %2684 = vmatpush1.msra.mxu0 %v2579
        %2685 = vmatprep.subr.mxu0 0.0
        %2686 = vmatpush1.msra.mxu0 %v2580
        %2687 = vmatprep.subr.mxu0 0.0
        %2688 = vmatpush1.msra.mxu0 %v2581
        %2689 = vmatprep.subr.mxu0 0.0
        %2690 = vmatpush1.msra.mxu0 %v2582
        %2691 = vmatprep.subr.mxu0 0.0
        %2692 = vmatpush1.msra.mxu0 %v2583
        %2693 = vmatprep.subr.mxu0 0.0
        %2694 = vmatpush1.msra.mxu0 %v2584
        %2695 = vmatprep.subr.mxu0 0.0
        %2696 = vmatpush1.msra.mxu0 %v2585
        %2697 = vmatprep.subr.mxu0 0.0
        %2698 = vmatpush1.msra.mxu0 %v2586
        %2699 = vmatprep.subr.mxu0 0.0
        %2700 = vmatpush1.msra.mxu0 %v2587
        %2701 = vmatprep.subr.mxu0 0.0
        %2702 = vmatpush1.msra.mxu0 %v2588
        %2703 = vmatprep.subr.mxu0 0.0
        %2704 = vmatpush1.msra.mxu0 %v2589
        %2705 = vmatprep.subr.mxu0 0.0
        %2706 = vmatpush1.msra.mxu0 %v2590
        %2707 = vmatprep.subr.mxu0 0.0
        %2708 = vmatpush1.msra.mxu0 %v2591
        %2709 = vmatprep.subr.mxu0 0.0
        %2710 = vmatpush1.msra.mxu0 %v2592
        %2711 = vmatprep.subr.mxu0 0.0
        %2712 = vmatpush1.msra.mxu0 0.0
        %2713 = vmatprep.subr.mxu0 0.0
        %2714 = vmatpush1.msra.mxu0 0.0
        %2715 = vmatprep.subr.mxu0 0.0
        %2716 = vmatpush1.msra.mxu0 0.0
        %2717 = vmatprep.subr.mxu0 0.0
        %2718 = vmatpush1.msra.mxu0 0.0
        %2719 = vmatprep.subr.mxu0 0.0
        %2720 = vmatpush1.msra.mxu0 0.0
        %2721 = vmatprep.subr.mxu0 0.0
        %2722 = vmatpush1.msra.mxu0 0.0
        %2723 = vmatprep.subr.mxu0 0.0
        %2724 = vmatpush1.msra.mxu0 0.0
        %2725 = vmatprep.subr.mxu0 0.0
        %2726 = vmatpush1.msra.mxu0 0.0
        %2727 = vmatprep.subr.mxu0 0.0
        %2728 = vmatpush1.msra.mxu0 0.0
        %2729 = vmatprep.subr.mxu0 0.0
        %2730 = vmatpush1.msra.mxu0 0.0
        %2731 = vmatprep.subr.mxu0 0.0
        %2732 = vmatpush1.msra.mxu0 0.0
        %2733 = vmatprep.subr.mxu0 0.0
        %2734 = vmatpush1.msra.mxu0 0.0
        %2735 = vmatprep.subr.mxu0 0.0
        %2736 = vmatpush1.msra.mxu0 0.0
        %2737 = vmatprep.subr.mxu0 0.0
        %2738 = vmatpush1.msra.mxu0 0.0
        %2739 = vmatprep.subr.mxu0 0.0
        %2740 = vmatpush1.msra.mxu0 0.0
        %2741 = vmatprep.subr.mxu0 0.0
        %2742 = vmatpush1.msra.mxu0 0.0
        %2743 = vmatprep.mubr.f32.mxu0 0.0
        %2744 = vmatmul.mubr.f32.gmra.mrb[0].mxu0 %v2574
        %v2745 = vpop.f32.mrb[0].mxu0
        %v2746 = vadd.f32 %v2676, %v2745
        %v2747 = vpop.f32.mrb[0].mxu0
        %2748 = vdwg.mxu0
        %v2749 = vadd.f32 %v2746, %v1334
        %v2750 = vmul.f32 %v2395, 0.9
        %v2751 = vtanh.pop %v2749
        %v2752 = vmul.f32 %v2751, 0.1
        %v2753 = vadd.f32 %v2750, %v2752
        %s2754 = scalar_lea.vmem %s604, 24 [#allocation20]
        %2755 = vst [vmem:[%s2754] sm:$0xff] %v2753
        %2756 = vst [vmem:[#allocation2] sm:$0xff] %v2216
        %2757 = vst [vmem:[%s625] sm:$0xff] %v2574
        %2758 = vst [vmem:[%s627] sm:$0xff] %v2753
        %s2759 = sand.u32 %s303, 1
        %s2760 = scalar_lea.sflag [#allocation5], %s2759
        %s2761 = sand.u32 %s303, 1
        %s2762 = smul.addr %s2761, 32
        %s2763 = scalar_lea.vmem [#allocation17], %s2762
        %s2764 = sand.u32 %s38, 1
        %s2765 = scalar_lea.sflag [#allocation19], %s2764
        %s2766 = sand.u32 %s331, 1
        %s2767 = smul.addr %s2766, 32
        %s2768 = scalar_lea.vmem [#allocation18], %s2767
        %s2769 = sand.u32 %s38, 1
        %s2770 = scalar_lea.sflag [#allocation19], %s2769
        %s2771 = sand.u32 %s359, 1
        %s2772 = smul.addr %s2771, 32
        %s2773 = scalar_lea.vmem [#allocation20], %s2772
        // Predicated region
        $region101: #{tpu_custom_call.1} parent=63 // pred_check
          %p2774 = pneg %p313
        $region102: #{tpu_custom_call.1} parent=63 // pred_check_branch
          %2776 = sbr.rel (%p2774) target = $region104
        $region103: #{tpu_custom_call.1} parent=63 // pred_region
          %s2777 = smul.u32 4, %s43
          %s2779 = ssub.s32 512, 512
          %2780 = vsyncadd %s2760, %s2779
          %s2781 = sadd.s32 %s42, %s2777
          %s2782 = smul.addr %s2781, 128
          %s2783 = scalar_lea.hbm %s11, %s2782
          %s2784 = sshll.u32 %s2763, 4
          %s2785 = int_to_ptr.vmem [resolvable:$true] %s2784
          %2790 = dma.vmem_to_hbm [thread:$0]  %s2785, 512, %s2783, %s2760, 128, 128, 8
        $region104: #{tpu_custom_call.1} parent=63 // pred_fallthru
          _
        // Predicated region
        $region105: #{tpu_custom_call.1} parent=63 // pred_check
          %p2791 = pneg %p341
        $region106: #{tpu_custom_call.1} parent=63 // pred_check_branch
          %2793 = sbr.rel (%p2791) target = $region108
        $region107: #{tpu_custom_call.1} parent=63 // pred_region
          %s2794 = smul.u32 4, %s43
          %s2796 = ssub.s32 512, 512
          %2797 = vsyncadd %s2765, %s2796
          %s2798 = sadd.s32 %s42, %s2794
          %s2799 = smul.addr %s2798, 128
          %s2800 = scalar_lea.hbm %s12, %s2799
          %s2801 = sshll.u32 %s2768, 4
          %s2802 = int_to_ptr.vmem [resolvable:$true] %s2801
          %2807 = dma.vmem_to_hbm [thread:$0]  %s2802, 512, %s2800, %s2765, 128, 128, 8
        $region108: #{tpu_custom_call.1} parent=63 // pred_fallthru
          _
        // Predicated region
        $region109: #{tpu_custom_call.1} parent=63 // pred_check
          %p2808 = pneg %p369
        $region110: #{tpu_custom_call.1} parent=63 // pred_check_branch
          %2810 = sbr.rel (%p2808) target = $region112
        $region111: #{tpu_custom_call.1} parent=63 // pred_region
          %s2811 = smul.u32 4, %s43
          %s2813 = ssub.s32 512, 512
          %2814 = vsyncadd %s2770, %s2813
          %s2815 = sadd.s32 %s42, %s2811
          %s2816 = smul.addr %s2815, 128
          %s2817 = scalar_lea.hbm %s13, %s2816
          %s2818 = sshll.u32 %s2773, 4
          %s2819 = int_to_ptr.vmem [resolvable:$true] %s2818
          %2824 = dma.vmem_to_hbm [thread:$0]  %s2819, 512, %s2817, %s2770, 128, 128, 8
        $region112: #{tpu_custom_call.1} parent=63 // pred_fallthru
          _
      $region64: #{tpu_custom_call.1} parent=5 // pred_fallthru
        _
      %p2825 = scmp.le.s32.totalorder 2, %s33
      // Predicated region
      $region113: #{tpu_custom_call.1} parent=5 // pred_check
        %p2826 = pneg %p2825
      $region114: #{tpu_custom_call.1} parent=5 // pred_check_branch
        %2828 = sbr.rel (%p2826) target = $region116
      $region115: #{tpu_custom_call.1} parent=5 // pred_region
        %s2829 = ssub.s32 %s33, 2
        // Predicated region
        $region117: #{tpu_custom_call.1} parent=115 // pred_check
          %p2830 = pneg %p319
        $region118: #{tpu_custom_call.1} parent=115 // pred_check_branch
          %2832 = sbr.rel (%p2830) target = $region120
        $region119: #{tpu_custom_call.1} parent=115 // pred_region
          %s2833 = sand.u32 %s304, 1
          %s2834 = scalar_lea.sflag [#allocation5], %s2833
          %s2835 = sand.u32 %s304, 1
          %s2836 = smul.addr %s2835, 32
          %s2837 = scalar_lea.vmem [#allocation17], %s2836
          %2838 = dma.done %s2834, 512
        $region120: #{tpu_custom_call.1} parent=115 // pred_fallthru
          _
        // Predicated region
        $region121: #{tpu_custom_call.1} parent=115 // pred_check
          %p2839 = pneg %p347
        $region122: #{tpu_custom_call.1} parent=115 // pred_check_branch
          %2841 = sbr.rel (%p2839) target = $region124
        $region123: #{tpu_custom_call.1} parent=115 // pred_region
          %s2842 = sand.u32 %s39, 1
          %s2843 = scalar_lea.sflag [#allocation19], %s2842
          %s2844 = sand.u32 %s332, 1
          %s2845 = smul.addr %s2844, 32
          %s2846 = scalar_lea.vmem [#allocation18], %s2845
          %2847 = dma.done %s2843, 512
        $region124: #{tpu_custom_call.1} parent=115 // pred_fallthru
          _
        // Predicated region
        $region125: #{tpu_custom_call.1} parent=115 // pred_check
          %p2848 = pneg %p375
        $region126: #{tpu_custom_call.1} parent=115 // pred_check_branch
          %2850 = sbr.rel (%p2848) target = $region128
        $region127: #{tpu_custom_call.1} parent=115 // pred_region
          %s2851 = sand.u32 %s39, 1
          %s2852 = scalar_lea.sflag [#allocation19], %s2851
          %s2853 = sand.u32 %s360, 1
          %s2854 = smul.addr %s2853, 32
          %s2855 = scalar_lea.vmem [#allocation20], %s2854
          %2856 = dma.done %s2852, 512
        $region128: #{tpu_custom_call.1} parent=115 // pred_fallthru
          _
      $region116: #{tpu_custom_call.1} parent=5 // pred_fallthru
        _
    $region6: #{tpu_custom_call.1} parent=1 // loop_footer
      %s37 = sadd.s32 1, %s33
    $region7: #{tpu_custom_call.1} parent=1 // loop_footer_branch
      %32 = sbr.rel target = $region3
    $region8: #{tpu_custom_call.1} parent=1 // loop_exit
      _
    %2857 = vsyncpa [#allocation4], 1
    %s2858 = scalar_lea.sflag [#allocation4], 1
    %2859 = vsyncpa %s2858, 1
    %2860 = vsyncpa [#allocation7], 1
    %2861 = vsyncpa [#allocation10], 1
    %2862 = vsyncpa [#allocation13], 1
    %2863 = vsyncpa [#allocation16], 1
    %2864 = vsyncpa [#allocation5], 1
    %s2865 = scalar_lea.sflag [#allocation5], 1
    %2866 = vsyncpa %s2865, 1
    %2867 = vsyncpa [#allocation19], 1
    %s2868 = scalar_lea.sflag [#allocation19], 1
    %2869 = vsyncpa %s2868, 1

// kernel: tpu_custom_call.1
$region0: #{tpu_custom_call.1}
  #allocation0 [shape = 'u32[]', space=smem, size = 0x4, offset = 0x4, fixed_abs, tag = 'smem constant byte address 0x4 - core index']
  #allocation1 [shape = 'u32[144,128]{1,0:T(1,128)}', space=vmem, size = 0x12000, scoped, tag = 'internal scratch']
  #allocation2 [shape = 'f32[3,8,128]{2,1,0:T(8,128)}', space=vmem, size = 0x3000, scoped, tag = 'scratch operand']
  %s0 = inlined_call_operand.hbm [shape: f32[16,8,16], index: 0, kind: input, shape index: {}]
  %s1 = inlined_call_operand.hbm [shape: f32[1,8,128], index: 1, kind: input, shape index: {}]
  %s2 = inlined_call_operand.hbm [shape: f32[16,128], index: 2, kind: input, shape index: {}]
  %s3 = inlined_call_operand.hbm [shape: f32[128,128], index: 3, kind: input, shape index: {}]
  %s4 = inlined_call_operand.vmem [shape: f32[1,128], index: 4, kind: input, shape index: {}]
  %s5 = inlined_call_operand.hbm [shape: f32[128,128], index: 5, kind: input, shape index: {}]
  %s6 = inlined_call_operand.hbm [shape: f32[128,128], index: 6, kind: input, shape index: {}]
  %s7 = inlined_call_operand.vmem [shape: f32[1,128], index: 7, kind: input, shape index: {}]
  %s8 = inlined_call_operand.hbm [shape: f32[128,128], index: 8, kind: input, shape index: {}]
  %s9 = inlined_call_operand.hbm [shape: f32[128,128], index: 9, kind: input, shape index: {}]
  %s10 = inlined_call_operand.vmem [shape: f32[1,128], index: 10, kind: input, shape index: {}]
  %s11 = inlined_call_operand.hbm [shape: f32[16,8,128], index: 11, kind: output, shape index: {0}]
  %s12 = inlined_call_operand.hbm [shape: f32[16,8,128], index: 12, kind: output, shape index: {1}]
  %s13 = inlined_call_operand.hbm [shape: f32[16,8,128], index: 13, kind: output, shape index: {2}]
  %14 = xla_tuple %s11, %s12, %s13
  %s15 = sld [smem:[#allocation0]]
  $region129: #{tpu_custom_call.1} parent=0
    _
  %s17 = ssub.s32 1, %s15
  %s18 = scalar_select 0, %s17, %s15
  $region1: #{tpu_custom_call.1} parent=0
    #allocation3 [shape = 'u8[32768]{0}', space=vmem, size = 0x8000, scoped, tag = 'input window, operand 0']
    #allocation4 [shape = 's32[2]{0}', space=sflag, size = 0x8, scoped, tag = 'scoped memory for tpu_custom_call.1']
    #allocation5 [shape = 's32[2]{0}', space=sflag, size = 0x8, scoped, tag = 'scoped memory for tpu_custom_call.1']
    #allocation6 [shape = 'u8[4096]{0}', space=vmem, size = 0x1000, scoped, tag = 'input window, operand 1, single buffered']
    #allocation7 [shape = 's32[1]{0}', space=sflag, size = 0x4, scoped, tag = 'scoped memory for tpu_custom_call.1']
    #allocation8 [shape = 'u8[8192]{0}', space=vmem, size = 0x2000, scoped, tag = 'input window, operand 2, single buffered']
    #allocation9 [shape = 'u8[65536]{0}', space=vmem, size = 0x10000, scoped, tag = 'input window, operand 3, single buffered']
    #allocation10 [shape = 's32[1]{0}', space=sflag, size = 0x4, scoped, tag = 'scoped memory for tpu_custom_call.1']
    #allocation11 [shape = 'u8[65536]{0}', space=vmem, size = 0x10000, scoped, tag = 'input window, operand 5, single buffered']
    #allocation12 [shape = 'u8[65536]{0}', space=vmem, size = 0x10000, scoped, tag = 'input window, operand 6, single buffered']
    #allocation13 [shape = 's32[1]{0}', space=sflag, size = 0x4, scoped, tag = 'scoped memory for tpu_custom_call.1']
    #allocation14 [shape = 'u8[65536]{0}', space=vmem, size = 0x10000, scoped, tag = 'input window, operand 8, single buffered']
    #allocation15 [shape = 'u8[65536]{0}', space=vmem, size = 0x10000, scoped, tag = 'input window, operand 9, single buffered']
    #allocation16 [shape = 's32[1]{0}', space=sflag, size = 0x4, scoped, tag = 'scoped memory for tpu_custom_call.1']
    #allocation17 [shape = 'u8[32768]{0}', space=vmem, size = 0x8000, scoped, tag = 'output window, operand 0']
    #allocation18 [shape = 'u8[32768]{0}', space=vmem, size = 0x8000, scoped, tag = 'output window, operand 1']
    #allocation19 [shape = 's32[2]{0}', space=sflag, size = 0x8, scoped, tag = 'scoped memory for tpu_custom_call.1']
    #allocation20 [shape = 'u8[32768]{0}', space=vmem, size = 0x8000, scoped, tag = 'output window, operand 2']
    %19 = vsyncpa [#allocation4], 0
    %s20 = scalar_lea.sflag [#allocation4], 1
    %21 = vsyncpa %s20, 0
    %22 = vsyncpa [#allocation7], 0
    %23 = vsyncpa [#allocation10], 0
    %24 = vsyncpa [#allocation13], 0
    %25 = vsyncpa [#allocation16], 0
    %26 = vsyncpa [#allocation5], 0
    %s27 = scalar_lea.sflag [#allocation5], 1
    %28 = vsyncpa %s27, 0
    %29 = vsyncpa [#allocation19], 0
    %s30 = scalar_lea.sflag [#allocation19], 1
    %31 = vsyncpa %s30, 0
    loop: start=0, step=1, limit=6
    $region2: #{tpu_custom_call.1} parent=1 // loop_pre_header
      _
    $region3: #{tpu_custom_call.1} parent=1 // loop_header
      %s33 = sphi 0, %s37
      %p34 = scmp.ge.s32.totalorder %s33, 6
      %s40 = sphi 0, %s52
      %s41 = sphi 0, %s48
      %s42 = sphi 0, %s40
      %s43 = sphi 0, %s41
      %s44 = sphi 0, %s42
      %s45 = sphi 0, %s43
      %s57 = sphi 0, %s59
      %s60 = sphi 0, %s57
      %s61 = sphi 0, %s60
      %s77 = sphi 0, %s61
      %s83 = sphi 0, %s85
      %s86 = sphi 0, %s83
      %s87 = sphi 0, %s86
      %s103 = sphi 0, %s87
      %s107 = sphi 0, %s107
      %s109 = sphi 0, %s107
      %s110 = sphi 0, %s109
      %s124 = sphi 0, %s110
      %s128 = sphi 0, %s128
      %s130 = sphi 0, %s128
      %s131 = sphi 0, %s130
      %s145 = sphi 0, %s131
      %s149 = sphi 0, %s149
      %s151 = sphi 0, %s149
      %s152 = sphi 0, %s151
      %s166 = sphi 0, %s152
      %s170 = sphi 0, %s170
      %s172 = sphi 0, %s170
      %s173 = sphi 0, %s172
      %s187 = sphi 0, %s173
      %s191 = sphi 0, %s191
      %s193 = sphi 0, %s191
      %s194 = sphi 0, %s193
      %s208 = sphi 0, %s194
      %s212 = sphi 0, %s212
      %s214 = sphi 0, %s212
      %s215 = sphi 0, %s214
      %s229 = sphi 0, %s215
      %s233 = sphi 0, %s233
      %s235 = sphi 0, %s233
      %s236 = sphi 0, %s235
      %s250 = sphi 0, %s236
      %s254 = sphi 0, %s254
      %s256 = sphi 0, %s254
      %s257 = sphi 0, %s256
      %s271 = sphi 0, %s257
      %s275 = sphi 0, %s275
      %s277 = sphi 0, %s275
      %s278 = sphi 0, %s277
      %s292 = sphi 0, %s278
      %s300 = sphi 0, %s302
      %s303 = sphi 0, %s300
      %s304 = sphi 0, %s303
      %s320 = sphi 0, %s304
      %s328 = sphi 0, %s330
      %s331 = sphi 0, %s328
      %s332 = sphi 0, %s331
      %s348 = sphi 0, %s332
      %s356 = sphi 0, %s358
      %s359 = sphi 0, %s356
      %s360 = sphi 0, %s359
      %s376 = sphi 0, %s360
    $region4: #{tpu_custom_call.1} parent=1 // loop_header_branch
      %36 = sbr.rel (%p34) target = $region8
    $region5: #{tpu_custom_call.1} parent=1 // loop_body
      %s38 = ssub.s32 %s33, 1
      %s39 = ssub.s32 %s33, 2
      %s46 = sadd.s32 1, %s41
      %p47 = scmp.ge.s32.totalorder %s46, 4
      %s48 = scalar_select %p47, 0, %s46
      %s49 = sadd.s32 1, %s40
      %s50 = scalar_select %p47, %s49, %s40
      %p51 = scmp.ge.s32.totalorder %s50, 1
      %s52 = scalar_select %p51, 0, %s50
      %s53 = ssub.s32 %s41, %s48
      %s54 = ssub.s32 %s40, %s52
      %s55 = sor.u32 %s53, %s54
      %p56 = scmp.eq.s32.totalorder %s55, 0
      %s58 = sadd.s32 %s57, 1
      %s59 = scalar_select %p56, %s57, %s58
      %p62 = pneg %p56
      %p63 = scmp.eq.s32.totalorder %s33, 3
      %p64 = por %p62, %p63
      %p65 = scmp.ne.s32.totalorder %s57, %s60
      %p66 = scmp.eq.s32.totalorder %s33, 0
      %p67 = por %p65, %p66
      %p68 = scmp.ne.s32.totalorder %s57, %s60
      %p69 = scmp.eq.s32.totalorder %s38, 3
      %p70 = por %p68, %p69
      %p71 = scmp.ne.s32.totalorder %s60, %s61
      %p72 = scmp.eq.s32.totalorder %s38, 0
      %p73 = por %p71, %p72
      %p74 = scmp.ne.s32.totalorder %s60, %s61
      %p75 = scmp.eq.s32.totalorder %s39, 3
      %p76 = por %p74, %p75
      %p78 = scmp.ne.s32.totalorder %s61, %s77
      %p79 = scmp.eq.s32.totalorder %s39, 0
      %p80 = por %p78, %p79
      %s81 = ssub.s32 %s40, %s52
      %p82 = scmp.eq.s32.totalorder %s81, 0
      %s84 = sadd.s32 %s83, 1
      %s85 = scalar_select %p82, %s83, %s84
      %p88 = pneg %p82
      %p89 = scmp.eq.s32.totalorder %s33, 3
      %p90 = por %p88, %p89
      %p91 = scmp.ne.s32.totalorder %s83, %s86
      %p92 = scmp.eq.s32.totalorder %s33, 0
      %p93 = por %p91, %p92
      %p94 = scmp.ne.s32.totalorder %s83, %s86
      %p95 = scmp.eq.s32.totalorder %s38, 3
      %p96 = por %p94, %p95
      %p97 = scmp.ne.s32.totalorder %s86, %s87
      %p98 = scmp.eq.s32.totalorder %s38, 0
      %p99 = por %p97, %p98
      %p100 = scmp.ne.s32.totalorder %s86, %s87
      %p101 = scmp.eq.s32.totalorder %s39, 3
      %p102 = por %p100, %p101
      %p104 = scmp.ne.s32.totalorder %s87, %s103
      %p105 = scmp.eq.s32.totalorder %s39, 0
      %p106 = por %p104, %p105
      %s108 = sadd.s32 %s107, 1
      %p111 = scmp.eq.s32.totalorder %s33, 3
      %p112 = scmp.ne.s32.totalorder %s107, %s109
      %p113 = scmp.eq.s32.totalorder %s33, 0
      %p114 = por %p112, %p113
      %p115 = scmp.ne.s32.totalorder %s107, %s109
      %p116 = scmp.eq.s32.totalorder %s38, 3
      %p117 = por %p115, %p116
      %p118 = scmp.ne.s32.totalorder %s109, %s110
      %p119 = scmp.eq.s32.totalorder %s38, 0
      %p120 = por %p118, %p119
      %p121 = scmp.ne.s32.totalorder %s109, %s110
      %p122 = scmp.eq.s32.totalorder %s39, 3
      %p123 = por %p121, %p122
      %p125 = scmp.ne.s32.totalorder %s110, %s124
      %p126 = scmp.eq.s32.totalorder %s39, 0
      %p127 = por %p125, %p126
      %s129 = sadd.s32 %s128, 1
      %p132 = scmp.eq.s32.totalorder %s33, 3
      %p133 = scmp.ne.s32.totalorder %s128, %s130
      %p134 = scmp.eq.s32.totalorder %s33, 0
      %p135 = por %p133, %p134
      %p136 = scmp.ne.s32.totalorder %s128, %s130
      %p137 = scmp.eq.s32.totalorder %s38, 3
      %p138 = por %p136, %p137
      %p139 = scmp.ne.s32.totalorder %s130, %s131
      %p140 = scmp.eq.s32.totalorder %s38, 0
      %p141 = por %p139, %p140
      %p142 = scmp.ne.s32.totalorder %s130, %s131
      %p143 = scmp.eq.s32.totalorder %s39, 3
      %p144 = por %p142, %p143
      %p146 = scmp.ne.s32.totalorder %s131, %s145
      %p147 = scmp.eq.s32.totalorder %s39, 0
      %p148 = por %p146, %p147
      %s150 = sadd.s32 %s149, 1
      %p153 = scmp.eq.s32.totalorder %s33, 3
      %p154 = scmp.ne.s32.totalorder %s149, %s151
      %p155 = scmp.eq.s32.totalorder %s33, 0
      %p156 = por %p154, %p155
      %p157 = scmp.ne.s32.totalorder %s149, %s151
      %p158 = scmp.eq.s32.totalorder %s38, 3
      %p159 = por %p157, %p158
      %p160 = scmp.ne.s32.totalorder %s151, %s152
      %p161 = scmp.eq.s32.totalorder %s38, 0
      %p162 = por %p160, %p161
      %p163 = scmp.ne.s32.totalorder %s151, %s152
      %p164 = scmp.eq.s32.totalorder %s39, 3
      %p165 = por %p163, %p164
      %p167 = scmp.ne.s32.totalorder %s152, %s166
      %p168 = scmp.eq.s32.totalorder %s39, 0
      %p169 = por %p167, %p168
      %s171 = sadd.s32 %s170, 1
      %p174 = scmp.eq.s32.totalorder %s33, 3
      %p175 = scmp.ne.s32.totalorder %s170, %s172
      %p176 = scmp.eq.s32.totalorder %s33, 0
      %p177 = por %p175, %p176
      %p178 = scmp.ne.s32.totalorder %s170, %s172
      %p179 = scmp.eq.s32.totalorder %s38, 3
      %p180 = por %p178, %p179
      %p181 = scmp.ne.s32.totalorder %s172, %s173
      %p182 = scmp.eq.s32.totalorder %s38, 0
      %p183 = por %p181, %p182
      %p184 = scmp.ne.s32.totalorder %s172, %s173
      %p185 = scmp.eq.s32.totalorder %s39, 3
      %p186 = por %p184, %p185
      %p188 = scmp.ne.s32.totalorder %s173, %s187
      %p189 = scmp.eq.s32.totalorder %s39, 0
      %p190 = por %p188, %p189
      %s192 = sadd.s32 %s191, 1
      %p195 = scmp.eq.s32.totalorder %s33, 3
      %p196 = scmp.ne.s32.totalorder %s191, %s193
      %p197 = scmp.eq.s32.totalorder %s33, 0
      %p198 = por %p196, %p197
      %p199 = scmp.ne.s32.totalorder %s191, %s193
      %p200 = scmp.eq.s32.totalorder %s38, 3
      %p201 = por %p199, %p200
      %p202 = scmp.ne.s32.totalorder %s193, %s194
      %p203 = scmp.eq.s32.totalorder %s38, 0
      %p204 = por %p202, %p203
      %p205 = scmp.ne.s32.totalorder %s193, %s194
      %p206 = scmp.eq.s32.totalorder %s39, 3
      %p207 = por %p205, %p206
      %p209 = scmp.ne.s32.totalorder %s194, %s208
      %p210 = scmp.eq.s32.totalorder %s39, 0
      %p211 = por %p209, %p210
      %s213 = sadd.s32 %s212, 1
      %p216 = scmp.eq.s32.totalorder %s33, 3
      %p217 = scmp.ne.s32.totalorder %s212, %s214
      %p218 = scmp.eq.s32.totalorder %s33, 0
      %p219 = por %p217, %p218
      %p220 = scmp.ne.s32.totalorder %s212, %s214
      %p221 = scmp.eq.s32.totalorder %s38, 3
      %p222 = por %p220, %p221
      %p223 = scmp.ne.s32.totalorder %s214, %s215
      %p224 = scmp.eq.s32.totalorder %s38, 0
      %p225 = por %p223, %p224
      %p226 = scmp.ne.s32.totalorder %s214, %s215
      %p227 = scmp.eq.s32.totalorder %s39, 3
      %p228 = por %p226, %p227
      %p230 = scmp.ne.s32.totalorder %s215, %s229
      %p231 = scmp.eq.s32.totalorder %s39, 0
      %p232 = por %p230, %p231
      %s234 = sadd.s32 %s233, 1
      %p237 = scmp.eq.s32.totalorder %s33, 3
      %p238 = scmp.ne.s32.totalorder %s233, %s235
      %p239 = scmp.eq.s32.totalorder %s33, 0
      %p240 = por %p238, %p239
      %p241 = scmp.ne.s32.totalorder %s233, %s235
      %p242 = scmp.eq.s32.totalorder %s38, 3
      %p243 = por %p241, %p242
      %p244 = scmp.ne.s32.totalorder %s235, %s236
      %p245 = scmp.eq.s32.totalorder %s38, 0
      %p246 = por %p244, %p245
      %p247 = scmp.ne.s32.totalorder %s235, %s236
      %p248 = scmp.eq.s32.totalorder %s39, 3
      %p249 = por %p247, %p248
      %p251 = scmp.ne.s32.totalorder %s236, %s250
      %p252 = scmp.eq.s32.totalorder %s39, 0
      %p253 = por %p251, %p252
      %s255 = sadd.s32 %s254, 1
      %p258 = scmp.eq.s32.totalorder %s33, 3
      %p259 = scmp.ne.s32.totalorder %s254, %s256
      %p260 = scmp.eq.s32.totalorder %s33, 0
      %p261 = por %p259, %p260
      %p262 = scmp.ne.s32.totalorder %s254, %s256
      %p263 = scmp.eq.s32.totalorder %s38, 3
      %p264 = por %p262, %p263
      %p265 = scmp.ne.s32.totalorder %s256, %s257
      %p266 = scmp.eq.s32.totalorder %s38, 0
      %p267 = por %p265, %p266
      %p268 = scmp.ne.s32.totalorder %s256, %s257
      %p269 = scmp.eq.s32.totalorder %s39, 3
      %p270 = por %p268, %p269
      %p272 = scmp.ne.s32.totalorder %s257, %s271
      %p273 = scmp.eq.s32.totalorder %s39, 0
      %p274 = por %p272, %p273
      %s276 = sadd.s32 %s275, 1
      %p279 = scmp.eq.s32.totalorder %s33, 3
      %p280 = scmp.ne.s32.totalorder %s275, %s277
      %p281 = scmp.eq.s32.totalorder %s33, 0
      %p282 = por %p280, %p281
      %p283 = scmp.ne.s32.totalorder %s275, %s277
      %p284 = scmp.eq.s32.totalorder %s38, 3
      %p285 = por %p283, %p284
      %p286 = scmp.ne.s32.totalorder %s277, %s278
      %p287 = scmp.eq.s32.totalorder %s38, 0
      %p288 = por %p286, %p287
      %p289 = scmp.ne.s32.totalorder %s277, %s278
      %p290 = scmp.eq.s32.totalorder %s39, 3
      %p291 = por %p289, %p290
      %p293 = scmp.ne.s32.totalorder %s278, %s292
      %p294 = scmp.eq.s32.totalorder %s39, 0
      %p295 = por %p293, %p294
      %s296 = ssub.s32 %s41, %s48
      %s297 = ssub.s32 %s40, %s52
      %s298 = sor.u32 %s296, %s297
      %p299 = scmp.eq.s32.totalorder %s298, 0
      %s301 = sadd.s32 %s300, 1
      %s302 = scalar_select %p299, %s300, %s301
      %p305 = pneg %p299
      %p306 = scmp.eq.s32.totalorder %s33, 3
      %p307 = por %p305, %p306
      %p308 = scmp.ne.s32.totalorder %s300, %s303
      %p309 = scmp.eq.s32.totalorder %s33, 0
      %p310 = por %p308, %p309
      %p311 = scmp.ne.s32.totalorder %s300, %s303
      %p312 = scmp.eq.s32.totalorder %s38, 3
      %p313 = por %p311, %p312
      %p314 = scmp.ne.s32.totalorder %s303, %s304
      %p315 = scmp.eq.s32.totalorder %s38, 0
      %p316 = por %p314, %p315
      %p317 = scmp.ne.s32.totalorder %s303, %s304
      %p318 = scmp.eq.s32.totalorder %s39, 3
      %p319 = por %p317, %p318
      %p321 = scmp.ne.s32.totalorder %s304, %s320
      %p322 = scmp.eq.s32.totalorder %s39, 0
      %p323 = por %p321, %p322
      %s324 = ssub.s32 %s41, %s48
      %s325 = ssub.s32 %s40, %s52
      %s326 = sor.u32 %s324, %s325
      %p327 = scmp.eq.s32.totalorder %s326, 0
      %s329 = sadd.s32 %s328, 1
      %s330 = scalar_select %p327, %s328, %s329
      %p333 = pneg %p327
      %p334 = scmp.eq.s32.totalorder %s33, 3
      %p335 = por %p333, %p334
      %p336 = scmp.ne.s32.totalorder %s328, %s331
      %p337 = scmp.eq.s32.totalorder %s33, 0
      %p338 = por %p336, %p337
      %p339 = scmp.ne.s32.totalorder %s328, %s331
      %p340 = scmp.eq.s32.totalorder %s38, 3
      %p341 = por %p339, %p340
      %p342 = scmp.ne.s32.totalorder %s331, %s332
      %p343 = scmp.eq.s32.totalorder %s38, 0
      %p344 = por %p342, %p343
      %p345 = scmp.ne.s32.totalorder %s331, %s332
      %p346 = scmp.eq.s32.totalorder %s39, 3
      %p347 = por %p345, %p346
      %p349 = scmp.ne.s32.totalorder %s332, %s348
      %p350 = scmp.eq.s32.totalorder %s39, 0
      %p351 = por %p349, %p350
      %s352 = ssub.s32 %s41, %s48
      %s353 = ssub.s32 %s40, %s52
      %s354 = sor.u32 %s352, %s353
      %p355 = scmp.eq.s32.totalorder %s354, 0
      %s357 = sadd.s32 %s356, 1
      %s358 = scalar_select %p355, %s356, %s357
      %p361 = pneg %p355
      %p362 = scmp.eq.s32.totalorder %s33, 3
      %p363 = por %p361, %p362
      %p364 = scmp.ne.s32.totalorder %s356, %s359
      %p365 = scmp.eq.s32.totalorder %s33, 0
      %p366 = por %p364, %p365
      %p367 = scmp.ne.s32.totalorder %s356, %s359
      %p368 = scmp.eq.s32.totalorder %s38, 3
      %p369 = por %p367, %p368
      %p370 = scmp.ne.s32.totalorder %s359, %s360
      %p371 = scmp.eq.s32.totalorder %s38, 0
      %p372 = por %p370, %p371
      %p373 = scmp.ne.s32.totalorder %s359, %s360
      %p374 = scmp.eq.s32.totalorder %s39, 3
      %p375 = por %p373, %p374
      %p377 = scmp.ne.s32.totalorder %s360, %s376
      %p378 = scmp.eq.s32.totalorder %s39, 0
      %p379 = por %p377, %p378
      %p380 = scmp.le.s32.totalorder 1, %s33
      %p381 = scmp.lt.s32.totalorder %s33, 5
      %p382 = pnand %p380, %p381
      %p383 = pneg %p382
      // Predicated region
      $region9: #{tpu_custom_call.1} parent=5 // pred_check
        _
      $region10: #{tpu_custom_call.1} parent=5 // pred_check_branch
        %385 = sbr.rel (%p382) target = $region12
      $region11: #{tpu_custom_call.1} parent=5 // pred_region
        %s386 = ssub.s32 %s33, 1
        // Predicated region
        $region13: #{tpu_custom_call.1} parent=11 // pred_check
          %p387 = pneg %p99
        $region14: #{tpu_custom_call.1} parent=11 // pred_check_branch
          %389 = sbr.rel (%p387) target = $region16
        $region15: #{tpu_custom_call.1} parent=11 // pred_region
          %s391 = ssub.s32 128, 128
          %392 = vsyncadd [#allocation7], %s391
          %s393 = smul.addr %s42, 128
          %s394 = scalar_lea.hbm %s1, %s393
          %s396 = sshll.u32 [#allocation6], 4
          %s397 = int_to_ptr.vmem [resolvable:$true] %s396
          %399 = dma.hbm_to_vmem [thread:$0]  %s394, 128, %s397, [#allocation7]
        $region16: #{tpu_custom_call.1} parent=11 // pred_fallthru
          _
        // Predicated region
        $region17: #{tpu_custom_call.1} parent=11 // pred_check
          %p400 = pneg %p120
        $region18: #{tpu_custom_call.1} parent=11 // pred_check_branch
          %402 = sbr.rel (%p400) target = $region20
        $region19: #{tpu_custom_call.1} parent=11 // pred_region
          %s404 = ssub.s32 256, 256
          %405 = vsyncadd [#allocation7], %s404
          %s406 = sshll.u32 [#allocation8], 4
          %s407 = int_to_ptr.vmem [resolvable:$true] %s406
          %412 = dma.hbm_to_vmem [thread:$0]  %s2, 256, %s407, [#allocation7], 128, 128, 8
        $region20: #{tpu_custom_call.1} parent=11 // pred_fallthru
          _
        // Predicated region
        $region21: #{tpu_custom_call.1} parent=11 // pred_check
          %p413 = pneg %p141
        $region22: #{tpu_custom_call.1} parent=11 // pred_check_branch
          %415 = sbr.rel (%p413) target = $region24
        $region23: #{tpu_custom_call.1} parent=11 // pred_region
          %s417 = ssub.s32 2048, 2048
          %418 = vsyncadd [#allocation10], %s417
          %s419 = sshll.u32 [#allocation9], 4
          %s420 = int_to_ptr.vmem [resolvable:$true] %s419
          %425 = dma.hbm_to_vmem [thread:$0]  %s3, 2048, %s420, [#allocation10], 128, 128, 8
        $region24: #{tpu_custom_call.1} parent=11 // pred_fallthru
          _
        // Predicated region
        $region25: #{tpu_custom_call.1} parent=11 // pred_check
          %p426 = pneg %p162
        $region26: #{tpu_custom_call.1} parent=11 // pred_check_branch
          %428 = sbr.rel (%p426) target = $region28
        $region27: #{tpu_custom_call.1} parent=11 // pred_region
          _
        $region28: #{tpu_custom_call.1} parent=11 // pred_fallthru
          _
        // Predicated region
        $region29: #{tpu_custom_call.1} parent=11 // pred_check
          %p429 = pneg %p183
        $region30: #{tpu_custom_call.1} parent=11 // pred_check_branch
          %431 = sbr.rel (%p429) target = $region32
        $region31: #{tpu_custom_call.1} parent=11 // pred_region
          %s433 = ssub.s32 2048, 2048
          %434 = vsyncadd [#allocation10], %s433
          %s435 = sshll.u32 [#allocation11], 4
          %s436 = int_to_ptr.vmem [resolvable:$true] %s435
          %441 = dma.hbm_to_vmem [thread:$0]  %s5, 2048, %s436, [#allocation10], 128, 128, 8
        $region32: #{tpu_custom_call.1} parent=11 // pred_fallthru
          _
        // Predicated region
        $region33: #{tpu_custom_call.1} parent=11 // pred_check
          %p442 = pneg %p204
        $region34: #{tpu_custom_call.1} parent=11 // pred_check_branch
          %444 = sbr.rel (%p442) target = $region36
        $region35: #{tpu_custom_call.1} parent=11 // pred_region
          %s446 = ssub.s32 2048, 2048
          %447 = vsyncadd [#allocation13], %s446
          %s448 = sshll.u32 [#allocation12], 4
          %s449 = int_to_ptr.vmem [resolvable:$true] %s448
          %454 = dma.hbm_to_vmem [thread:$0]  %s6, 2048, %s449, [#allocation13], 128, 128, 8
        $region36: #{tpu_custom_call.1} parent=11 // pred_fallthru
          _
        // Predicated region
        $region37: #{tpu_custom_call.1} parent=11 // pred_check
          %p455 = pneg %p225
        $region38: #{tpu_custom_call.1} parent=11 // pred_check_branch
          %457 = sbr.rel (%p455) target = $region40
        $region39: #{tpu_custom_call.1} parent=11 // pred_region
          _
        $region40: #{tpu_custom_call.1} parent=11 // pred_fallthru
          _
        // Predicated region
        $region41: #{tpu_custom_call.1} parent=11 // pred_check
          %p458 = pneg %p246
        $region42: #{tpu_custom_call.1} parent=11 // pred_check_branch
          %460 = sbr.rel (%p458) target = $region44
        $region43: #{tpu_custom_call.1} parent=11 // pred_region
          %s462 = ssub.s32 2048, 2048
          %463 = vsyncadd [#allocation13], %s462
          %s464 = sshll.u32 [#allocation14], 4
          %s465 = int_to_ptr.vmem [resolvable:$true] %s464
          %470 = dma.hbm_to_vmem [thread:$0]  %s8, 2048, %s465, [#allocation13], 128, 128, 8
        $region44: #{tpu_custom_call.1} parent=11 // pred_fallthru
          _
        // Predicated region
        $region45: #{tpu_custom_call.1} parent=11 // pred_check
          %p471 = pneg %p267
        $region46: #{tpu_custom_call.1} parent=11 // pred_check_branch
          %473 = sbr.rel (%p471) target = $region48
        $region47: #{tpu_custom_call.1} parent=11 // pred_region
          %s475 = ssub.s32 2048, 2048
          %476 = vsyncadd [#allocation16], %s475
          %s477 = sshll.u32 [#allocation15], 4
          %s478 = int_to_ptr.vmem [resolvable:$true] %s477
          %483 = dma.hbm_to_vmem [thread:$0]  %s9, 2048, %s478, [#allocation16], 128, 128, 8
        $region48: #{tpu_custom_call.1} parent=11 // pred_fallthru
          _
        // Predicated region
        $region49: #{tpu_custom_call.1} parent=11 // pred_check
          %p484 = pneg %p288
        $region50: #{tpu_custom_call.1} parent=11 // pred_check_branch
          %486 = sbr.rel (%p484) target = $region52
        $region51: #{tpu_custom_call.1} parent=11 // pred_region
          _
        $region52: #{tpu_custom_call.1} parent=11 // pred_fallthru
          _
      $region12: #{tpu_custom_call.1} parent=5 // pred_fallthru
        _
      %p487 = scmp.lt.s32.totalorder %s33, 4
      // Predicated region
      $region53: #{tpu_custom_call.1} parent=5 // pred_check
        %p488 = pneg %p487
      $region54: #{tpu_custom_call.1} parent=5 // pred_check_branch
        %490 = sbr.rel (%p488) target = $region56
      $region55: #{tpu_custom_call.1} parent=5 // pred_region
        // Predicated region
        $region57: #{tpu_custom_call.1} parent=55 // pred_check
          %p491 = pneg %p67
        $region58: #{tpu_custom_call.1} parent=55 // pred_check_branch
          %493 = sbr.rel (%p491) target = $region60
        $region59: #{tpu_custom_call.1} parent=55 // pred_region
          %s494 = sand.u32 %s57, 1
          %s495 = scalar_lea.sflag [#allocation4], %s494
          %s496 = sand.u32 %s57, 1
          %s497 = smul.addr %s496, 32
          %s498 = scalar_lea.vmem [#allocation3], %s497
          %s499 = smul.u32 4, %s41
          %s501 = ssub.s32 512, 512
          %502 = vsyncadd %s495, %s501
          %s503 = sadd.s32 %s40, %s499
          %s504 = smul.addr %s503, 128
          %s505 = scalar_lea.hbm %s0, %s504
          %s506 = sshll.u32 %s498, 4
          %s507 = int_to_ptr.vmem [resolvable:$true] %s506
          %512 = dma.hbm_to_vmem [thread:$0]  %s505, 512, %s507, %s495, 128, 128, 8
        $region60: #{tpu_custom_call.1} parent=55 // pred_fallthru
          _
      $region56: #{tpu_custom_call.1} parent=5 // pred_fallthru
        _
      %p513 = scmp.le.s32.totalorder 1, %s33
      %p514 = scmp.lt.s32.totalorder %s33, 5
      %p515 = pnand %p513, %p514
      %p516 = pneg %p515
      // Predicated region
      $region61: #{tpu_custom_call.1} parent=5 // pred_check
        _
      $region62: #{tpu_custom_call.1} parent=5 // pred_check_branch
        %518 = sbr.rel (%p515) target = $region64
      $region63: #{tpu_custom_call.1} parent=5 // pred_region
        %s519 = ssub.s32 %s33, 1
        %s520 = sand.u32 %s60, 1
        %s521 = scalar_lea.sflag [#allocation4], %s520
        %s522 = sand.u32 %s60, 1
        %s523 = smul.addr %s522, 32
        %s524 = scalar_lea.vmem [#allocation3], %s523
        // Predicated region
        $region65: #{tpu_custom_call.1} parent=63 // pred_check
          %p525 = pneg %p73
        $region66: #{tpu_custom_call.1} parent=63 // pred_check_branch
          %527 = sbr.rel (%p525) target = $region68
        $region67: #{tpu_custom_call.1} parent=63 // pred_region
          %528 = dma.done %s521, 512
        $region68: #{tpu_custom_call.1} parent=63 // pred_fallthru
          _
        // Predicated region
        $region69: #{tpu_custom_call.1} parent=63 // pred_check
          %p529 = pneg %p99
        $region70: #{tpu_custom_call.1} parent=63 // pred_check_branch
          %531 = sbr.rel (%p529) target = $region72
        $region71: #{tpu_custom_call.1} parent=63 // pred_region
          %532 = dma.done [#allocation7], 128
        $region72: #{tpu_custom_call.1} parent=63 // pred_fallthru
          _
        // Predicated region
        $region73: #{tpu_custom_call.1} parent=63 // pred_check
          %p533 = pneg %p120
        $region74: #{tpu_custom_call.1} parent=63 // pred_check_branch
          %535 = sbr.rel (%p533) target = $region76
        $region75: #{tpu_custom_call.1} parent=63 // pred_region
          %536 = dma.done [#allocation7], 256
        $region76: #{tpu_custom_call.1} parent=63 // pred_fallthru
          _
        // Predicated region
        $region77: #{tpu_custom_call.1} parent=63 // pred_check
          %p537 = pneg %p141
        $region78: #{tpu_custom_call.1} parent=63 // pred_check_branch
          %539 = sbr.rel (%p537) target = $region80
        $region79: #{tpu_custom_call.1} parent=63 // pred_region
          %540 = dma.done [#allocation10], 2048
        $region80: #{tpu_custom_call.1} parent=63 // pred_fallthru
          _
        // Predicated region
        $region81: #{tpu_custom_call.1} parent=63 // pred_check
          %p541 = pneg %p183
        $region82: #{tpu_custom_call.1} parent=63 // pred_check_branch
          %543 = sbr.rel (%p541) target = $region84
        $region83: #{tpu_custom_call.1} parent=63 // pred_region
          %544 = dma.done [#allocation10], 2048
        $region84: #{tpu_custom_call.1} parent=63 // pred_fallthru
          _
        // Predicated region
        $region85: #{tpu_custom_call.1} parent=63 // pred_check
          %p545 = pneg %p204
        $region86: #{tpu_custom_call.1} parent=63 // pred_check_branch
          %547 = sbr.rel (%p545) target = $region88
        $region87: #{tpu_custom_call.1} parent=63 // pred_region
          %548 = dma.done [#allocation13], 2048
        $region88: #{tpu_custom_call.1} parent=63 // pred_fallthru
          _
        // Predicated region
        $region89: #{tpu_custom_call.1} parent=63 // pred_check
          %p549 = pneg %p246
        $region90: #{tpu_custom_call.1} parent=63 // pred_check_branch
          %551 = sbr.rel (%p549) target = $region92
        $region91: #{tpu_custom_call.1} parent=63 // pred_region
          %552 = dma.done [#allocation13], 2048
        $region92: #{tpu_custom_call.1} parent=63 // pred_fallthru
          _
        // Predicated region
        $region93: #{tpu_custom_call.1} parent=63 // pred_check
          %p553 = pneg %p267
        $region94: #{tpu_custom_call.1} parent=63 // pred_check_branch
          %555 = sbr.rel (%p553) target = $region96
        $region95: #{tpu_custom_call.1} parent=63 // pred_region
          %556 = dma.done [#allocation16], 2048
        $region96: #{tpu_custom_call.1} parent=63 // pred_fallthru
          _
        %s557 = sand.u32 %s60, 1
        %s558 = scalar_lea.sflag [#allocation4], %s557
        %s559 = sand.u32 %s60, 1
        %s560 = smul.addr %s559, 32
        %s561 = scalar_lea.vmem [#allocation3], %s560
        %p562 = pneg %p73
        %p563 = pneg %p70
        %p564 = pneg %p99
        %p565 = pneg %p96
        %p566 = pneg %p120
        %p567 = pneg %p117
        %p568 = pneg %p141
        %p569 = pneg %p138
        %p570 = pneg %p162
        %p571 = pneg %p159
        %p572 = pneg %p183
        %p573 = pneg %p180
        %p574 = pneg %p204
        %p575 = pneg %p201
        %p576 = pneg %p225
        %p577 = pneg %p222
        %p578 = pneg %p246
        %p579 = pneg %p243
        %p580 = pneg %p267
        %p581 = pneg %p264
        %p582 = pneg %p288
        %p583 = pneg %p285
        %p584 = pneg %p316
        %p585 = pneg %p313
        %s586 = sand.u32 %s303, 1
        %s587 = scalar_lea.sflag [#allocation5], %s586
        %s588 = sand.u32 %s303, 1
        %s589 = smul.addr %s588, 32
        %s590 = scalar_lea.vmem [#allocation17], %s589
        %p591 = pneg %p344
        %p592 = pneg %p341
        %s593 = sand.u32 %s38, 1
        %s594 = scalar_lea.sflag [#allocation19], %s593
        %s595 = sand.u32 %s331, 1
        %s596 = smul.addr %s595, 32
        %s597 = scalar_lea.vmem [#allocation18], %s596
        %p598 = pneg %p372
        %p599 = pneg %p369
        %s600 = sand.u32 %s38, 1
        %s601 = scalar_lea.sflag [#allocation19], %s600
        %s602 = sand.u32 %s359, 1
        %s603 = smul.addr %s602, 32
        %s604 = scalar_lea.vmem [#allocation20], %s603
        %s605 = smul.u32 4, %s43
        %s606 = smul.u32 4, %s43
        %s607 = smul.u32 4, %s43
        %s608 = smul.u32 4, %s43
        %p609 = scmp.eq.s32.totalorder %s43, 0
        // Predicated region
        $region97: #{tpu_custom_call.1} parent=63 // pred_check
          %p610 = pneg %p609
        $region98: #{tpu_custom_call.1} parent=63 // pred_check_branch
          %612 = sbr.rel (%p610) target = $region100
        $region99: #{tpu_custom_call.1} parent=63 // pred_region
          %v613 = vld [vmem:[#allocation6] sm:$0xff]
          %614 = vst [vmem:[#allocation2] sm:$0xff] %v613
          %v615 = vld [vmem:[#allocation6] sm:$0xff]
          %s616 = scalar_lea.vmem [#allocation2], 8
          %617 = vst [vmem:[%s616] sm:$0xff] %v615
          %v618 = vld [vmem:[#allocation6] sm:$0xff]
          %s619 = scalar_lea.vmem [#allocation2], 16
          %620 = vst [vmem:[%s619] sm:$0xff] %v618
        $region100: #{tpu_custom_call.1} parent=63 // pred_fallthru
          _
        %v621 = vld [vmem:[%s4] sm:$0x1]
        %v622 = vld [vmem:[%s7] sm:$0x1]
        %v623 = vld [vmem:[%s10] sm:$0x1]
        %v624 = vld [vmem:[#allocation2] sm:$0xff]
        %s625 = scalar_lea.vmem [#allocation2], 8
        %v626 = vld [vmem:[%s625] sm:$0xff]
        %s627 = scalar_lea.vmem [#allocation2], 16
        %v628 = vld [vmem:[%s627] sm:$0xff]
        %v629 = vld [vmem:[%s524] sm:$0xff]
        %v630 = vld [vmem:[#allocation8] sm:$0xff]
        %v631 = vld [vmem:[#allocation8 + $0x8] sm:$0xff]
        %v632 = vld [vmem:[#allocation9] sm:$0xff]
        %v633 = vld [vmem:[#allocation9 + $0x8] sm:$0xff]
        %v634 = vld [vmem:[#allocation9 + $0x10] sm:$0xff]
        %v635 = vld [vmem:[#allocation9 + $0x18] sm:$0xff]
        %v636 = vld [vmem:[#allocation9 + $0x20] sm:$0xff]
        %v637 = vld [vmem:[#allocation9 + $0x28] sm:$0xff]
        %v638 = vld [vmem:[#allocation9 + $0x30] sm:$0xff]
        %v639 = vld [vmem:[#allocation9 + $0x38] sm:$0xff]
        %v640 = vld [vmem:[#allocation9 + $0x40] sm:$0xff]
        %v641 = vld [vmem:[#allocation9 + $0x48] sm:$0xff]
        %v642 = vld [vmem:[#allocation9 + $0x50] sm:$0xff]
        %v643 = vld [vmem:[#allocation9 + $0x58] sm:$0xff]
        %v644 = vld [vmem:[#allocation9 + $0x60] sm:$0xff]
        %v645 = vld [vmem:[#allocation9 + $0x68] sm:$0xff]
        %v646 = vld [vmem:[#allocation9 + $0x70] sm:$0xff]
        %v647 = vld [vmem:[#allocation9 + $0x78] sm:$0xff]
        %648 = vmatprep.subr.mxu0 0.0
        %649 = vmatpush1.msra.mxu0 %v632
        %650 = vmatprep.subr.mxu0 0.0
        %651 = vmatpush1.msra.mxu0 %v633
        %652 = vmatprep.subr.mxu0 0.0
        %653 = vmatpush1.msra.mxu0 %v634
        %654 = vmatprep.subr.mxu0 0.0
        %655 = vmatpush1.msra.mxu0 %v635
        %656 = vmatprep.subr.mxu0 0.0
        %657 = vmatpush1.msra.mxu0 %v636
        %658 = vmatprep.subr.mxu0 0.0
        %659 = vmatpush1.msra.mxu0 %v637
        %660 = vmatprep.subr.mxu0 0.0
        %661 = vmatpush1.msra.mxu0 %v638
        %662 = vmatprep.subr.mxu0 0.0
        %663 = vmatpush1.msra.mxu0 %v639
        %664 = vmatprep.subr.mxu0 0.0
        %665 = vmatpush1.msra.mxu0 %v640
        %666 = vmatprep.subr.mxu0 0.0
        %667 = vmatpush1.msra.mxu0 %v641
        %668 = vmatprep.subr.mxu0 0.0
        %669 = vmatpush1.msra.mxu0 %v642
        %670 = vmatprep.subr.mxu0 0.0
        %671 = vmatpush1.msra.mxu0 %v643
        %672 = vmatprep.subr.mxu0 0.0
        %673 = vmatpush1.msra.mxu0 %v644
        %674 = vmatprep.subr.mxu0 0.0
        %675 = vmatpush1.msra.mxu0 %v645
        %676 = vmatprep.subr.mxu0 0.0
        %677 = vmatpush1.msra.mxu0 %v646
        %678 = vmatprep.subr.mxu0 0.0
        %679 = vmatpush1.msra.mxu0 %v647
        %680 = vmatprep.subr.mxu0 0.0
        %681 = vmatpush1.msra.mxu0 0.0
        %682 = vmatprep.subr.mxu0 0.0
        %683 = vmatpush1.msra.mxu0 0.0
        %684 = vmatprep.subr.mxu0 0.0
        %685 = vmatpush1.msra.mxu0 0.0
        %686 = vmatprep.subr.mxu0 0.0
        %687 = vmatpush1.msra.mxu0 0.0
        %688 = vmatprep.subr.mxu0 0.0
        %689 = vmatpush1.msra.mxu0 0.0
        %690 = vmatprep.subr.mxu0 0.0
        %691 = vmatpush1.msra.mxu0 0.0
        %692 = vmatprep.subr.mxu0 0.0
        %693 = vmatpush1.msra.mxu0 0.0
        %694 = vmatprep.subr.mxu0 0.0
        %695 = vmatpush1.msra.mxu0 0.0
        %696 = vmatprep.subr.mxu0 0.0
        %697 = vmatpush1.msra.mxu0 0.0
        %698 = vmatprep.subr.mxu0 0.0
        %699 = vmatpush1.msra.mxu0 0.0
        %700 = vmatprep.subr.mxu0 0.0
        %701 = vmatpush1.msra.mxu0 0.0
        %702 = vmatprep.subr.mxu0 0.0
        %703 = vmatpush1.msra.mxu0 0.0
        %704 = vmatprep.subr.mxu0 0.0
        %705 = vmatpush1.msra.mxu0 0.0
        %706 = vmatprep.subr.mxu0 0.0
        %707 = vmatpush1.msra.mxu0 0.0
        %708 = vmatprep.subr.mxu0 0.0
        %709 = vmatpush1.msra.mxu0 0.0
        %710 = vmatprep.subr.mxu0 0.0
        %711 = vmatpush1.msra.mxu0 0.0
        %712 = vmatprep.mubr.f32.mxu0 0.0
        %713 = vmatmul.mubr.f32.gmra.mrb[0].mxu0 %v624
        %v714 = vpop.f32.mrb[0].mxu0
        %v715 = vadd.f32 0.0, %v714
        %v716 = vpop.f32.mrb[0].mxu0
        %717 = vdwg.mxu0
        %vm718 = vcmask 130048
        %v720 = vsel %vm718, %v629, 0
        %722 = vmatprep.subr.mxu0 0.0
        %723 = vmatpush1.msra.mxu0 %v630
        %724 = vmatprep.subr.mxu0 0.0
        %725 = vmatpush1.msra.mxu0 %v631
        %726 = vmatprep.subr.mxu0 0.0
        %727 = vmatpush1.msra.mxu0 0.0
        %728 = vmatprep.subr.mxu0 0.0
        %729 = vmatpush1.msra.mxu0 0.0
        %730 = vmatprep.subr.mxu0 0.0
        %731 = vmatpush1.msra.mxu0 0.0
        %732 = vmatprep.subr.mxu0 0.0
        %733 = vmatpush1.msra.mxu0 0.0
        %734 = vmatprep.subr.mxu0 0.0
        %735 = vmatpush1.msra.mxu0 0.0
        %736 = vmatprep.subr.mxu0 0.0
        %737 = vmatpush1.msra.mxu0 0.0
        %738 = vmatprep.subr.mxu0 0.0
        %739 = vmatpush1.msra.mxu0 0.0
        %740 = vmatprep.subr.mxu0 0.0
        %741 = vmatpush1.msra.mxu0 0.0
        %742 = vmatprep.subr.mxu0 0.0
        %743 = vmatpush1.msra.mxu0 0.0
        %744 = vmatprep.subr.mxu0 0.0
        %745 = vmatpush1.msra.mxu0 0.0
        %746 = vmatprep.subr.mxu0 0.0
        %747 = vmatpush1.msra.mxu0 0.0
        %748 = vmatprep.subr.mxu0 0.0
        %749 = vmatpush1.msra.mxu0 0.0
        %750 = vmatprep.subr.mxu0 0.0
        %751 = vmatpush1.msra.mxu0 0.0
        %752 = vmatprep.subr.mxu0 0.0
        %753 = vmatpush1.msra.mxu0 0.0
        %754 = vmatprep.subr.mxu0 0.0
        %755 = vmatpush1.msra.mxu0 0.0
        %756 = vmatprep.subr.mxu0 0.0
        %757 = vmatpush1.msra.mxu0 0.0
        %758 = vmatprep.subr.mxu0 0.0
        %759 = vmatpush1.msra.mxu0 0.0
        %760 = vmatprep.subr.mxu0 0.0
        %761 = vmatpush1.msra.mxu0 0.0
        %762 = vmatprep.subr.mxu0 0.0
        %763 = vmatpush1.msra.mxu0 0.0
        %764 = vmatprep.subr.mxu0 0.0
        %765 = vmatpush1.msra.mxu0 0.0
        %766 = vmatprep.subr.mxu0 0.0
        %767 = vmatpush1.msra.mxu0 0.0
        %768 = vmatprep.subr.mxu0 0.0
        %769 = vmatpush1.msra.mxu0 0.0
        %770 = vmatprep.subr.mxu0 0.0
        %771 = vmatpush1.msra.mxu0 0.0
        %772 = vmatprep.subr.mxu0 0.0
        %773 = vmatpush1.msra.mxu0 0.0
        %774 = vmatprep.subr.mxu0 0.0
        %775 = vmatpush1.msra.mxu0 0.0
        %776 = vmatprep.subr.mxu0 0.0
        %777 = vmatpush1.msra.mxu0 0.0
        %778 = vmatprep.subr.mxu0 0.0
        %779 = vmatpush1.msra.mxu0 0.0
        %780 = vmatprep.subr.mxu0 0.0
        %781 = vmatpush1.msra.mxu0 0.0
        %782 = vmatprep.subr.mxu0 0.0
        %783 = vmatpush1.msra.mxu0 0.0
        %784 = vmatprep.subr.mxu0 0.0
        %785 = vmatpush1.msra.mxu0 0.0
        %786 = vmatprep.mubr.f32.mxu0 0.0
        %787 = vmatmul.mubr.f32.gmra.mrb[0].mxu0 %v720
        %v788 = vpop.f32.mrb[0].mxu0
        %v789 = vadd.f32 %v715, %v788
        %v790 = vpop.f32.mrb[0].mxu0
        %791 = vdwg.mxu0
        %v793 = vlaneseq
        %v794 = vshrl.u32 %v793, 7
        %v795 = vsub.s32 0, %v794
        %v796 = vrot.slane %v621, %v795
        %v798 = vadd.f32 %v789, %v796
        %v799 = vmul.f32 %v624, 0.9
        %v800 = vtanh.pop %v798
        %v801 = vmul.f32 %v800, 0.1
        %v802 = vadd.f32 %v799, %v801
        %803 = vst [vmem:[%s590] sm:$0xff] %v802
        %v804 = vld [vmem:[#allocation11] sm:$0xff]
        %v805 = vld [vmem:[#allocation11 + $0x8] sm:$0xff]
        %v806 = vld [vmem:[#allocation11 + $0x10] sm:$0xff]
        %v807 = vld [vmem:[#allocation11 + $0x18] sm:$0xff]
        %v808 = vld [vmem:[#allocation11 + $0x20] sm:$0xff]
        %v809 = vld [vmem:[#allocation11 + $0x28] sm:$0xff]
        %v810 = vld [vmem:[#allocation11 + $0x30] sm:$0xff]
        %v811 = vld [vmem:[#allocation11 + $0x38] sm:$0xff]
        %v812 = vld [vmem:[#allocation11 + $0x40] sm:$0xff]
        %v813 = vld [vmem:[#allocation11 + $0x48] sm:$0xff]
        %v814 = vld [vmem:[#allocation11 + $0x50] sm:$0xff]
        %v815 = vld [vmem:[#allocation11 + $0x58] sm:$0xff]
        %v816 = vld [vmem:[#allocation11 + $0x60] sm:$0xff]
        %v817 = vld [vmem:[#allocation11 + $0x68] sm:$0xff]
        %v818 = vld [vmem:[#allocation11 + $0x70] sm:$0xff]
        %v819 = vld [vmem:[#allocation11 + $0x78] sm:$0xff]
        %v820 = vld [vmem:[#allocation12] sm:$0xff]
        %v821 = vld [vmem:[#allocation12 + $0x8] sm:$0xff]
        %v822 = vld [vmem:[#allocation12 + $0x10] sm:$0xff]
        %v823 = vld [vmem:[#allocation12 + $0x18] sm:$0xff]
        %v824 = vld [vmem:[#allocation12 + $0x20] sm:$0xff]
        %v825 = vld [vmem:[#allocation12 + $0x28] sm:$0xff]
        %v826 = vld [vmem:[#allocation12 + $0x30] sm:$0xff]
        %v827 = vld [vmem:[#allocation12 + $0x38] sm:$0xff]
        %v828 = vld [vmem:[#allocation12 + $0x40] sm:$0xff]
        %v829 = vld [vmem:[#allocation12 + $0x48] sm:$0xff]
        %v830 = vld [vmem:[#allocation12 + $0x50] sm:$0xff]
        %v831 = vld [vmem:[#allocation12 + $0x58] sm:$0xff]
        %v832 = vld [vmem:[#allocation12 + $0x60] sm:$0xff]
        %v833 = vld [vmem:[#allocation12 + $0x68] sm:$0xff]
        %v834 = vld [vmem:[#allocation12 + $0x70] sm:$0xff]
        %v835 = vld [vmem:[#allocation12 + $0x78] sm:$0xff]
        %836 = vmatprep.subr.mxu0 0.0
        %837 = vmatpush1.msra.mxu0 %v820
        %838 = vmatprep.subr.mxu0 0.0
        %839 = vmatpush1.msra.mxu0 %v821
        %840 = vmatprep.subr.mxu0 0.0
        %841 = vmatpush1.msra.mxu0 %v822
        %842 = vmatprep.subr.mxu0 0.0
        %843 = vmatpush1.msra.mxu0 %v823
        %844 = vmatprep.subr.mxu0 0.0
        %845 = vmatpush1.msra.mxu0 %v824
        %846 = vmatprep.subr.mxu0 0.0
        %847 = vmatpush1.msra.mxu0 %v825
        %848 = vmatprep.subr.mxu0 0.0
        %849 = vmatpush1.msra.mxu0 %v826
        %850 = vmatprep.subr.mxu0 0.0
        %851 = vmatpush1.msra.mxu0 %v827
        %852 = vmatprep.subr.mxu0 0.0
        %853 = vmatpush1.msra.mxu0 %v828
        %854 = vmatprep.subr.mxu0 0.0
        %855 = vmatpush1.msra.mxu0 %v829
        %856 = vmatprep.subr.mxu0 0.0
        %857 = vmatpush1.msra.mxu0 %v830
        %858 = vmatprep.subr.mxu0 0.0
        %859 = vmatpush1.msra.mxu0 %v831
        %860 = vmatprep.subr.mxu0 0.0
        %861 = vmatpush1.msra.mxu0 %v832
        %862 = vmatprep.subr.mxu0 0.0
        %863 = vmatpush1.msra.mxu0 %v833
        %864 = vmatprep.subr.mxu0 0.0
        %865 = vmatpush1.msra.mxu0 %v834
        %866 = vmatprep.subr.mxu0 0.0
        %867 = vmatpush1.msra.mxu0 %v835
        %868 = vmatprep.subr.mxu0 0.0
        %869 = vmatpush1.msra.mxu0 0.0
        %870 = vmatprep.subr.mxu0 0.0
        %871 = vmatpush1.msra.mxu0 0.0
        %872 = vmatprep.subr.mxu0 0.0
        %873 = vmatpush1.msra.mxu0 0.0
        %874 = vmatprep.subr.mxu0 0.0
        %875 = vmatpush1.msra.mxu0 0.0
        %876 = vmatprep.subr.mxu0 0.0
        %877 = vmatpush1.msra.mxu0 0.0
        %878 = vmatprep.subr.mxu0 0.0
        %879 = vmatpush1.msra.mxu0 0.0
        %880 = vmatprep.subr.mxu0 0.0
        %881 = vmatpush1.msra.mxu0 0.0
        %882 = vmatprep.subr.mxu0 0.0
        %883 = vmatpush1.msra.mxu0 0.0
        %884 = vmatprep.subr.mxu0 0.0
        %885 = vmatpush1.msra.mxu0 0.0
        %886 = vmatprep.subr.mxu0 0.0
        %887 = vmatpush1.msra.mxu0 0.0
        %888 = vmatprep.subr.mxu0 0.0
        %889 = vmatpush1.msra.mxu0 0.0
        %890 = vmatprep.subr.mxu0 0.0
        %891 = vmatpush1.msra.mxu0 0.0
        %892 = vmatprep.subr.mxu0 0.0
        %893 = vmatpush1.msra.mxu0 0.0
        %894 = vmatprep.subr.mxu0 0.0
        %895 = vmatpush1.msra.mxu0 0.0
        %896 = vmatprep.subr.mxu0 0.0
        %897 = vmatpush1.msra.mxu0 0.0
        %898 = vmatprep.subr.mxu0 0.0
        %899 = vmatpush1.msra.mxu0 0.0
        %900 = vmatprep.mubr.f32.mxu0 0.0
        %901 = vmatmul.mubr.f32.gmra.mrb[0].mxu0 %v626
        %v902 = vpop.f32.mrb[0].mxu0
        %v903 = vadd.f32 0.0, %v902
        %v904 = vpop.f32.mrb[0].mxu0
        %905 = vdwg.mxu0
        %906 = vmatprep.subr.mxu0 0.0
        %907 = vmatpush1.msra.mxu0 %v804
        %908 = vmatprep.subr.mxu0 0.0
        %909 = vmatpush1.msra.mxu0 %v805
        %910 = vmatprep.subr.mxu0 0.0
        %911 = vmatpush1.msra.mxu0 %v806
        %912 = vmatprep.subr.mxu0 0.0
        %913 = vmatpush1.msra.mxu0 %v807
        %914 = vmatprep.subr.mxu0 0.0
        %915 = vmatpush1.msra.mxu0 %v808
        %916 = vmatprep.subr.mxu0 0.0
        %917 = vmatpush1.msra.mxu0 %v809
        %918 = vmatprep.subr.mxu0 0.0
        %919 = vmatpush1.msra.mxu0 %v810
        %920 = vmatprep.subr.mxu0 0.0
        %921 = vmatpush1.msra.mxu0 %v811
        %922 = vmatprep.subr.mxu0 0.0
        %923 = vmatpush1.msra.mxu0 %v812
        %924 = vmatprep.subr.mxu0 0.0
        %925 = vmatpush1.msra.mxu0 %v813
        %926 = vmatprep.subr.mxu0 0.0
        %927 = vmatpush1.msra.mxu0 %v814
        %928 = vmatprep.subr.mxu0 0.0
        %929 = vmatpush1.msra.mxu0 %v815
        %930 = vmatprep.subr.mxu0 0.0
        %931 = vmatpush1.msra.mxu0 %v816
        %932 = vmatprep.subr.mxu0 0.0
        %933 = vmatpush1.msra.mxu0 %v817
        %934 = vmatprep.subr.mxu0 0.0
        %935 = vmatpush1.msra.mxu0 %v818
        %936 = vmatprep.subr.mxu0 0.0
        %937 = vmatpush1.msra.mxu0 %v819
        %938 = vmatprep.subr.mxu0 0.0
        %939 = vmatpush1.msra.mxu0 0.0
        %940 = vmatprep.subr.mxu0 0.0
        %941 = vmatpush1.msra.mxu0 0.0
        %942 = vmatprep.subr.mxu0 0.0
        %943 = vmatpush1.msra.mxu0 0.0
        %944 = vmatprep.subr.mxu0 0.0
        %945 = vmatpush1.msra.mxu0 0.0
        %946 = vmatprep.subr.mxu0 0.0
        %947 = vmatpush1.msra.mxu0 0.0
        %948 = vmatprep.subr.mxu0 0.0
        %949 = vmatpush1.msra.mxu0 0.0
        %950 = vmatprep.subr.mxu0 0.0
        %951 = vmatpush1.msra.mxu0 0.0
        %952 = vmatprep.subr.mxu0 0.0
        %953 = vmatpush1.msra.mxu0 0.0
        %954 = vmatprep.subr.mxu0 0.0
        %955 = vmatpush1.msra.mxu0 0.0
        %956 = vmatprep.subr.mxu0 0.0
        %957 = vmatpush1.msra.mxu0 0.0
        %958 = vmatprep.subr.mxu0 0.0
        %959 = vmatpush1.msra.mxu0 0.0
        %960 = vmatprep.subr.mxu0 0.0
        %961 = vmatpush1.msra.mxu0 0.0
        %962 = vmatprep.subr.mxu0 0.0
        %963 = vmatpush1.msra.mxu0 0.0
        %964 = vmatprep.subr.mxu0 0.0
        %965 = vmatpush1.msra.mxu0 0.0
        %966 = vmatprep.subr.mxu0 0.0
        %967 = vmatpush1.msra.mxu0 0.0
        %968 = vmatprep.subr.mxu0 0.0
        %969 = vmatpush1.msra.mxu0 0.0
        %970 = vmatprep.mubr.f32.mxu0 0.0
        %971 = vmatmul.mubr.f32.gmra.mrb[0].mxu0 %v802
        %v972 = vpop.f32.mrb[0].mxu0
        %v973 = vadd.f32 %v903, %v972
        %v974 = vpop.f32.mrb[0].mxu0
        %975 = vdwg.mxu0
        %v977 = vlaneseq
        %v978 = vshrl.u32 %v977, 7
        %v979 = vsub.s32 0, %v978
        %v980 = vrot.slane %v622, %v979
        %v982 = vadd.f32 %v973, %v980
        %v983 = vmul.f32 %v626, 0.9
        %v984 = vtanh.pop %v982
        %v985 = vmul.f32 %v984, 0.1
        %v986 = vadd.f32 %v983, %v985
        %987 = vst [vmem:[%s597] sm:$0xff] %v986
        %s988 = scalar_lea.vmem %s524, 8 [#allocation3]
        %v989 = vld [vmem:[%s988] sm:$0xff]
        %v990 = vld [vmem:[#allocation8] sm:$0xff]
        %v991 = vld [vmem:[#allocation8 + $0x8] sm:$0xff]
        %v992 = vld [vmem:[#allocation9] sm:$0xff]
        %v993 = vld [vmem:[#allocation9 + $0x8] sm:$0xff]
        %v994 = vld [vmem:[#allocation9 + $0x10] sm:$0xff]
        %v995 = vld [vmem:[#allocation9 + $0x18] sm:$0xff]
        %v996 = vld [vmem:[#allocation9 + $0x20] sm:$0xff]
        %v997 = vld [vmem:[#allocation9 + $0x28] sm:$0xff]
        %v998 = vld [vmem:[#allocation9 + $0x30] sm:$0xff]
        %v999 = vld [vmem:[#allocation9 + $0x38] sm:$0xff]
        %v1000 = vld [vmem:[#allocation9 + $0x40] sm:$0xff]
        %v1001 = vld [vmem:[#allocation9 + $0x48] sm:$0xff]
        %v1002 = vld [vmem:[#allocation9 + $0x50] sm:$0xff]
        %v1003 = vld [vmem:[#allocation9 + $0x58] sm:$0xff]
        %v1004 = vld [vmem:[#allocation9 + $0x60] sm:$0xff]
        %v1005 = vld [vmem:[#allocation9 + $0x68] sm:$0xff]
        %v1006 = vld [vmem:[#allocation9 + $0x70] sm:$0xff]
        %v1007 = vld [vmem:[#allocation9 + $0x78] sm:$0xff]
        %1008 = vmatprep.subr.mxu0 0.0
        %1009 = vmatpush1.msra.mxu0 %v992
        %1010 = vmatprep.subr.mxu0 0.0
        %1011 = vmatpush1.msra.mxu0 %v993
        %1012 = vmatprep.subr.mxu0 0.0
        %1013 = vmatpush1.msra.mxu0 %v994
        %1014 = vmatprep.subr.mxu0 0.0
        %1015 = vmatpush1.msra.mxu0 %v995
        %1016 = vmatprep.subr.mxu0 0.0
        %1017 = vmatpush1.msra.mxu0 %v996
        %1018 = vmatprep.subr.mxu0 0.0
        %1019 = vmatpush1.msra.mxu0 %v997
        %1020 = vmatprep.subr.mxu0 0.0
        %1021 = vmatpush1.msra.mxu0 %v998
        %1022 = vmatprep.subr.mxu0 0.0
        %1023 = vmatpush1.msra.mxu0 %v999
        %1024 = vmatprep.subr.mxu0 0.0
        %1025 = vmatpush1.msra.mxu0 %v1000
        %1026 = vmatprep.subr.mxu0 0.0
        %1027 = vmatpush1.msra.mxu0 %v1001
        %1028 = vmatprep.subr.mxu0 0.0
        %1029 = vmatpush1.msra.mxu0 %v1002
        %1030 = vmatprep.subr.mxu0 0.0
        %1031 = vmatpush1.msra.mxu0 %v1003
        %1032 = vmatprep.subr.mxu0 0.0
        %1033 = vmatpush1.msra.mxu0 %v1004
        %1034 = vmatprep.subr.mxu0 0.0
        %1035 = vmatpush1.msra.mxu0 %v1005
        %1036 = vmatprep.subr.mxu0 0.0
        %1037 = vmatpush1.msra.mxu0 %v1006
        %1038 = vmatprep.subr.mxu0 0.0
        %1039 = vmatpush1.msra.mxu0 %v1007
        %1040 = vmatprep.subr.mxu0 0.0
        %1041 = vmatpush1.msra.mxu0 0.0
        %1042 = vmatprep.subr.mxu0 0.0
        %1043 = vmatpush1.msra.mxu0 0.0
        %1044 = vmatprep.subr.mxu0 0.0
        %1045 = vmatpush1.msra.mxu0 0.0
        %1046 = vmatprep.subr.mxu0 0.0
        %1047 = vmatpush1.msra.mxu0 0.0
        %1048 = vmatprep.subr.mxu0 0.0
        %1049 = vmatpush1.msra.mxu0 0.0
        %1050 = vmatprep.subr.mxu0 0.0
        %1051 = vmatpush1.msra.mxu0 0.0
        %1052 = vmatprep.subr.mxu0 0.0
        %1053 = vmatpush1.msra.mxu0 0.0
        %1054 = vmatprep.subr.mxu0 0.0
        %1055 = vmatpush1.msra.mxu0 0.0
        %1056 = vmatprep.subr.mxu0 0.0
        %1057 = vmatpush1.msra.mxu0 0.0
        %1058 = vmatprep.subr.mxu0 0.0
        %1059 = vmatpush1.msra.mxu0 0.0
        %1060 = vmatprep.subr.mxu0 0.0
        %1061 = vmatpush1.msra.mxu0 0.0
        %1062 = vmatprep.subr.mxu0 0.0
        %1063 = vmatpush1.msra.mxu0 0.0
        %1064 = vmatprep.subr.mxu0 0.0
        %1065 = vmatpush1.msra.mxu0 0.0
        %1066 = vmatprep.subr.mxu0 0.0
        %1067 = vmatpush1.msra.mxu0 0.0
        %1068 = vmatprep.subr.mxu0 0.0
        %1069 = vmatpush1.msra.mxu0 0.0
        %1070 = vmatprep.subr.mxu0 0.0
        %1071 = vmatpush1.msra.mxu0 0.0
        %1072 = vmatprep.mubr.f32.mxu0 0.0
        %1073 = vmatmul.mubr.f32.gmra.mrb[0].mxu0 %v802
        %v1074 = vpop.f32.mrb[0].mxu0
        %v1075 = vadd.f32 0.0, %v1074
        %v1076 = vpop.f32.mrb[0].mxu0
        %1077 = vdwg.mxu0
        %v1079 = vsel %vm718, %v989, 0
        %1081 = vmatprep.subr.mxu0 0.0
        %1082 = vmatpush1.msra.mxu0 %v990
        %1083 = vmatprep.subr.mxu0 0.0
        %1084 = vmatpush1.msra.mxu0 %v991
        %1085 = vmatprep.subr.mxu0 0.0
        %1086 = vmatpush1.msra.mxu0 0.0
        %1087 = vmatprep.subr.mxu0 0.0
        %1088 = vmatpush1.msra.mxu0 0.0
        %1089 = vmatprep.subr.mxu0 0.0
        %1090 = vmatpush1.msra.mxu0 0.0
        %1091 = vmatprep.subr.mxu0 0.0
        %1092 = vmatpush1.msra.mxu0 0.0
        %1093 = vmatprep.subr.mxu0 0.0
        %1094 = vmatpush1.msra.mxu0 0.0
        %1095 = vmatprep.subr.mxu0 0.0
        %1096 = vmatpush1.msra.mxu0 0.0
        %1097 = vmatprep.subr.mxu0 0.0
        %1098 = vmatpush1.msra.mxu0 0.0
        %1099 = vmatprep.subr.mxu0 0.0
        %1100 = vmatpush1.msra.mxu0 0.0
        %1101 = vmatprep.subr.mxu0 0.0
        %1102 = vmatpush1.msra.mxu0 0.0
        %1103 = vmatprep.subr.mxu0 0.0
        %1104 = vmatpush1.msra.mxu0 0.0
        %1105 = vmatprep.subr.mxu0 0.0
        %1106 = vmatpush1.msra.mxu0 0.0
        %1107 = vmatprep.subr.mxu0 0.0
        %1108 = vmatpush1.msra.mxu0 0.0
        %1109 = vmatprep.subr.mxu0 0.0
        %1110 = vmatpush1.msra.mxu0 0.0
        %1111 = vmatprep.subr.mxu0 0.0
        %1112 = vmatpush1.msra.mxu0 0.0
        %1113 = vmatprep.subr.mxu0 0.0
        %1114 = vmatpush1.msra.mxu0 0.0
        %1115 = vmatprep.subr.mxu0 0.0
        %1116 = vmatpush1.msra.mxu0 0.0
        %1117 = vmatprep.subr.mxu0 0.0
        %1118 = vmatpush1.msra.mxu0 0.0
        %1119 = vmatprep.subr.mxu0 0.0
        %1120 = vmatpush1.msra.mxu0 0.0
        %1121 = vmatprep.subr.mxu0 0.0
        %1122 = vmatpush1.msra.mxu0 0.0
        %1123 = vmatprep.subr.mxu0 0.0
        %1124 = vmatpush1.msra.mxu0 0.0
        %1125 = vmatprep.subr.mxu0 0.0
        %1126 = vmatpush1.msra.mxu0 0.0
        %1127 = vmatprep.subr.mxu0 0.0
        %1128 = vmatpush1.msra.mxu0 0.0
        %1129 = vmatprep.subr.mxu0 0.0
        %1130 = vmatpush1.msra.mxu0 0.0
        %1131 = vmatprep.subr.mxu0 0.0
        %1132 = vmatpush1.msra.mxu0 0.0
        %1133 = vmatprep.subr.mxu0 0.0
        %1134 = vmatpush1.msra.mxu0 0.0
        %1135 = vmatprep.subr.mxu0 0.0
        %1136 = vmatpush1.msra.mxu0 0.0
        %1137 = vmatprep.subr.mxu0 0.0
        %1138 = vmatpush1.msra.mxu0 0.0
        %1139 = vmatprep.subr.mxu0 0.0
        %1140 = vmatpush1.msra.mxu0 0.0
        %1141 = vmatprep.subr.mxu0 0.0
        %1142 = vmatpush1.msra.mxu0 0.0
        %1143 = vmatprep.subr.mxu0 0.0
        %1144 = vmatpush1.msra.mxu0 0.0
        %1145 = vmatprep.mubr.f32.mxu0 0.0
        %1146 = vmatmul.mubr.f32.gmra.mrb[0].mxu0 %v1079
        %v1147 = vpop.f32.mrb[0].mxu0
        %v1148 = vadd.f32 %v1075, %v1147
        %v1149 = vpop.f32.mrb[0].mxu0
        %1150 = vdwg.mxu0
        %v1151 = vadd.f32 %v1148, %v796
        %v1152 = vmul.f32 %v802, 0.9
        %v1153 = vtanh.pop %v1151
        %v1154 = vmul.f32 %v1153, 0.1
        %v1155 = vadd.f32 %v1152, %v1154
        %s1156 = scalar_lea.vmem %s590, 8 [#allocation17]
        %1157 = vst [vmem:[%s1156] sm:$0xff] %v1155
        %v1158 = vld [vmem:[#allocation14] sm:$0xff]
        %v1159 = vld [vmem:[#allocation14 + $0x8] sm:$0xff]
        %v1160 = vld [vmem:[#allocation14 + $0x10] sm:$0xff]
        %v1161 = vld [vmem:[#allocation14 + $0x18] sm:$0xff]
        %v1162 = vld [vmem:[#allocation14 + $0x20] sm:$0xff]
        %v1163 = vld [vmem:[#allocation14 + $0x28] sm:$0xff]
        %v1164 = vld [vmem:[#allocation14 + $0x30] sm:$0xff]
        %v1165 = vld [vmem:[#allocation14 + $0x38] sm:$0xff]
        %v1166 = vld [vmem:[#allocation14 + $0x40] sm:$0xff]
        %v1167 = vld [vmem:[#allocation14 + $0x48] sm:$0xff]
        %v1168 = vld [vmem:[#allocation14 + $0x50] sm:$0xff]
        %v1169 = vld [vmem:[#allocation14 + $0x58] sm:$0xff]
        %v1170 = vld [vmem:[#allocation14 + $0x60] sm:$0xff]
        %v1171 = vld [vmem:[#allocation14 + $0x68] sm:$0xff]
        %v1172 = vld [vmem:[#allocation14 + $0x70] sm:$0xff]
        %v1173 = vld [vmem:[#allocation14 + $0x78] sm:$0xff]
        %v1174 = vld [vmem:[#allocation15] sm:$0xff]
        %v1175 = vld [vmem:[#allocation15 + $0x8] sm:$0xff]
        %v1176 = vld [vmem:[#allocation15 + $0x10] sm:$0xff]
        %v1177 = vld [vmem:[#allocation15 + $0x18] sm:$0xff]
        %v1178 = vld [vmem:[#allocation15 + $0x20] sm:$0xff]
        %v1179 = vld [vmem:[#allocation15 + $0x28] sm:$0xff]
        %v1180 = vld [vmem:[#allocation15 + $0x30] sm:$0xff]
        %v1181 = vld [vmem:[#allocation15 + $0x38] sm:$0xff]
        %v1182 = vld [vmem:[#allocation15 + $0x40] sm:$0xff]
        %v1183 = vld [vmem:[#allocation15 + $0x48] sm:$0xff]
        %v1184 = vld [vmem:[#allocation15 + $0x50] sm:$0xff]
        %v1185 = vld [vmem:[#allocation15 + $0x58] sm:$0xff]
        %v1186 = vld [vmem:[#allocation15 + $0x60] sm:$0xff]
        %v1187 = vld [vmem:[#allocation15 + $0x68] sm:$0xff]
        %v1188 = vld [vmem:[#allocation15 + $0x70] sm:$0xff]
        %v1189 = vld [vmem:[#allocation15 + $0x78] sm:$0xff]
        %1190 = vmatprep.subr.mxu0 0.0
        %1191 = vmatpush1.msra.mxu0 %v1174
        %1192 = vmatprep.subr.mxu0 0.0
        %1193 = vmatpush1.msra.mxu0 %v1175
        %1194 = vmatprep.subr.mxu0 0.0
        %1195 = vmatpush1.msra.mxu0 %v1176
        %1196 = vmatprep.subr.mxu0 0.0
        %1197 = vmatpush1.msra.mxu0 %v1177
        %1198 = vmatprep.subr.mxu0 0.0
        %1199 = vmatpush1.msra.mxu0 %v1178
        %1200 = vmatprep.subr.mxu0 0.0
        %1201 = vmatpush1.msra.mxu0 %v1179
        %1202 = vmatprep.subr.mxu0 0.0
        %1203 = vmatpush1.msra.mxu0 %v1180
        %1204 = vmatprep.subr.mxu0 0.0
        %1205 = vmatpush1.msra.mxu0 %v1181
        %1206 = vmatprep.subr.mxu0 0.0
        %1207 = vmatpush1.msra.mxu0 %v1182
        %1208 = vmatprep.subr.mxu0 0.0
        %1209 = vmatpush1.msra.mxu0 %v1183
        %1210 = vmatprep.subr.mxu0 0.0
        %1211 = vmatpush1.msra.mxu0 %v1184
        %1212 = vmatprep.subr.mxu0 0.0
        %1213 = vmatpush1.msra.mxu0 %v1185
        %1214 = vmatprep.subr.mxu0 0.0
        %1215 = vmatpush1.msra.mxu0 %v1186
        %1216 = vmatprep.subr.mxu0 0.0
        %1217 = vmatpush1.msra.mxu0 %v1187
        %1218 = vmatprep.subr.mxu0 0.0
        %1219 = vmatpush1.msra.mxu0 %v1188
        %1220 = vmatprep.subr.mxu0 0.0
        %1221 = vmatpush1.msra.mxu0 %v1189
        %1222 = vmatprep.subr.mxu0 0.0
        %1223 = vmatpush1.msra.mxu0 0.0
        %1224 = vmatprep.subr.mxu0 0.0
        %1225 = vmatpush1.msra.mxu0 0.0
        %1226 = vmatprep.subr.mxu0 0.0
        %1227 = vmatpush1.msra.mxu0 0.0
        %1228 = vmatprep.subr.mxu0 0.0
        %1229 = vmatpush1.msra.mxu0 0.0
        %1230 = vmatprep.subr.mxu0 0.0
        %1231 = vmatpush1.msra.mxu0 0.0
        %1232 = vmatprep.subr.mxu0 0.0
        %1233 = vmatpush1.msra.mxu0 0.0
        %1234 = vmatprep.subr.mxu0 0.0
        %1235 = vmatpush1.msra.mxu0 0.0
        %1236 = vmatprep.subr.mxu0 0.0
        %1237 = vmatpush1.msra.mxu0 0.0
        %1238 = vmatprep.subr.mxu0 0.0
        %1239 = vmatpush1.msra.mxu0 0.0
        %1240 = vmatprep.subr.mxu0 0.0
        %1241 = vmatpush1.msra.mxu0 0.0
        %1242 = vmatprep.subr.mxu0 0.0
        %1243 = vmatpush1.msra.mxu0 0.0
        %1244 = vmatprep.subr.mxu0 0.0
        %1245 = vmatpush1.msra.mxu0 0.0
        %1246 = vmatprep.subr.mxu0 0.0
        %1247 = vmatpush1.msra.mxu0 0.0
        %1248 = vmatprep.subr.mxu0 0.0
        %1249 = vmatpush1.msra.mxu0 0.0
        %1250 = vmatprep.subr.mxu0 0.0
        %1251 = vmatpush1.msra.mxu0 0.0
        %1252 = vmatprep.subr.mxu0 0.0
        %1253 = vmatpush1.msra.mxu0 0.0
        %1254 = vmatprep.mubr.f32.mxu0 0.0
        %1255 = vmatmul.mubr.f32.gmra.mrb[0].mxu0 %v628
        %v1256 = vpop.f32.mrb[0].mxu0
        %v1257 = vadd.f32 0.0, %v1256
        %v1258 = vpop.f32.mrb[0].mxu0
        %1259 = vdwg.mxu0
        %1260 = vmatprep.subr.mxu0 0.0
        %1261 = vmatpush1.msra.mxu0 %v1158
        %1262 = vmatprep.subr.mxu0 0.0
        %1263 = vmatpush1.msra.mxu0 %v1159
        %1264 = vmatprep.subr.mxu0 0.0
        %1265 = vmatpush1.msra.mxu0 %v1160
        %1266 = vmatprep.subr.mxu0 0.0
        %1267 = vmatpush1.msra.mxu0 %v1161
        %1268 = vmatprep.subr.mxu0 0.0
        %1269 = vmatpush1.msra.mxu0 %v1162
        %1270 = vmatprep.subr.mxu0 0.0
        %1271 = vmatpush1.msra.mxu0 %v1163
        %1272 = vmatprep.subr.mxu0 0.0
        %1273 = vmatpush1.msra.mxu0 %v1164
        %1274 = vmatprep.subr.mxu0 0.0
        %1275 = vmatpush1.msra.mxu0 %v1165
        %1276 = vmatprep.subr.mxu0 0.0
        %1277 = vmatpush1.msra.mxu0 %v1166
        %1278 = vmatprep.subr.mxu0 0.0
        %1279 = vmatpush1.msra.mxu0 %v1167
        %1280 = vmatprep.subr.mxu0 0.0
        %1281 = vmatpush1.msra.mxu0 %v1168
        %1282 = vmatprep.subr.mxu0 0.0
        %1283 = vmatpush1.msra.mxu0 %v1169
        %1284 = vmatprep.subr.mxu0 0.0
        %1285 = vmatpush1.msra.mxu0 %v1170
        %1286 = vmatprep.subr.mxu0 0.0
        %1287 = vmatpush1.msra.mxu0 %v1171
        %1288 = vmatprep.subr.mxu0 0.0
        %1289 = vmatpush1.msra.mxu0 %v1172
        %1290 = vmatprep.subr.mxu0 0.0
        %1291 = vmatpush1.msra.mxu0 %v1173
        %1292 = vmatprep.subr.mxu0 0.0
        %1293 = vmatpush1.msra.mxu0 0.0
        %1294 = vmatprep.subr.mxu0 0.0
        %1295 = vmatpush1.msra.mxu0 0.0
        %1296 = vmatprep.subr.mxu0 0.0
        %1297 = vmatpush1.msra.mxu0 0.0
        %1298 = vmatprep.subr.mxu0 0.0
        %1299 = vmatpush1.msra.mxu0 0.0
        %1300 = vmatprep.subr.mxu0 0.0
        %1301 = vmatpush1.msra.mxu0 0.0
        %1302 = vmatprep.subr.mxu0 0.0
        %1303 = vmatpush1.msra.mxu0 0.0
        %1304 = vmatprep.subr.mxu0 0.0
        %1305 = vmatpush1.msra.mxu0 0.0
        %1306 = vmatprep.subr.mxu0 0.0
        %1307 = vmatpush1.msra.mxu0 0.0
        %1308 = vmatprep.subr.mxu0 0.0
        %1309 = vmatpush1.msra.mxu0 0.0
        %1310 = vmatprep.subr.mxu0 0.0
        %1311 = vmatpush1.msra.mxu0 0.0
        %1312 = vmatprep.subr.mxu0 0.0
        %1313 = vmatpush1.msra.mxu0 0.0
        %1314 = vmatprep.subr.mxu0 0.0
        %1315 = vmatpush1.msra.mxu0 0.0
        %1316 = vmatprep.subr.mxu0 0.0
        %1317 = vmatpush1.msra.mxu0 0.0
        %1318 = vmatprep.subr.mxu0 0.0
        %1319 = vmatpush1.msra.mxu0 0.0
        %1320 = vmatprep.subr.mxu0 0.0
        %1321 = vmatpush1.msra.mxu0 0.0
        %1322 = vmatprep.subr.mxu0 0.0
        %1323 = vmatpush1.msra.mxu0 0.0
        %1324 = vmatprep.mubr.f32.mxu0 0.0
        %1325 = vmatmul.mubr.f32.gmra.mrb[0].mxu0 %v986
        %v1326 = vpop.f32.mrb[0].mxu0
        %v1327 = vadd.f32 %v1257, %v1326
        %v1328 = vpop.f32.mrb[0].mxu0
        %1329 = vdwg.mxu0
        %v1331 = vlaneseq
        %v1332 = vshrl.u32 %v1331, 7
        %v1333 = vsub.s32 0, %v1332
        %v1334 = vrot.slane %v623, %v1333
        %v1336 = vadd.f32 %v1327, %v1334
        %v1337 = vmul.f32 %v628, 0.9
        %v1338 = vtanh.pop %v1336
        %v1339 = vmul.f32 %v1338, 0.1
        %v1340 = vadd.f32 %v1337, %v1339
        %1341 = vst [vmem:[%s604] sm:$0xff] %v1340
        %v1342 = vld [vmem:[#allocation11] sm:$0xff]
        %v1343 = vld [vmem:[#allocation11 + $0x8] sm:$0xff]
        %v1344 = vld [vmem:[#allocation11 + $0x10] sm:$0xff]
        %v1345 = vld [vmem:[#allocation11 + $0x18] sm:$0xff]
        %v1346 = vld [vmem:[#allocation11 + $0x20] sm:$0xff]
        %v1347 = vld [vmem:[#allocation11 + $0x28] sm:$0xff]
        %v1348 = vld [vmem:[#allocation11 + $0x30] sm:$0xff]
        %v1349 = vld [vmem:[#allocation11 + $0x38] sm:$0xff]
        %v1350 = vld [vmem:[#allocation11 + $0x40] sm:$0xff]
        %v1351 = vld [vmem:[#allocation11 + $0x48] sm:$0xff]
        %v1352 = vld [vmem:[#allocation11 + $0x50] sm:$0xff]
        %v1353 = vld [vmem:[#allocation11 + $0x58] sm:$0xff]
        %v1354 = vld [vmem:[#allocation11 + $0x60] sm:$0xff]
        %v1355 = vld [vmem:[#allocation11 + $0x68] sm:$0xff]
        %v1356 = vld [vmem:[#allocation11 + $0x70] sm:$0xff]
        %v1357 = vld [vmem:[#allocation11 + $0x78] sm:$0xff]
        %v1358 = vld [vmem:[#allocation12] sm:$0xff]
        %v1359 = vld [vmem:[#allocation12 + $0x8] sm:$0xff]
        %v1360 = vld [vmem:[#allocation12 + $0x10] sm:$0xff]
        %v1361 = vld [vmem:[#allocation12 + $0x18] sm:$0xff]
        %v1362 = vld [vmem:[#allocation12 + $0x20] sm:$0xff]
        %v1363 = vld [vmem:[#allocation12 + $0x28] sm:$0xff]
        %v1364 = vld [vmem:[#allocation12 + $0x30] sm:$0xff]
        %v1365 = vld [vmem:[#allocation12 + $0x38] sm:$0xff]
        %v1366 = vld [vmem:[#allocation12 + $0x40] sm:$0xff]
        %v1367 = vld [vmem:[#allocation12 + $0x48] sm:$0xff]
        %v1368 = vld [vmem:[#allocation12 + $0x50] sm:$0xff]
        %v1369 = vld [vmem:[#allocation12 + $0x58] sm:$0xff]
        %v1370 = vld [vmem:[#allocation12 + $0x60] sm:$0xff]
        %v1371 = vld [vmem:[#allocation12 + $0x68] sm:$0xff]
        %v1372 = vld [vmem:[#allocation12 + $0x70] sm:$0xff]
        %v1373 = vld [vmem:[#allocation12 + $0x78] sm:$0xff]
        %1374 = vmatprep.subr.mxu0 0.0
        %1375 = vmatpush1.msra.mxu0 %v1358
        %1376 = vmatprep.subr.mxu0 0.0
        %1377 = vmatpush1.msra.mxu0 %v1359
        %1378 = vmatprep.subr.mxu0 0.0
        %1379 = vmatpush1.msra.mxu0 %v1360
        %1380 = vmatprep.subr.mxu0 0.0
        %1381 = vmatpush1.msra.mxu0 %v1361
        %1382 = vmatprep.subr.mxu0 0.0
        %1383 = vmatpush1.msra.mxu0 %v1362
        %1384 = vmatprep.subr.mxu0 0.0
        %1385 = vmatpush1.msra.mxu0 %v1363
        %1386 = vmatprep.subr.mxu0 0.0
        %1387 = vmatpush1.msra.mxu0 %v1364
        %1388 = vmatprep.subr.mxu0 0.0
        %1389 = vmatpush1.msra.mxu0 %v1365
        %1390 = vmatprep.subr.mxu0 0.0
        %1391 = vmatpush1.msra.mxu0 %v1366
        %1392 = vmatprep.subr.mxu0 0.0
        %1393 = vmatpush1.msra.mxu0 %v1367
        %1394 = vmatprep.subr.mxu0 0.0
        %1395 = vmatpush1.msra.mxu0 %v1368
        %1396 = vmatprep.subr.mxu0 0.0
        %1397 = vmatpush1.msra.mxu0 %v1369
        %1398 = vmatprep.subr.mxu0 0.0
        %1399 = vmatpush1.msra.mxu0 %v1370
        %1400 = vmatprep.subr.mxu0 0.0
        %1401 = vmatpush1.msra.mxu0 %v1371
        %1402 = vmatprep.subr.mxu0 0.0
        %1403 = vmatpush1.msra.mxu0 %v1372
        %1404 = vmatprep.subr.mxu0 0.0
        %1405 = vmatpush1.msra.mxu0 %v1373
        %1406 = vmatprep.subr.mxu0 0.0
        %1407 = vmatpush1.msra.mxu0 0.0
        %1408 = vmatprep.subr.mxu0 0.0
        %1409 = vmatpush1.msra.mxu0 0.0
        %1410 = vmatprep.subr.mxu0 0.0
        %1411 = vmatpush1.msra.mxu0 0.0
        %1412 = vmatprep.subr.mxu0 0.0
        %1413 = vmatpush1.msra.mxu0 0.0
        %1414 = vmatprep.subr.mxu0 0.0
        %1415 = vmatpush1.msra.mxu0 0.0
        %1416 = vmatprep.subr.mxu0 0.0
        %1417 = vmatpush1.msra.mxu0 0.0
        %1418 = vmatprep.subr.mxu0 0.0
        %1419 = vmatpush1.msra.mxu0 0.0
        %1420 = vmatprep.subr.mxu0 0.0
        %1421 = vmatpush1.msra.mxu0 0.0
        %1422 = vmatprep.subr.mxu0 0.0
        %1423 = vmatpush1.msra.mxu0 0.0
        %1424 = vmatprep.subr.mxu0 0.0
        %1425 = vmatpush1.msra.mxu0 0.0
        %1426 = vmatprep.subr.mxu0 0.0
        %1427 = vmatpush1.msra.mxu0 0.0
        %1428 = vmatprep.subr.mxu0 0.0
        %1429 = vmatpush1.msra.mxu0 0.0
        %1430 = vmatprep.subr.mxu0 0.0
        %1431 = vmatpush1.msra.mxu0 0.0
        %1432 = vmatprep.subr.mxu0 0.0
        %1433 = vmatpush1.msra.mxu0 0.0
        %1434 = vmatprep.subr.mxu0 0.0
        %1435 = vmatpush1.msra.mxu0 0.0
        %1436 = vmatprep.subr.mxu0 0.0
        %1437 = vmatpush1.msra.mxu0 0.0
        %1438 = vmatprep.mubr.f32.mxu0 0.0
        %1439 = vmatmul.mubr.f32.gmra.mrb[0].mxu0 %v986
        %v1440 = vpop.f32.mrb[0].mxu0
        %v1441 = vadd.f32 0.0, %v1440
        %v1442 = vpop.f32.mrb[0].mxu0
        %1443 = vdwg.mxu0
        %1444 = vmatprep.subr.mxu0 0.0
        %1445 = vmatpush1.msra.mxu0 %v1342
        %1446 = vmatprep.subr.mxu0 0.0
        %1447 = vmatpush1.msra.mxu0 %v1343
        %1448 = vmatprep.subr.mxu0 0.0
        %1449 = vmatpush1.msra.mxu0 %v1344
        %1450 = vmatprep.subr.mxu0 0.0
        %1451 = vmatpush1.msra.mxu0 %v1345
        %1452 = vmatprep.subr.mxu0 0.0
        %1453 = vmatpush1.msra.mxu0 %v1346
        %1454 = vmatprep.subr.mxu0 0.0
        %1455 = vmatpush1.msra.mxu0 %v1347
        %1456 = vmatprep.subr.mxu0 0.0
        %1457 = vmatpush1.msra.mxu0 %v1348
        %1458 = vmatprep.subr.mxu0 0.0
        %1459 = vmatpush1.msra.mxu0 %v1349
        %1460 = vmatprep.subr.mxu0 0.0
        %1461 = vmatpush1.msra.mxu0 %v1350
        %1462 = vmatprep.subr.mxu0 0.0
        %1463 = vmatpush1.msra.mxu0 %v1351
        %1464 = vmatprep.subr.mxu0 0.0
        %1465 = vmatpush1.msra.mxu0 %v1352
        %1466 = vmatprep.subr.mxu0 0.0
        %1467 = vmatpush1.msra.mxu0 %v1353
        %1468 = vmatprep.subr.mxu0 0.0
        %1469 = vmatpush1.msra.mxu0 %v1354
        %1470 = vmatprep.subr.mxu0 0.0
        %1471 = vmatpush1.msra.mxu0 %v1355
        %1472 = vmatprep.subr.mxu0 0.0
        %1473 = vmatpush1.msra.mxu0 %v1356
        %1474 = vmatprep.subr.mxu0 0.0
        %1475 = vmatpush1.msra.mxu0 %v1357
        %1476 = vmatprep.subr.mxu0 0.0
        %1477 = vmatpush1.msra.mxu0 0.0
        %1478 = vmatprep.subr.mxu0 0.0
        %1479 = vmatpush1.msra.mxu0 0.0
        %1480 = vmatprep.subr.mxu0 0.0
        %1481 = vmatpush1.msra.mxu0 0.0
        %1482 = vmatprep.subr.mxu0 0.0
        %1483 = vmatpush1.msra.mxu0 0.0
        %1484 = vmatprep.subr.mxu0 0.0
        %1485 = vmatpush1.msra.mxu0 0.0
        %1486 = vmatprep.subr.mxu0 0.0
        %1487 = vmatpush1.msra.mxu0 0.0
        %1488 = vmatprep.subr.mxu0 0.0
        %1489 = vmatpush1.msra.mxu0 0.0
        %1490 = vmatprep.subr.mxu0 0.0
        %1491 = vmatpush1.msra.mxu0 0.0
        %1492 = vmatprep.subr.mxu0 0.0
        %1493 = vmatpush1.msra.mxu0 0.0
        %1494 = vmatprep.subr.mxu0 0.0
        %1495 = vmatpush1.msra.mxu0 0.0
        %1496 = vmatprep.subr.mxu0 0.0
        %1497 = vmatpush1.msra.mxu0 0.0
        %1498 = vmatprep.subr.mxu0 0.0
        %1499 = vmatpush1.msra.mxu0 0.0
        %1500 = vmatprep.subr.mxu0 0.0
        %1501 = vmatpush1.msra.mxu0 0.0
        %1502 = vmatprep.subr.mxu0 0.0
        %1503 = vmatpush1.msra.mxu0 0.0
        %1504 = vmatprep.subr.mxu0 0.0
        %1505 = vmatpush1.msra.mxu0 0.0
        %1506 = vmatprep.subr.mxu0 0.0
        %1507 = vmatpush1.msra.mxu0 0.0
        %1508 = vmatprep.mubr.f32.mxu0 0.0
        %1509 = vmatmul.mubr.f32.gmra.mrb[0].mxu0 %v1155
        %v1510 = vpop.f32.mrb[0].mxu0
        %v1511 = vadd.f32 %v1441, %v1510
        %v1512 = vpop.f32.mrb[0].mxu0
        %1513 = vdwg.mxu0
        %v1514 = vadd.f32 %v1511, %v980
        %v1515 = vmul.f32 %v986, 0.9
        %v1516 = vtanh.pop %v1514
        %v1517 = vmul.f32 %v1516, 0.1
        %v1518 = vadd.f32 %v1515, %v1517
        %s1519 = scalar_lea.vmem %s597, 8 [#allocation18]
        %1520 = vst [vmem:[%s1519] sm:$0xff] %v1518
        %s1521 = scalar_lea.vmem %s524, 16 [#allocation3]
        %v1522 = vld [vmem:[%s1521] sm:$0xff]
        %v1523 = vld [vmem:[#allocation8] sm:$0xff]
        %v1524 = vld [vmem:[#allocation8 + $0x8] sm:$0xff]
        %v1525 = vld [vmem:[#allocation9] sm:$0xff]
        %v1526 = vld [vmem:[#allocation9 + $0x8] sm:$0xff]
        %v1527 = vld [vmem:[#allocation9 + $0x10] sm:$0xff]
        %v1528 = vld [vmem:[#allocation9 + $0x18] sm:$0xff]
        %v1529 = vld [vmem:[#allocation9 + $0x20] sm:$0xff]
        %v1530 = vld [vmem:[#allocation9 + $0x28] sm:$0xff]
        %v1531 = vld [vmem:[#allocation9 + $0x30] sm:$0xff]
        %v1532 = vld [vmem:[#allocation9 + $0x38] sm:$0xff]
        %v1533 = vld [vmem:[#allocation9 + $0x40] sm:$0xff]
        %v1534 = vld [vmem:[#allocation9 + $0x48] sm:$0xff]
        %v1535 = vld [vmem:[#allocation9 + $0x50] sm:$0xff]
        %v1536 = vld [vmem:[#allocation9 + $0x58] sm:$0xff]
        %v1537 = vld [vmem:[#allocation9 + $0x60] sm:$0xff]
        %v1538 = vld [vmem:[#allocation9 + $0x68] sm:$0xff]
        %v1539 = vld [vmem:[#allocation9 + $0x70] sm:$0xff]
        %v1540 = vld [vmem:[#allocation9 + $0x78] sm:$0xff]
        %1541 = vmatprep.subr.mxu0 0.0
        %1542 = vmatpush1.msra.mxu0 %v1525
        %1543 = vmatprep.subr.mxu0 0.0
        %1544 = vmatpush1.msra.mxu0 %v1526
        %1545 = vmatprep.subr.mxu0 0.0
        %1546 = vmatpush1.msra.mxu0 %v1527
        %1547 = vmatprep.subr.mxu0 0.0
        %1548 = vmatpush1.msra.mxu0 %v1528
        %1549 = vmatprep.subr.mxu0 0.0
        %1550 = vmatpush1.msra.mxu0 %v1529
        %1551 = vmatprep.subr.mxu0 0.0
        %1552 = vmatpush1.msra.mxu0 %v1530
        %1553 = vmatprep.subr.mxu0 0.0
        %1554 = vmatpush1.msra.mxu0 %v1531
        %1555 = vmatprep.subr.mxu0 0.0
        %1556 = vmatpush1.msra.mxu0 %v1532
        %1557 = vmatprep.subr.mxu0 0.0
        %1558 = vmatpush1.msra.mxu0 %v1533
        %1559 = vmatprep.subr.mxu0 0.0
        %1560 = vmatpush1.msra.mxu0 %v1534
        %1561 = vmatprep.subr.mxu0 0.0
        %1562 = vmatpush1.msra.mxu0 %v1535
        %1563 = vmatprep.subr.mxu0 0.0
        %1564 = vmatpush1.msra.mxu0 %v1536
        %1565 = vmatprep.subr.mxu0 0.0
        %1566 = vmatpush1.msra.mxu0 %v1537
        %1567 = vmatprep.subr.mxu0 0.0
        %1568 = vmatpush1.msra.mxu0 %v1538
        %1569 = vmatprep.subr.mxu0 0.0
        %1570 = vmatpush1.msra.mxu0 %v1539
        %1571 = vmatprep.subr.mxu0 0.0
        %1572 = vmatpush1.msra.mxu0 %v1540
        %1573 = vmatprep.subr.mxu0 0.0
        %1574 = vmatpush1.msra.mxu0 0.0
        %1575 = vmatprep.subr.mxu0 0.0
        %1576 = vmatpush1.msra.mxu0 0.0
        %1577 = vmatprep.subr.mxu0 0.0
        %1578 = vmatpush1.msra.mxu0 0.0
        %1579 = vmatprep.subr.mxu0 0.0
        %1580 = vmatpush1.msra.mxu0 0.0
        %1581 = vmatprep.subr.mxu0 0.0
        %1582 = vmatpush1.msra.mxu0 0.0
        %1583 = vmatprep.subr.mxu0 0.0
        %1584 = vmatpush1.msra.mxu0 0.0
        %1585 = vmatprep.subr.mxu0 0.0
        %1586 = vmatpush1.msra.mxu0 0.0
        %1587 = vmatprep.subr.mxu0 0.0
        %1588 = vmatpush1.msra.mxu0 0.0
        %1589 = vmatprep.subr.mxu0 0.0
        %1590 = vmatpush1.msra.mxu0 0.0
        %1591 = vmatprep.subr.mxu0 0.0
        %1592 = vmatpush1.msra.mxu0 0.0
        %1593 = vmatprep.subr.mxu0 0.0
        %1594 = vmatpush1.msra.mxu0 0.0
        %1595 = vmatprep.subr.mxu0 0.0
        %1596 = vmatpush1.msra.mxu0 0.0
        %1597 = vmatprep.subr.mxu0 0.0
        %1598 = vmatpush1.msra.mxu0 0.0
        %1599 = vmatprep.subr.mxu0 0.0
        %1600 = vmatpush1.msra.mxu0 0.0
        %1601 = vmatprep.subr.mxu0 0.0
        %1602 = vmatpush1.msra.mxu0 0.0
        %1603 = vmatprep.subr.mxu0 0.0
        %1604 = vmatpush1.msra.mxu0 0.0
        %1605 = vmatprep.mubr.f32.mxu0 0.0
        %1606 = vmatmul.mubr.f32.gmra.mrb[0].mxu0 %v1155
        %v1607 = vpop.f32.mrb[0].mxu0
        %v1608 = vadd.f32 0.0, %v1607
        %v1609 = vpop.f32.mrb[0].mxu0
        %1610 = vdwg.mxu0
        %v1612 = vsel %vm718, %v1522, 0
        %1614 = vmatprep.subr.mxu0 0.0
        %1615 = vmatpush1.msra.mxu0 %v1523
        %1616 = vmatprep.subr.mxu0 0.0
        %1617 = vmatpush1.msra.mxu0 %v1524
        %1618 = vmatprep.subr.mxu0 0.0
        %1619 = vmatpush1.msra.mxu0 0.0
        %1620 = vmatprep.subr.mxu0 0.0
        %1621 = vmatpush1.msra.mxu0 0.0
        %1622 = vmatprep.subr.mxu0 0.0
        %1623 = vmatpush1.msra.mxu0 0.0
        %1624 = vmatprep.subr.mxu0 0.0
        %1625 = vmatpush1.msra.mxu0 0.0
        %1626 = vmatprep.subr.mxu0 0.0
        %1627 = vmatpush1.msra.mxu0 0.0
        %1628 = vmatprep.subr.mxu0 0.0
        %1629 = vmatpush1.msra.mxu0 0.0
        %1630 = vmatprep.subr.mxu0 0.0
        %1631 = vmatpush1.msra.mxu0 0.0
        %1632 = vmatprep.subr.mxu0 0.0
        %1633 = vmatpush1.msra.mxu0 0.0
        %1634 = vmatprep.subr.mxu0 0.0
        %1635 = vmatpush1.msra.mxu0 0.0
        %1636 = vmatprep.subr.mxu0 0.0
        %1637 = vmatpush1.msra.mxu0 0.0
        %1638 = vmatprep.subr.mxu0 0.0
        %1639 = vmatpush1.msra.mxu0 0.0
        %1640 = vmatprep.subr.mxu0 0.0
        %1641 = vmatpush1.msra.mxu0 0.0
        %1642 = vmatprep.subr.mxu0 0.0
        %1643 = vmatpush1.msra.mxu0 0.0
        %1644 = vmatprep.subr.mxu0 0.0
        %1645 = vmatpush1.msra.mxu0 0.0
        %1646 = vmatprep.subr.mxu0 0.0
        %1647 = vmatpush1.msra.mxu0 0.0
        %1648 = vmatprep.subr.mxu0 0.0
        %1649 = vmatpush1.msra.mxu0 0.0
        %1650 = vmatprep.subr.mxu0 0.0
        %1651 = vmatpush1.msra.mxu0 0.0
        %1652 = vmatprep.subr.mxu0 0.0
        %1653 = vmatpush1.msra.mxu0 0.0
        %1654 = vmatprep.subr.mxu0 0.0
        %1655 = vmatpush1.msra.mxu0 0.0
        %1656 = vmatprep.subr.mxu0 0.0
        %1657 = vmatpush1.msra.mxu0 0.0
        %1658 = vmatprep.subr.mxu0 0.0
        %1659 = vmatpush1.msra.mxu0 0.0
        %1660 = vmatprep.subr.mxu0 0.0
        %1661 = vmatpush1.msra.mxu0 0.0
        %1662 = vmatprep.subr.mxu0 0.0
        %1663 = vmatpush1.msra.mxu0 0.0
        %1664 = vmatprep.subr.mxu0 0.0
        %1665 = vmatpush1.msra.mxu0 0.0
        %1666 = vmatprep.subr.mxu0 0.0
        %1667 = vmatpush1.msra.mxu0 0.0
        %1668 = vmatprep.subr.mxu0 0.0
        %1669 = vmatpush1.msra.mxu0 0.0
        %1670 = vmatprep.subr.mxu0 0.0
        %1671 = vmatpush1.msra.mxu0 0.0
        %1672 = vmatprep.subr.mxu0 0.0
        %1673 = vmatpush1.msra.mxu0 0.0
        %1674 = vmatprep.subr.mxu0 0.0
        %1675 = vmatpush1.msra.mxu0 0.0
        %1676 = vmatprep.subr.mxu0 0.0
        %1677 = vmatpush1.msra.mxu0 0.0
        %1678 = vmatprep.mubr.f32.mxu0 0.0
        %1679 = vmatmul.mubr.f32.gmra.mrb[0].mxu0 %v1612
        %v1680 = vpop.f32.mrb[0].mxu0
        %v1681 = vadd.f32 %v1608, %v1680
        %v1682 = vpop.f32.mrb[0].mxu0
        %1683 = vdwg.mxu0
        %v1684 = vadd.f32 %v1681, %v796
        %v1685 = vmul.f32 %v1155, 0.9
        %v1686 = vtanh.pop %v1684
        %v1687 = vmul.f32 %v1686, 0.1
        %v1688 = vadd.f32 %v1685, %v1687
        %s1689 = scalar_lea.vmem %s590, 16 [#allocation17]
        %1690 = vst [vmem:[%s1689] sm:$0xff] %v1688
        %v1691 = vld [vmem:[#allocation14] sm:$0xff]
        %v1692 = vld [vmem:[#allocation14 + $0x8] sm:$0xff]
        %v1693 = vld [vmem:[#allocation14 + $0x10] sm:$0xff]
        %v1694 = vld [vmem:[#allocation14 + $0x18] sm:$0xff]
        %v1695 = vld [vmem:[#allocation14 + $0x20] sm:$0xff]
        %v1696 = vld [vmem:[#allocation14 + $0x28] sm:$0xff]
        %v1697 = vld [vmem:[#allocation14 + $0x30] sm:$0xff]
        %v1698 = vld [vmem:[#allocation14 + $0x38] sm:$0xff]
        %v1699 = vld [vmem:[#allocation14 + $0x40] sm:$0xff]
        %v1700 = vld [vmem:[#allocation14 + $0x48] sm:$0xff]
        %v1701 = vld [vmem:[#allocation14 + $0x50] sm:$0xff]
        %v1702 = vld [vmem:[#allocation14 + $0x58] sm:$0xff]
        %v1703 = vld [vmem:[#allocation14 + $0x60] sm:$0xff]
        %v1704 = vld [vmem:[#allocation14 + $0x68] sm:$0xff]
        %v1705 = vld [vmem:[#allocation14 + $0x70] sm:$0xff]
        %v1706 = vld [vmem:[#allocation14 + $0x78] sm:$0xff]
        %v1707 = vld [vmem:[#allocation15] sm:$0xff]
        %v1708 = vld [vmem:[#allocation15 + $0x8] sm:$0xff]
        %v1709 = vld [vmem:[#allocation15 + $0x10] sm:$0xff]
        %v1710 = vld [vmem:[#allocation15 + $0x18] sm:$0xff]
        %v1711 = vld [vmem:[#allocation15 + $0x20] sm:$0xff]
        %v1712 = vld [vmem:[#allocation15 + $0x28] sm:$0xff]
        %v1713 = vld [vmem:[#allocation15 + $0x30] sm:$0xff]
        %v1714 = vld [vmem:[#allocation15 + $0x38] sm:$0xff]
        %v1715 = vld [vmem:[#allocation15 + $0x40] sm:$0xff]
        %v1716 = vld [vmem:[#allocation15 + $0x48] sm:$0xff]
        %v1717 = vld [vmem:[#allocation15 + $0x50] sm:$0xff]
        %v1718 = vld [vmem:[#allocation15 + $0x58] sm:$0xff]
        %v1719 = vld [vmem:[#allocation15 + $0x60] sm:$0xff]
        %v1720 = vld [vmem:[#allocation15 + $0x68] sm:$0xff]
        %v1721 = vld [vmem:[#allocation15 + $0x70] sm:$0xff]
        %v1722 = vld [vmem:[#allocation15 + $0x78] sm:$0xff]
        %1723 = vmatprep.subr.mxu0 0.0
        %1724 = vmatpush1.msra.mxu0 %v1707
        %1725 = vmatprep.subr.mxu0 0.0
        %1726 = vmatpush1.msra.mxu0 %v1708
        %1727 = vmatprep.subr.mxu0 0.0
        %1728 = vmatpush1.msra.mxu0 %v1709
        %1729 = vmatprep.subr.mxu0 0.0
        %1730 = vmatpush1.msra.mxu0 %v1710
        %1731 = vmatprep.subr.mxu0 0.0
        %1732 = vmatpush1.msra.mxu0 %v1711
        %1733 = vmatprep.subr.mxu0 0.0
        %1734 = vmatpush1.msra.mxu0 %v1712
        %1735 = vmatprep.subr.mxu0 0.0
        %1736 = vmatpush1.msra.mxu0 %v1713
        %1737 = vmatprep.subr.mxu0 0.0
        %1738 = vmatpush1.msra.mxu0 %v1714
        %1739 = vmatprep.subr.mxu0 0.0
        %1740 = vmatpush1.msra.mxu0 %v1715
        %1741 = vmatprep.subr.mxu0 0.0
        %1742 = vmatpush1.msra.mxu0 %v1716
        %1743 = vmatprep.subr.mxu0 0.0
        %1744 = vmatpush1.msra.mxu0 %v1717
        %1745 = vmatprep.subr.mxu0 0.0
        %1746 = vmatpush1.msra.mxu0 %v1718
        %1747 = vmatprep.subr.mxu0 0.0
        %1748 = vmatpush1.msra.mxu0 %v1719
        %1749 = vmatprep.subr.mxu0 0.0
        %1750 = vmatpush1.msra.mxu0 %v1720
        %1751 = vmatprep.subr.mxu0 0.0
        %1752 = vmatpush1.msra.mxu0 %v1721
        %1753 = vmatprep.subr.mxu0 0.0
        %1754 = vmatpush1.msra.mxu0 %v1722
        %1755 = vmatprep.subr.mxu0 0.0
        %1756 = vmatpush1.msra.mxu0 0.0
        %1757 = vmatprep.subr.mxu0 0.0
        %1758 = vmatpush1.msra.mxu0 0.0
        %1759 = vmatprep.subr.mxu0 0.0
        %1760 = vmatpush1.msra.mxu0 0.0
        %1761 = vmatprep.subr.mxu0 0.0
        %1762 = vmatpush1.msra.mxu0 0.0
        %1763 = vmatprep.subr.mxu0 0.0
        %1764 = vmatpush1.msra.mxu0 0.0
        %1765 = vmatprep.subr.mxu0 0.0
        %1766 = vmatpush1.msra.mxu0 0.0
        %1767 = vmatprep.subr.mxu0 0.0
        %1768 = vmatpush1.msra.mxu0 0.0
        %1769 = vmatprep.subr.mxu0 0.0
        %1770 = vmatpush1.msra.mxu0 0.0
        %1771 = vmatprep.subr.mxu0 0.0
        %1772 = vmatpush1.msra.mxu0 0.0
        %1773 = vmatprep.subr.mxu0 0.0
        %1774 = vmatpush1.msra.mxu0 0.0
        %1775 = vmatprep.subr.mxu0 0.0
        %1776 = vmatpush1.msra.mxu0 0.0
        %1777 = vmatprep.subr.mxu0 0.0
        %1778 = vmatpush1.msra.mxu0 0.0
        %1779 = vmatprep.subr.mxu0 0.0
        %1780 = vmatpush1.msra.mxu0 0.0
        %1781 = vmatprep.subr.mxu0 0.0
        %1782 = vmatpush1.msra.mxu0 0.0
        %1783 = vmatprep.subr.mxu0 0.0
        %1784 = vmatpush1.msra.mxu0 0.0
        %1785 = vmatprep.subr.mxu0 0.0
        %1786 = vmatpush1.msra.mxu0 0.0
        %1787 = vmatprep.mubr.f32.mxu0 0.0
        %1788 = vmatmul.mubr.f32.gmra.mrb[0].mxu0 %v1340
        %v1789 = vpop.f32.mrb[0].mxu0
        %v1790 = vadd.f32 0.0, %v1789
        %v1791 = vpop.f32.mrb[0].mxu0
        %1792 = vdwg.mxu0
        %1793 = vmatprep.subr.mxu0 0.0
        %1794 = vmatpush1.msra.mxu0 %v1691
        %1795 = vmatprep.subr.mxu0 0.0
        %1796 = vmatpush1.msra.mxu0 %v1692
        %1797 = vmatprep.subr.mxu0 0.0
        %1798 = vmatpush1.msra.mxu0 %v1693
        %1799 = vmatprep.subr.mxu0 0.0
        %1800 = vmatpush1.msra.mxu0 %v1694
        %1801 = vmatprep.subr.mxu0 0.0
        %1802 = vmatpush1.msra.mxu0 %v1695
        %1803 = vmatprep.subr.mxu0 0.0
        %1804 = vmatpush1.msra.mxu0 %v1696
        %1805 = vmatprep.subr.mxu0 0.0
        %1806 = vmatpush1.msra.mxu0 %v1697
        %1807 = vmatprep.subr.mxu0 0.0
        %1808 = vmatpush1.msra.mxu0 %v1698
        %1809 = vmatprep.subr.mxu0 0.0
        %1810 = vmatpush1.msra.mxu0 %v1699
        %1811 = vmatprep.subr.mxu0 0.0
        %1812 = vmatpush1.msra.mxu0 %v1700
        %1813 = vmatprep.subr.mxu0 0.0
        %1814 = vmatpush1.msra.mxu0 %v1701
        %1815 = vmatprep.subr.mxu0 0.0
        %1816 = vmatpush1.msra.mxu0 %v1702
        %1817 = vmatprep.subr.mxu0 0.0
        %1818 = vmatpush1.msra.mxu0 %v1703
        %1819 = vmatprep.subr.mxu0 0.0
        %1820 = vmatpush1.msra.mxu0 %v1704
        %1821 = vmatprep.subr.mxu0 0.0
        %1822 = vmatpush1.msra.mxu0 %v1705
        %1823 = vmatprep.subr.mxu0 0.0
        %1824 = vmatpush1.msra.mxu0 %v1706
        %1825 = vmatprep.subr.mxu0 0.0
        %1826 = vmatpush1.msra.mxu0 0.0
        %1827 = vmatprep.subr.mxu0 0.0
        %1828 = vmatpush1.msra.mxu0 0.0
        %1829 = vmatprep.subr.mxu0 0.0
        %1830 = vmatpush1.msra.mxu0 0.0
        %1831 = vmatprep.subr.mxu0 0.0
        %1832 = vmatpush1.msra.mxu0 0.0
        %1833 = vmatprep.subr.mxu0 0.0
        %1834 = vmatpush1.msra.mxu0 0.0
        %1835 = vmatprep.subr.mxu0 0.0
        %1836 = vmatpush1.msra.mxu0 0.0
        %1837 = vmatprep.subr.mxu0 0.0
        %1838 = vmatpush1.msra.mxu0 0.0
        %1839 = vmatprep.subr.mxu0 0.0
        %1840 = vmatpush1.msra.mxu0 0.0
        %1841 = vmatprep.subr.mxu0 0.0
        %1842 = vmatpush1.msra.mxu0 0.0
        %1843 = vmatprep.subr.mxu0 0.0
        %1844 = vmatpush1.msra.mxu0 0.0
        %1845 = vmatprep.subr.mxu0 0.0
        %1846 = vmatpush1.msra.mxu0 0.0
        %1847 = vmatprep.subr.mxu0 0.0
        %1848 = vmatpush1.msra.mxu0 0.0
        %1849 = vmatprep.subr.mxu0 0.0
        %1850 = vmatpush1.msra.mxu0 0.0
        %1851 = vmatprep.subr.mxu0 0.0
        %1852 = vmatpush1.msra.mxu0 0.0
        %1853 = vmatprep.subr.mxu0 0.0
        %1854 = vmatpush1.msra.mxu0 0.0
        %1855 = vmatprep.subr.mxu0 0.0
        %1856 = vmatpush1.msra.mxu0 0.0
        %1857 = vmatprep.mubr.f32.mxu0 0.0
        %1858 = vmatmul.mubr.f32.gmra.mrb[0].mxu0 %v1518
        %v1859 = vpop.f32.mrb[0].mxu0
        %v1860 = vadd.f32 %v1790, %v1859
        %v1861 = vpop.f32.mrb[0].mxu0
        %1862 = vdwg.mxu0
        %v1863 = vadd.f32 %v1860, %v1334
        %v1864 = vmul.f32 %v1340, 0.9
        %v1865 = vtanh.pop %v1863
        %v1866 = vmul.f32 %v1865, 0.1
        %v1867 = vadd.f32 %v1864, %v1866
        %s1868 = scalar_lea.vmem %s604, 8 [#allocation20]
        %1869 = vst [vmem:[%s1868] sm:$0xff] %v1867
        %v1870 = vld [vmem:[#allocation11] sm:$0xff]
        %v1871 = vld [vmem:[#allocation11 + $0x8] sm:$0xff]
        %v1872 = vld [vmem:[#allocation11 + $0x10] sm:$0xff]
        %v1873 = vld [vmem:[#allocation11 + $0x18] sm:$0xff]
        %v1874 = vld [vmem:[#allocation11 + $0x20] sm:$0xff]
        %v1875 = vld [vmem:[#allocation11 + $0x28] sm:$0xff]
        %v1876 = vld [vmem:[#allocation11 + $0x30] sm:$0xff]
        %v1877 = vld [vmem:[#allocation11 + $0x38] sm:$0xff]
        %v1878 = vld [vmem:[#allocation11 + $0x40] sm:$0xff]
        %v1879 = vld [vmem:[#allocation11 + $0x48] sm:$0xff]
        %v1880 = vld [vmem:[#allocation11 + $0x50] sm:$0xff]
        %v1881 = vld [vmem:[#allocation11 + $0x58] sm:$0xff]
        %v1882 = vld [vmem:[#allocation11 + $0x60] sm:$0xff]
        %v1883 = vld [vmem:[#allocation11 + $0x68] sm:$0xff]
        %v1884 = vld [vmem:[#allocation11 + $0x70] sm:$0xff]
        %v1885 = vld [vmem:[#allocation11 + $0x78] sm:$0xff]
        %v1886 = vld [vmem:[#allocation12] sm:$0xff]
        %v1887 = vld [vmem:[#allocation12 + $0x8] sm:$0xff]
        %v1888 = vld [vmem:[#allocation12 + $0x10] sm:$0xff]
        %v1889 = vld [vmem:[#allocation12 + $0x18] sm:$0xff]
        %v1890 = vld [vmem:[#allocation12 + $0x20] sm:$0xff]
        %v1891 = vld [vmem:[#allocation12 + $0x28] sm:$0xff]
        %v1892 = vld [vmem:[#allocation12 + $0x30] sm:$0xff]
        %v1893 = vld [vmem:[#allocation12 + $0x38] sm:$0xff]
        %v1894 = vld [vmem:[#allocation12 + $0x40] sm:$0xff]
        %v1895 = vld [vmem:[#allocation12 + $0x48] sm:$0xff]
        %v1896 = vld [vmem:[#allocation12 + $0x50] sm:$0xff]
        %v1897 = vld [vmem:[#allocation12 + $0x58] sm:$0xff]
        %v1898 = vld [vmem:[#allocation12 + $0x60] sm:$0xff]
        %v1899 = vld [vmem:[#allocation12 + $0x68] sm:$0xff]
        %v1900 = vld [vmem:[#allocation12 + $0x70] sm:$0xff]
        %v1901 = vld [vmem:[#allocation12 + $0x78] sm:$0xff]
        %1902 = vmatprep.subr.mxu0 0.0
        %1903 = vmatpush1.msra.mxu0 %v1886
        %1904 = vmatprep.subr.mxu0 0.0
        %1905 = vmatpush1.msra.mxu0 %v1887
        %1906 = vmatprep.subr.mxu0 0.0
        %1907 = vmatpush1.msra.mxu0 %v1888
        %1908 = vmatprep.subr.mxu0 0.0
        %1909 = vmatpush1.msra.mxu0 %v1889
        %1910 = vmatprep.subr.mxu0 0.0
        %1911 = vmatpush1.msra.mxu0 %v1890
        %1912 = vmatprep.subr.mxu0 0.0
        %1913 = vmatpush1.msra.mxu0 %v1891
        %1914 = vmatprep.subr.mxu0 0.0
        %1915 = vmatpush1.msra.mxu0 %v1892
        %1916 = vmatprep.subr.mxu0 0.0
        %1917 = vmatpush1.msra.mxu0 %v1893
        %1918 = vmatprep.subr.mxu0 0.0
        %1919 = vmatpush1.msra.mxu0 %v1894
        %1920 = vmatprep.subr.mxu0 0.0
        %1921 = vmatpush1.msra.mxu0 %v1895
        %1922 = vmatprep.subr.mxu0 0.0
        %1923 = vmatpush1.msra.mxu0 %v1896
        %1924 = vmatprep.subr.mxu0 0.0
        %1925 = vmatpush1.msra.mxu0 %v1897
        %1926 = vmatprep.subr.mxu0 0.0
        %1927 = vmatpush1.msra.mxu0 %v1898
        %1928 = vmatprep.subr.mxu0 0.0
        %1929 = vmatpush1.msra.mxu0 %v1899
        %1930 = vmatprep.subr.mxu0 0.0
        %1931 = vmatpush1.msra.mxu0 %v1900
        %1932 = vmatprep.subr.mxu0 0.0
        %1933 = vmatpush1.msra.mxu0 %v1901
        %1934 = vmatprep.subr.mxu0 0.0
        %1935 = vmatpush1.msra.mxu0 0.0
        %1936 = vmatprep.subr.mxu0 0.0
        %1937 = vmatpush1.msra.mxu0 0.0
        %1938 = vmatprep.subr.mxu0 0.0
        %1939 = vmatpush1.msra.mxu0 0.0
        %1940 = vmatprep.subr.mxu0 0.0
        %1941 = vmatpush1.msra.mxu0 0.0
        %1942 = vmatprep.subr.mxu0 0.0
        %1943 = vmatpush1.msra.mxu0 0.0
        %1944 = vmatprep.subr.mxu0 0.0
        %1945 = vmatpush1.msra.mxu0 0.0
        %1946 = vmatprep.subr.mxu0 0.0
        %1947 = vmatpush1.msra.mxu0 0.0
        %1948 = vmatprep.subr.mxu0 0.0
        %1949 = vmatpush1.msra.mxu0 0.0
        %1950 = vmatprep.subr.mxu0 0.0
        %1951 = vmatpush1.msra.mxu0 0.0
        %1952 = vmatprep.subr.mxu0 0.0
        %1953 = vmatpush1.msra.mxu0 0.0
        %1954 = vmatprep.subr.mxu0 0.0
        %1955 = vmatpush1.msra.mxu0 0.0
        %1956 = vmatprep.subr.mxu0 0.0
        %1957 = vmatpush1.msra.mxu0 0.0
        %1958 = vmatprep.subr.mxu0 0.0
        %1959 = vmatpush1.msra.mxu0 0.0
        %1960 = vmatprep.subr.mxu0 0.0
        %1961 = vmatpush1.msra.mxu0 0.0
        %1962 = vmatprep.subr.mxu0 0.0
        %1963 = vmatpush1.msra.mxu0 0.0
        %1964 = vmatprep.subr.mxu0 0.0
        %1965 = vmatpush1.msra.mxu0 0.0
        %1966 = vmatprep.mubr.f32.mxu0 0.0
        %1967 = vmatmul.mubr.f32.gmra.mrb[0].mxu0 %v1518
        %v1968 = vpop.f32.mrb[0].mxu0
        %v1969 = vadd.f32 0.0, %v1968
        %v1970 = vpop.f32.mrb[0].mxu0
        %1971 = vdwg.mxu0
        %1972 = vmatprep.subr.mxu0 0.0
        %1973 = vmatpush1.msra.mxu0 %v1870
        %1974 = vmatprep.subr.mxu0 0.0
        %1975 = vmatpush1.msra.mxu0 %v1871
        %1976 = vmatprep.subr.mxu0 0.0
        %1977 = vmatpush1.msra.mxu0 %v1872
        %1978 = vmatprep.subr.mxu0 0.0
        %1979 = vmatpush1.msra.mxu0 %v1873
        %1980 = vmatprep.subr.mxu0 0.0
        %1981 = vmatpush1.msra.mxu0 %v1874
        %1982 = vmatprep.subr.mxu0 0.0
        %1983 = vmatpush1.msra.mxu0 %v1875
        %1984 = vmatprep.subr.mxu0 0.0
        %1985 = vmatpush1.msra.mxu0 %v1876
        %1986 = vmatprep.subr.mxu0 0.0
        %1987 = vmatpush1.msra.mxu0 %v1877
        %1988 = vmatprep.subr.mxu0 0.0
        %1989 = vmatpush1.msra.mxu0 %v1878
        %1990 = vmatprep.subr.mxu0 0.0
        %1991 = vmatpush1.msra.mxu0 %v1879
        %1992 = vmatprep.subr.mxu0 0.0
        %1993 = vmatpush1.msra.mxu0 %v1880
        %1994 = vmatprep.subr.mxu0 0.0
        %1995 = vmatpush1.msra.mxu0 %v1881
        %1996 = vmatprep.subr.mxu0 0.0
        %1997 = vmatpush1.msra.mxu0 %v1882
        %1998 = vmatprep.subr.mxu0 0.0
        %1999 = vmatpush1.msra.mxu0 %v1883
        %2000 = vmatprep.subr.mxu0 0.0
        %2001 = vmatpush1.msra.mxu0 %v1884
        %2002 = vmatprep.subr.mxu0 0.0
        %2003 = vmatpush1.msra.mxu0 %v1885
        %2004 = vmatprep.subr.mxu0 0.0
        %2005 = vmatpush1.msra.mxu0 0.0
        %2006 = vmatprep.subr.mxu0 0.0
        %2007 = vmatpush1.msra.mxu0 0.0
        %2008 = vmatprep.subr.mxu0 0.0
        %2009 = vmatpush1.msra.mxu0 0.0
        %2010 = vmatprep.subr.mxu0 0.0
        %2011 = vmatpush1.msra.mxu0 0.0
        %2012 = vmatprep.subr.mxu0 0.0
        %2013 = vmatpush1.msra.mxu0 0.0
        %2014 = vmatprep.subr.mxu0 0.0
        %2015 = vmatpush1.msra.mxu0 0.0
        %2016 = vmatprep.subr.mxu0 0.0
        %2017 = vmatpush1.msra.mxu0 0.0
        %2018 = vmatprep.subr.mxu0 0.0
        %2019 = vmatpush1.msra.mxu0 0.0
        %2020 = vmatprep.subr.mxu0 0.0
        %2021 = vmatpush1.msra.mxu0 0.0
        %2022 = vmatprep.subr.mxu0 0.0
        %2023 = vmatpush1.msra.mxu0 0.0
        %2024 = vmatprep.subr.mxu0 0.0
        %2025 = vmatpush1.msra.mxu0 0.0
        %2026 = vmatprep.subr.mxu0 0.0
        %2027 = vmatpush1.msra.mxu0 0.0
        %2028 = vmatprep.subr.mxu0 0.0
        %2029 = vmatpush1.msra.mxu0 0.0
        %2030 = vmatprep.subr.mxu0 0.0
        %2031 = vmatpush1.msra.mxu0 0.0
        %2032 = vmatprep.subr.mxu0 0.0
        %2033 = vmatpush1.msra.mxu0 0.0
        %2034 = vmatprep.subr.mxu0 0.0
        %2035 = vmatpush1.msra.mxu0 0.0
        %2036 = vmatprep.mubr.f32.mxu0 0.0
        %2037 = vmatmul.mubr.f32.gmra.mrb[0].mxu0 %v1688
        %v2038 = vpop.f32.mrb[0].mxu0
        %v2039 = vadd.f32 %v1969, %v2038
        %v2040 = vpop.f32.mrb[0].mxu0
        %2041 = vdwg.mxu0
        %v2042 = vadd.f32 %v2039, %v980
        %v2043 = vmul.f32 %v1518, 0.9
        %v2044 = vtanh.pop %v2042
        %v2045 = vmul.f32 %v2044, 0.1
        %v2046 = vadd.f32 %v2043, %v2045
        %s2047 = scalar_lea.vmem %s597, 16 [#allocation18]
        %2048 = vst [vmem:[%s2047] sm:$0xff] %v2046
        %s2049 = scalar_lea.vmem %s524, 24 [#allocation3]
        %v2050 = vld [vmem:[%s2049] sm:$0xff]
        %v2051 = vld [vmem:[#allocation8] sm:$0xff]
        %v2052 = vld [vmem:[#allocation8 + $0x8] sm:$0xff]
        %v2053 = vld [vmem:[#allocation9] sm:$0xff]
        %v2054 = vld [vmem:[#allocation9 + $0x8] sm:$0xff]
        %v2055 = vld [vmem:[#allocation9 + $0x10] sm:$0xff]
        %v2056 = vld [vmem:[#allocation9 + $0x18] sm:$0xff]
        %v2057 = vld [vmem:[#allocation9 + $0x20] sm:$0xff]
        %v2058 = vld [vmem:[#allocation9 + $0x28] sm:$0xff]
        %v2059 = vld [vmem:[#allocation9 + $0x30] sm:$0xff]
        %v2060 = vld [vmem:[#allocation9 + $0x38] sm:$0xff]
        %v2061 = vld [vmem:[#allocation9 + $0x40] sm:$0xff]
        %v2062 = vld [vmem:[#allocation9 + $0x48] sm:$0xff]
        %v2063 = vld [vmem:[#allocation9 + $0x50] sm:$0xff]
        %v2064 = vld [vmem:[#allocation9 + $0x58] sm:$0xff]
        %v2065 = vld [vmem:[#allocation9 + $0x60] sm:$0xff]
        %v2066 = vld [vmem:[#allocation9 + $0x68] sm:$0xff]
        %v2067 = vld [vmem:[#allocation9 + $0x70] sm:$0xff]
        %v2068 = vld [vmem:[#allocation9 + $0x78] sm:$0xff]
        %2069 = vmatprep.subr.mxu0 0.0
        %2070 = vmatpush1.msra.mxu0 %v2053
        %2071 = vmatprep.subr.mxu0 0.0
        %2072 = vmatpush1.msra.mxu0 %v2054
        %2073 = vmatprep.subr.mxu0 0.0
        %2074 = vmatpush1.msra.mxu0 %v2055
        %2075 = vmatprep.subr.mxu0 0.0
        %2076 = vmatpush1.msra.mxu0 %v2056
        %2077 = vmatprep.subr.mxu0 0.0
        %2078 = vmatpush1.msra.mxu0 %v2057
        %2079 = vmatprep.subr.mxu0 0.0
        %2080 = vmatpush1.msra.mxu0 %v2058
        %2081 = vmatprep.subr.mxu0 0.0
        %2082 = vmatpush1.msra.mxu0 %v2059
        %2083 = vmatprep.subr.mxu0 0.0
        %2084 = vmatpush1.msra.mxu0 %v2060
        %2085 = vmatprep.subr.mxu0 0.0
        %2086 = vmatpush1.msra.mxu0 %v2061
        %2087 = vmatprep.subr.mxu0 0.0
        %2088 = vmatpush1.msra.mxu0 %v2062
        %2089 = vmatprep.subr.mxu0 0.0
        %2090 = vmatpush1.msra.mxu0 %v2063
        %2091 = vmatprep.subr.mxu0 0.0
        %2092 = vmatpush1.msra.mxu0 %v2064
        %2093 = vmatprep.subr.mxu0 0.0
        %2094 = vmatpush1.msra.mxu0 %v2065
        %2095 = vmatprep.subr.mxu0 0.0
        %2096 = vmatpush1.msra.mxu0 %v2066
        %2097 = vmatprep.subr.mxu0 0.0
        %2098 = vmatpush1.msra.mxu0 %v2067
        %2099 = vmatprep.subr.mxu0 0.0
        %2100 = vmatpush1.msra.mxu0 %v2068
        %2101 = vmatprep.subr.mxu0 0.0
        %2102 = vmatpush1.msra.mxu0 0.0
        %2103 = vmatprep.subr.mxu0 0.0
        %2104 = vmatpush1.msra.mxu0 0.0
        %2105 = vmatprep.subr.mxu0 0.0
        %2106 = vmatpush1.msra.mxu0 0.0
        %2107 = vmatprep.subr.mxu0 0.0
        %2108 = vmatpush1.msra.mxu0 0.0
        %2109 = vmatprep.subr.mxu0 0.0
        %2110 = vmatpush1.msra.mxu0 0.0
        %2111 = vmatprep.subr.mxu0 0.0
        %2112 = vmatpush1.msra.mxu0 0.0
        %2113 = vmatprep.subr.mxu0 0.0
        %2114 = vmatpush1.msra.mxu0 0.0
        %2115 = vmatprep.subr.mxu0 0.0
        %2116 = vmatpush1.msra.mxu0 0.0
        %2117 = vmatprep.subr.mxu0 0.0
        %2118 = vmatpush1.msra.mxu0 0.0
        %2119 = vmatprep.subr.mxu0 0.0
        %2120 = vmatpush1.msra.mxu0 0.0
        %2121 = vmatprep.subr.mxu0 0.0
        %2122 = vmatpush1.msra.mxu0 0.0
        %2123 = vmatprep.subr.mxu0 0.0
        %2124 = vmatpush1.msra.mxu0 0.0
        %2125 = vmatprep.subr.mxu0 0.0
        %2126 = vmatpush1.msra.mxu0 0.0
        %2127 = vmatprep.subr.mxu0 0.0
        %2128 = vmatpush1.msra.mxu0 0.0
        %2129 = vmatprep.subr.mxu0 0.0
        %2130 = vmatpush1.msra.mxu0 0.0
        %2131 = vmatprep.subr.mxu0 0.0
        %2132 = vmatpush1.msra.mxu0 0.0
        %2133 = vmatprep.mubr.f32.mxu0 0.0
        %2134 = vmatmul.mubr.f32.gmra.mrb[0].mxu0 %v1688
        %v2135 = vpop.f32.mrb[0].mxu0
        %v2136 = vadd.f32 0.0, %v2135
        %v2137 = vpop.f32.mrb[0].mxu0
        %2138 = vdwg.mxu0
        %v2140 = vsel %vm718, %v2050, 0
        %2142 = vmatprep.subr.mxu0 0.0
        %2143 = vmatpush1.msra.mxu0 %v2051
        %2144 = vmatprep.subr.mxu0 0.0
        %2145 = vmatpush1.msra.mxu0 %v2052
        %2146 = vmatprep.subr.mxu0 0.0
        %2147 = vmatpush1.msra.mxu0 0.0
        %2148 = vmatprep.subr.mxu0 0.0
        %2149 = vmatpush1.msra.mxu0 0.0
        %2150 = vmatprep.subr.mxu0 0.0
        %2151 = vmatpush1.msra.mxu0 0.0
        %2152 = vmatprep.subr.mxu0 0.0
        %2153 = vmatpush1.msra.mxu0 0.0
        %2154 = vmatprep.subr.mxu0 0.0
        %2155 = vmatpush1.msra.mxu0 0.0
        %2156 = vmatprep.subr.mxu0 0.0
        %2157 = vmatpush1.msra.mxu0 0.0
        %2158 = vmatprep.subr.mxu0 0.0
        %2159 = vmatpush1.msra.mxu0 0.0
        %2160 = vmatprep.subr.mxu0 0.0
        %2161 = vmatpush1.msra.mxu0 0.0
        %2162 = vmatprep.subr.mxu0 0.0
        %2163 = vmatpush1.msra.mxu0 0.0
        %2164 = vmatprep.subr.mxu0 0.0
        %2165 = vmatpush1.msra.mxu0 0.0
        %2166 = vmatprep.subr.mxu0 0.0
        %2167 = vmatpush1.msra.mxu0 0.0
        %2168 = vmatprep.subr.mxu0 0.0
        %2169 = vmatpush1.msra.mxu0 0.0
        %2170 = vmatprep.subr.mxu0 0.0
        %2171 = vmatpush1.msra.mxu0 0.0
        %2172 = vmatprep.subr.mxu0 0.0
        %2173 = vmatpush1.msra.mxu0 0.0
        %2174 = vmatprep.subr.mxu0 0.0
        %2175 = vmatpush1.msra.mxu0 0.0
        %2176 = vmatprep.subr.mxu0 0.0
        %2177 = vmatpush1.msra.mxu0 0.0
        %2178 = vmatprep.subr.mxu0 0.0
        %2179 = vmatpush1.msra.mxu0 0.0
        %2180 = vmatprep.subr.mxu0 0.0
        %2181 = vmatpush1.msra.mxu0 0.0
        %2182 = vmatprep.subr.mxu0 0.0
        %2183 = vmatpush1.msra.mxu0 0.0
        %2184 = vmatprep.subr.mxu0 0.0
        %2185 = vmatpush1.msra.mxu0 0.0
        %2186 = vmatprep.subr.mxu0 0.0
        %2187 = vmatpush1.msra.mxu0 0.0
        %2188 = vmatprep.subr.mxu0 0.0
        %2189 = vmatpush1.msra.mxu0 0.0
        %2190 = vmatprep.subr.mxu0 0.0
        %2191 = vmatpush1.msra.mxu0 0.0
        %2192 = vmatprep.subr.mxu0 0.0
        %2193 = vmatpush1.msra.mxu0 0.0
        %2194 = vmatprep.subr.mxu0 0.0
        %2195 = vmatpush1.msra.mxu0 0.0
        %2196 = vmatprep.subr.mxu0 0.0
        %2197 = vmatpush1.msra.mxu0 0.0
        %2198 = vmatprep.subr.mxu0 0.0
        %2199 = vmatpush1.msra.mxu0 0.0
        %2200 = vmatprep.subr.mxu0 0.0
        %2201 = vmatpush1.msra.mxu0 0.0
        %2202 = vmatprep.subr.mxu0 0.0
        %2203 = vmatpush1.msra.mxu0 0.0
        %2204 = vmatprep.subr.mxu0 0.0
        %2205 = vmatpush1.msra.mxu0 0.0
        %2206 = vmatprep.mubr.f32.mxu0 0.0
        %2207 = vmatmul.mubr.f32.gmra.mrb[0].mxu0 %v2140
        %v2208 = vpop.f32.mrb[0].mxu0
        %v2209 = vadd.f32 %v2136, %v2208
        %v2210 = vpop.f32.mrb[0].mxu0
        %2211 = vdwg.mxu0
        %v2212 = vadd.f32 %v2209, %v796
        %v2213 = vmul.f32 %v1688, 0.9
        %v2214 = vtanh.pop %v2212
        %v2215 = vmul.f32 %v2214, 0.1
        %v2216 = vadd.f32 %v2213, %v2215
        %s2217 = scalar_lea.vmem %s590, 24 [#allocation17]
        %2218 = vst [vmem:[%s2217] sm:$0xff] %v2216
        %v2219 = vld [vmem:[#allocation14] sm:$0xff]
        %v2220 = vld [vmem:[#allocation14 + $0x8] sm:$0xff]
        %v2221 = vld [vmem:[#allocation14 + $0x10] sm:$0xff]
        %v2222 = vld [vmem:[#allocation14 + $0x18] sm:$0xff]
        %v2223 = vld [vmem:[#allocation14 + $0x20] sm:$0xff]
        %v2224 = vld [vmem:[#allocation14 + $0x28] sm:$0xff]
        %v2225 = vld [vmem:[#allocation14 + $0x30] sm:$0xff]
        %v2226 = vld [vmem:[#allocation14 + $0x38] sm:$0xff]
        %v2227 = vld [vmem:[#allocation14 + $0x40] sm:$0xff]
        %v2228 = vld [vmem:[#allocation14 + $0x48] sm:$0xff]
        %v2229 = vld [vmem:[#allocation14 + $0x50] sm:$0xff]
        %v2230 = vld [vmem:[#allocation14 + $0x58] sm:$0xff]
        %v2231 = vld [vmem:[#allocation14 + $0x60] sm:$0xff]
        %v2232 = vld [vmem:[#allocation14 + $0x68] sm:$0xff]
        %v2233 = vld [vmem:[#allocation14 + $0x70] sm:$0xff]
        %v2234 = vld [vmem:[#allocation14 + $0x78] sm:$0xff]
        %v2235 = vld [vmem:[#allocation15] sm:$0xff]
        %v2236 = vld [vmem:[#allocation15 + $0x8] sm:$0xff]
        %v2237 = vld [vmem:[#allocation15 + $0x10] sm:$0xff]
        %v2238 = vld [vmem:[#allocation15 + $0x18] sm:$0xff]
        %v2239 = vld [vmem:[#allocation15 + $0x20] sm:$0xff]
        %v2240 = vld [vmem:[#allocation15 + $0x28] sm:$0xff]
        %v2241 = vld [vmem:[#allocation15 + $0x30] sm:$0xff]
        %v2242 = vld [vmem:[#allocation15 + $0x38] sm:$0xff]
        %v2243 = vld [vmem:[#allocation15 + $0x40] sm:$0xff]
        %v2244 = vld [vmem:[#allocation15 + $0x48] sm:$0xff]
        %v2245 = vld [vmem:[#allocation15 + $0x50] sm:$0xff]
        %v2246 = vld [vmem:[#allocation15 + $0x58] sm:$0xff]
        %v2247 = vld [vmem:[#allocation15 + $0x60] sm:$0xff]
        %v2248 = vld [vmem:[#allocation15 + $0x68] sm:$0xff]
        %v2249 = vld [vmem:[#allocation15 + $0x70] sm:$0xff]
        %v2250 = vld [vmem:[#allocation15 + $0x78] sm:$0xff]
        %2251 = vmatprep.subr.mxu0 0.0
        %2252 = vmatpush1.msra.mxu0 %v2235
        %2253 = vmatprep.subr.mxu0 0.0
        %2254 = vmatpush1.msra.mxu0 %v2236
        %2255 = vmatprep.subr.mxu0 0.0
        %2256 = vmatpush1.msra.mxu0 %v2237
        %2257 = vmatprep.subr.mxu0 0.0
        %2258 = vmatpush1.msra.mxu0 %v2238
        %2259 = vmatprep.subr.mxu0 0.0
        %2260 = vmatpush1.msra.mxu0 %v2239
        %2261 = vmatprep.subr.mxu0 0.0
        %2262 = vmatpush1.msra.mxu0 %v2240
        %2263 = vmatprep.subr.mxu0 0.0
        %2264 = vmatpush1.msra.mxu0 %v2241
        %2265 = vmatprep.subr.mxu0 0.0
        %2266 = vmatpush1.msra.mxu0 %v2242
        %2267 = vmatprep.subr.mxu0 0.0
        %2268 = vmatpush1.msra.mxu0 %v2243
        %2269 = vmatprep.subr.mxu0 0.0
        %2270 = vmatpush1.msra.mxu0 %v2244
        %2271 = vmatprep.subr.mxu0 0.0
        %2272 = vmatpush1.msra.mxu0 %v2245
        %2273 = vmatprep.subr.mxu0 0.0
        %2274 = vmatpush1.msra.mxu0 %v2246
        %2275 = vmatprep.subr.mxu0 0.0
        %2276 = vmatpush1.msra.mxu0 %v2247
        %2277 = vmatprep.subr.mxu0 0.0
        %2278 = vmatpush1.msra.mxu0 %v2248
        %2279 = vmatprep.subr.mxu0 0.0
        %2280 = vmatpush1.msra.mxu0 %v2249
        %2281 = vmatprep.subr.mxu0 0.0
        %2282 = vmatpush1.msra.mxu0 %v2250
        %2283 = vmatprep.subr.mxu0 0.0
        %2284 = vmatpush1.msra.mxu0 0.0
        %2285 = vmatprep.subr.mxu0 0.0
        %2286 = vmatpush1.msra.mxu0 0.0
        %2287 = vmatprep.subr.mxu0 0.0
        %2288 = vmatpush1.msra.mxu0 0.0
        %2289 = vmatprep.subr.mxu0 0.0
        %2290 = vmatpush1.msra.mxu0 0.0
        %2291 = vmatprep.subr.mxu0 0.0
        %2292 = vmatpush1.msra.mxu0 0.0
        %2293 = vmatprep.subr.mxu0 0.0
        %2294 = vmatpush1.msra.mxu0 0.0
        %2295 = vmatprep.subr.mxu0 0.0
        %2296 = vmatpush1.msra.mxu0 0.0
        %2297 = vmatprep.subr.mxu0 0.0
        %2298 = vmatpush1.msra.mxu0 0.0
        %2299 = vmatprep.subr.mxu0 0.0
        %2300 = vmatpush1.msra.mxu0 0.0
        %2301 = vmatprep.subr.mxu0 0.0
        %2302 = vmatpush1.msra.mxu0 0.0
        %2303 = vmatprep.subr.mxu0 0.0
        %2304 = vmatpush1.msra.mxu0 0.0
        %2305 = vmatprep.subr.mxu0 0.0
        %2306 = vmatpush1.msra.mxu0 0.0
        %2307 = vmatprep.subr.mxu0 0.0
        %2308 = vmatpush1.msra.mxu0 0.0
        %2309 = vmatprep.subr.mxu0 0.0
        %2310 = vmatpush1.msra.mxu0 0.0
        %2311 = vmatprep.subr.mxu0 0.0
        %2312 = vmatpush1.msra.mxu0 0.0
        %2313 = vmatprep.subr.mxu0 0.0
        %2314 = vmatpush1.msra.mxu0 0.0
        %2315 = vmatprep.mubr.f32.mxu0 0.0
        %2316 = vmatmul.mubr.f32.gmra.mrb[0].mxu0 %v1867
        %v2317 = vpop.f32.mrb[0].mxu0
        %v2318 = vadd.f32 0.0, %v2317
        %v2319 = vpop.f32.mrb[0].mxu0
        %2320 = vdwg.mxu0
        %2321 = vmatprep.subr.mxu0 0.0
        %2322 = vmatpush1.msra.mxu0 %v2219
        %2323 = vmatprep.subr.mxu0 0.0
        %2324 = vmatpush1.msra.mxu0 %v2220
        %2325 = vmatprep.subr.mxu0 0.0
        %2326 = vmatpush1.msra.mxu0 %v2221
        %2327 = vmatprep.subr.mxu0 0.0
        %2328 = vmatpush1.msra.mxu0 %v2222
        %2329 = vmatprep.subr.mxu0 0.0
        %2330 = vmatpush1.msra.mxu0 %v2223
        %2331 = vmatprep.subr.mxu0 0.0
        %2332 = vmatpush1.msra.mxu0 %v2224
        %2333 = vmatprep.subr.mxu0 0.0
        %2334 = vmatpush1.msra.mxu0 %v2225
        %2335 = vmatprep.subr.mxu0 0.0
        %2336 = vmatpush1.msra.mxu0 %v2226
        %2337 = vmatprep.subr.mxu0 0.0
        %2338 = vmatpush1.msra.mxu0 %v2227
        %2339 = vmatprep.subr.mxu0 0.0
        %2340 = vmatpush1.msra.mxu0 %v2228
        %2341 = vmatprep.subr.mxu0 0.0
        %2342 = vmatpush1.msra.mxu0 %v2229
        %2343 = vmatprep.subr.mxu0 0.0
        %2344 = vmatpush1.msra.mxu0 %v2230
        %2345 = vmatprep.subr.mxu0 0.0
        %2346 = vmatpush1.msra.mxu0 %v2231
        %2347 = vmatprep.subr.mxu0 0.0
        %2348 = vmatpush1.msra.mxu0 %v2232
        %2349 = vmatprep.subr.mxu0 0.0
        %2350 = vmatpush1.msra.mxu0 %v2233
        %2351 = vmatprep.subr.mxu0 0.0
        %2352 = vmatpush1.msra.mxu0 %v2234
        %2353 = vmatprep.subr.mxu0 0.0
        %2354 = vmatpush1.msra.mxu0 0.0
        %2355 = vmatprep.subr.mxu0 0.0
        %2356 = vmatpush1.msra.mxu0 0.0
        %2357 = vmatprep.subr.mxu0 0.0
        %2358 = vmatpush1.msra.mxu0 0.0
        %2359 = vmatprep.subr.mxu0 0.0
        %2360 = vmatpush1.msra.mxu0 0.0
        %2361 = vmatprep.subr.mxu0 0.0
        %2362 = vmatpush1.msra.mxu0 0.0
        %2363 = vmatprep.subr.mxu0 0.0
        %2364 = vmatpush1.msra.mxu0 0.0
        %2365 = vmatprep.subr.mxu0 0.0
        %2366 = vmatpush1.msra.mxu0 0.0
        %2367 = vmatprep.subr.mxu0 0.0
        %2368 = vmatpush1.msra.mxu0 0.0
        %2369 = vmatprep.subr.mxu0 0.0
        %2370 = vmatpush1.msra.mxu0 0.0
        %2371 = vmatprep.subr.mxu0 0.0
        %2372 = vmatpush1.msra.mxu0 0.0
        %2373 = vmatprep.subr.mxu0 0.0
        %2374 = vmatpush1.msra.mxu0 0.0
        %2375 = vmatprep.subr.mxu0 0.0
        %2376 = vmatpush1.msra.mxu0 0.0
        %2377 = vmatprep.subr.mxu0 0.0
        %2378 = vmatpush1.msra.mxu0 0.0
        %2379 = vmatprep.subr.mxu0 0.0
        %2380 = vmatpush1.msra.mxu0 0.0
        %2381 = vmatprep.subr.mxu0 0.0
        %2382 = vmatpush1.msra.mxu0 0.0
        %2383 = vmatprep.subr.mxu0 0.0
        %2384 = vmatpush1.msra.mxu0 0.0
        %2385 = vmatprep.mubr.f32.mxu0 0.0
        %2386 = vmatmul.mubr.f32.gmra.mrb[0].mxu0 %v2046
        %v2387 = vpop.f32.mrb[0].mxu0
        %v2388 = vadd.f32 %v2318, %v2387
        %v2389 = vpop.f32.mrb[0].mxu0
        %2390 = vdwg.mxu0
        %v2391 = vadd.f32 %v2388, %v1334
        %v2392 = vmul.f32 %v1867, 0.9
        %v2393 = vtanh.pop %v2391
        %v2394 = vmul.f32 %v2393, 0.1
        %v2395 = vadd.f32 %v2392, %v2394
        %s2396 = scalar_lea.vmem %s604, 16 [#allocation20]
        %2397 = vst [vmem:[%s2396] sm:$0xff] %v2395
        %v2398 = vld [vmem:[#allocation11] sm:$0xff]
        %v2399 = vld [vmem:[#allocation11 + $0x8] sm:$0xff]
        %v2400 = vld [vmem:[#allocation11 + $0x10] sm:$0xff]
        %v2401 = vld [vmem:[#allocation11 + $0x18] sm:$0xff]
        %v2402 = vld [vmem:[#allocation11 + $0x20] sm:$0xff]
        %v2403 = vld [vmem:[#allocation11 + $0x28] sm:$0xff]
        %v2404 = vld [vmem:[#allocation11 + $0x30] sm:$0xff]
        %v2405 = vld [vmem:[#allocation11 + $0x38] sm:$0xff]
        %v2406 = vld [vmem:[#allocation11 + $0x40] sm:$0xff]
        %v2407 = vld [vmem:[#allocation11 + $0x48] sm:$0xff]
        %v2408 = vld [vmem:[#allocation11 + $0x50] sm:$0xff]
        %v2409 = vld [vmem:[#allocation11 + $0x58] sm:$0xff]
        %v2410 = vld [vmem:[#allocation11 + $0x60] sm:$0xff]
        %v2411 = vld [vmem:[#allocation11 + $0x68] sm:$0xff]
        %v2412 = vld [vmem:[#allocation11 + $0x70] sm:$0xff]
        %v2413 = vld [vmem:[#allocation11 + $0x78] sm:$0xff]
        %v2414 = vld [vmem:[#allocation12] sm:$0xff]
        %v2415 = vld [vmem:[#allocation12 + $0x8] sm:$0xff]
        %v2416 = vld [vmem:[#allocation12 + $0x10] sm:$0xff]
        %v2417 = vld [vmem:[#allocation12 + $0x18] sm:$0xff]
        %v2418 = vld [vmem:[#allocation12 + $0x20] sm:$0xff]
        %v2419 = vld [vmem:[#allocation12 + $0x28] sm:$0xff]
        %v2420 = vld [vmem:[#allocation12 + $0x30] sm:$0xff]
        %v2421 = vld [vmem:[#allocation12 + $0x38] sm:$0xff]
        %v2422 = vld [vmem:[#allocation12 + $0x40] sm:$0xff]
        %v2423 = vld [vmem:[#allocation12 + $0x48] sm:$0xff]
        %v2424 = vld [vmem:[#allocation12 + $0x50] sm:$0xff]
        %v2425 = vld [vmem:[#allocation12 + $0x58] sm:$0xff]
        %v2426 = vld [vmem:[#allocation12 + $0x60] sm:$0xff]
        %v2427 = vld [vmem:[#allocation12 + $0x68] sm:$0xff]
        %v2428 = vld [vmem:[#allocation12 + $0x70] sm:$0xff]
        %v2429 = vld [vmem:[#allocation12 + $0x78] sm:$0xff]
        %2430 = vmatprep.subr.mxu0 0.0
        %2431 = vmatpush1.msra.mxu0 %v2414
        %2432 = vmatprep.subr.mxu0 0.0
        %2433 = vmatpush1.msra.mxu0 %v2415
        %2434 = vmatprep.subr.mxu0 0.0
        %2435 = vmatpush1.msra.mxu0 %v2416
        %2436 = vmatprep.subr.mxu0 0.0
        %2437 = vmatpush1.msra.mxu0 %v2417
        %2438 = vmatprep.subr.mxu0 0.0
        %2439 = vmatpush1.msra.mxu0 %v2418
        %2440 = vmatprep.subr.mxu0 0.0
        %2441 = vmatpush1.msra.mxu0 %v2419
        %2442 = vmatprep.subr.mxu0 0.0
        %2443 = vmatpush1.msra.mxu0 %v2420
        %2444 = vmatprep.subr.mxu0 0.0
        %2445 = vmatpush1.msra.mxu0 %v2421
        %2446 = vmatprep.subr.mxu0 0.0
        %2447 = vmatpush1.msra.mxu0 %v2422
        %2448 = vmatprep.subr.mxu0 0.0
        %2449 = vmatpush1.msra.mxu0 %v2423
        %2450 = vmatprep.subr.mxu0 0.0
        %2451 = vmatpush1.msra.mxu0 %v2424
        %2452 = vmatprep.subr.mxu0 0.0
        %2453 = vmatpush1.msra.mxu0 %v2425
        %2454 = vmatprep.subr.mxu0 0.0
        %2455 = vmatpush1.msra.mxu0 %v2426
        %2456 = vmatprep.subr.mxu0 0.0
        %2457 = vmatpush1.msra.mxu0 %v2427
        %2458 = vmatprep.subr.mxu0 0.0
        %2459 = vmatpush1.msra.mxu0 %v2428
        %2460 = vmatprep.subr.mxu0 0.0
        %2461 = vmatpush1.msra.mxu0 %v2429
        %2462 = vmatprep.subr.mxu0 0.0
        %2463 = vmatpush1.msra.mxu0 0.0
        %2464 = vmatprep.subr.mxu0 0.0
        %2465 = vmatpush1.msra.mxu0 0.0
        %2466 = vmatprep.subr.mxu0 0.0
        %2467 = vmatpush1.msra.mxu0 0.0
        %2468 = vmatprep.subr.mxu0 0.0
        %2469 = vmatpush1.msra.mxu0 0.0
        %2470 = vmatprep.subr.mxu0 0.0
        %2471 = vmatpush1.msra.mxu0 0.0
        %2472 = vmatprep.subr.mxu0 0.0
        %2473 = vmatpush1.msra.mxu0 0.0
        %2474 = vmatprep.subr.mxu0 0.0
        %2475 = vmatpush1.msra.mxu0 0.0
        %2476 = vmatprep.subr.mxu0 0.0
        %2477 = vmatpush1.msra.mxu0 0.0
        %2478 = vmatprep.subr.mxu0 0.0
        %2479 = vmatpush1.msra.mxu0 0.0
        %2480 = vmatprep.subr.mxu0 0.0
        %2481 = vmatpush1.msra.mxu0 0.0
        %2482 = vmatprep.subr.mxu0 0.0
        %2483 = vmatpush1.msra.mxu0 0.0
        %2484 = vmatprep.subr.mxu0 0.0
        %2485 = vmatpush1.msra.mxu0 0.0
        %2486 = vmatprep.subr.mxu0 0.0
        %2487 = vmatpush1.msra.mxu0 0.0
        %2488 = vmatprep.subr.mxu0 0.0
        %2489 = vmatpush1.msra.mxu0 0.0
        %2490 = vmatprep.subr.mxu0 0.0
        %2491 = vmatpush1.msra.mxu0 0.0
        %2492 = vmatprep.subr.mxu0 0.0
        %2493 = vmatpush1.msra.mxu0 0.0
        %2494 = vmatprep.mubr.f32.mxu0 0.0
        %2495 = vmatmul.mubr.f32.gmra.mrb[0].mxu0 %v2046
        %v2496 = vpop.f32.mrb[0].mxu0
        %v2497 = vadd.f32 0.0, %v2496
        %v2498 = vpop.f32.mrb[0].mxu0
        %2499 = vdwg.mxu0
        %2500 = vmatprep.subr.mxu0 0.0
        %2501 = vmatpush1.msra.mxu0 %v2398
        %2502 = vmatprep.subr.mxu0 0.0
        %2503 = vmatpush1.msra.mxu0 %v2399
        %2504 = vmatprep.subr.mxu0 0.0
        %2505 = vmatpush1.msra.mxu0 %v2400
        %2506 = vmatprep.subr.mxu0 0.0
        %2507 = vmatpush1.msra.mxu0 %v2401
        %2508 = vmatprep.subr.mxu0 0.0
        %2509 = vmatpush1.msra.mxu0 %v2402
        %2510 = vmatprep.subr.mxu0 0.0
        %2511 = vmatpush1.msra.mxu0 %v2403
        %2512 = vmatprep.subr.mxu0 0.0
        %2513 = vmatpush1.msra.mxu0 %v2404
        %2514 = vmatprep.subr.mxu0 0.0
        %2515 = vmatpush1.msra.mxu0 %v2405
        %2516 = vmatprep.subr.mxu0 0.0
        %2517 = vmatpush1.msra.mxu0 %v2406
        %2518 = vmatprep.subr.mxu0 0.0
        %2519 = vmatpush1.msra.mxu0 %v2407
        %2520 = vmatprep.subr.mxu0 0.0
        %2521 = vmatpush1.msra.mxu0 %v2408
        %2522 = vmatprep.subr.mxu0 0.0
        %2523 = vmatpush1.msra.mxu0 %v2409
        %2524 = vmatprep.subr.mxu0 0.0
        %2525 = vmatpush1.msra.mxu0 %v2410
        %2526 = vmatprep.subr.mxu0 0.0
        %2527 = vmatpush1.msra.mxu0 %v2411
        %2528 = vmatprep.subr.mxu0 0.0
        %2529 = vmatpush1.msra.mxu0 %v2412
        %2530 = vmatprep.subr.mxu0 0.0
        %2531 = vmatpush1.msra.mxu0 %v2413
        %2532 = vmatprep.subr.mxu0 0.0
        %2533 = vmatpush1.msra.mxu0 0.0
        %2534 = vmatprep.subr.mxu0 0.0
        %2535 = vmatpush1.msra.mxu0 0.0
        %2536 = vmatprep.subr.mxu0 0.0
        %2537 = vmatpush1.msra.mxu0 0.0
        %2538 = vmatprep.subr.mxu0 0.0
        %2539 = vmatpush1.msra.mxu0 0.0
        %2540 = vmatprep.subr.mxu0 0.0
        %2541 = vmatpush1.msra.mxu0 0.0
        %2542 = vmatprep.subr.mxu0 0.0
        %2543 = vmatpush1.msra.mxu0 0.0
        %2544 = vmatprep.subr.mxu0 0.0
        %2545 = vmatpush1.msra.mxu0 0.0
        %2546 = vmatprep.subr.mxu0 0.0
        %2547 = vmatpush1.msra.mxu0 0.0
        %2548 = vmatprep.subr.mxu0 0.0
        %2549 = vmatpush1.msra.mxu0 0.0
        %2550 = vmatprep.subr.mxu0 0.0
        %2551 = vmatpush1.msra.mxu0 0.0
        %2552 = vmatprep.subr.mxu0 0.0
        %2553 = vmatpush1.msra.mxu0 0.0
        %2554 = vmatprep.subr.mxu0 0.0
        %2555 = vmatpush1.msra.mxu0 0.0
        %2556 = vmatprep.subr.mxu0 0.0
        %2557 = vmatpush1.msra.mxu0 0.0
        %2558 = vmatprep.subr.mxu0 0.0
        %2559 = vmatpush1.msra.mxu0 0.0
        %2560 = vmatprep.subr.mxu0 0.0
        %2561 = vmatpush1.msra.mxu0 0.0
        %2562 = vmatprep.subr.mxu0 0.0
        %2563 = vmatpush1.msra.mxu0 0.0
        %2564 = vmatprep.mubr.f32.mxu0 0.0
        %2565 = vmatmul.mubr.f32.gmra.mrb[0].mxu0 %v2216
        %v2566 = vpop.f32.mrb[0].mxu0
        %v2567 = vadd.f32 %v2497, %v2566
        %v2568 = vpop.f32.mrb[0].mxu0
        %2569 = vdwg.mxu0
        %v2570 = vadd.f32 %v2567, %v980
        %v2571 = vmul.f32 %v2046, 0.9
        %v2572 = vtanh.pop %v2570
        %v2573 = vmul.f32 %v2572, 0.1
        %v2574 = vadd.f32 %v2571, %v2573
        %s2575 = scalar_lea.vmem %s597, 24 [#allocation18]
        %2576 = vst [vmem:[%s2575] sm:$0xff] %v2574
        %v2577 = vld [vmem:[#allocation14] sm:$0xff]
        %v2578 = vld [vmem:[#allocation14 + $0x8] sm:$0xff]
        %v2579 = vld [vmem:[#allocation14 + $0x10] sm:$0xff]
        %v2580 = vld [vmem:[#allocation14 + $0x18] sm:$0xff]
        %v2581 = vld [vmem:[#allocation14 + $0x20] sm:$0xff]
        %v2582 = vld [vmem:[#allocation14 + $0x28] sm:$0xff]
        %v2583 = vld [vmem:[#allocation14 + $0x30] sm:$0xff]
        %v2584 = vld [vmem:[#allocation14 + $0x38] sm:$0xff]
        %v2585 = vld [vmem:[#allocation14 + $0x40] sm:$0xff]
        %v2586 = vld [vmem:[#allocation14 + $0x48] sm:$0xff]
        %v2587 = vld [vmem:[#allocation14 + $0x50] sm:$0xff]
        %v2588 = vld [vmem:[#allocation14 + $0x58] sm:$0xff]
        %v2589 = vld [vmem:[#allocation14 + $0x60] sm:$0xff]
        %v2590 = vld [vmem:[#allocation14 + $0x68] sm:$0xff]
        %v2591 = vld [vmem:[#allocation14 + $0x70] sm:$0xff]
        %v2592 = vld [vmem:[#allocation14 + $0x78] sm:$0xff]
        %v2593 = vld [vmem:[#allocation15] sm:$0xff]
        %v2594 = vld [vmem:[#allocation15 + $0x8] sm:$0xff]
        %v2595 = vld [vmem:[#allocation15 + $0x10] sm:$0xff]
        %v2596 = vld [vmem:[#allocation15 + $0x18] sm:$0xff]
        %v2597 = vld [vmem:[#allocation15 + $0x20] sm:$0xff]
        %v2598 = vld [vmem:[#allocation15 + $0x28] sm:$0xff]
        %v2599 = vld [vmem:[#allocation15 + $0x30] sm:$0xff]
        %v2600 = vld [vmem:[#allocation15 + $0x38] sm:$0xff]
        %v2601 = vld [vmem:[#allocation15 + $0x40] sm:$0xff]
        %v2602 = vld [vmem:[#allocation15 + $0x48] sm:$0xff]
        %v2603 = vld [vmem:[#allocation15 + $0x50] sm:$0xff]
        %v2604 = vld [vmem:[#allocation15 + $0x58] sm:$0xff]
        %v2605 = vld [vmem:[#allocation15 + $0x60] sm:$0xff]
        %v2606 = vld [vmem:[#allocation15 + $0x68] sm:$0xff]
        %v2607 = vld [vmem:[#allocation15 + $0x70] sm:$0xff]
        %v2608 = vld [vmem:[#allocation15 + $0x78] sm:$0xff]
        %2609 = vmatprep.subr.mxu0 0.0
        %2610 = vmatpush1.msra.mxu0 %v2593
        %2611 = vmatprep.subr.mxu0 0.0
        %2612 = vmatpush1.msra.mxu0 %v2594
        %2613 = vmatprep.subr.mxu0 0.0
        %2614 = vmatpush1.msra.mxu0 %v2595
        %2615 = vmatprep.subr.mxu0 0.0
        %2616 = vmatpush1.msra.mxu0 %v2596
        %2617 = vmatprep.subr.mxu0 0.0
        %2618 = vmatpush1.msra.mxu0 %v2597
        %2619 = vmatprep.subr.mxu0 0.0
        %2620 = vmatpush1.msra.mxu0 %v2598
        %2621 = vmatprep.subr.mxu0 0.0
        %2622 = vmatpush1.msra.mxu0 %v2599
        %2623 = vmatprep.subr.mxu0 0.0
        %2624 = vmatpush1.msra.mxu0 %v2600
        %2625 = vmatprep.subr.mxu0 0.0
        %2626 = vmatpush1.msra.mxu0 %v2601
        %2627 = vmatprep.subr.mxu0 0.0
        %2628 = vmatpush1.msra.mxu0 %v2602
        %2629 = vmatprep.subr.mxu0 0.0
        %2630 = vmatpush1.msra.mxu0 %v2603
        %2631 = vmatprep.subr.mxu0 0.0
        %2632 = vmatpush1.msra.mxu0 %v2604
        %2633 = vmatprep.subr.mxu0 0.0
        %2634 = vmatpush1.msra.mxu0 %v2605
        %2635 = vmatprep.subr.mxu0 0.0
        %2636 = vmatpush1.msra.mxu0 %v2606
        %2637 = vmatprep.subr.mxu0 0.0
        %2638 = vmatpush1.msra.mxu0 %v2607
        %2639 = vmatprep.subr.mxu0 0.0
        %2640 = vmatpush1.msra.mxu0 %v2608
        %2641 = vmatprep.subr.mxu0 0.0
        %2642 = vmatpush1.msra.mxu0 0.0
        %2643 = vmatprep.subr.mxu0 0.0
        %2644 = vmatpush1.msra.mxu0 0.0
        %2645 = vmatprep.subr.mxu0 0.0
        %2646 = vmatpush1.msra.mxu0 0.0
        %2647 = vmatprep.subr.mxu0 0.0
        %2648 = vmatpush1.msra.mxu0 0.0
        %2649 = vmatprep.subr.mxu0 0.0
        %2650 = vmatpush1.msra.mxu0 0.0
        %2651 = vmatprep.subr.mxu0 0.0
        %2652 = vmatpush1.msra.mxu0 0.0
        %2653 = vmatprep.subr.mxu0 0.0
        %2654 = vmatpush1.msra.mxu0 0.0
        %2655 = vmatprep.subr.mxu0 0.0
        %2656 = vmatpush1.msra.mxu0 0.0
        %2657 = vmatprep.subr.mxu0 0.0
        %2658 = vmatpush1.msra.mxu0 0.0
        %2659 = vmatprep.subr.mxu0 0.0
        %2660 = vmatpush1.msra.mxu0 0.0
        %2661 = vmatprep.subr.mxu0 0.0
        %2662 = vmatpush1.msra.mxu0 0.0
        %2663 = vmatprep.subr.mxu0 0.0
        %2664 = vmatpush1.msra.mxu0 0.0
        %2665 = vmatprep.subr.mxu0 0.0
        %2666 = vmatpush1.msra.mxu0 0.0
        %2667 = vmatprep.subr.mxu0 0.0
        %2668 = vmatpush1.msra.mxu0 0.0
        %2669 = vmatprep.subr.mxu0 0.0
        %2670 = vmatpush1.msra.mxu0 0.0
        %2671 = vmatprep.subr.mxu0 0.0
        %2672 = vmatpush1.msra.mxu0 0.0
        %2673 = vmatprep.mubr.f32.mxu0 0.0
        %2674 = vmatmul.mubr.f32.gmra.mrb[0].mxu0 %v2395
        %v2675 = vpop.f32.mrb[0].mxu0
        %v2676 = vadd.f32 0.0, %v2675
        %v2677 = vpop.f32.mrb[0].mxu0
        %2678 = vdwg.mxu0
        %2679 = vmatprep.subr.mxu0 0.0
        %2680 = vmatpush1.msra.mxu0 %v2577
        %2681 = vmatprep.subr.mxu0 0.0
        %2682 = vmatpush1.msra.mxu0 %v2578
        %2683 = vmatprep.subr.mxu0 0.0
        %2684 = vmatpush1.msra.mxu0 %v2579
        %2685 = vmatprep.subr.mxu0 0.0
        %2686 = vmatpush1.msra.mxu0 %v2580
        %2687 = vmatprep.subr.mxu0 0.0
        %2688 = vmatpush1.msra.mxu0 %v2581
        %2689 = vmatprep.subr.mxu0 0.0
        %2690 = vmatpush1.msra.mxu0 %v2582
        %2691 = vmatprep.subr.mxu0 0.0
        %2692 = vmatpush1.msra.mxu0 %v2583
        %2693 = vmatprep.subr.mxu0 0.0
        %2694 = vmatpush1.msra.mxu0 %v2584
        %2695 = vmatprep.subr.mxu0 0.0
        %2696 = vmatpush1.msra.mxu0 %v2585
        %2697 = vmatprep.subr.mxu0 0.0
        %2698 = vmatpush1.msra.mxu0 %v2586
        %2699 = vmatprep.subr.mxu0 0.0
        %2700 = vmatpush1.msra.mxu0 %v2587
        %2701 = vmatprep.subr.mxu0 0.0
        %2702 = vmatpush1.msra.mxu0 %v2588
        %2703 = vmatprep.subr.mxu0 0.0
        %2704 = vmatpush1.msra.mxu0 %v2589
        %2705 = vmatprep.subr.mxu0 0.0
        %2706 = vmatpush1.msra.mxu0 %v2590
        %2707 = vmatprep.subr.mxu0 0.0
        %2708 = vmatpush1.msra.mxu0 %v2591
        %2709 = vmatprep.subr.mxu0 0.0
        %2710 = vmatpush1.msra.mxu0 %v2592
        %2711 = vmatprep.subr.mxu0 0.0
        %2712 = vmatpush1.msra.mxu0 0.0
        %2713 = vmatprep.subr.mxu0 0.0
        %2714 = vmatpush1.msra.mxu0 0.0
        %2715 = vmatprep.subr.mxu0 0.0
        %2716 = vmatpush1.msra.mxu0 0.0
        %2717 = vmatprep.subr.mxu0 0.0
        %2718 = vmatpush1.msra.mxu0 0.0
        %2719 = vmatprep.subr.mxu0 0.0
        %2720 = vmatpush1.msra.mxu0 0.0
        %2721 = vmatprep.subr.mxu0 0.0
        %2722 = vmatpush1.msra.mxu0 0.0
        %2723 = vmatprep.subr.mxu0 0.0
        %2724 = vmatpush1.msra.mxu0 0.0
        %2725 = vmatprep.subr.mxu0 0.0
        %2726 = vmatpush1.msra.mxu0 0.0
        %2727 = vmatprep.subr.mxu0 0.0
        %2728 = vmatpush1.msra.mxu0 0.0
        %2729 = vmatprep.subr.mxu0 0.0
        %2730 = vmatpush1.msra.mxu0 0.0
        %2731 = vmatprep.subr.mxu0 0.0
        %2732 = vmatpush1.msra.mxu0 0.0
        %2733 = vmatprep.subr.mxu0 0.0
        %2734 = vmatpush1.msra.mxu0 0.0
        %2735 = vmatprep.subr.mxu0 0.0
        %2736 = vmatpush1.msra.mxu0 0.0
        %2737 = vmatprep.subr.mxu0 0.0
        %2738 = vmatpush1.msra.mxu0 0.0
        %2739 = vmatprep.subr.mxu0 0.0
        %2740 = vmatpush1.msra.mxu0 0.0
        %2741 = vmatprep.subr.mxu0 0.0
        %2742 = vmatpush1.msra.mxu0 0.0
        %2743 = vmatprep.mubr.f32.mxu0 0.0
        %2744 = vmatmul.mubr.f32.gmra.mrb[0].mxu0 %v2574
        %v2745 = vpop.f32.mrb[0].mxu0
        %v2746 = vadd.f32 %v2676, %v2745
        %v2747 = vpop.f32.mrb[0].mxu0
        %2748 = vdwg.mxu0
        %v2749 = vadd.f32 %v2746, %v1334
        %v2750 = vmul.f32 %v2395, 0.9
        %v2751 = vtanh.pop %v2749
        %v2752 = vmul.f32 %v2751, 0.1
        %v2753 = vadd.f32 %v2750, %v2752
        %s2754 = scalar_lea.vmem %s604, 24 [#allocation20]
        %2755 = vst [vmem:[%s2754] sm:$0xff] %v2753
        %2756 = vst [vmem:[#allocation2] sm:$0xff] %v2216
        %2757 = vst [vmem:[%s625] sm:$0xff] %v2574
        %2758 = vst [vmem:[%s627] sm:$0xff] %v2753
        %s2759 = sand.u32 %s303, 1
        %s2760 = scalar_lea.sflag [#allocation5], %s2759
        %s2761 = sand.u32 %s303, 1
        %s2762 = smul.addr %s2761, 32
        %s2763 = scalar_lea.vmem [#allocation17], %s2762
        %s2764 = sand.u32 %s38, 1
        %s2765 = scalar_lea.sflag [#allocation19], %s2764
        %s2766 = sand.u32 %s331, 1
        %s2767 = smul.addr %s2766, 32
        %s2768 = scalar_lea.vmem [#allocation18], %s2767
        %s2769 = sand.u32 %s38, 1
        %s2770 = scalar_lea.sflag [#allocation19], %s2769
        %s2771 = sand.u32 %s359, 1
        %s2772 = smul.addr %s2771, 32
        %s2773 = scalar_lea.vmem [#allocation20], %s2772
        // Predicated region
        $region101: #{tpu_custom_call.1} parent=63 // pred_check
          %p2774 = pneg %p313
        $region102: #{tpu_custom_call.1} parent=63 // pred_check_branch
          %2776 = sbr.rel (%p2774) target = $region104
        $region103: #{tpu_custom_call.1} parent=63 // pred_region
          %s2777 = smul.u32 4, %s43
          %s2779 = ssub.s32 512, 512
          %2780 = vsyncadd %s2760, %s2779
          %s2781 = sadd.s32 %s42, %s2777
          %s2782 = smul.addr %s2781, 128
          %s2783 = scalar_lea.hbm %s11, %s2782
          %s2784 = sshll.u32 %s2763, 4
          %s2785 = int_to_ptr.vmem [resolvable:$true] %s2784
          %2790 = dma.vmem_to_hbm [thread:$0]  %s2785, 512, %s2783, %s2760, 128, 128, 8
        $region104: #{tpu_custom_call.1} parent=63 // pred_fallthru
          _
        // Predicated region
        $region105: #{tpu_custom_call.1} parent=63 // pred_check
          %p2791 = pneg %p341
        $region106: #{tpu_custom_call.1} parent=63 // pred_check_branch
          %2793 = sbr.rel (%p2791) target = $region108
        $region107: #{tpu_custom_call.1} parent=63 // pred_region
          %s2794 = smul.u32 4, %s43
          %s2796 = ssub.s32 512, 512
          %2797 = vsyncadd %s2765, %s2796
          %s2798 = sadd.s32 %s42, %s2794
          %s2799 = smul.addr %s2798, 128
          %s2800 = scalar_lea.hbm %s12, %s2799
          %s2801 = sshll.u32 %s2768, 4
          %s2802 = int_to_ptr.vmem [resolvable:$true] %s2801
          %2807 = dma.vmem_to_hbm [thread:$0]  %s2802, 512, %s2800, %s2765, 128, 128, 8
        $region108: #{tpu_custom_call.1} parent=63 // pred_fallthru
          _
        // Predicated region
        $region109: #{tpu_custom_call.1} parent=63 // pred_check
          %p2808 = pneg %p369
        $region110: #{tpu_custom_call.1} parent=63 // pred_check_branch
          %2810 = sbr.rel (%p2808) target = $region112
        $region111: #{tpu_custom_call.1} parent=63 // pred_region
          %s2811 = smul.u32 4, %s43
          %s2813 = ssub.s32 512, 512
          %2814 = vsyncadd %s2770, %s2813
          %s2815 = sadd.s32 %s42, %s2811
          %s2816 = smul.addr %s2815, 128
          %s2817 = scalar_lea.hbm %s13, %s2816
          %s2818 = sshll.u32 %s2773, 4
          %s2819 = int_to_ptr.vmem [resolvable:$true] %s2818
          %2824 = dma.vmem_to_hbm [thread:$0]  %s2819, 512, %s2817, %s2770, 128, 128, 8
        $region112: #{tpu_custom_call.1} parent=63 // pred_fallthru
          _
      $region64: #{tpu_custom_call.1} parent=5 // pred_fallthru
        _
      %p2825 = scmp.le.s32.totalorder 2, %s33
      // Predicated region
      $region113: #{tpu_custom_call.1} parent=5 // pred_check
        %p2826 = pneg %p2825
      $region114: #{tpu_custom_call.1} parent=5 // pred_check_branch
        %2828 = sbr.rel (%p2826) target = $region116
      $region115: #{tpu_custom_call.1} parent=5 // pred_region
        %s2829 = ssub.s32 %s33, 2
        // Predicated region
        $region117: #{tpu_custom_call.1} parent=115 // pred_check
          %p2830 = pneg %p319
        $region118: #{tpu_custom_call.1} parent=115 // pred_check_branch
          %2832 = sbr.rel (%p2830) target = $region120
        $region119: #{tpu_custom_call.1} parent=115 // pred_region
          %s2833 = sand.u32 %s304, 1
          %s2834 = scalar_lea.sflag [#allocation5], %s2833
          %s2835 = sand.u32 %s304, 1
          %s2836 = smul.addr %s2835, 32
          %s2837 = scalar_lea.vmem [#allocation17], %s2836
          %2838 = dma.done %s2834, 512
        $region120: #{tpu_custom_call.1} parent=115 // pred_fallthru
          _
        // Predicated region
        $region121: #{tpu_custom_call.1} parent=115 // pred_check
          %p2839 = pneg %p347
        $region122: #{tpu_custom_call.1} parent=115 // pred_check_branch
          %2841 = sbr.rel (%p2839) target = $region124
        $region123: #{tpu_custom_call.1} parent=115 // pred_region
          %s2842 = sand.u32 %s39, 1
          %s2843 = scalar_lea.sflag [#allocation19], %s2842
          %s2844 = sand.u32 %s332, 1
          %s2845 = smul.addr %s2844, 32
          %s2846 = scalar_lea.vmem [#allocation18], %s2845
          %2847 = dma.done %s2843, 512
        $region124: #{tpu_custom_call.1} parent=115 // pred_fallthru
          _
        // Predicated region
        $region125: #{tpu_custom_call.1} parent=115 // pred_check
          %p2848 = pneg %p375
        $region126: #{tpu_custom_call.1} parent=115 // pred_check_branch
          %2850 = sbr.rel (%p2848) target = $region128
        $region127: #{tpu_custom_call.1} parent=115 // pred_region
          %s2851 = sand.u32 %s39, 1
          %s2852 = scalar_lea.sflag [#allocation19], %s2851
          %s2853 = sand.u32 %s360, 1
          %s2854 = smul.addr %s2853, 32
          %s2855 = scalar_lea.vmem [#allocation20], %s2854
          %2856 = dma.done %s2852, 512
        $region128: #{tpu_custom_call.1} parent=115 // pred_fallthru
          _
      $region116: #{tpu_custom_call.1} parent=5 // pred_fallthru
        _
    $region6: #{tpu_custom_call.1} parent=1 // loop_footer
      %s37 = sadd.s32 1, %s33
    $region7: #{tpu_custom_call.1} parent=1 // loop_footer_branch
      %32 = sbr.rel target = $region3
    $region8: #{tpu_custom_call.1} parent=1 // loop_exit
      _
    %2857 = vsyncpa [#allocation4], 1
    %s2858 = scalar_lea.sflag [#allocation4], 1
    %2859 = vsyncpa %s2858, 1
    %2860 = vsyncpa [#allocation7], 1
    %2861 = vsyncpa [#allocation10], 1
    %2862 = vsyncpa [#allocation13], 1
    %2863 = vsyncpa [#allocation16], 1
    %2864 = vsyncpa [#allocation5], 1
    %s2865 = scalar_lea.sflag [#allocation5], 1
    %2866 = vsyncpa %s2865, 1
    %2867 = vsyncpa [#allocation19], 1
    %s2868 = scalar_lea.sflag [#allocation19], 1
    %2869 = vsyncpa %s2868, 1

</llo_original>
